<compile_context>
chip_gen: v5e
topology: v5e:2x2
jax: 0.10.0
libtpu: 0.0.40
codegen_flags: <defaults>
</compile_context>

<pallas_src>
import math

import numpy as np
import jax
import jax.numpy as jnp
from jax import lax
from jax.experimental import pallas as pl
from jax.experimental.pallas import tpu as pltpu

LANE = 128


def _cpad(c):
    """Pad a channel count up to a lane-dense multiple of 128 (minimum 128)."""
    return max(LANE, ((c + LANE - 1) // LANE) * LANE)


def _round_up(x, m):
    return ((x + m - 1) // m) * m


# ---------------------------------------------------------------------------
# Static layer plan (all shapes / strides known at trace time)
# ---------------------------------------------------------------------------
def build_plan(latent_size, in_channels=7, in_len=64):
    enc_dims = [16, 32, 64, 128, 256, 512]
    dec_dims = [512, 256, 128, 64, 32, 16]
    plan = []

    def add(kind, c_in, c_out, k, stride, pad, l_in, out_pad=0, has_bn=True,
            act="leaky", linear=False, emit=None):
        if kind == "conv":
            l_out = (l_in + 2 * pad - k) // stride + 1
        else:  # convt
            l_out = (l_in - 1) * stride - 2 * pad + k + out_pad
        plan.append(dict(kind=kind, c_in=c_in, c_out=c_out, k=k, stride=stride,
                         pad=pad, l_in=l_in, l_out=l_out,
                         c_in_pad=_cpad(c_in), c_out_pad=_cpad(c_out),
                         has_bn=has_bn, act=act, linear=linear, emit=emit))
        return l_out

    # ---- Encoder ----
    l, c = in_len, in_channels
    for h in enc_dims[:-1]:                       # 5x Conv1d(k3,s2,p1)+BN+LeakyReLU
        l = add("conv", c, h, 3, 2, 1, l)
        c = h
    l = add("conv", enc_dims[-2], enc_dims[-1], 1, 1, 0, l)   # Conv1d(256->512,k1)+BN+LReLU
    assert l == 2, "encoder Flatten->Linear(512*2) requires input length 64"
    # Flatten + Linear(512*2 -> latent): expressed as a K=2 stride-1 "conv" collapsing L.
    l = add("conv", enc_dims[-1], latent_size, l, 1, 0, l,
            has_bn=False, act=None, linear=True, emit="embedding")

    # ---- Decoder ----
    # Linear(latent -> 512) followed by view(-1, 512, 1): a K=1 "conv" on L=1.
    l = add("conv", latent_size, dec_dims[0], 1, 1, 0, 1,
            has_bn=False, act=None, linear=True)
    for i in range(len(dec_dims) - 1):            # 5x ConvT(k3,s2,p1,op1)+BN+LeakyReLU
        l = add("convt", dec_dims[i], dec_dims[i + 1], 3, 2, 1, l, out_pad=1)
    l = add("convt", dec_dims[-1], dec_dims[-1], 3, 2, 2, l, out_pad=1)  # ConvT(16,16,p2,op1)
    l = add("conv", dec_dims[-1], 7, 5, 1, 1, l,
            has_bn=False, act="sigmoid", emit="recovered")     # Conv1d(16,7,k5,p1)+Sigmoid
    return plan


# ---------------------------------------------------------------------------
# Parameters: PyTorch-compatible shapes, deterministic synthetic init
# ---------------------------------------------------------------------------
def init_params(key, plan):
    """Conv1d: (C_out,C_in,K); ConvTranspose1d: (C_in,C_out,K); Linear: (out,in)."""
    layers = []
    for cfg in plan:
        key, kw, kb = jax.random.split(key, 3)
        scale = 1.0 / math.sqrt(float(cfg["c_in"] * cfg["k"]))
        if cfg["linear"]:
            wshape = (cfg["c_out"], cfg["c_in"] * cfg["k"])
        elif cfg["kind"] == "conv":
            wshape = (cfg["c_out"], cfg["c_in"], cfg["k"])
        else:
            wshape = (cfg["c_in"], cfg["c_out"], cfg["k"])
        layer = dict(
            w=jax.random.uniform(kw, wshape, jnp.float32, -scale, scale),
            b=jax.random.uniform(kb, (cfg["c_out"],), jnp.float32, -scale, scale),
        )
        if cfg["has_bn"]:
            layer["gamma"] = jnp.ones((cfg["c_out"],), jnp.float32)
            layer["beta"] = jnp.zeros((cfg["c_out"],), jnp.float32)
        layers.append(layer)
    return layers


# ---------------------------------------------------------------------------
# Host-side packing: a handful of flat slabs + static per-layer metadata
# ---------------------------------------------------------------------------
def pack_operands(plan, layers, batch):
    """Per layer the weight is stored wide: W = [W_tap0 | W_tap1 | ...] of shape
    (C_in_pad, n_taps*C_out_pad) in bf16, grouped by width into a few slabs.  Every
    non-identity tap gets a precomputed block-diagonal 0/1 matrix kron(I_B, Sel)
    (row-padded to 8, lane-padded) stored in one bf16 slab.  The f32 aux slab holds
    [gamma; beta] for BN layers and [bias] otherwise (conv bias cancels under BN)."""
    sel_w = _round_up(batch * max(cfg["l_in"] for cfg in plan), LANE)
    aux_w = max(cfg["c_out_pad"] for cfg in plan)

    w_slabs, w_rows = {}, {}
    sel_blocks, sel_rows = [], 0
    aux_list = []
    meta = []

    for cfg, p in zip(plan, layers):
        k, stride, pad = cfg["k"], cfg["stride"], cfg["pad"]
        l_in, l_out = cfg["l_in"], cfg["l_out"]
        cin, cout = cfg["c_in"], cfg["c_out"]
        cinp, coutp = cfg["c_in_pad"], cfg["c_out_pad"]
        transposed = cfg["kind"] == "convt"
        n_in, n_out = batch * l_in, batch * l_out
        assert n_in <= sel_w

        # --- taps: identity (no Sel) or a precomputed block-diagonal selection matrix
        taps = []
        for j in range(k):
            off = j - pad
            if stride == 1 and off == 0 and l_in == l_out:
                taps.append(("identity", 0, j))
                continue
            sel = np.zeros((l_out, l_in), np.float32)
            if transposed:
                for t in range(l_in):
                    d = stride * t + off
                    if 0 <= d < l_out:
                        sel[d, t] = 1.0
            else:
                for r in range(l_out):
                    s = stride * r + off
                    if 0 <= s < l_in:
                        sel[r, s] = 1.0
            if sel.sum() == 0.0:          # tap only touches zero padding: drop it entirely
                continue
            selb = np.kron(np.eye(batch, dtype=np.float32), sel)      # (n_out, n_in)
            selb = np.pad(selb, ((0, (-n_out) % 8), (0, sel_w - n_in)))
            taps.append(("sel", sel_rows, j))
            sel_blocks.append(selb)
            sel_rows += selb.shape[0]

        # --- weights: wide tap-concatenated matrix (C_in_pad, n_taps * C_out_pad)
        w = np.asarray(p["w"], np.float32)
        if cfg["linear"]:
            w = w.reshape(cout, cin, k)            # flat index = c*K + tap (Flatten order)
        if cfg["kind"] == "conv":
            wt = np.transpose(w, (2, 1, 0))        # (K, C_in, C_out)
        else:                                      # ConvTranspose1d weight is (C_in,C_out,K)
            wt = np.transpose(w, (2, 0, 1))        # (K, C_in, C_out)
        wt = np.pad(wt, ((0, 0), (0, cinp - cin), (0, coutp - cout)))
        wt = wt[[tp[2] for tp in taps]]            # keep active taps only
        w_wide = np.transpose(wt, (1, 0, 2)).reshape(cinp, len(taps) * coutp)
        width = w_wide.shape[1]
        w_off = w_rows.get(width, 0)
        w_slabs.setdefault(width, []).append(w_wide)
        w_rows[width] = w_off + cinp

        # --- aux rows: gamma/beta for BN layers, bias otherwise
        aux_off = len(aux_list)
        if cfg["has_bn"]:
            aux_list.append(np.pad(np.asarray(p["gamma"], np.float32), (0, aux_w - cout)))
            aux_list.append(np.pad(np.asarray(p["beta"], np.float32), (0, aux_w - cout)))
        else:
            aux_list.append(np.pad(np.asarray(p["b"], np.float32), (0, aux_w - cout)))

        meta.append(dict(
            taps=[(mode, soff) for (mode, soff, _j) in taps],
            w_width=width, w_off=w_off, aux_off=aux_off,
            cinp=cinp, coutp=coutp, n_in=n_in, n_out=n_out,
            has_bn=cfg["has_bn"], act=cfg["act"], emit=cfg["emit"],
        ))

    widths = sorted(w_slabs)
    for m in meta:
        m["w_slab"] = widths.index(m["w_width"])
    w_arrays = [jnp.asarray(np.concatenate(w_slabs[w], axis=0), jnp.bfloat16)
                for w in widths]
    sel_array = jnp.asarray(np.concatenate(sel_blocks, axis=0), jnp.bfloat16)
    aux_array = jnp.asarray(np.stack(aux_list, axis=0), jnp.float32)
    return w_arrays, sel_array, aux_array, meta


# ---------------------------------------------------------------------------
# The single fused Pallas kernel
# ---------------------------------------------------------------------------
def _make_kernel(meta, n_w_slabs):
    def kernel(x_ref, *refs):
        w_refs = refs[:n_w_slabs]
        sel_ref = refs[n_w_slabs]
        aux_ref = refs[n_w_slabs + 1]
        emb_ref = refs[n_w_slabs + 2]
        rec_ref = refs[n_w_slabs + 3]

        ab = x_ref[...]                                    # (B*L0, 128) bf16, batch-stacked
        for m in meta:
            cinp, coutp = m["cinp"], m["coutp"]
            n_in, n_out = m["n_in"], m["n_out"]

            # One wide MXU matmul against all taps' weights at once.
            w = w_refs[m["w_slab"]][m["w_off"]:m["w_off"] + cinp, :]
            t = jnp.dot(ab, w, preferred_element_type=jnp.float32)   # (n_in, n_taps*coutp)

            # Per-tap shift/stride via precomputed block-diagonal 0/1 matrices (MXU).
            if any(mode == "sel" for mode, _ in m["taps"]):
                tb = t.astype(jnp.bfloat16)
            acc = None
            for a, (mode, soff) in enumerate(m["taps"]):
                if mode == "identity":
                    part = t[:, a * coutp:(a + 1) * coutp]
                else:
                    sel = sel_ref[soff:soff + n_out, 0:n_in]
                    part = jnp.dot(sel, tb[:, a * coutp:(a + 1) * coutp],
                                   preferred_element_type=jnp.float32)
                acc = part if acc is None else acc + part            # (n_out, coutp) f32

            if m["has_bn"]:
                # Training-mode BatchNorm1d over the B*L rows, single pass, f32 stats.
                # Conv bias is omitted: it is cancelled exactly by the mean subtraction.
                inv_n = 1.0 / float(n_out)
                mean = jnp.sum(acc, axis=0, keepdims=True) * inv_n
                ex2 = jnp.sum(acc * acc, axis=0, keepdims=True) * inv_n
                var = jnp.maximum(ex2 - mean * mean, 0.0)            # biased, like PyTorch
                gamma = aux_ref[m["aux_off"]:m["aux_off"] + 1, 0:coutp]
                beta = aux_ref[m["aux_off"] + 1:m["aux_off"] + 2, 0:coutp]
                scale = lax.rsqrt(var + 1e-5) * gamma
                acc = acc * scale + (beta - mean * scale)
            else:
                acc = acc + aux_ref[m["aux_off"]:m["aux_off"] + 1, 0:coutp]

            if m["act"] == "leaky":
                acc = jnp.where(acc >= 0.0, acc, 0.01 * acc)
            elif m["act"] == "sigmoid":
                acc = jax.nn.sigmoid(acc)

            if m["emit"] == "embedding":
                emb_ref[...] = acc                          # (B, 128) f32, lane-dense
            elif m["emit"] == "recovered":
                rec_ref[...] = acc                          # (B*L, 128) f32, lane-dense

            ab = acc.astype(jnp.bfloat16)                   # bf16 inter-layer activations
    return kernel


# ---------------------------------------------------------------------------
# Forward wrapper: layout plumbing only; all compute lives in the kernel.
# ---------------------------------------------------------------------------
def make_forward(plan, layers, batch, latent_size):
    w_arrays, sel_array, aux_array, meta = pack_operands(plan, layers, batch)
    n_w = len(w_arrays)

    l0, c0, c0p = plan[0]["l_in"], plan[0]["c_in"], plan[0]["c_in_pad"]
    rec_len, rec_c = plan[-1]["l_out"], plan[-1]["c_out"]
    rec_cp = plan[-1]["c_out_pad"]
    emb_pad = next(m["coutp"] for m in meta if m["emit"] == "embedding")

    vmem = pl.BlockSpec(memory_space=pltpu.MemorySpace.VMEM)
    call = pl.pallas_call(
        _make_kernel(meta, n_w),
        out_shape=(
            jax.ShapeDtypeStruct((batch, emb_pad), jnp.float32),
            jax.ShapeDtypeStruct((batch * rec_len, rec_cp), jnp.float32),
        ),
        in_specs=[vmem] * (1 + n_w + 2),
        out_specs=(vmem, vmem),
        compiler_params=pltpu.CompilerParams(vmem_limit_bytes=32 * 1024 * 1024),
    )
    operands = list(w_arrays) + [sel_array, aux_array]

    def forward(x):
        # NCL -> batch-stacked (B*L, C_pad) bf16 rows (layout plumbing only).
        xt = jnp.transpose(x, (0, 2, 1)).reshape(batch * l0, c0)
        xt = jnp.pad(xt, ((0, 0), (0, c0p - c0))).astype(jnp.bfloat16)
        emb, rec = call(xt, *operands)
        embedding = emb[:, :latent_size]
        recovered = jnp.transpose(rec[:, :rec_c].reshape(batch, rec_len, rec_c), (0, 2, 1))
        return recovered, embedding

    return forward


if __name__ == "__main__":
    latent_size = 32
    batch, in_channels, in_len = 2, 7, 64   # length 64 required by Flatten -> Linear(512*2)

    plan = build_plan(latent_size, in_channels, in_len)

    key = jax.random.PRNGKey(0)
    pkey, xkey = jax.random.split(key)
    layers = init_params(pkey, plan)

    forward = jax.jit(make_forward(plan, layers, batch, latent_size))

    x = jax.random.normal(xkey, (batch, in_channels, in_len), jnp.float32)
    recovered, embedding = forward(x)
    jax.block_until_ready((recovered, embedding))

    assert recovered.shape == (batch, 7, 60), recovered.shape
    assert embedding.shape == (batch, latent_size), embedding.shape
    assert bool(jnp.all(jnp.isfinite(recovered)))
    assert bool(jnp.all(jnp.isfinite(embedding)))
    assert bool(jnp.all((recovered > 0.0) & (recovered < 1.0)))   # Sigmoid output range
    print("KERNEL_OK")
</pallas_src>

<mosaic_0001>
module attributes {stable_mosaic.version = 11 : i64} {
  func.func @kernel(%arg0: memref<128x128xbf16, #tpu.memory_space<vmem>>, %arg1: memref<512x256xbf16, #tpu.memory_space<vmem>>, %arg2: memref<1280x384xbf16, #tpu.memory_space<vmem>>, %arg3: memref<896x512xbf16, #tpu.memory_space<vmem>>, %arg4: memref<128x640xbf16, #tpu.memory_space<vmem>>, %arg5: memref<128x768xbf16, #tpu.memory_space<vmem>>, %arg6: memref<1760x128xbf16, #tpu.memory_space<vmem>>, %arg7: memref<27x512xf32, #tpu.memory_space<vmem>>, %arg8: memref<2x128xf32, #tpu.memory_space<vmem>>, %arg9: memref<120x128xf32, #tpu.memory_space<vmem>>) attributes {dimension_semantics = [], scalar_prefetch = 0 : i64, scratch_operands = 0 : i64, tpu.core_type = #tpu.core_type<tc>} {
    %c0 = arith.constant 0 : index
    %c0_0 = arith.constant 0 : index
    %0 = vector.load %arg0[%c0, %c0_0] : memref<128x128xbf16, #tpu.memory_space<vmem>>, vector<128x128xbf16>
    %c0_1 = arith.constant 0 : index
    %c0_2 = arith.constant 0 : index
    %1 = vector.load %arg2[%c0_1, %c0_2] : memref<1280x384xbf16, #tpu.memory_space<vmem>>, vector<128x384xbf16>
    %cst = arith.constant dense<0.000000e+00> : vector<128x384xf32>
    %2 = tpu.matmul %0, %1, %cst {dimension_numbers = #tpu.dot_dimension_numbers<[1], [0], [0], [1], [0, 0, 1, 1], [], []>} : vector<128x128xbf16>, vector<128x384xbf16>, vector<128x384xf32> -> vector<128x384xf32>
    %3 = arith.truncf %2 : vector<128x384xf32> to vector<128x384xbf16>
    %c0_3 = arith.constant 0 : index
    %c0_4 = arith.constant 0 : index
    %4 = vector.load %arg6[%c0_3, %c0_4] : memref<1760x128xbf16, #tpu.memory_space<vmem>>, vector<64x128xbf16>
    %5 = vector.extract_strided_slice %3 {offsets = [0, 0], sizes = [128, 128], strides = [1, 1]} : vector<128x384xbf16> to vector<128x128xbf16>
    %cst_5 = arith.constant dense<0.000000e+00> : vector<64x128xf32>
    %6 = tpu.matmul %4, %5, %cst_5 {dimension_numbers = #tpu.dot_dimension_numbers<[1], [0], [0], [1], [0, 0, 1, 1], [], []>} : vector<64x128xbf16>, vector<128x128xbf16>, vector<64x128xf32> -> vector<64x128xf32>
    %c64 = arith.constant 64 : index
    %c0_6 = arith.constant 0 : index
    %7 = vector.load %arg6[%c64, %c0_6] : memref<1760x128xbf16, #tpu.memory_space<vmem>>, vector<64x128xbf16>
    %8 = vector.extract_strided_slice %3 {offsets = [0, 128], sizes = [128, 128], strides = [1, 1]} : vector<128x384xbf16> to vector<128x128xbf16>
    %cst_7 = arith.constant dense<0.000000e+00> : vector<64x128xf32>
    %9 = tpu.matmul %7, %8, %cst_7 {dimension_numbers = #tpu.dot_dimension_numbers<[1], [0], [0], [1], [0, 0, 1, 1], [], []>} : vector<64x128xbf16>, vector<128x128xbf16>, vector<64x128xf32> -> vector<64x128xf32>
    %10 = arith.addf %6, %9 : vector<64x128xf32>
    %c128 = arith.constant 128 : index
    %c0_8 = arith.constant 0 : index
    %11 = vector.load %arg6[%c128, %c0_8] : memref<1760x128xbf16, #tpu.memory_space<vmem>>, vector<64x128xbf16>
    %12 = vector.extract_strided_slice %3 {offsets = [0, 256], sizes = [128, 128], strides = [1, 1]} : vector<128x384xbf16> to vector<128x128xbf16>
    %cst_9 = arith.constant dense<0.000000e+00> : vector<64x128xf32>
    %13 = tpu.matmul %11, %12, %cst_9 {dimension_numbers = #tpu.dot_dimension_numbers<[1], [0], [0], [1], [0, 0, 1, 1], [], []>} : vector<64x128xbf16>, vector<128x128xbf16>, vector<64x128xf32> -> vector<64x128xf32>
    %14 = arith.addf %10, %13 : vector<64x128xf32>
    %cst_10 = arith.constant dense<0.000000e+00> : vector<128xf32>
    %15 = vector.multi_reduction <add>, %14, %cst_10 [0] : vector<64x128xf32> to vector<128xf32>
    %16 = vector.shape_cast %15 : vector<128xf32> to vector<1x128xf32>
    %cst_11 = arith.constant 1.562500e-02 : f32
    %17 = vector.broadcast %cst_11 : f32 to vector<1x128xf32>
    %18 = arith.mulf %16, %17 : vector<1x128xf32>
    %19 = arith.mulf %14, %14 : vector<64x128xf32>
    %cst_12 = arith.constant dense<0.000000e+00> : vector<128xf32>
    %20 = vector.multi_reduction <add>, %19, %cst_12 [0] : vector<64x128xf32> to vector<128xf32>
    %21 = vector.shape_cast %20 : vector<128xf32> to vector<1x128xf32>
    %cst_13 = arith.constant 1.562500e-02 : f32
    %22 = vector.broadcast %cst_13 : f32 to vector<1x128xf32>
    %23 = arith.mulf %21, %22 : vector<1x128xf32>
    %24 = arith.mulf %18, %18 : vector<1x128xf32>
    %25 = arith.subf %23, %24 : vector<1x128xf32>
    %cst_14 = arith.constant 0.000000e+00 : f32
    %26 = vector.broadcast %cst_14 : f32 to vector<1x128xf32>
    %27 = arith.maximumf %25, %26 : vector<1x128xf32>
    %c0_15 = arith.constant 0 : index
    %c0_16 = arith.constant 0 : index
    %28 = vector.load %arg7[%c0_15, %c0_16] : memref<27x512xf32, #tpu.memory_space<vmem>>, vector<1x128xf32>
    %c1 = arith.constant 1 : index
    %c0_17 = arith.constant 0 : index
    %29 = vector.load %arg7[%c1, %c0_17] : memref<27x512xf32, #tpu.memory_space<vmem>>, vector<1x128xf32>
    %cst_18 = arith.constant 9.99999974E-6 : f32
    %30 = vector.broadcast %cst_18 : f32 to vector<1x128xf32>
    %31 = arith.addf %27, %30 : vector<1x128xf32>
    %32 = math.rsqrt %31 : vector<1x128xf32>
    %33 = arith.mulf %32, %28 : vector<1x128xf32>
    %34 = vector.broadcast %33 : vector<1x128xf32> to vector<64x128xf32>
    %35 = arith.mulf %14, %34 : vector<64x128xf32>
    %36 = arith.mulf %18, %33 : vector<1x128xf32>
    %37 = arith.subf %29, %36 : vector<1x128xf32>
    %38 = vector.broadcast %37 : vector<1x128xf32> to vector<64x128xf32>
    %39 = arith.addf %35, %38 : vector<64x128xf32>
    %cst_19 = arith.constant 0.000000e+00 : f32
    %40 = vector.broadcast %cst_19 : f32 to vector<64x128xf32>
    %41 = arith.cmpf oge, %39, %40 : vector<64x128xf32>
    %cst_20 = arith.constant 0.00999999977 : f32
    %42 = vector.broadcast %cst_20 : f32 to vector<64x128xf32>
    %43 = arith.mulf %42, %39 : vector<64x128xf32>
    %44 = arith.select %41, %39, %43 : vector<64x128xi1>, vector<64x128xf32>
    %45 = arith.truncf %44 : vector<64x128xf32> to vector<64x128xbf16>
    %c128_21 = arith.constant 128 : index
    %c0_22 = arith.constant 0 : index
    %46 = vector.load %arg2[%c128_21, %c0_22] : memref<1280x384xbf16, #tpu.memory_space<vmem>>, vector<128x384xbf16>
    %cst_23 = arith.constant dense<0.000000e+00> : vector<64x384xf32>
    %47 = tpu.matmul %45, %46, %cst_23 {dimension_numbers = #tpu.dot_dimension_numbers<[1], [0], [0], [1], [0, 0, 1, 1], [], []>} : vector<64x128xbf16>, vector<128x384xbf16>, vector<64x384xf32> -> vector<64x384xf32>
    %48 = arith.truncf %47 : vector<64x384xf32> to vector<64x384xbf16>
    %c192 = arith.constant 192 : index
    %c0_24 = arith.constant 0 : index
    %49 = vector.load %arg6[%c192, %c0_24] : memref<1760x128xbf16, #tpu.memory_space<vmem>>, vector<32x64xbf16>
    %50 = vector.extract_strided_slice %48 {offsets = [0, 0], sizes = [64, 128], strides = [1, 1]} : vector<64x384xbf16> to vector<64x128xbf16>
    %cst_25 = arith.constant dense<0.000000e+00> : vector<32x128xf32>
    %51 = tpu.matmul %49, %50, %cst_25 {dimension_numbers = #tpu.dot_dimension_numbers<[1], [0], [0], [1], [0, 0, 1, 1], [], []>} : vector<32x64xbf16>, vector<64x128xbf16>, vector<32x128xf32> -> vector<32x128xf32>
    %c224 = arith.constant 224 : index
    %c0_26 = arith.constant 0 : index
    %52 = vector.load %arg6[%c224, %c0_26] : memref<1760x128xbf16, #tpu.memory_space<vmem>>, vector<32x64xbf16>
    %53 = vector.extract_strided_slice %48 {offsets = [0, 128], sizes = [64, 128], strides = [1, 1]} : vector<64x384xbf16> to vector<64x128xbf16>
    %cst_27 = arith.constant dense<0.000000e+00> : vector<32x128xf32>
    %54 = tpu.matmul %52, %53, %cst_27 {dimension_numbers = #tpu.dot_dimension_numbers<[1], [0], [0], [1], [0, 0, 1, 1], [], []>} : vector<32x64xbf16>, vector<64x128xbf16>, vector<32x128xf32> -> vector<32x128xf32>
    %55 = arith.addf %51, %54 : vector<32x128xf32>
    %c256 = arith.constant 256 : index
    %c0_28 = arith.constant 0 : index
    %56 = vector.load %arg6[%c256, %c0_28] : memref<1760x128xbf16, #tpu.memory_space<vmem>>, vector<32x64xbf16>
    %57 = vector.extract_strided_slice %48 {offsets = [0, 256], sizes = [64, 128], strides = [1, 1]} : vector<64x384xbf16> to vector<64x128xbf16>
    %cst_29 = arith.constant dense<0.000000e+00> : vector<32x128xf32>
    %58 = tpu.matmul %56, %57, %cst_29 {dimension_numbers = #tpu.dot_dimension_numbers<[1], [0], [0], [1], [0, 0, 1, 1], [], []>} : vector<32x64xbf16>, vector<64x128xbf16>, vector<32x128xf32> -> vector<32x128xf32>
    %59 = arith.addf %55, %58 : vector<32x128xf32>
    %cst_30 = arith.constant dense<0.000000e+00> : vector<128xf32>
    %60 = vector.multi_reduction <add>, %59, %cst_30 [0] : vector<32x128xf32> to vector<128xf32>
    %61 = vector.shape_cast %60 : vector<128xf32> to vector<1x128xf32>
    %cst_31 = arith.constant 3.125000e-02 : f32
    %62 = vector.broadcast %cst_31 : f32 to vector<1x128xf32>
    %63 = arith.mulf %61, %62 : vector<1x128xf32>
    %64 = arith.mulf %59, %59 : vector<32x128xf32>
    %cst_32 = arith.constant dense<0.000000e+00> : vector<128xf32>
    %65 = vector.multi_reduction <add>, %64, %cst_32 [0] : vector<32x128xf32> to vector<128xf32>
    %66 = vector.shape_cast %65 : vector<128xf32> to vector<1x128xf32>
    %cst_33 = arith.constant 3.125000e-02 : f32
    %67 = vector.broadcast %cst_33 : f32 to vector<1x128xf32>
    %68 = arith.mulf %66, %67 : vector<1x128xf32>
    %69 = arith.mulf %63, %63 : vector<1x128xf32>
    %70 = arith.subf %68, %69 : vector<1x128xf32>
    %cst_34 = arith.constant 0.000000e+00 : f32
    %71 = vector.broadcast %cst_34 : f32 to vector<1x128xf32>
    %72 = arith.maximumf %70, %71 : vector<1x128xf32>
    %c2 = arith.constant 2 : index
    %c0_35 = arith.constant 0 : index
    %73 = vector.load %arg7[%c2, %c0_35] : memref<27x512xf32, #tpu.memory_space<vmem>>, vector<1x128xf32>
    %c3 = arith.constant 3 : index
    %c0_36 = arith.constant 0 : index
    %74 = vector.load %arg7[%c3, %c0_36] : memref<27x512xf32, #tpu.memory_space<vmem>>, vector<1x128xf32>
    %cst_37 = arith.constant 9.99999974E-6 : f32
    %75 = vector.broadcast %cst_37 : f32 to vector<1x128xf32>
    %76 = arith.addf %72, %75 : vector<1x128xf32>
    %77 = math.rsqrt %76 : vector<1x128xf32>
    %78 = arith.mulf %77, %73 : vector<1x128xf32>
    %79 = vector.broadcast %78 : vector<1x128xf32> to vector<32x128xf32>
    %80 = arith.mulf %59, %79 : vector<32x128xf32>
    %81 = arith.mulf %63, %78 : vector<1x128xf32>
    %82 = arith.subf %74, %81 : vector<1x128xf32>
    %83 = vector.broadcast %82 : vector<1x128xf32> to vector<32x128xf32>
    %84 = arith.addf %80, %83 : vector<32x128xf32>
    %cst_38 = arith.constant 0.000000e+00 : f32
    %85 = vector.broadcast %cst_38 : f32 to vector<32x128xf32>
    %86 = arith.cmpf oge, %84, %85 : vector<32x128xf32>
    %cst_39 = arith.constant 0.00999999977 : f32
    %87 = vector.broadcast %cst_39 : f32 to vector<32x128xf32>
    %88 = arith.mulf %87, %84 : vector<32x128xf32>
    %89 = arith.select %86, %84, %88 : vector<32x128xi1>, vector<32x128xf32>
    %90 = arith.truncf %89 : vector<32x128xf32> to vector<32x128xbf16>
    %c256_40 = arith.constant 256 : index
    %c0_41 = arith.constant 0 : index
    %91 = vector.load %arg2[%c256_40, %c0_41] : memref<1280x384xbf16, #tpu.memory_space<vmem>>, vector<128x384xbf16>
    %cst_42 = arith.constant dense<0.000000e+00> : vector<32x384xf32>
    %92 = tpu.matmul %90, %91, %cst_42 {dimension_numbers = #tpu.dot_dimension_numbers<[1], [0], [0], [1], [0, 0, 1, 1], [], []>} : vector<32x128xbf16>, vector<128x384xbf16>, vector<32x384xf32> -> vector<32x384xf32>
    %93 = arith.truncf %92 : vector<32x384xf32> to vector<32x384xbf16>
    %c288 = arith.constant 288 : index
    %c0_43 = arith.constant 0 : index
    %94 = vector.load %arg6[%c288, %c0_43] : memref<1760x128xbf16, #tpu.memory_space<vmem>>, vector<16x32xbf16>
    %95 = vector.extract_strided_slice %93 {offsets = [0, 0], sizes = [32, 128], strides = [1, 1]} : vector<32x384xbf16> to vector<32x128xbf16>
    %cst_44 = arith.constant dense<0.000000e+00> : vector<16x128xf32>
    %96 = tpu.matmul %94, %95, %cst_44 {dimension_numbers = #tpu.dot_dimension_numbers<[1], [0], [0], [1], [0, 0, 1, 1], [], []>} : vector<16x32xbf16>, vector<32x128xbf16>, vector<16x128xf32> -> vector<16x128xf32>
    %c304 = arith.constant 304 : index
    %c0_45 = arith.constant 0 : index
    %97 = vector.load %arg6[%c304, %c0_45] : memref<1760x128xbf16, #tpu.memory_space<vmem>>, vector<16x32xbf16>
    %98 = vector.extract_strided_slice %93 {offsets = [0, 128], sizes = [32, 128], strides = [1, 1]} : vector<32x384xbf16> to vector<32x128xbf16>
    %cst_46 = arith.constant dense<0.000000e+00> : vector<16x128xf32>
    %99 = tpu.matmul %97, %98, %cst_46 {dimension_numbers = #tpu.dot_dimension_numbers<[1], [0], [0], [1], [0, 0, 1, 1], [], []>} : vector<16x32xbf16>, vector<32x128xbf16>, vector<16x128xf32> -> vector<16x128xf32>
    %100 = arith.addf %96, %99 : vector<16x128xf32>
    %c320 = arith.constant 320 : index
    %c0_47 = arith.constant 0 : index
    %101 = vector.load %arg6[%c320, %c0_47] : memref<1760x128xbf16, #tpu.memory_space<vmem>>, vector<16x32xbf16>
    %102 = vector.extract_strided_slice %93 {offsets = [0, 256], sizes = [32, 128], strides = [1, 1]} : vector<32x384xbf16> to vector<32x128xbf16>
    %cst_48 = arith.constant dense<0.000000e+00> : vector<16x128xf32>
    %103 = tpu.matmul %101, %102, %cst_48 {dimension_numbers = #tpu.dot_dimension_numbers<[1], [0], [0], [1], [0, 0, 1, 1], [], []>} : vector<16x32xbf16>, vector<32x128xbf16>, vector<16x128xf32> -> vector<16x128xf32>
    %104 = arith.addf %100, %103 : vector<16x128xf32>
    %cst_49 = arith.constant dense<0.000000e+00> : vector<128xf32>
    %105 = vector.multi_reduction <add>, %104, %cst_49 [0] : vector<16x128xf32> to vector<128xf32>
    %106 = vector.shape_cast %105 : vector<128xf32> to vector<1x128xf32>
    %cst_50 = arith.constant 6.250000e-02 : f32
    %107 = vector.broadcast %cst_50 : f32 to vector<1x128xf32>
    %108 = arith.mulf %106, %107 : vector<1x128xf32>
    %109 = arith.mulf %104, %104 : vector<16x128xf32>
    %cst_51 = arith.constant dense<0.000000e+00> : vector<128xf32>
    %110 = vector.multi_reduction <add>, %109, %cst_51 [0] : vector<16x128xf32> to vector<128xf32>
    %111 = vector.shape_cast %110 : vector<128xf32> to vector<1x128xf32>
    %cst_52 = arith.constant 6.250000e-02 : f32
    %112 = vector.broadcast %cst_52 : f32 to vector<1x128xf32>
    %113 = arith.mulf %111, %112 : vector<1x128xf32>
    %114 = arith.mulf %108, %108 : vector<1x128xf32>
    %115 = arith.subf %113, %114 : vector<1x128xf32>
    %cst_53 = arith.constant 0.000000e+00 : f32
    %116 = vector.broadcast %cst_53 : f32 to vector<1x128xf32>
    %117 = arith.maximumf %115, %116 : vector<1x128xf32>
    %c4 = arith.constant 4 : index
    %c0_54 = arith.constant 0 : index
    %118 = vector.load %arg7[%c4, %c0_54] : memref<27x512xf32, #tpu.memory_space<vmem>>, vector<1x128xf32>
    %c5 = arith.constant 5 : index
    %c0_55 = arith.constant 0 : index
    %119 = vector.load %arg7[%c5, %c0_55] : memref<27x512xf32, #tpu.memory_space<vmem>>, vector<1x128xf32>
    %cst_56 = arith.constant 9.99999974E-6 : f32
    %120 = vector.broadcast %cst_56 : f32 to vector<1x128xf32>
    %121 = arith.addf %117, %120 : vector<1x128xf32>
    %122 = math.rsqrt %121 : vector<1x128xf32>
    %123 = arith.mulf %122, %118 : vector<1x128xf32>
    %124 = vector.broadcast %123 : vector<1x128xf32> to vector<16x128xf32>
    %125 = arith.mulf %104, %124 : vector<16x128xf32>
    %126 = arith.mulf %108, %123 : vector<1x128xf32>
    %127 = arith.subf %119, %126 : vector<1x128xf32>
    %128 = vector.broadcast %127 : vector<1x128xf32> to vector<16x128xf32>
    %129 = arith.addf %125, %128 : vector<16x128xf32>
    %cst_57 = arith.constant 0.000000e+00 : f32
    %130 = vector.broadcast %cst_57 : f32 to vector<16x128xf32>
    %131 = arith.cmpf oge, %129, %130 : vector<16x128xf32>
    %cst_58 = arith.constant 0.00999999977 : f32
    %132 = vector.broadcast %cst_58 : f32 to vector<16x128xf32>
    %133 = arith.mulf %132, %129 : vector<16x128xf32>
    %134 = arith.select %131, %129, %133 : vector<16x128xi1>, vector<16x128xf32>
    %135 = arith.truncf %134 : vector<16x128xf32> to vector<16x128xbf16>
    %c384 = arith.constant 384 : index
    %c0_59 = arith.constant 0 : index
    %136 = vector.load %arg2[%c384, %c0_59] : memref<1280x384xbf16, #tpu.memory_space<vmem>>, vector<128x384xbf16>
    %cst_60 = arith.constant dense<0.000000e+00> : vector<16x384xf32>
    %137 = tpu.matmul %135, %136, %cst_60 {dimension_numbers = #tpu.dot_dimension_numbers<[1], [0], [0], [1], [0, 0, 1, 1], [], []>} : vector<16x128xbf16>, vector<128x384xbf16>, vector<16x384xf32> -> vector<16x384xf32>
    %138 = arith.truncf %137 : vector<16x384xf32> to vector<16x384xbf16>
    %c336 = arith.constant 336 : index
    %c0_61 = arith.constant 0 : index
    %139 = vector.load %arg6[%c336, %c0_61] : memref<1760x128xbf16, #tpu.memory_space<vmem>>, vector<8x16xbf16>
    %140 = vector.extract_strided_slice %138 {offsets = [0, 0], sizes = [16, 128], strides = [1, 1]} : vector<16x384xbf16> to vector<16x128xbf16>
    %cst_62 = arith.constant dense<0.000000e+00> : vector<8x128xf32>
    %141 = tpu.matmul %139, %140, %cst_62 {dimension_numbers = #tpu.dot_dimension_numbers<[1], [0], [0], [1], [0, 0, 1, 1], [], []>} : vector<8x16xbf16>, vector<16x128xbf16>, vector<8x128xf32> -> vector<8x128xf32>
    %c344 = arith.constant 344 : index
    %c0_63 = arith.constant 0 : index
    %142 = vector.load %arg6[%c344, %c0_63] : memref<1760x128xbf16, #tpu.memory_space<vmem>>, vector<8x16xbf16>
    %143 = vector.extract_strided_slice %138 {offsets = [0, 128], sizes = [16, 128], strides = [1, 1]} : vector<16x384xbf16> to vector<16x128xbf16>
    %cst_64 = arith.constant dense<0.000000e+00> : vector<8x128xf32>
    %144 = tpu.matmul %142, %143, %cst_64 {dimension_numbers = #tpu.dot_dimension_numbers<[1], [0], [0], [1], [0, 0, 1, 1], [], []>} : vector<8x16xbf16>, vector<16x128xbf16>, vector<8x128xf32> -> vector<8x128xf32>
    %145 = arith.addf %141, %144 : vector<8x128xf32>
    %c352 = arith.constant 352 : index
    %c0_65 = arith.constant 0 : index
    %146 = vector.load %arg6[%c352, %c0_65] : memref<1760x128xbf16, #tpu.memory_space<vmem>>, vector<8x16xbf16>
    %147 = vector.extract_strided_slice %138 {offsets = [0, 256], sizes = [16, 128], strides = [1, 1]} : vector<16x384xbf16> to vector<16x128xbf16>
    %cst_66 = arith.constant dense<0.000000e+00> : vector<8x128xf32>
    %148 = tpu.matmul %146, %147, %cst_66 {dimension_numbers = #tpu.dot_dimension_numbers<[1], [0], [0], [1], [0, 0, 1, 1], [], []>} : vector<8x16xbf16>, vector<16x128xbf16>, vector<8x128xf32> -> vector<8x128xf32>
    %149 = arith.addf %145, %148 : vector<8x128xf32>
    %cst_67 = arith.constant dense<0.000000e+00> : vector<128xf32>
    %150 = vector.multi_reduction <add>, %149, %cst_67 [0] : vector<8x128xf32> to vector<128xf32>
    %151 = vector.shape_cast %150 : vector<128xf32> to vector<1x128xf32>
    %cst_68 = arith.constant 1.250000e-01 : f32
    %152 = vector.broadcast %cst_68 : f32 to vector<1x128xf32>
    %153 = arith.mulf %151, %152 : vector<1x128xf32>
    %154 = arith.mulf %149, %149 : vector<8x128xf32>
    %cst_69 = arith.constant dense<0.000000e+00> : vector<128xf32>
    %155 = vector.multi_reduction <add>, %154, %cst_69 [0] : vector<8x128xf32> to vector<128xf32>
    %156 = vector.shape_cast %155 : vector<128xf32> to vector<1x128xf32>
    %cst_70 = arith.constant 1.250000e-01 : f32
    %157 = vector.broadcast %cst_70 : f32 to vector<1x128xf32>
    %158 = arith.mulf %156, %157 : vector<1x128xf32>
    %159 = arith.mulf %153, %153 : vector<1x128xf32>
    %160 = arith.subf %158, %159 : vector<1x128xf32>
    %cst_71 = arith.constant 0.000000e+00 : f32
    %161 = vector.broadcast %cst_71 : f32 to vector<1x128xf32>
    %162 = arith.maximumf %160, %161 : vector<1x128xf32>
    %c6 = arith.constant 6 : index
    %c0_72 = arith.constant 0 : index
    %163 = vector.load %arg7[%c6, %c0_72] : memref<27x512xf32, #tpu.memory_space<vmem>>, vector<1x128xf32>
    %c7 = arith.constant 7 : index
    %c0_73 = arith.constant 0 : index
    %164 = vector.load %arg7[%c7, %c0_73] : memref<27x512xf32, #tpu.memory_space<vmem>>, vector<1x128xf32>
    %cst_74 = arith.constant 9.99999974E-6 : f32
    %165 = vector.broadcast %cst_74 : f32 to vector<1x128xf32>
    %166 = arith.addf %162, %165 : vector<1x128xf32>
    %167 = math.rsqrt %166 : vector<1x128xf32>
    %168 = arith.mulf %167, %163 : vector<1x128xf32>
    %169 = vector.broadcast %168 : vector<1x128xf32> to vector<8x128xf32>
    %170 = arith.mulf %149, %169 : vector<8x128xf32>
    %171 = arith.mulf %153, %168 : vector<1x128xf32>
    %172 = arith.subf %164, %171 : vector<1x128xf32>
    %173 = vector.broadcast %172 : vector<1x128xf32> to vector<8x128xf32>
    %174 = arith.addf %170, %173 : vector<8x128xf32>
    %cst_75 = arith.constant 0.000000e+00 : f32
    %175 = vector.broadcast %cst_75 : f32 to vector<8x128xf32>
    %176 = arith.cmpf oge, %174, %175 : vector<8x128xf32>
    %cst_76 = arith.constant 0.00999999977 : f32
    %177 = vector.broadcast %cst_76 : f32 to vector<8x128xf32>
    %178 = arith.mulf %177, %174 : vector<8x128xf32>
    %179 = arith.select %176, %174, %178 : vector<8x128xi1>, vector<8x128xf32>
    %180 = arith.truncf %179 : vector<8x128xf32> to vector<8x128xbf16>
    %c0_77 = arith.constant 0 : index
    %c0_78 = arith.constant 0 : index
    %181 = vector.load %arg5[%c0_77, %c0_78] : memref<128x768xbf16, #tpu.memory_space<vmem>>, vector<128x768xbf16>
    %cst_79 = arith.constant dense<0.000000e+00> : vector<8x768xf32>
    %182 = tpu.matmul %180, %181, %cst_79 {dimension_numbers = #tpu.dot_dimension_numbers<[1], [0], [0], [1], [0, 0, 1, 1], [], []>} : vector<8x128xbf16>, vector<128x768xbf16>, vector<8x768xf32> -> vector<8x768xf32>
    %183 = arith.truncf %182 : vector<8x768xf32> to vector<8x768xbf16>
    %c360 = arith.constant 360 : index
    %c0_80 = arith.constant 0 : index
    %184 = vector.load %arg6[%c360, %c0_80] : memref<1760x128xbf16, #tpu.memory_space<vmem>>, vector<4x8xbf16>
    %185 = vector.extract_strided_slice %183 {offsets = [0, 0], sizes = [8, 256], strides = [1, 1]} : vector<8x768xbf16> to vector<8x256xbf16>
    %cst_81 = arith.constant dense<0.000000e+00> : vector<4x256xf32>
    %186 = tpu.matmul %184, %185, %cst_81 {dimension_numbers = #tpu.dot_dimension_numbers<[1], [0], [0], [1], [0, 0, 1, 1], [], []>} : vector<4x8xbf16>, vector<8x256xbf16>, vector<4x256xf32> -> vector<4x256xf32>
    %c368 = arith.constant 368 : index
    %c0_82 = arith.constant 0 : index
    %187 = vector.load %arg6[%c368, %c0_82] : memref<1760x128xbf16, #tpu.memory_space<vmem>>, vector<4x8xbf16>
    %188 = vector.extract_strided_slice %183 {offsets = [0, 256], sizes = [8, 256], strides = [1, 1]} : vector<8x768xbf16> to vector<8x256xbf16>
    %cst_83 = arith.constant dense<0.000000e+00> : vector<4x256xf32>
    %189 = tpu.matmul %187, %188, %cst_83 {dimension_numbers = #tpu.dot_dimension_numbers<[1], [0], [0], [1], [0, 0, 1, 1], [], []>} : vector<4x8xbf16>, vector<8x256xbf16>, vector<4x256xf32> -> vector<4x256xf32>
    %190 = arith.addf %186, %189 : vector<4x256xf32>
    %c376 = arith.constant 376 : index
    %c0_84 = arith.constant 0 : index
    %191 = vector.load %arg6[%c376, %c0_84] : memref<1760x128xbf16, #tpu.memory_space<vmem>>, vector<4x8xbf16>
    %192 = vector.extract_strided_slice %183 {offsets = [0, 512], sizes = [8, 256], strides = [1, 1]} : vector<8x768xbf16> to vector<8x256xbf16>
    %cst_85 = arith.constant dense<0.000000e+00> : vector<4x256xf32>
    %193 = tpu.matmul %191, %192, %cst_85 {dimension_numbers = #tpu.dot_dimension_numbers<[1], [0], [0], [1], [0, 0, 1, 1], [], []>} : vector<4x8xbf16>, vector<8x256xbf16>, vector<4x256xf32> -> vector<4x256xf32>
    %194 = arith.addf %190, %193 : vector<4x256xf32>
    %cst_86 = arith.constant dense<0.000000e+00> : vector<256xf32>
    %195 = vector.multi_reduction <add>, %194, %cst_86 [0] : vector<4x256xf32> to vector<256xf32>
    %196 = vector.shape_cast %195 : vector<256xf32> to vector<1x256xf32>
    %cst_87 = arith.constant 2.500000e-01 : f32
    %197 = vector.broadcast %cst_87 : f32 to vector<1x256xf32>
    %198 = arith.mulf %196, %197 : vector<1x256xf32>
    %199 = arith.mulf %194, %194 : vector<4x256xf32>
    %cst_88 = arith.constant dense<0.000000e+00> : vector<256xf32>
    %200 = vector.multi_reduction <add>, %199, %cst_88 [0] : vector<4x256xf32> to vector<256xf32>
    %201 = vector.shape_cast %200 : vector<256xf32> to vector<1x256xf32>
    %cst_89 = arith.constant 2.500000e-01 : f32
    %202 = vector.broadcast %cst_89 : f32 to vector<1x256xf32>
    %203 = arith.mulf %201, %202 : vector<1x256xf32>
    %204 = arith.mulf %198, %198 : vector<1x256xf32>
    %205 = arith.subf %203, %204 : vector<1x256xf32>
    %cst_90 = arith.constant 0.000000e+00 : f32
    %206 = vector.broadcast %cst_90 : f32 to vector<1x256xf32>
    %207 = arith.maximumf %205, %206 : vector<1x256xf32>
    %c8 = arith.constant 8 : index
    %c0_91 = arith.constant 0 : index
    %208 = vector.load %arg7[%c8, %c0_91] : memref<27x512xf32, #tpu.memory_space<vmem>>, vector<1x256xf32>
    %c9 = arith.constant 9 : index
    %c0_92 = arith.constant 0 : index
    %209 = vector.load %arg7[%c9, %c0_92] : memref<27x512xf32, #tpu.memory_space<vmem>>, vector<1x256xf32>
    %cst_93 = arith.constant 9.99999974E-6 : f32
    %210 = vector.broadcast %cst_93 : f32 to vector<1x256xf32>
    %211 = arith.addf %207, %210 : vector<1x256xf32>
    %212 = math.rsqrt %211 : vector<1x256xf32>
    %213 = arith.mulf %212, %208 : vector<1x256xf32>
    %214 = vector.broadcast %213 : vector<1x256xf32> to vector<4x256xf32>
    %215 = arith.mulf %194, %214 : vector<4x256xf32>
    %216 = arith.mulf %198, %213 : vector<1x256xf32>
    %217 = arith.subf %209, %216 : vector<1x256xf32>
    %218 = vector.broadcast %217 : vector<1x256xf32> to vector<4x256xf32>
    %219 = arith.addf %215, %218 : vector<4x256xf32>
    %cst_94 = arith.constant 0.000000e+00 : f32
    %220 = vector.broadcast %cst_94 : f32 to vector<4x256xf32>
    %221 = arith.cmpf oge, %219, %220 : vector<4x256xf32>
    %cst_95 = arith.constant 0.00999999977 : f32
    %222 = vector.broadcast %cst_95 : f32 to vector<4x256xf32>
    %223 = arith.mulf %222, %219 : vector<4x256xf32>
    %224 = arith.select %221, %219, %223 : vector<4x256xi1>, vector<4x256xf32>
    %225 = arith.truncf %224 : vector<4x256xf32> to vector<4x256xbf16>
    %c0_96 = arith.constant 0 : index
    %c0_97 = arith.constant 0 : index
    %226 = vector.load %arg3[%c0_96, %c0_97] : memref<896x512xbf16, #tpu.memory_space<vmem>>, vector<256x512xbf16>
    %cst_98 = arith.constant dense<0.000000e+00> : vector<4x512xf32>
    %227 = tpu.matmul %225, %226, %cst_98 {dimension_numbers = #tpu.dot_dimension_numbers<[1], [0], [0], [1], [0, 0, 1, 1], [], []>} : vector<4x256xbf16>, vector<256x512xbf16>, vector<4x512xf32> -> vector<4x512xf32>
    %cst_99 = arith.constant dense<0.000000e+00> : vector<512xf32>
    %228 = vector.multi_reduction <add>, %227, %cst_99 [0] : vector<4x512xf32> to vector<512xf32>
    %229 = vector.shape_cast %228 : vector<512xf32> to vector<1x512xf32>
    %cst_100 = arith.constant 2.500000e-01 : f32
    %230 = vector.broadcast %cst_100 : f32 to vector<1x512xf32>
    %231 = arith.mulf %229, %230 : vector<1x512xf32>
    %232 = arith.mulf %227, %227 : vector<4x512xf32>
    %cst_101 = arith.constant dense<0.000000e+00> : vector<512xf32>
    %233 = vector.multi_reduction <add>, %232, %cst_101 [0] : vector<4x512xf32> to vector<512xf32>
    %234 = vector.shape_cast %233 : vector<512xf32> to vector<1x512xf32>
    %cst_102 = arith.constant 2.500000e-01 : f32
    %235 = vector.broadcast %cst_102 : f32 to vector<1x512xf32>
    %236 = arith.mulf %234, %235 : vector<1x512xf32>
    %237 = arith.mulf %231, %231 : vector<1x512xf32>
    %238 = arith.subf %236, %237 : vector<1x512xf32>
    %cst_103 = arith.constant 0.000000e+00 : f32
    %239 = vector.broadcast %cst_103 : f32 to vector<1x512xf32>
    %240 = arith.maximumf %238, %239 : vector<1x512xf32>
    %c10 = arith.constant 10 : index
    %c0_104 = arith.constant 0 : index
    %241 = vector.load %arg7[%c10, %c0_104] : memref<27x512xf32, #tpu.memory_space<vmem>>, vector<1x512xf32>
    %c11 = arith.constant 11 : index
    %c0_105 = arith.constant 0 : index
    %242 = vector.load %arg7[%c11, %c0_105] : memref<27x512xf32, #tpu.memory_space<vmem>>, vector<1x512xf32>
    %cst_106 = arith.constant 9.99999974E-6 : f32
    %243 = vector.broadcast %cst_106 : f32 to vector<1x512xf32>
    %244 = arith.addf %240, %243 : vector<1x512xf32>
    %245 = math.rsqrt %244 : vector<1x512xf32>
    %246 = arith.mulf %245, %241 : vector<1x512xf32>
    %247 = vector.broadcast %246 : vector<1x512xf32> to vector<4x512xf32>
    %248 = arith.mulf %227, %247 : vector<4x512xf32>
    %249 = arith.mulf %231, %246 : vector<1x512xf32>
    %250 = arith.subf %242, %249 : vector<1x512xf32>
    %251 = vector.broadcast %250 : vector<1x512xf32> to vector<4x512xf32>
    %252 = arith.addf %248, %251 : vector<4x512xf32>
    %cst_107 = arith.constant 0.000000e+00 : f32
    %253 = vector.broadcast %cst_107 : f32 to vector<4x512xf32>
    %254 = arith.cmpf oge, %252, %253 : vector<4x512xf32>
    %cst_108 = arith.constant 0.00999999977 : f32
    %255 = vector.broadcast %cst_108 : f32 to vector<4x512xf32>
    %256 = arith.mulf %255, %252 : vector<4x512xf32>
    %257 = arith.select %254, %252, %256 : vector<4x512xi1>, vector<4x512xf32>
    %258 = arith.truncf %257 : vector<4x512xf32> to vector<4x512xbf16>
    %c0_109 = arith.constant 0 : index
    %c0_110 = arith.constant 0 : index
    %259 = vector.load %arg1[%c0_109, %c0_110] : memref<512x256xbf16, #tpu.memory_space<vmem>>, vector<512x256xbf16>
    %cst_111 = arith.constant dense<0.000000e+00> : vector<4x256xf32>
    %260 = tpu.matmul %258, %259, %cst_111 {dimension_numbers = #tpu.dot_dimension_numbers<[1], [0], [0], [1], [0, 0, 1, 1], [], []>} : vector<4x512xbf16>, vector<512x256xbf16>, vector<4x256xf32> -> vector<4x256xf32>
    %261 = arith.truncf %260 : vector<4x256xf32> to vector<4x256xbf16>
    %c384_112 = arith.constant 384 : index
    %c0_113 = arith.constant 0 : index
    %262 = vector.load %arg6[%c384_112, %c0_113] : memref<1760x128xbf16, #tpu.memory_space<vmem>>, vector<2x4xbf16>
    %263 = vector.extract_strided_slice %261 {offsets = [0, 0], sizes = [4, 128], strides = [1, 1]} : vector<4x256xbf16> to vector<4x128xbf16>
    %cst_114 = arith.constant dense<0.000000e+00> : vector<2x128xf32>
    %264 = tpu.matmul %262, %263, %cst_114 {dimension_numbers = #tpu.dot_dimension_numbers<[1], [0], [0], [1], [0, 0, 1, 1], [], []>} : vector<2x4xbf16>, vector<4x128xbf16>, vector<2x128xf32> -> vector<2x128xf32>
    %c392 = arith.constant 392 : index
    %c0_115 = arith.constant 0 : index
    %265 = vector.load %arg6[%c392, %c0_115] : memref<1760x128xbf16, #tpu.memory_space<vmem>>, vector<2x4xbf16>
    %266 = vector.extract_strided_slice %261 {offsets = [0, 128], sizes = [4, 128], strides = [1, 1]} : vector<4x256xbf16> to vector<4x128xbf16>
    %cst_116 = arith.constant dense<0.000000e+00> : vector<2x128xf32>
    %267 = tpu.matmul %265, %266, %cst_116 {dimension_numbers = #tpu.dot_dimension_numbers<[1], [0], [0], [1], [0, 0, 1, 1], [], []>} : vector<2x4xbf16>, vector<4x128xbf16>, vector<2x128xf32> -> vector<2x128xf32>
    %268 = arith.addf %264, %267 : vector<2x128xf32>
    %c12 = arith.constant 12 : index
    %c0_117 = arith.constant 0 : index
    %269 = vector.load %arg7[%c12, %c0_117] : memref<27x512xf32, #tpu.memory_space<vmem>>, vector<1x128xf32>
    %270 = vector.broadcast %269 : vector<1x128xf32> to vector<2x128xf32>
    %271 = arith.addf %268, %270 : vector<2x128xf32>
    %c0_118 = arith.constant 0 : index
    %c0_119 = arith.constant 0 : index
    %272 = vector.load %arg8[%c0_118, %c0_119] : memref<2x128xf32, #tpu.memory_space<vmem>>, vector<2x128xf32>
    tpu.vector_store %arg8[%c0_118, %c0_119], %271 {strides = array<i32>} : memref<2x128xf32, #tpu.memory_space<vmem>>, vector<2x128xf32>,
    %273 = arith.truncf %271 : vector<2x128xf32> to vector<2x128xbf16>
    %c256_120 = arith.constant 256 : index
    %c0_121 = arith.constant 0 : index
    %274 = vector.load %arg3[%c256_120, %c0_121] : memref<896x512xbf16, #tpu.memory_space<vmem>>, vector<128x512xbf16>
    %cst_122 = arith.constant dense<0.000000e+00> : vector<2x512xf32>
    %275 = tpu.matmul %273, %274, %cst_122 {dimension_numbers = #tpu.dot_dimension_numbers<[1], [0], [0], [1], [0, 0, 1, 1], [], []>} : vector<2x128xbf16>, vector<128x512xbf16>, vector<2x512xf32> -> vector<2x512xf32>
    %c13 = arith.constant 13 : index
    %c0_123 = arith.constant 0 : index
    %276 = vector.load %arg7[%c13, %c0_123] : memref<27x512xf32, #tpu.memory_space<vmem>>, vector<1x512xf32>
    %277 = vector.broadcast %276 : vector<1x512xf32> to vector<2x512xf32>
    %278 = arith.addf %275, %277 : vector<2x512xf32>
    %279 = arith.truncf %278 : vector<2x512xf32> to vector<2x512xbf16>
    %c384_124 = arith.constant 384 : index
    %c0_125 = arith.constant 0 : index
    %280 = vector.load %arg3[%c384_124, %c0_125] : memref<896x512xbf16, #tpu.memory_space<vmem>>, vector<512x512xbf16>
    %cst_126 = arith.constant dense<0.000000e+00> : vector<2x512xf32>
    %281 = tpu.matmul %279, %280, %cst_126 {dimension_numbers = #tpu.dot_dimension_numbers<[1], [0], [0], [1], [0, 0, 1, 1], [], []>} : vector<2x512xbf16>, vector<512x512xbf16>, vector<2x512xf32> -> vector<2x512xf32>
    %282 = arith.truncf %281 : vector<2x512xf32> to vector<2x512xbf16>
    %c400 = arith.constant 400 : index
    %c0_127 = arith.constant 0 : index
    %283 = vector.load %arg6[%c400, %c0_127] : memref<1760x128xbf16, #tpu.memory_space<vmem>>, vector<4x2xbf16>
    %284 = vector.extract_strided_slice %282 {offsets = [0, 0], sizes = [2, 256], strides = [1, 1]} : vector<2x512xbf16> to vector<2x256xbf16>
    %cst_128 = arith.constant dense<0.000000e+00> : vector<4x256xf32>
    %285 = tpu.matmul %283, %284, %cst_128 {dimension_numbers = #tpu.dot_dimension_numbers<[1], [0], [0], [1], [0, 0, 1, 1], [], []>} : vector<4x2xbf16>, vector<2x256xbf16>, vector<4x256xf32> -> vector<4x256xf32>
    %c408 = arith.constant 408 : index
    %c0_129 = arith.constant 0 : index
    %286 = vector.load %arg6[%c408, %c0_129] : memref<1760x128xbf16, #tpu.memory_space<vmem>>, vector<4x2xbf16>
    %287 = vector.extract_strided_slice %282 {offsets = [0, 256], sizes = [2, 256], strides = [1, 1]} : vector<2x512xbf16> to vector<2x256xbf16>
    %cst_130 = arith.constant dense<0.000000e+00> : vector<4x256xf32>
    %288 = tpu.matmul %286, %287, %cst_130 {dimension_numbers = #tpu.dot_dimension_numbers<[1], [0], [0], [1], [0, 0, 1, 1], [], []>} : vector<4x2xbf16>, vector<2x256xbf16>, vector<4x256xf32> -> vector<4x256xf32>
    %289 = arith.addf %285, %288 : vector<4x256xf32>
    %cst_131 = arith.constant dense<0.000000e+00> : vector<256xf32>
    %290 = vector.multi_reduction <add>, %289, %cst_131 [0] : vector<4x256xf32> to vector<256xf32>
    %291 = vector.shape_cast %290 : vector<256xf32> to vector<1x256xf32>
    %cst_132 = arith.constant 2.500000e-01 : f32
    %292 = vector.broadcast %cst_132 : f32 to vector<1x256xf32>
    %293 = arith.mulf %291, %292 : vector<1x256xf32>
    %294 = arith.mulf %289, %289 : vector<4x256xf32>
    %cst_133 = arith.constant dense<0.000000e+00> : vector<256xf32>
    %295 = vector.multi_reduction <add>, %294, %cst_133 [0] : vector<4x256xf32> to vector<256xf32>
    %296 = vector.shape_cast %295 : vector<256xf32> to vector<1x256xf32>
    %cst_134 = arith.constant 2.500000e-01 : f32
    %297 = vector.broadcast %cst_134 : f32 to vector<1x256xf32>
    %298 = arith.mulf %296, %297 : vector<1x256xf32>
    %299 = arith.mulf %293, %293 : vector<1x256xf32>
    %300 = arith.subf %298, %299 : vector<1x256xf32>
    %cst_135 = arith.constant 0.000000e+00 : f32
    %301 = vector.broadcast %cst_135 : f32 to vector<1x256xf32>
    %302 = arith.maximumf %300, %301 : vector<1x256xf32>
    %c14 = arith.constant 14 : index
    %c0_136 = arith.constant 0 : index
    %303 = vector.load %arg7[%c14, %c0_136] : memref<27x512xf32, #tpu.memory_space<vmem>>, vector<1x256xf32>
    %c15 = arith.constant 15 : index
    %c0_137 = arith.constant 0 : index
    %304 = vector.load %arg7[%c15, %c0_137] : memref<27x512xf32, #tpu.memory_space<vmem>>, vector<1x256xf32>
    %cst_138 = arith.constant 9.99999974E-6 : f32
    %305 = vector.broadcast %cst_138 : f32 to vector<1x256xf32>
    %306 = arith.addf %302, %305 : vector<1x256xf32>
    %307 = math.rsqrt %306 : vector<1x256xf32>
    %308 = arith.mulf %307, %303 : vector<1x256xf32>
    %309 = vector.broadcast %308 : vector<1x256xf32> to vector<4x256xf32>
    %310 = arith.mulf %289, %309 : vector<4x256xf32>
    %311 = arith.mulf %293, %308 : vector<1x256xf32>
    %312 = arith.subf %304, %311 : vector<1x256xf32>
    %313 = vector.broadcast %312 : vector<1x256xf32> to vector<4x256xf32>
    %314 = arith.addf %310, %313 : vector<4x256xf32>
    %cst_139 = arith.constant 0.000000e+00 : f32
    %315 = vector.broadcast %cst_139 : f32 to vector<4x256xf32>
    %316 = arith.cmpf oge, %314, %315 : vector<4x256xf32>
    %cst_140 = arith.constant 0.00999999977 : f32
    %317 = vector.broadcast %cst_140 : f32 to vector<4x256xf32>
    %318 = arith.mulf %317, %314 : vector<4x256xf32>
    %319 = arith.select %316, %314, %318 : vector<4x256xi1>, vector<4x256xf32>
    %320 = arith.truncf %319 : vector<4x256xf32> to vector<4x256xbf16>
    %c512 = arith.constant 512 : index
    %c0_141 = arith.constant 0 : index
    %321 = vector.load %arg2[%c512, %c0_141] : memref<1280x384xbf16, #tpu.memory_space<vmem>>, vector<256x384xbf16>
    %cst_142 = arith.constant dense<0.000000e+00> : vector<4x384xf32>
    %322 = tpu.matmul %320, %321, %cst_142 {dimension_numbers = #tpu.dot_dimension_numbers<[1], [0], [0], [1], [0, 0, 1, 1], [], []>} : vector<4x256xbf16>, vector<256x384xbf16>, vector<4x384xf32> -> vector<4x384xf32>
    %323 = arith.truncf %322 : vector<4x384xf32> to vector<4x384xbf16>
    %c416 = arith.constant 416 : index
    %c0_143 = arith.constant 0 : index
    %324 = vector.load %arg6[%c416, %c0_143] : memref<1760x128xbf16, #tpu.memory_space<vmem>>, vector<8x4xbf16>
    %325 = vector.extract_strided_slice %323 {offsets = [0, 0], sizes = [4, 128], strides = [1, 1]} : vector<4x384xbf16> to vector<4x128xbf16>
    %cst_144 = arith.constant dense<0.000000e+00> : vector<8x128xf32>
    %326 = tpu.matmul %324, %325, %cst_144 {dimension_numbers = #tpu.dot_dimension_numbers<[1], [0], [0], [1], [0, 0, 1, 1], [], []>} : vector<8x4xbf16>, vector<4x128xbf16>, vector<8x128xf32> -> vector<8x128xf32>
    %c424 = arith.constant 424 : index
    %c0_145 = arith.constant 0 : index
    %327 = vector.load %arg6[%c424, %c0_145] : memref<1760x128xbf16, #tpu.memory_space<vmem>>, vector<8x4xbf16>
    %328 = vector.extract_strided_slice %323 {offsets = [0, 128], sizes = [4, 128], strides = [1, 1]} : vector<4x384xbf16> to vector<4x128xbf16>
    %cst_146 = arith.constant dense<0.000000e+00> : vector<8x128xf32>
    %329 = tpu.matmul %327, %328, %cst_146 {dimension_numbers = #tpu.dot_dimension_numbers<[1], [0], [0], [1], [0, 0, 1, 1], [], []>} : vector<8x4xbf16>, vector<4x128xbf16>, vector<8x128xf32> -> vector<8x128xf32>
    %330 = arith.addf %326, %329 : vector<8x128xf32>
    %c432 = arith.constant 432 : index
    %c0_147 = arith.constant 0 : index
    %331 = vector.load %arg6[%c432, %c0_147] : memref<1760x128xbf16, #tpu.memory_space<vmem>>, vector<8x4xbf16>
    %332 = vector.extract_strided_slice %323 {offsets = [0, 256], sizes = [4, 128], strides = [1, 1]} : vector<4x384xbf16> to vector<4x128xbf16>
    %cst_148 = arith.constant dense<0.000000e+00> : vector<8x128xf32>
    %333 = tpu.matmul %331, %332, %cst_148 {dimension_numbers = #tpu.dot_dimension_numbers<[1], [0], [0], [1], [0, 0, 1, 1], [], []>} : vector<8x4xbf16>, vector<4x128xbf16>, vector<8x128xf32> -> vector<8x128xf32>
    %334 = arith.addf %330, %333 : vector<8x128xf32>
    %cst_149 = arith.constant dense<0.000000e+00> : vector<128xf32>
    %335 = vector.multi_reduction <add>, %334, %cst_149 [0] : vector<8x128xf32> to vector<128xf32>
    %336 = vector.shape_cast %335 : vector<128xf32> to vector<1x128xf32>
    %cst_150 = arith.constant 1.250000e-01 : f32
    %337 = vector.broadcast %cst_150 : f32 to vector<1x128xf32>
    %338 = arith.mulf %336, %337 : vector<1x128xf32>
    %339 = arith.mulf %334, %334 : vector<8x128xf32>
    %cst_151 = arith.constant dense<0.000000e+00> : vector<128xf32>
    %340 = vector.multi_reduction <add>, %339, %cst_151 [0] : vector<8x128xf32> to vector<128xf32>
    %341 = vector.shape_cast %340 : vector<128xf32> to vector<1x128xf32>
    %cst_152 = arith.constant 1.250000e-01 : f32
    %342 = vector.broadcast %cst_152 : f32 to vector<1x128xf32>
    %343 = arith.mulf %341, %342 : vector<1x128xf32>
    %344 = arith.mulf %338, %338 : vector<1x128xf32>
    %345 = arith.subf %343, %344 : vector<1x128xf32>
    %cst_153 = arith.constant 0.000000e+00 : f32
    %346 = vector.broadcast %cst_153 : f32 to vector<1x128xf32>
    %347 = arith.maximumf %345, %346 : vector<1x128xf32>
    %c16 = arith.constant 16 : index
    %c0_154 = arith.constant 0 : index
    %348 = vector.load %arg7[%c16, %c0_154] : memref<27x512xf32, #tpu.memory_space<vmem>>, vector<1x128xf32>
    %c17 = arith.constant 17 : index
    %c0_155 = arith.constant 0 : index
    %349 = vector.load %arg7[%c17, %c0_155] : memref<27x512xf32, #tpu.memory_space<vmem>>, vector<1x128xf32>
    %cst_156 = arith.constant 9.99999974E-6 : f32
    %350 = vector.broadcast %cst_156 : f32 to vector<1x128xf32>
    %351 = arith.addf %347, %350 : vector<1x128xf32>
    %352 = math.rsqrt %351 : vector<1x128xf32>
    %353 = arith.mulf %352, %348 : vector<1x128xf32>
    %354 = vector.broadcast %353 : vector<1x128xf32> to vector<8x128xf32>
    %355 = arith.mulf %334, %354 : vector<8x128xf32>
    %356 = arith.mulf %338, %353 : vector<1x128xf32>
    %357 = arith.subf %349, %356 : vector<1x128xf32>
    %358 = vector.broadcast %357 : vector<1x128xf32> to vector<8x128xf32>
    %359 = arith.addf %355, %358 : vector<8x128xf32>
    %cst_157 = arith.constant 0.000000e+00 : f32
    %360 = vector.broadcast %cst_157 : f32 to vector<8x128xf32>
    %361 = arith.cmpf oge, %359, %360 : vector<8x128xf32>
    %cst_158 = arith.constant 0.00999999977 : f32
    %362 = vector.broadcast %cst_158 : f32 to vector<8x128xf32>
    %363 = arith.mulf %362, %359 : vector<8x128xf32>
    %364 = arith.select %361, %359, %363 : vector<8x128xi1>, vector<8x128xf32>
    %365 = arith.truncf %364 : vector<8x128xf32> to vector<8x128xbf16>
    %c768 = arith.constant 768 : index
    %c0_159 = arith.constant 0 : index
    %366 = vector.load %arg2[%c768, %c0_159] : memref<1280x384xbf16, #tpu.memory_space<vmem>>, vector<128x384xbf16>
    %cst_160 = arith.constant dense<0.000000e+00> : vector<8x384xf32>
    %367 = tpu.matmul %365, %366, %cst_160 {dimension_numbers = #tpu.dot_dimension_numbers<[1], [0], [0], [1], [0, 0, 1, 1], [], []>} : vector<8x128xbf16>, vector<128x384xbf16>, vector<8x384xf32> -> vector<8x384xf32>
    %368 = arith.truncf %367 : vector<8x384xf32> to vector<8x384xbf16>
    %c440 = arith.constant 440 : index
    %c0_161 = arith.constant 0 : index
    %369 = vector.load %arg6[%c440, %c0_161] : memref<1760x128xbf16, #tpu.memory_space<vmem>>, vector<16x8xbf16>
    %370 = vector.extract_strided_slice %368 {offsets = [0, 0], sizes = [8, 128], strides = [1, 1]} : vector<8x384xbf16> to vector<8x128xbf16>
    %cst_162 = arith.constant dense<0.000000e+00> : vector<16x128xf32>
    %371 = tpu.matmul %369, %370, %cst_162 {dimension_numbers = #tpu.dot_dimension_numbers<[1], [0], [0], [1], [0, 0, 1, 1], [], []>} : vector<16x8xbf16>, vector<8x128xbf16>, vector<16x128xf32> -> vector<16x128xf32>
    %c456 = arith.constant 456 : index
    %c0_163 = arith.constant 0 : index
    %372 = vector.load %arg6[%c456, %c0_163] : memref<1760x128xbf16, #tpu.memory_space<vmem>>, vector<16x8xbf16>
    %373 = vector.extract_strided_slice %368 {offsets = [0, 128], sizes = [8, 128], strides = [1, 1]} : vector<8x384xbf16> to vector<8x128xbf16>
    %cst_164 = arith.constant dense<0.000000e+00> : vector<16x128xf32>
    %374 = tpu.matmul %372, %373, %cst_164 {dimension_numbers = #tpu.dot_dimension_numbers<[1], [0], [0], [1], [0, 0, 1, 1], [], []>} : vector<16x8xbf16>, vector<8x128xbf16>, vector<16x128xf32> -> vector<16x128xf32>
    %375 = arith.addf %371, %374 : vector<16x128xf32>
    %c472 = arith.constant 472 : index
    %c0_165 = arith.constant 0 : index
    %376 = vector.load %arg6[%c472, %c0_165] : memref<1760x128xbf16, #tpu.memory_space<vmem>>, vector<16x8xbf16>
    %377 = vector.extract_strided_slice %368 {offsets = [0, 256], sizes = [8, 128], strides = [1, 1]} : vector<8x384xbf16> to vector<8x128xbf16>
    %cst_166 = arith.constant dense<0.000000e+00> : vector<16x128xf32>
    %378 = tpu.matmul %376, %377, %cst_166 {dimension_numbers = #tpu.dot_dimension_numbers<[1], [0], [0], [1], [0, 0, 1, 1], [], []>} : vector<16x8xbf16>, vector<8x128xbf16>, vector<16x128xf32> -> vector<16x128xf32>
    %379 = arith.addf %375, %378 : vector<16x128xf32>
    %cst_167 = arith.constant dense<0.000000e+00> : vector<128xf32>
    %380 = vector.multi_reduction <add>, %379, %cst_167 [0] : vector<16x128xf32> to vector<128xf32>
    %381 = vector.shape_cast %380 : vector<128xf32> to vector<1x128xf32>
    %cst_168 = arith.constant 6.250000e-02 : f32
    %382 = vector.broadcast %cst_168 : f32 to vector<1x128xf32>
    %383 = arith.mulf %381, %382 : vector<1x128xf32>
    %384 = arith.mulf %379, %379 : vector<16x128xf32>
    %cst_169 = arith.constant dense<0.000000e+00> : vector<128xf32>
    %385 = vector.multi_reduction <add>, %384, %cst_169 [0] : vector<16x128xf32> to vector<128xf32>
    %386 = vector.shape_cast %385 : vector<128xf32> to vector<1x128xf32>
    %cst_170 = arith.constant 6.250000e-02 : f32
    %387 = vector.broadcast %cst_170 : f32 to vector<1x128xf32>
    %388 = arith.mulf %386, %387 : vector<1x128xf32>
    %389 = arith.mulf %383, %383 : vector<1x128xf32>
    %390 = arith.subf %388, %389 : vector<1x128xf32>
    %cst_171 = arith.constant 0.000000e+00 : f32
    %391 = vector.broadcast %cst_171 : f32 to vector<1x128xf32>
    %392 = arith.maximumf %390, %391 : vector<1x128xf32>
    %c18 = arith.constant 18 : index
    %c0_172 = arith.constant 0 : index
    %393 = vector.load %arg7[%c18, %c0_172] : memref<27x512xf32, #tpu.memory_space<vmem>>, vector<1x128xf32>
    %c19 = arith.constant 19 : index
    %c0_173 = arith.constant 0 : index
    %394 = vector.load %arg7[%c19, %c0_173] : memref<27x512xf32, #tpu.memory_space<vmem>>, vector<1x128xf32>
    %cst_174 = arith.constant 9.99999974E-6 : f32
    %395 = vector.broadcast %cst_174 : f32 to vector<1x128xf32>
    %396 = arith.addf %392, %395 : vector<1x128xf32>
    %397 = math.rsqrt %396 : vector<1x128xf32>
    %398 = arith.mulf %397, %393 : vector<1x128xf32>
    %399 = vector.broadcast %398 : vector<1x128xf32> to vector<16x128xf32>
    %400 = arith.mulf %379, %399 : vector<16x128xf32>
    %401 = arith.mulf %383, %398 : vector<1x128xf32>
    %402 = arith.subf %394, %401 : vector<1x128xf32>
    %403 = vector.broadcast %402 : vector<1x128xf32> to vector<16x128xf32>
    %404 = arith.addf %400, %403 : vector<16x128xf32>
    %cst_175 = arith.constant 0.000000e+00 : f32
    %405 = vector.broadcast %cst_175 : f32 to vector<16x128xf32>
    %406 = arith.cmpf oge, %404, %405 : vector<16x128xf32>
    %cst_176 = arith.constant 0.00999999977 : f32
    %407 = vector.broadcast %cst_176 : f32 to vector<16x128xf32>
    %408 = arith.mulf %407, %404 : vector<16x128xf32>
    %409 = arith.select %406, %404, %408 : vector<16x128xi1>, vector<16x128xf32>
    %410 = arith.truncf %409 : vector<16x128xf32> to vector<16x128xbf16>
    %c896 = arith.constant 896 : index
    %c0_177 = arith.constant 0 : index
    %411 = vector.load %arg2[%c896, %c0_177] : memref<1280x384xbf16, #tpu.memory_space<vmem>>, vector<128x384xbf16>
    %cst_178 = arith.constant dense<0.000000e+00> : vector<16x384xf32>
    %412 = tpu.matmul %410, %411, %cst_178 {dimension_numbers = #tpu.dot_dimension_numbers<[1], [0], [0], [1], [0, 0, 1, 1], [], []>} : vector<16x128xbf16>, vector<128x384xbf16>, vector<16x384xf32> -> vector<16x384xf32>
    %413 = arith.truncf %412 : vector<16x384xf32> to vector<16x384xbf16>
    %c488 = arith.constant 488 : index
    %c0_179 = arith.constant 0 : index
    %414 = vector.load %arg6[%c488, %c0_179] : memref<1760x128xbf16, #tpu.memory_space<vmem>>, vector<32x16xbf16>
    %415 = vector.extract_strided_slice %413 {offsets = [0, 0], sizes = [16, 128], strides = [1, 1]} : vector<16x384xbf16> to vector<16x128xbf16>
    %cst_180 = arith.constant dense<0.000000e+00> : vector<32x128xf32>
    %416 = tpu.matmul %414, %415, %cst_180 {dimension_numbers = #tpu.dot_dimension_numbers<[1], [0], [0], [1], [0, 0, 1, 1], [], []>} : vector<32x16xbf16>, vector<16x128xbf16>, vector<32x128xf32> -> vector<32x128xf32>
    %c520 = arith.constant 520 : index
    %c0_181 = arith.constant 0 : index
    %417 = vector.load %arg6[%c520, %c0_181] : memref<1760x128xbf16, #tpu.memory_space<vmem>>, vector<32x16xbf16>
    %418 = vector.extract_strided_slice %413 {offsets = [0, 128], sizes = [16, 128], strides = [1, 1]} : vector<16x384xbf16> to vector<16x128xbf16>
    %cst_182 = arith.constant dense<0.000000e+00> : vector<32x128xf32>
    %419 = tpu.matmul %417, %418, %cst_182 {dimension_numbers = #tpu.dot_dimension_numbers<[1], [0], [0], [1], [0, 0, 1, 1], [], []>} : vector<32x16xbf16>, vector<16x128xbf16>, vector<32x128xf32> -> vector<32x128xf32>
    %420 = arith.addf %416, %419 : vector<32x128xf32>
    %c552 = arith.constant 552 : index
    %c0_183 = arith.constant 0 : index
    %421 = vector.load %arg6[%c552, %c0_183] : memref<1760x128xbf16, #tpu.memory_space<vmem>>, vector<32x16xbf16>
    %422 = vector.extract_strided_slice %413 {offsets = [0, 256], sizes = [16, 128], strides = [1, 1]} : vector<16x384xbf16> to vector<16x128xbf16>
    %cst_184 = arith.constant dense<0.000000e+00> : vector<32x128xf32>
    %423 = tpu.matmul %421, %422, %cst_184 {dimension_numbers = #tpu.dot_dimension_numbers<[1], [0], [0], [1], [0, 0, 1, 1], [], []>} : vector<32x16xbf16>, vector<16x128xbf16>, vector<32x128xf32> -> vector<32x128xf32>
    %424 = arith.addf %420, %423 : vector<32x128xf32>
    %cst_185 = arith.constant dense<0.000000e+00> : vector<128xf32>
    %425 = vector.multi_reduction <add>, %424, %cst_185 [0] : vector<32x128xf32> to vector<128xf32>
    %426 = vector.shape_cast %425 : vector<128xf32> to vector<1x128xf32>
    %cst_186 = arith.constant 3.125000e-02 : f32
    %427 = vector.broadcast %cst_186 : f32 to vector<1x128xf32>
    %428 = arith.mulf %426, %427 : vector<1x128xf32>
    %429 = arith.mulf %424, %424 : vector<32x128xf32>
    %cst_187 = arith.constant dense<0.000000e+00> : vector<128xf32>
    %430 = vector.multi_reduction <add>, %429, %cst_187 [0] : vector<32x128xf32> to vector<128xf32>
    %431 = vector.shape_cast %430 : vector<128xf32> to vector<1x128xf32>
    %cst_188 = arith.constant 3.125000e-02 : f32
    %432 = vector.broadcast %cst_188 : f32 to vector<1x128xf32>
    %433 = arith.mulf %431, %432 : vector<1x128xf32>
    %434 = arith.mulf %428, %428 : vector<1x128xf32>
    %435 = arith.subf %433, %434 : vector<1x128xf32>
    %cst_189 = arith.constant 0.000000e+00 : f32
    %436 = vector.broadcast %cst_189 : f32 to vector<1x128xf32>
    %437 = arith.maximumf %435, %436 : vector<1x128xf32>
    %c20 = arith.constant 20 : index
    %c0_190 = arith.constant 0 : index
    %438 = vector.load %arg7[%c20, %c0_190] : memref<27x512xf32, #tpu.memory_space<vmem>>, vector<1x128xf32>
    %c21 = arith.constant 21 : index
    %c0_191 = arith.constant 0 : index
    %439 = vector.load %arg7[%c21, %c0_191] : memref<27x512xf32, #tpu.memory_space<vmem>>, vector<1x128xf32>
    %cst_192 = arith.constant 9.99999974E-6 : f32
    %440 = vector.broadcast %cst_192 : f32 to vector<1x128xf32>
    %441 = arith.addf %437, %440 : vector<1x128xf32>
    %442 = math.rsqrt %441 : vector<1x128xf32>
    %443 = arith.mulf %442, %438 : vector<1x128xf32>
    %444 = vector.broadcast %443 : vector<1x128xf32> to vector<32x128xf32>
    %445 = arith.mulf %424, %444 : vector<32x128xf32>
    %446 = arith.mulf %428, %443 : vector<1x128xf32>
    %447 = arith.subf %439, %446 : vector<1x128xf32>
    %448 = vector.broadcast %447 : vector<1x128xf32> to vector<32x128xf32>
    %449 = arith.addf %445, %448 : vector<32x128xf32>
    %cst_193 = arith.constant 0.000000e+00 : f32
    %450 = vector.broadcast %cst_193 : f32 to vector<32x128xf32>
    %451 = arith.cmpf oge, %449, %450 : vector<32x128xf32>
    %cst_194 = arith.constant 0.00999999977 : f32
    %452 = vector.broadcast %cst_194 : f32 to vector<32x128xf32>
    %453 = arith.mulf %452, %449 : vector<32x128xf32>
    %454 = arith.select %451, %449, %453 : vector<32x128xi1>, vector<32x128xf32>
    %455 = arith.truncf %454 : vector<32x128xf32> to vector<32x128xbf16>
    %c1024 = arith.constant 1024 : index
    %c0_195 = arith.constant 0 : index
    %456 = vector.load %arg2[%c1024, %c0_195] : memref<1280x384xbf16, #tpu.memory_space<vmem>>, vector<128x384xbf16>
    %cst_196 = arith.constant dense<0.000000e+00> : vector<32x384xf32>
    %457 = tpu.matmul %455, %456, %cst_196 {dimension_numbers = #tpu.dot_dimension_numbers<[1], [0], [0], [1], [0, 0, 1, 1], [], []>} : vector<32x128xbf16>, vector<128x384xbf16>, vector<32x384xf32> -> vector<32x384xf32>
    %458 = arith.truncf %457 : vector<32x384xf32> to vector<32x384xbf16>
    %c584 = arith.constant 584 : index
    %c0_197 = arith.constant 0 : index
    %459 = vector.load %arg6[%c584, %c0_197] : memref<1760x128xbf16, #tpu.memory_space<vmem>>, vector<64x32xbf16>
    %460 = vector.extract_strided_slice %458 {offsets = [0, 0], sizes = [32, 128], strides = [1, 1]} : vector<32x384xbf16> to vector<32x128xbf16>
    %cst_198 = arith.constant dense<0.000000e+00> : vector<64x128xf32>
    %461 = tpu.matmul %459, %460, %cst_198 {dimension_numbers = #tpu.dot_dimension_numbers<[1], [0], [0], [1], [0, 0, 1, 1], [], []>} : vector<64x32xbf16>, vector<32x128xbf16>, vector<64x128xf32> -> vector<64x128xf32>
    %c648 = arith.constant 648 : index
    %c0_199 = arith.constant 0 : index
    %462 = vector.load %arg6[%c648, %c0_199] : memref<1760x128xbf16, #tpu.memory_space<vmem>>, vector<64x32xbf16>
    %463 = vector.extract_strided_slice %458 {offsets = [0, 128], sizes = [32, 128], strides = [1, 1]} : vector<32x384xbf16> to vector<32x128xbf16>
    %cst_200 = arith.constant dense<0.000000e+00> : vector<64x128xf32>
    %464 = tpu.matmul %462, %463, %cst_200 {dimension_numbers = #tpu.dot_dimension_numbers<[1], [0], [0], [1], [0, 0, 1, 1], [], []>} : vector<64x32xbf16>, vector<32x128xbf16>, vector<64x128xf32> -> vector<64x128xf32>
    %465 = arith.addf %461, %464 : vector<64x128xf32>
    %c712 = arith.constant 712 : index
    %c0_201 = arith.constant 0 : index
    %466 = vector.load %arg6[%c712, %c0_201] : memref<1760x128xbf16, #tpu.memory_space<vmem>>, vector<64x32xbf16>
    %467 = vector.extract_strided_slice %458 {offsets = [0, 256], sizes = [32, 128], strides = [1, 1]} : vector<32x384xbf16> to vector<32x128xbf16>
    %cst_202 = arith.constant dense<0.000000e+00> : vector<64x128xf32>
    %468 = tpu.matmul %466, %467, %cst_202 {dimension_numbers = #tpu.dot_dimension_numbers<[1], [0], [0], [1], [0, 0, 1, 1], [], []>} : vector<64x32xbf16>, vector<32x128xbf16>, vector<64x128xf32> -> vector<64x128xf32>
    %469 = arith.addf %465, %468 : vector<64x128xf32>
    %cst_203 = arith.constant dense<0.000000e+00> : vector<128xf32>
    %470 = vector.multi_reduction <add>, %469, %cst_203 [0] : vector<64x128xf32> to vector<128xf32>
    %471 = vector.shape_cast %470 : vector<128xf32> to vector<1x128xf32>
    %cst_204 = arith.constant 1.562500e-02 : f32
    %472 = vector.broadcast %cst_204 : f32 to vector<1x128xf32>
    %473 = arith.mulf %471, %472 : vector<1x128xf32>
    %474 = arith.mulf %469, %469 : vector<64x128xf32>
    %cst_205 = arith.constant dense<0.000000e+00> : vector<128xf32>
    %475 = vector.multi_reduction <add>, %474, %cst_205 [0] : vector<64x128xf32> to vector<128xf32>
    %476 = vector.shape_cast %475 : vector<128xf32> to vector<1x128xf32>
    %cst_206 = arith.constant 1.562500e-02 : f32
    %477 = vector.broadcast %cst_206 : f32 to vector<1x128xf32>
    %478 = arith.mulf %476, %477 : vector<1x128xf32>
    %479 = arith.mulf %473, %473 : vector<1x128xf32>
    %480 = arith.subf %478, %479 : vector<1x128xf32>
    %cst_207 = arith.constant 0.000000e+00 : f32
    %481 = vector.broadcast %cst_207 : f32 to vector<1x128xf32>
    %482 = arith.maximumf %480, %481 : vector<1x128xf32>
    %c22 = arith.constant 22 : index
    %c0_208 = arith.constant 0 : index
    %483 = vector.load %arg7[%c22, %c0_208] : memref<27x512xf32, #tpu.memory_space<vmem>>, vector<1x128xf32>
    %c23 = arith.constant 23 : index
    %c0_209 = arith.constant 0 : index
    %484 = vector.load %arg7[%c23, %c0_209] : memref<27x512xf32, #tpu.memory_space<vmem>>, vector<1x128xf32>
    %cst_210 = arith.constant 9.99999974E-6 : f32
    %485 = vector.broadcast %cst_210 : f32 to vector<1x128xf32>
    %486 = arith.addf %482, %485 : vector<1x128xf32>
    %487 = math.rsqrt %486 : vector<1x128xf32>
    %488 = arith.mulf %487, %483 : vector<1x128xf32>
    %489 = vector.broadcast %488 : vector<1x128xf32> to vector<64x128xf32>
    %490 = arith.mulf %469, %489 : vector<64x128xf32>
    %491 = arith.mulf %473, %488 : vector<1x128xf32>
    %492 = arith.subf %484, %491 : vector<1x128xf32>
    %493 = vector.broadcast %492 : vector<1x128xf32> to vector<64x128xf32>
    %494 = arith.addf %490, %493 : vector<64x128xf32>
    %cst_211 = arith.constant 0.000000e+00 : f32
    %495 = vector.broadcast %cst_211 : f32 to vector<64x128xf32>
    %496 = arith.cmpf oge, %494, %495 : vector<64x128xf32>
    %cst_212 = arith.constant 0.00999999977 : f32
    %497 = vector.broadcast %cst_212 : f32 to vector<64x128xf32>
    %498 = arith.mulf %497, %494 : vector<64x128xf32>
    %499 = arith.select %496, %494, %498 : vector<64x128xi1>, vector<64x128xf32>
    %500 = arith.truncf %499 : vector<64x128xf32> to vector<64x128xbf16>
    %c1152 = arith.constant 1152 : index
    %c0_213 = arith.constant 0 : index
    %501 = vector.load %arg2[%c1152, %c0_213] : memref<1280x384xbf16, #tpu.memory_space<vmem>>, vector<128x384xbf16>
    %cst_214 = arith.constant dense<0.000000e+00> : vector<64x384xf32>
    %502 = tpu.matmul %500, %501, %cst_214 {dimension_numbers = #tpu.dot_dimension_numbers<[1], [0], [0], [1], [0, 0, 1, 1], [], []>} : vector<64x128xbf16>, vector<128x384xbf16>, vector<64x384xf32> -> vector<64x384xf32>
    %503 = arith.truncf %502 : vector<64x384xf32> to vector<64x384xbf16>
    %c776 = arith.constant 776 : index
    %c0_215 = arith.constant 0 : index
    %504 = vector.load %arg6[%c776, %c0_215] : memref<1760x128xbf16, #tpu.memory_space<vmem>>, vector<124x64xbf16>
    %505 = vector.extract_strided_slice %503 {offsets = [0, 0], sizes = [64, 128], strides = [1, 1]} : vector<64x384xbf16> to vector<64x128xbf16>
    %cst_216 = arith.constant dense<0.000000e+00> : vector<124x128xf32>
    %506 = tpu.matmul %504, %505, %cst_216 {dimension_numbers = #tpu.dot_dimension_numbers<[1], [0], [0], [1], [0, 0, 1, 1], [], []>} : vector<124x64xbf16>, vector<64x128xbf16>, vector<124x128xf32> -> vector<124x128xf32>
    %c904 = arith.constant 904 : index
    %c0_217 = arith.constant 0 : index
    %507 = vector.load %arg6[%c904, %c0_217] : memref<1760x128xbf16, #tpu.memory_space<vmem>>, vector<124x64xbf16>
    %508 = vector.extract_strided_slice %503 {offsets = [0, 128], sizes = [64, 128], strides = [1, 1]} : vector<64x384xbf16> to vector<64x128xbf16>
    %cst_218 = arith.constant dense<0.000000e+00> : vector<124x128xf32>
    %509 = tpu.matmul %507, %508, %cst_218 {dimension_numbers = #tpu.dot_dimension_numbers<[1], [0], [0], [1], [0, 0, 1, 1], [], []>} : vector<124x64xbf16>, vector<64x128xbf16>, vector<124x128xf32> -> vector<124x128xf32>
    %510 = arith.addf %506, %509 : vector<124x128xf32>
    %c1032 = arith.constant 1032 : index
    %c0_219 = arith.constant 0 : index
    %511 = vector.load %arg6[%c1032, %c0_219] : memref<1760x128xbf16, #tpu.memory_space<vmem>>, vector<124x64xbf16>
    %512 = vector.extract_strided_slice %503 {offsets = [0, 256], sizes = [64, 128], strides = [1, 1]} : vector<64x384xbf16> to vector<64x128xbf16>
    %cst_220 = arith.constant dense<0.000000e+00> : vector<124x128xf32>
    %513 = tpu.matmul %511, %512, %cst_220 {dimension_numbers = #tpu.dot_dimension_numbers<[1], [0], [0], [1], [0, 0, 1, 1], [], []>} : vector<124x64xbf16>, vector<64x128xbf16>, vector<124x128xf32> -> vector<124x128xf32>
    %514 = arith.addf %510, %513 : vector<124x128xf32>
    %cst_221 = arith.constant dense<0.000000e+00> : vector<128xf32>
    %515 = vector.multi_reduction <add>, %514, %cst_221 [0] : vector<124x128xf32> to vector<128xf32>
    %516 = vector.shape_cast %515 : vector<128xf32> to vector<1x128xf32>
    %cst_222 = arith.constant 0.00806451589 : f32
    %517 = vector.broadcast %cst_222 : f32 to vector<1x128xf32>
    %518 = arith.mulf %516, %517 : vector<1x128xf32>
    %519 = arith.mulf %514, %514 : vector<124x128xf32>
    %cst_223 = arith.constant dense<0.000000e+00> : vector<128xf32>
    %520 = vector.multi_reduction <add>, %519, %cst_223 [0] : vector<124x128xf32> to vector<128xf32>
    %521 = vector.shape_cast %520 : vector<128xf32> to vector<1x128xf32>
    %cst_224 = arith.constant 0.00806451589 : f32
    %522 = vector.broadcast %cst_224 : f32 to vector<1x128xf32>
    %523 = arith.mulf %521, %522 : vector<1x128xf32>
    %524 = arith.mulf %518, %518 : vector<1x128xf32>
    %525 = arith.subf %523, %524 : vector<1x128xf32>
    %cst_225 = arith.constant 0.000000e+00 : f32
    %526 = vector.broadcast %cst_225 : f32 to vector<1x128xf32>
    %527 = arith.maximumf %525, %526 : vector<1x128xf32>
    %c24 = arith.constant 24 : index
    %c0_226 = arith.constant 0 : index
    %528 = vector.load %arg7[%c24, %c0_226] : memref<27x512xf32, #tpu.memory_space<vmem>>, vector<1x128xf32>
    %c25 = arith.constant 25 : index
    %c0_227 = arith.constant 0 : index
    %529 = vector.load %arg7[%c25, %c0_227] : memref<27x512xf32, #tpu.memory_space<vmem>>, vector<1x128xf32>
    %cst_228 = arith.constant 9.99999974E-6 : f32
    %530 = vector.broadcast %cst_228 : f32 to vector<1x128xf32>
    %531 = arith.addf %527, %530 : vector<1x128xf32>
    %532 = math.rsqrt %531 : vector<1x128xf32>
    %533 = arith.mulf %532, %528 : vector<1x128xf32>
    %534 = vector.broadcast %533 : vector<1x128xf32> to vector<124x128xf32>
    %535 = arith.mulf %514, %534 : vector<124x128xf32>
    %536 = arith.mulf %518, %533 : vector<1x128xf32>
    %537 = arith.subf %529, %536 : vector<1x128xf32>
    %538 = vector.broadcast %537 : vector<1x128xf32> to vector<124x128xf32>
    %539 = arith.addf %535, %538 : vector<124x128xf32>
    %cst_229 = arith.constant 0.000000e+00 : f32
    %540 = vector.broadcast %cst_229 : f32 to vector<124x128xf32>
    %541 = arith.cmpf oge, %539, %540 : vector<124x128xf32>
    %cst_230 = arith.constant 0.00999999977 : f32
    %542 = vector.broadcast %cst_230 : f32 to vector<124x128xf32>
    %543 = arith.mulf %542, %539 : vector<124x128xf32>
    %544 = arith.select %541, %539, %543 : vector<124x128xi1>, vector<124x128xf32>
    %545 = arith.truncf %544 : vector<124x128xf32> to vector<124x128xbf16>
    %c0_231 = arith.constant 0 : index
    %c0_232 = arith.constant 0 : index
    %546 = vector.load %arg4[%c0_231, %c0_232] : memref<128x640xbf16, #tpu.memory_space<vmem>>, vector<128x640xbf16>
    %cst_233 = arith.constant dense<0.000000e+00> : vector<124x640xf32>
    %547 = tpu.matmul %545, %546, %cst_233 {dimension_numbers = #tpu.dot_dimension_numbers<[1], [0], [0], [1], [0, 0, 1, 1], [], []>} : vector<124x128xbf16>, vector<128x640xbf16>, vector<124x640xf32> -> vector<124x640xf32>
    %548 = arith.truncf %547 : vector<124x640xf32> to vector<124x640xbf16>
    %c1160 = arith.constant 1160 : index
    %c0_234 = arith.constant 0 : index
    %549 = vector.load %arg6[%c1160, %c0_234] : memref<1760x128xbf16, #tpu.memory_space<vmem>>, vector<120x124xbf16>
    %550 = vector.extract_strided_slice %548 {offsets = [0, 0], sizes = [124, 128], strides = [1, 1]} : vector<124x640xbf16> to vector<124x128xbf16>
    %cst_235 = arith.constant dense<0.000000e+00> : vector<120x128xf32>
    %551 = tpu.matmul %549, %550, %cst_235 {dimension_numbers = #tpu.dot_dimension_numbers<[1], [0], [0], [1], [0, 0, 1, 1], [], []>} : vector<120x124xbf16>, vector<124x128xbf16>, vector<120x128xf32> -> vector<120x128xf32>
    %c1280 = arith.constant 1280 : index
    %c0_236 = arith.constant 0 : index
    %552 = vector.load %arg6[%c1280, %c0_236] : memref<1760x128xbf16, #tpu.memory_space<vmem>>, vector<120x124xbf16>
    %553 = vector.extract_strided_slice %548 {offsets = [0, 128], sizes = [124, 128], strides = [1, 1]} : vector<124x640xbf16> to vector<124x128xbf16>
    %cst_237 = arith.constant dense<0.000000e+00> : vector<120x128xf32>
    %554 = tpu.matmul %552, %553, %cst_237 {dimension_numbers = #tpu.dot_dimension_numbers<[1], [0], [0], [1], [0, 0, 1, 1], [], []>} : vector<120x124xbf16>, vector<124x128xbf16>, vector<120x128xf32> -> vector<120x128xf32>
    %555 = arith.addf %551, %554 : vector<120x128xf32>
    %c1400 = arith.constant 1400 : index
    %c0_238 = arith.constant 0 : index
    %556 = vector.load %arg6[%c1400, %c0_238] : memref<1760x128xbf16, #tpu.memory_space<vmem>>, vector<120x124xbf16>
    %557 = vector.extract_strided_slice %548 {offsets = [0, 256], sizes = [124, 128], strides = [1, 1]} : vector<124x640xbf16> to vector<124x128xbf16>
    %cst_239 = arith.constant dense<0.000000e+00> : vector<120x128xf32>
    %558 = tpu.matmul %556, %557, %cst_239 {dimension_numbers = #tpu.dot_dimension_numbers<[1], [0], [0], [1], [0, 0, 1, 1], [], []>} : vector<120x124xbf16>, vector<124x128xbf16>, vector<120x128xf32> -> vector<120x128xf32>
    %559 = arith.addf %555, %558 : vector<120x128xf32>
    %c1520 = arith.constant 1520 : index
    %c0_240 = arith.constant 0 : index
    %560 = vector.load %arg6[%c1520, %c0_240] : memref<1760x128xbf16, #tpu.memory_space<vmem>>, vector<120x124xbf16>
    %561 = vector.extract_strided_slice %548 {offsets = [0, 384], sizes = [124, 128], strides = [1, 1]} : vector<124x640xbf16> to vector<124x128xbf16>
    %cst_241 = arith.constant dense<0.000000e+00> : vector<120x128xf32>
    %562 = tpu.matmul %560, %561, %cst_241 {dimension_numbers = #tpu.dot_dimension_numbers<[1], [0], [0], [1], [0, 0, 1, 1], [], []>} : vector<120x124xbf16>, vector<124x128xbf16>, vector<120x128xf32> -> vector<120x128xf32>
    %563 = arith.addf %559, %562 : vector<120x128xf32>
    %c1640 = arith.constant 1640 : index
    %c0_242 = arith.constant 0 : index
    %564 = vector.load %arg6[%c1640, %c0_242] : memref<1760x128xbf16, #tpu.memory_space<vmem>>, vector<120x124xbf16>
    %565 = vector.extract_strided_slice %548 {offsets = [0, 512], sizes = [124, 128], strides = [1, 1]} : vector<124x640xbf16> to vector<124x128xbf16>
    %cst_243 = arith.constant dense<0.000000e+00> : vector<120x128xf32>
    %566 = tpu.matmul %564, %565, %cst_243 {dimension_numbers = #tpu.dot_dimension_numbers<[1], [0], [0], [1], [0, 0, 1, 1], [], []>} : vector<120x124xbf16>, vector<124x128xbf16>, vector<120x128xf32> -> vector<120x128xf32>
    %567 = arith.addf %563, %566 : vector<120x128xf32>
    %c26 = arith.constant 26 : index
    %c0_244 = arith.constant 0 : index
    %568 = vector.load %arg7[%c26, %c0_244] : memref<27x512xf32, #tpu.memory_space<vmem>>, vector<1x128xf32>
    %569 = vector.broadcast %568 : vector<1x128xf32> to vector<120x128xf32>
    %570 = arith.addf %567, %569 : vector<120x128xf32>
    %571 = arith.negf %570 : vector<120x128xf32>
    %572 = math.exp %571 : vector<120x128xf32>
    %cst_245 = arith.constant 1.000000e+00 : f32
    %573 = vector.broadcast %cst_245 : f32 to vector<120x128xf32>
    %574 = arith.addf %573, %572 : vector<120x128xf32>
    %575 = arith.divf %573, %574 : vector<120x128xf32>
    %c0_246 = arith.constant 0 : index
    %c0_247 = arith.constant 0 : index
    %576 = vector.load %arg9[%c0_246, %c0_247] : memref<120x128xf32, #tpu.memory_space<vmem>>, vector<120x128xf32>
    tpu.vector_store %arg9[%c0_246, %c0_247], %575 {strides = array<i32>} : memref<120x128xf32, #tpu.memory_space<vmem>>, vector<120x128xf32>,
    return
  }
}

</mosaic_0001>

<llo_original>
// kernel: forward.1
$region0: #{forward.1}
  #allocation0 [shape = 'u32[]', space=smem, size = 0x4, offset = 0x4, fixed_abs, tag = 'smem constant byte address 0x4 - core index']
  #allocation1 [shape = 'u32[72,128]{1,0:T(1,128)}', space=vmem, size = 0x9000, scoped, tag = 'internal scratch']
  %s0 = inlined_call_operand.vmem [shape: bf16[128,128], index: 0, kind: input, shape index: {}]
  %s1 = inlined_call_operand.hbm [shape: bf16[512,256], index: 1, kind: input, shape index: {}]
  %s2 = inlined_call_operand.hbm [shape: bf16[1280,384], index: 2, kind: input, shape index: {}]
  %s3 = inlined_call_operand.hbm [shape: bf16[896,512], index: 3, kind: input, shape index: {}]
  %s4 = inlined_call_operand.hbm [shape: bf16[128,640], index: 4, kind: input, shape index: {}]
  %s5 = inlined_call_operand.hbm [shape: bf16[128,768], index: 5, kind: input, shape index: {}]
  %s6 = inlined_call_operand.hbm [shape: bf16[1760,128], index: 6, kind: input, shape index: {}]
  %s7 = inlined_call_operand.vmem [shape: f32[27,512], index: 7, kind: input, shape index: {}]
  %s8 = inlined_call_operand.hbm [shape: f32[2,128], index: 8, kind: output, shape index: {0}]
  %s9 = inlined_call_operand.vmem [shape: f32[120,128], index: 9, kind: output, shape index: {1}]
  %10 = xla_tuple %s8, %s9
  %s11 = sld [smem:[#allocation0]]
  $region74: #{forward.1} parent=0
    _
  %s13 = ssub.s32 1, %s11
  %s14 = scalar_select 0, %s13, %s11
  $region1: #{forward.1} parent=0
    #allocation2 [shape = 'u8[262144]{0}', space=vmem, size = 0x40000, scoped, tag = 'input window, operand 1, single buffered']
    #allocation3 [shape = 's32[1]{0}', space=sflag, size = 0x4, scoped, tag = 'scoped memory for forward.1']
    #allocation4 [shape = 's32[1]{0}', space=sflag, size = 0x4, scoped, tag = 'scoped memory for forward.1']
    #allocation5 [shape = 'u8[983040]{0}', space=vmem, size = 0xf0000, scoped, tag = 'input window, operand 2, single buffered']
    #allocation6 [shape = 's32[1]{0}', space=sflag, size = 0x4, scoped, tag = 'scoped memory for forward.1']
    #allocation7 [shape = 'u8[917504]{0}', space=vmem, size = 0xe0000, scoped, tag = 'input window, operand 3, single buffered']
    #allocation8 [shape = 'u8[163840]{0}', space=vmem, size = 0x28000, scoped, tag = 'input window, operand 4, single buffered']
    #allocation9 [shape = 's32[1]{0}', space=sflag, size = 0x4, scoped, tag = 'scoped memory for forward.1']
    #allocation10 [shape = 'u8[196608]{0}', space=vmem, size = 0x30000, scoped, tag = 'input window, operand 5, single buffered']
    #allocation11 [shape = 'u8[450560]{0}', space=vmem, size = 0x6e000, scoped, tag = 'input window, operand 6, single buffered']
    #allocation12 [shape = 's32[1]{0}', space=sflag, size = 0x4, scoped, tag = 'scoped memory for forward.1']
    #allocation13 [shape = 'u8[1024]{0}', space=vmem, size = 0x400, scoped, tag = 'output window, operand 0, single buffered']
    %15 = vsyncpa [#allocation3], 0
    %16 = vsyncpa [#allocation6], 0
    %17 = vsyncpa [#allocation9], 0
    %18 = vsyncpa [#allocation12], 0
    %19 = vsyncpa [#allocation4], 0
    // Predicated region
    $region2: #{forward.1} parent=1 // pred_check
      _
    $region3: #{forward.1} parent=1 // pred_check_branch
      %21 = sbr.rel (0) target = $region5
    $region4: #{forward.1} parent=1 // pred_region
      _
    $region5: #{forward.1} parent=1 // pred_fallthru
      _
    // Predicated region
    $region6: #{forward.1} parent=1 // pred_check
      _
    $region7: #{forward.1} parent=1 // pred_check_branch
      %23 = sbr.rel (0) target = $region9
    $region8: #{forward.1} parent=1 // pred_region
      %25 = vsyncadd [#allocation3], 0
      %s26 = sshll.u32 %s1, 4
      %s27 = int_to_ptr.hbm [resolvable:$true] %s26
      %s28 = sshll.u32 [#allocation2], 4
      %s29 = int_to_ptr.vmem [resolvable:$true] %s28
      %34 = dma.hbm_to_vmem [thread:$0]  %s27, 8192, %s29, [#allocation3], 128, 128, 8
    $region9: #{forward.1} parent=1 // pred_fallthru
      _
    // Predicated region
    $region10: #{forward.1} parent=1 // pred_check
      _
    $region11: #{forward.1} parent=1 // pred_check_branch
      %36 = sbr.rel (0) target = $region13
    $region12: #{forward.1} parent=1 // pred_region
      %38 = vsyncadd [#allocation6], 0
      %s39 = sshll.u32 %s2, 4
      %s40 = int_to_ptr.hbm [resolvable:$true] %s39
      %s41 = sshll.u32 [#allocation5], 4
      %s42 = int_to_ptr.vmem [resolvable:$true] %s41
      %47 = dma.hbm_to_vmem [thread:$0]  %s40, 30720, %s42, [#allocation6], 192, 192, 12
    $region13: #{forward.1} parent=1 // pred_fallthru
      _
    // Predicated region
    $region14: #{forward.1} parent=1 // pred_check
      _
    $region15: #{forward.1} parent=1 // pred_check_branch
      %49 = sbr.rel (0) target = $region17
    $region16: #{forward.1} parent=1 // pred_region
      %51 = vsyncadd [#allocation6], 0
      %s52 = sshll.u32 %s3, 4
      %s53 = int_to_ptr.hbm [resolvable:$true] %s52
      %s54 = sshll.u32 [#allocation7], 4
      %s55 = int_to_ptr.vmem [resolvable:$true] %s54
      %60 = dma.hbm_to_vmem [thread:$0]  %s53, 28672, %s55, [#allocation6], 256, 256, 16
    $region17: #{forward.1} parent=1 // pred_fallthru
      _
    // Predicated region
    $region18: #{forward.1} parent=1 // pred_check
      _
    $region19: #{forward.1} parent=1 // pred_check_branch
      %62 = sbr.rel (0) target = $region21
    $region20: #{forward.1} parent=1 // pred_region
      %64 = vsyncadd [#allocation9], 0
      %s65 = sshll.u32 %s4, 4
      %s66 = int_to_ptr.hbm [resolvable:$true] %s65
      %s67 = sshll.u32 [#allocation8], 4
      %s68 = int_to_ptr.vmem [resolvable:$true] %s67
      %73 = dma.hbm_to_vmem [thread:$0]  %s66, 5120, %s68, [#allocation9], 320, 320, 20
    $region21: #{forward.1} parent=1 // pred_fallthru
      _
    // Predicated region
    $region22: #{forward.1} parent=1 // pred_check
      _
    $region23: #{forward.1} parent=1 // pred_check_branch
      %75 = sbr.rel (0) target = $region25
    $region24: #{forward.1} parent=1 // pred_region
      %77 = vsyncadd [#allocation9], 0
      %s78 = sshll.u32 %s5, 4
      %s79 = int_to_ptr.hbm [resolvable:$true] %s78
      %s80 = sshll.u32 [#allocation10], 4
      %s81 = int_to_ptr.vmem [resolvable:$true] %s80
      %86 = dma.hbm_to_vmem [thread:$0]  %s79, 6144, %s81, [#allocation9], 384, 384, 24
    $region25: #{forward.1} parent=1 // pred_fallthru
      _
    // Predicated region
    $region26: #{forward.1} parent=1 // pred_check
      _
    $region27: #{forward.1} parent=1 // pred_check_branch
      %88 = sbr.rel (0) target = $region29
    $region28: #{forward.1} parent=1 // pred_region
      %90 = vsyncadd [#allocation12], 0
      %s91 = sshll.u32 %s6, 4
      %s92 = int_to_ptr.hbm [resolvable:$true] %s91
      %s93 = sshll.u32 [#allocation11], 4
      %s94 = int_to_ptr.vmem [resolvable:$true] %s93
      %99 = dma.hbm_to_vmem [thread:$0]  %s92, 14080, %s94, [#allocation12], 64, 64, 4
    $region29: #{forward.1} parent=1 // pred_fallthru
      _
    // Predicated region
    $region30: #{forward.1} parent=1 // pred_check
      _
    $region31: #{forward.1} parent=1 // pred_check_branch
      %101 = sbr.rel (0) target = $region33
    $region32: #{forward.1} parent=1 // pred_region
      _
    $region33: #{forward.1} parent=1 // pred_fallthru
      _
    // Predicated region
    $region34: #{forward.1} parent=1 // pred_check
      _
    $region35: #{forward.1} parent=1 // pred_check_branch
      %103 = sbr.rel (0) target = $region37
    $region36: #{forward.1} parent=1 // pred_region
      %105 = dma.done [#allocation3], 8192
    $region37: #{forward.1} parent=1 // pred_fallthru
      _
    // Predicated region
    $region38: #{forward.1} parent=1 // pred_check
      _
    $region39: #{forward.1} parent=1 // pred_check_branch
      %107 = sbr.rel (0) target = $region41
    $region40: #{forward.1} parent=1 // pred_region
      %109 = dma.done [#allocation6], 30720
    $region41: #{forward.1} parent=1 // pred_fallthru
      _
    // Predicated region
    $region42: #{forward.1} parent=1 // pred_check
      _
    $region43: #{forward.1} parent=1 // pred_check_branch
      %111 = sbr.rel (0) target = $region45
    $region44: #{forward.1} parent=1 // pred_region
      %113 = dma.done [#allocation6], 28672
    $region45: #{forward.1} parent=1 // pred_fallthru
      _
    // Predicated region
    $region46: #{forward.1} parent=1 // pred_check
      _
    $region47: #{forward.1} parent=1 // pred_check_branch
      %115 = sbr.rel (0) target = $region49
    $region48: #{forward.1} parent=1 // pred_region
      %117 = dma.done [#allocation9], 5120
    $region49: #{forward.1} parent=1 // pred_fallthru
      _
    // Predicated region
    $region50: #{forward.1} parent=1 // pred_check
      _
    $region51: #{forward.1} parent=1 // pred_check_branch
      %119 = sbr.rel (0) target = $region53
    $region52: #{forward.1} parent=1 // pred_region
      %121 = dma.done [#allocation9], 6144
    $region53: #{forward.1} parent=1 // pred_fallthru
      _
    // Predicated region
    $region54: #{forward.1} parent=1 // pred_check
      _
    $region55: #{forward.1} parent=1 // pred_check_branch
      %123 = sbr.rel (0) target = $region57
    $region56: #{forward.1} parent=1 // pred_region
      %125 = dma.done [#allocation12], 14080
    $region57: #{forward.1} parent=1 // pred_fallthru
      _
    %v127 = vld [vmem:[%s0] sm:$0xf]
    %v128 = vld [vmem:[%s0 + $0x4] sm:$0xf]
    %v129 = vld [vmem:[%s0 + $0x8] sm:$0xf]
    %v130 = vld [vmem:[%s0 + $0xc] sm:$0xf]
    %v131 = vld [vmem:[%s0 + $0x10] sm:$0xf]
    %v132 = vld [vmem:[%s0 + $0x14] sm:$0xf]
    %v133 = vld [vmem:[%s0 + $0x18] sm:$0xf]
    %v134 = vld [vmem:[%s0 + $0x1c] sm:$0xf]
    %v135 = vld [vmem:[%s0 + $0x20] sm:$0xf]
    %v136 = vld [vmem:[%s0 + $0x24] sm:$0xf]
    %v137 = vld [vmem:[%s0 + $0x28] sm:$0xf]
    %v138 = vld [vmem:[%s0 + $0x2c] sm:$0xf]
    %v139 = vld [vmem:[%s0 + $0x30] sm:$0xf]
    %v140 = vld [vmem:[%s0 + $0x34] sm:$0xf]
    %v141 = vld [vmem:[%s0 + $0x38] sm:$0xf]
    %v142 = vld [vmem:[%s0 + $0x3c] sm:$0xf]
    %v143 = vld [vmem:[#allocation5] sm:$0xff]
    %v144 = vld [vmem:[#allocation5 + $0x8] sm:$0xf]
    %v145 = vld [vmem:[#allocation5 + $0xc] sm:$0xff]
    %v146 = vld [vmem:[#allocation5 + $0x14] sm:$0xf]
    %v147 = vld [vmem:[#allocation5 + $0x18] sm:$0xff]
    %v148 = vld [vmem:[#allocation5 + $0x20] sm:$0xf]
    %v149 = vld [vmem:[#allocation5 + $0x24] sm:$0xff]
    %v150 = vld [vmem:[#allocation5 + $0x2c] sm:$0xf]
    %v151 = vld [vmem:[#allocation5 + $0x30] sm:$0xff]
    %v152 = vld [vmem:[#allocation5 + $0x38] sm:$0xf]
    %v153 = vld [vmem:[#allocation5 + $0x3c] sm:$0xff]
    %v154 = vld [vmem:[#allocation5 + $0x44] sm:$0xf]
    %v155 = vld [vmem:[#allocation5 + $0x48] sm:$0xff]
    %v156 = vld [vmem:[#allocation5 + $0x50] sm:$0xf]
    %v157 = vld [vmem:[#allocation5 + $0x54] sm:$0xff]
    %v158 = vld [vmem:[#allocation5 + $0x5c] sm:$0xf]
    %v159 = vld [vmem:[#allocation5 + $0x60] sm:$0xff]
    %v160 = vld [vmem:[#allocation5 + $0x68] sm:$0xf]
    %v161 = vld [vmem:[#allocation5 + $0x6c] sm:$0xff]
    %v162 = vld [vmem:[#allocation5 + $0x74] sm:$0xf]
    %v163 = vld [vmem:[#allocation5 + $0x78] sm:$0xff]
    %v164 = vld [vmem:[#allocation5 + $0x80] sm:$0xf]
    %v165 = vld [vmem:[#allocation5 + $0x84] sm:$0xff]
    %v166 = vld [vmem:[#allocation5 + $0x8c] sm:$0xf]
    %v167 = vld [vmem:[#allocation5 + $0x90] sm:$0xff]
    %v168 = vld [vmem:[#allocation5 + $0x98] sm:$0xf]
    %v169 = vld [vmem:[#allocation5 + $0x9c] sm:$0xff]
    %v170 = vld [vmem:[#allocation5 + $0xa4] sm:$0xf]
    %v171 = vld [vmem:[#allocation5 + $0xa8] sm:$0xff]
    %v172 = vld [vmem:[#allocation5 + $0xb0] sm:$0xf]
    %v173 = vld [vmem:[#allocation5 + $0xb4] sm:$0xff]
    %v174 = vld [vmem:[#allocation5 + $0xbc] sm:$0xf]
    %v191 = vunpack.c.l.b16 %v127
    %v192 = vunpack.c.l.b16 %v128
    %v193 = vunpack.c.l.b16 %v129
    %v194 = vunpack.c.l.b16 %v130
    %v195 = vunpack.c.l.b16 %v131
    %v196 = vunpack.c.l.b16 %v132
    %v197 = vunpack.c.l.b16 %v133
    %v198 = vunpack.c.l.b16 %v134
    %v199 = vunpack.c.l.b16 %v135
    %v200 = vunpack.c.l.b16 %v136
    %v201 = vunpack.c.l.b16 %v137
    %v202 = vunpack.c.l.b16 %v138
    %v203 = vunpack.c.l.b16 %v139
    %v204 = vunpack.c.l.b16 %v140
    %v205 = vunpack.c.l.b16 %v141
    %v206 = vunpack.c.l.b16 %v142
    %v207 = vpack.c.b16 %v192, %v191
    %v208 = vpack.c.b16 %v194, %v193
    %v209 = vpack.c.b16 %v196, %v195
    %v210 = vpack.c.b16 %v198, %v197
    %v211 = vpack.c.b16 %v200, %v199
    %v212 = vpack.c.b16 %v202, %v201
    %v213 = vpack.c.b16 %v204, %v203
    %v214 = vpack.c.b16 %v206, %v205
    %v255 = vunpack.c.l.b16 %v143
    %v256 = vunpack.c.h.b16 %v143
    %v257 = vunpack.c.l.b16 %v144
    %v258 = vunpack.c.l.b16 %v145
    %v259 = vunpack.c.h.b16 %v145
    %v260 = vunpack.c.l.b16 %v146
    %v261 = vunpack.c.l.b16 %v147
    %v262 = vunpack.c.h.b16 %v147
    %v263 = vunpack.c.l.b16 %v148
    %v264 = vunpack.c.l.b16 %v149
    %v265 = vunpack.c.h.b16 %v149
    %v266 = vunpack.c.l.b16 %v150
    %v267 = vunpack.c.l.b16 %v151
    %v268 = vunpack.c.h.b16 %v151
    %v269 = vunpack.c.l.b16 %v152
    %v270 = vunpack.c.l.b16 %v153
    %v271 = vunpack.c.h.b16 %v153
    %v272 = vunpack.c.l.b16 %v154
    %v273 = vunpack.c.l.b16 %v155
    %v274 = vunpack.c.h.b16 %v155
    %v275 = vunpack.c.l.b16 %v156
    %v276 = vunpack.c.l.b16 %v157
    %v277 = vunpack.c.h.b16 %v157
    %v278 = vunpack.c.l.b16 %v158
    %v279 = vunpack.c.l.b16 %v159
    %v280 = vunpack.c.h.b16 %v159
    %v281 = vunpack.c.l.b16 %v160
    %v282 = vunpack.c.l.b16 %v161
    %v283 = vunpack.c.h.b16 %v161
    %v284 = vunpack.c.l.b16 %v162
    %v285 = vunpack.c.l.b16 %v163
    %v286 = vunpack.c.h.b16 %v163
    %v287 = vunpack.c.l.b16 %v164
    %v288 = vunpack.c.l.b16 %v165
    %v289 = vunpack.c.h.b16 %v165
    %v290 = vunpack.c.l.b16 %v166
    %v291 = vunpack.c.l.b16 %v167
    %v292 = vunpack.c.h.b16 %v167
    %v293 = vunpack.c.l.b16 %v168
    %v294 = vunpack.c.l.b16 %v169
    %v295 = vunpack.c.h.b16 %v169
    %v296 = vunpack.c.l.b16 %v170
    %v297 = vunpack.c.l.b16 %v171
    %v298 = vunpack.c.h.b16 %v171
    %v299 = vunpack.c.l.b16 %v172
    %v300 = vunpack.c.l.b16 %v173
    %v301 = vunpack.c.h.b16 %v173
    %v302 = vunpack.c.l.b16 %v174
    %v303 = vpack.c.b16 %v258, %v255
    %v304 = vpack.c.b16 %v259, %v256
    %v305 = vpack.c.b16 %v260, %v257
    %v306 = vpack.c.b16 %v264, %v261
    %v307 = vpack.c.b16 %v265, %v262
    %v308 = vpack.c.b16 %v266, %v263
    %v309 = vpack.c.b16 %v270, %v267
    %v310 = vpack.c.b16 %v271, %v268
    %v311 = vpack.c.b16 %v272, %v269
    %v312 = vpack.c.b16 %v276, %v273
    %v313 = vpack.c.b16 %v277, %v274
    %v314 = vpack.c.b16 %v278, %v275
    %v315 = vpack.c.b16 %v282, %v279
    %v316 = vpack.c.b16 %v283, %v280
    %v317 = vpack.c.b16 %v284, %v281
    %v318 = vpack.c.b16 %v288, %v285
    %v319 = vpack.c.b16 %v289, %v286
    %v320 = vpack.c.b16 %v290, %v287
    %v321 = vpack.c.b16 %v294, %v291
    %v322 = vpack.c.b16 %v295, %v292
    %v323 = vpack.c.b16 %v296, %v293
    %v324 = vpack.c.b16 %v300, %v297
    %v325 = vpack.c.b16 %v301, %v298
    %v326 = vpack.c.b16 %v302, %v299
    %351 = vmatpush.bf16.msra.mxu0 %v324
    %352 = vmatpush.bf16.msra.mxu0 %v321
    %353 = vmatpush.bf16.msra.mxu0 %v318
    %354 = vmatpush.bf16.msra.mxu0 %v315
    %355 = vmatpush.bf16.msra.mxu0 %v312
    %356 = vmatpush.bf16.msra.mxu0 %v309
    %357 = vmatpush.bf16.msra.mxu0 %v306
    %358 = vmatpush.bf16.msra.mxu0 %v303
    %359 = vmatmul.bf16.gmra.mxu0 %v207
    %v360 = vpop.f32.mrf.mxu0
    %v361 = vadd.f32 0.0, %v360
    %v362 = vpop.f32.mrf.mxu0
    %v363 = vadd.f32 0.0, %v362
    %364 = vmatmul.bf16.gmra.mxu0 %v208
    %v365 = vpop.f32.mrf.mxu0
    %v366 = vadd.f32 0.0, %v365
    %v367 = vpop.f32.mrf.mxu0
    %v368 = vadd.f32 0.0, %v367
    %369 = vmatmul.bf16.gmra.mxu0 %v209
    %v370 = vpop.f32.mrf.mxu0
    %v371 = vadd.f32 0.0, %v370
    %v372 = vpop.f32.mrf.mxu0
    %v373 = vadd.f32 0.0, %v372
    %374 = vmatmul.bf16.gmra.mxu0 %v210
    %v375 = vpop.f32.mrf.mxu0
    %v376 = vadd.f32 0.0, %v375
    %v377 = vpop.f32.mrf.mxu0
    %v378 = vadd.f32 0.0, %v377
    %379 = vmatmul.bf16.gmra.mxu0 %v211
    %v380 = vpop.f32.mrf.mxu0
    %v381 = vadd.f32 0.0, %v380
    %v382 = vpop.f32.mrf.mxu0
    %v383 = vadd.f32 0.0, %v382
    %384 = vmatmul.bf16.gmra.mxu0 %v212
    %v385 = vpop.f32.mrf.mxu0
    %v386 = vadd.f32 0.0, %v385
    %v387 = vpop.f32.mrf.mxu0
    %v388 = vadd.f32 0.0, %v387
    %389 = vmatmul.bf16.gmra.mxu0 %v213
    %v390 = vpop.f32.mrf.mxu0
    %v391 = vadd.f32 0.0, %v390
    %v392 = vpop.f32.mrf.mxu0
    %v393 = vadd.f32 0.0, %v392
    %394 = vmatmul.bf16.gmra.mxu0 %v214
    %v395 = vpop.f32.mrf.mxu0
    %v396 = vadd.f32 0.0, %v395
    %v397 = vpop.f32.mrf.mxu0
    %v398 = vadd.f32 0.0, %v397
    %399 = vdwg.mxu0
    %400 = vmatpush.bf16.msra.mxu0 %v325
    %401 = vmatpush.bf16.msra.mxu0 %v322
    %402 = vmatpush.bf16.msra.mxu0 %v319
    %403 = vmatpush.bf16.msra.mxu0 %v316
    %404 = vmatpush.bf16.msra.mxu0 %v313
    %405 = vmatpush.bf16.msra.mxu0 %v310
    %406 = vmatpush.bf16.msra.mxu0 %v307
    %407 = vmatpush.bf16.msra.mxu0 %v304
    %408 = vmatmul.bf16.gmra.mxu0 %v207
    %v409 = vpop.f32.mrf.mxu0
    %v410 = vadd.f32 0.0, %v409
    %v411 = vpop.f32.mrf.mxu0
    %v412 = vadd.f32 0.0, %v411
    %413 = vmatmul.bf16.gmra.mxu0 %v208
    %v414 = vpop.f32.mrf.mxu0
    %v415 = vadd.f32 0.0, %v414
    %v416 = vpop.f32.mrf.mxu0
    %v417 = vadd.f32 0.0, %v416
    %418 = vmatmul.bf16.gmra.mxu0 %v209
    %v419 = vpop.f32.mrf.mxu0
    %v420 = vadd.f32 0.0, %v419
    %v421 = vpop.f32.mrf.mxu0
    %v422 = vadd.f32 0.0, %v421
    %423 = vmatmul.bf16.gmra.mxu0 %v210
    %v424 = vpop.f32.mrf.mxu0
    %v425 = vadd.f32 0.0, %v424
    %v426 = vpop.f32.mrf.mxu0
    %v427 = vadd.f32 0.0, %v426
    %428 = vmatmul.bf16.gmra.mxu0 %v211
    %v429 = vpop.f32.mrf.mxu0
    %v430 = vadd.f32 0.0, %v429
    %v431 = vpop.f32.mrf.mxu0
    %v432 = vadd.f32 0.0, %v431
    %433 = vmatmul.bf16.gmra.mxu0 %v212
    %v434 = vpop.f32.mrf.mxu0
    %v435 = vadd.f32 0.0, %v434
    %v436 = vpop.f32.mrf.mxu0
    %v437 = vadd.f32 0.0, %v436
    %438 = vmatmul.bf16.gmra.mxu0 %v213
    %v439 = vpop.f32.mrf.mxu0
    %v440 = vadd.f32 0.0, %v439
    %v441 = vpop.f32.mrf.mxu0
    %v442 = vadd.f32 0.0, %v441
    %443 = vmatmul.bf16.gmra.mxu0 %v214
    %v444 = vpop.f32.mrf.mxu0
    %v445 = vadd.f32 0.0, %v444
    %v446 = vpop.f32.mrf.mxu0
    %v447 = vadd.f32 0.0, %v446
    %448 = vdwg.mxu0
    %449 = vmatpush.bf16.msra.mxu0 %v326
    %450 = vmatpush.bf16.msra.mxu0 %v323
    %451 = vmatpush.bf16.msra.mxu0 %v320
    %452 = vmatpush.bf16.msra.mxu0 %v317
    %453 = vmatpush.bf16.msra.mxu0 %v314
    %454 = vmatpush.bf16.msra.mxu0 %v311
    %455 = vmatpush.bf16.msra.mxu0 %v308
    %456 = vmatpush.bf16.msra.mxu0 %v305
    %457 = vmatmul.bf16.gmra.mxu0 %v207
    %v458 = vpop.f32.mrf.mxu0
    %v459 = vadd.f32 0.0, %v458
    %v460 = vpop.f32.mrf.mxu0
    %v461 = vadd.f32 0.0, %v460
    %462 = vmatmul.bf16.gmra.mxu0 %v208
    %v463 = vpop.f32.mrf.mxu0
    %v464 = vadd.f32 0.0, %v463
    %v465 = vpop.f32.mrf.mxu0
    %v466 = vadd.f32 0.0, %v465
    %467 = vmatmul.bf16.gmra.mxu0 %v209
    %v468 = vpop.f32.mrf.mxu0
    %v469 = vadd.f32 0.0, %v468
    %v470 = vpop.f32.mrf.mxu0
    %v471 = vadd.f32 0.0, %v470
    %472 = vmatmul.bf16.gmra.mxu0 %v210
    %v473 = vpop.f32.mrf.mxu0
    %v474 = vadd.f32 0.0, %v473
    %v475 = vpop.f32.mrf.mxu0
    %v476 = vadd.f32 0.0, %v475
    %477 = vmatmul.bf16.gmra.mxu0 %v211
    %v478 = vpop.f32.mrf.mxu0
    %v479 = vadd.f32 0.0, %v478
    %v480 = vpop.f32.mrf.mxu0
    %v481 = vadd.f32 0.0, %v480
    %482 = vmatmul.bf16.gmra.mxu0 %v212
    %v483 = vpop.f32.mrf.mxu0
    %v484 = vadd.f32 0.0, %v483
    %v485 = vpop.f32.mrf.mxu0
    %v486 = vadd.f32 0.0, %v485
    %487 = vmatmul.bf16.gmra.mxu0 %v213
    %v488 = vpop.f32.mrf.mxu0
    %v489 = vadd.f32 0.0, %v488
    %v490 = vpop.f32.mrf.mxu0
    %v491 = vadd.f32 0.0, %v490
    %492 = vmatmul.bf16.gmra.mxu0 %v214
    %v493 = vpop.f32.mrf.mxu0
    %v494 = vadd.f32 0.0, %v493
    %v495 = vpop.f32.mrf.mxu0
    %v496 = vadd.f32 0.0, %v495
    %497 = vdwg.mxu0
    %v498 = vpack.c.bf16 %v410, %v361
    %v499 = vpack.c.bf16 %v459, %v459
    %v500 = vpack.c.bf16 %v412, %v363
    %v501 = vpack.c.bf16 %v461, %v461
    %v502 = vpack.c.bf16 %v415, %v366
    %v503 = vpack.c.bf16 %v464, %v464
    %v504 = vpack.c.bf16 %v417, %v368
    %v505 = vpack.c.bf16 %v466, %v466
    %v506 = vpack.c.bf16 %v420, %v371
    %v507 = vpack.c.bf16 %v469, %v469
    %v508 = vpack.c.bf16 %v422, %v373
    %v509 = vpack.c.bf16 %v471, %v471
    %v510 = vpack.c.bf16 %v425, %v376
    %v511 = vpack.c.bf16 %v474, %v474
    %v512 = vpack.c.bf16 %v427, %v378
    %v513 = vpack.c.bf16 %v476, %v476
    %v514 = vpack.c.bf16 %v430, %v381
    %v515 = vpack.c.bf16 %v479, %v479
    %v516 = vpack.c.bf16 %v432, %v383
    %v517 = vpack.c.bf16 %v481, %v481
    %v518 = vpack.c.bf16 %v435, %v386
    %v519 = vpack.c.bf16 %v484, %v484
    %v520 = vpack.c.bf16 %v437, %v388
    %v521 = vpack.c.bf16 %v486, %v486
    %v522 = vpack.c.bf16 %v440, %v391
    %v523 = vpack.c.bf16 %v489, %v489
    %v524 = vpack.c.bf16 %v442, %v393
    %v525 = vpack.c.bf16 %v491, %v491
    %v526 = vpack.c.bf16 %v445, %v396
    %v527 = vpack.c.bf16 %v494, %v494
    %v528 = vpack.c.bf16 %v447, %v398
    %v529 = vpack.c.bf16 %v496, %v496
    %v530 = vld [vmem:[#allocation11] sm:$0xf]
    %v531 = vld [vmem:[#allocation11 + $0x4] sm:$0xf]
    %v532 = vld [vmem:[#allocation11 + $0x8] sm:$0xf]
    %v533 = vld [vmem:[#allocation11 + $0xc] sm:$0xf]
    %v534 = vld [vmem:[#allocation11 + $0x10] sm:$0xf]
    %v535 = vld [vmem:[#allocation11 + $0x14] sm:$0xf]
    %v536 = vld [vmem:[#allocation11 + $0x18] sm:$0xf]
    %v537 = vld [vmem:[#allocation11 + $0x1c] sm:$0xf]
    %v538 = vld [vmem:[#allocation11 + $0x20] sm:$0xf]
    %v539 = vld [vmem:[#allocation11 + $0x24] sm:$0xf]
    %v540 = vld [vmem:[#allocation11 + $0x28] sm:$0xf]
    %v541 = vld [vmem:[#allocation11 + $0x2c] sm:$0xf]
    %v542 = vld [vmem:[#allocation11 + $0x30] sm:$0xf]
    %v543 = vld [vmem:[#allocation11 + $0x34] sm:$0xf]
    %v544 = vld [vmem:[#allocation11 + $0x38] sm:$0xf]
    %v545 = vld [vmem:[#allocation11 + $0x3c] sm:$0xf]
    %v554 = vunpack.c.l.b16 %v538
    %v555 = vunpack.c.l.b16 %v539
    %v556 = vunpack.c.l.b16 %v540
    %v557 = vunpack.c.l.b16 %v541
    %v558 = vunpack.c.l.b16 %v542
    %v559 = vunpack.c.l.b16 %v543
    %v560 = vunpack.c.l.b16 %v544
    %v561 = vunpack.c.l.b16 %v545
    %v562 = vpack.c.b16 %v555, %v554
    %v563 = vpack.c.b16 %v557, %v556
    %v564 = vpack.c.b16 %v559, %v558
    %v565 = vpack.c.b16 %v561, %v560
    %v586 = vunpack.c.h.b16 %v498
    %v587 = vunpack.c.h.b16 %v500
    %v588 = vunpack.c.h.b16 %v502
    %v589 = vunpack.c.h.b16 %v504
    %v590 = vunpack.c.h.b16 %v506
    %v591 = vunpack.c.h.b16 %v508
    %v592 = vunpack.c.h.b16 %v510
    %v593 = vunpack.c.h.b16 %v512
    %v594 = vunpack.c.h.b16 %v514
    %v595 = vunpack.c.h.b16 %v516
    %v596 = vunpack.c.h.b16 %v518
    %v597 = vunpack.c.h.b16 %v520
    %v598 = vunpack.c.h.b16 %v522
    %v599 = vunpack.c.h.b16 %v524
    %v600 = vunpack.c.h.b16 %v526
    %v601 = vunpack.c.h.b16 %v528
    %v602 = vpack.c.b16 %v587, %v586
    %v603 = vpack.c.b16 %v589, %v588
    %v604 = vpack.c.b16 %v591, %v590
    %v605 = vpack.c.b16 %v593, %v592
    %v606 = vpack.c.b16 %v595, %v594
    %v607 = vpack.c.b16 %v597, %v596
    %v608 = vpack.c.b16 %v599, %v598
    %v609 = vpack.c.b16 %v601, %v600
    %618 = vmatpush.bf16.msra.mxu0 %v609
    %619 = vmatpush.bf16.msra.mxu0 %v608
    %620 = vmatpush.bf16.msra.mxu0 %v607
    %621 = vmatpush.bf16.msra.mxu0 %v606
    %622 = vmatpush.bf16.msra.mxu0 %v605
    %623 = vmatpush.bf16.msra.mxu0 %v604
    %624 = vmatpush.bf16.msra.mxu0 %v603
    %625 = vmatpush.bf16.msra.mxu0 %v602
    %626 = vmatmul.bf16.gmra.mxu0 %v562
    %v627 = vpop.f32.mrf.mxu0
    %v628 = vadd.f32 0.0, %v627
    %v629 = vpop.f32.mrf.mxu0
    %v630 = vadd.f32 0.0, %v629
    %631 = vmatmul.bf16.gmra.mxu0 %v563
    %v632 = vpop.f32.mrf.mxu0
    %v633 = vadd.f32 0.0, %v632
    %v634 = vpop.f32.mrf.mxu0
    %v635 = vadd.f32 0.0, %v634
    %636 = vmatmul.bf16.gmra.mxu0 %v564
    %v637 = vpop.f32.mrf.mxu0
    %v638 = vadd.f32 0.0, %v637
    %v639 = vpop.f32.mrf.mxu0
    %v640 = vadd.f32 0.0, %v639
    %641 = vmatmul.bf16.gmra.mxu0 %v565
    %v642 = vpop.f32.mrf.mxu0
    %v643 = vadd.f32 0.0, %v642
    %v644 = vpop.f32.mrf.mxu0
    %v645 = vadd.f32 0.0, %v644
    %646 = vdwg.mxu0
    %v655 = vunpack.c.l.b16 %v530
    %v656 = vunpack.c.l.b16 %v531
    %v657 = vunpack.c.l.b16 %v532
    %v658 = vunpack.c.l.b16 %v533
    %v659 = vunpack.c.l.b16 %v534
    %v660 = vunpack.c.l.b16 %v535
    %v661 = vunpack.c.l.b16 %v536
    %v662 = vunpack.c.l.b16 %v537
    %v663 = vpack.c.b16 %v656, %v655
    %v664 = vpack.c.b16 %v658, %v657
    %v665 = vpack.c.b16 %v660, %v659
    %v666 = vpack.c.b16 %v662, %v661
    %v671 = vunpack.c.l.b16 %v498
    %v672 = vunpack.c.l.b16 %v500
    %v673 = vunpack.c.l.b16 %v502
    %v674 = vunpack.c.l.b16 %v504
    %v675 = vunpack.c.l.b16 %v506
    %v676 = vunpack.c.l.b16 %v508
    %v677 = vunpack.c.l.b16 %v510
    %v678 = vunpack.c.l.b16 %v512
    %v679 = vunpack.c.l.b16 %v514
    %v680 = vunpack.c.l.b16 %v516
    %v681 = vunpack.c.l.b16 %v518
    %v682 = vunpack.c.l.b16 %v520
    %v683 = vunpack.c.l.b16 %v522
    %v684 = vunpack.c.l.b16 %v524
    %v685 = vunpack.c.l.b16 %v526
    %v686 = vunpack.c.l.b16 %v528
    %v687 = vpack.c.b16 %v672, %v671
    %v688 = vpack.c.b16 %v674, %v673
    %v689 = vpack.c.b16 %v676, %v675
    %v690 = vpack.c.b16 %v678, %v677
    %v691 = vpack.c.b16 %v680, %v679
    %v692 = vpack.c.b16 %v682, %v681
    %v693 = vpack.c.b16 %v684, %v683
    %v694 = vpack.c.b16 %v686, %v685
    %703 = vmatpush.bf16.msra.mxu0 %v694
    %704 = vmatpush.bf16.msra.mxu0 %v693
    %705 = vmatpush.bf16.msra.mxu0 %v692
    %706 = vmatpush.bf16.msra.mxu0 %v691
    %707 = vmatpush.bf16.msra.mxu0 %v690
    %708 = vmatpush.bf16.msra.mxu0 %v689
    %709 = vmatpush.bf16.msra.mxu0 %v688
    %710 = vmatpush.bf16.msra.mxu0 %v687
    %711 = vmatmul.bf16.gmra.mxu0 %v663
    %v712 = vpop.f32.mrf.mxu0
    %v713 = vadd.f32 %v628, %v712
    %v714 = vpop.f32.mrf.mxu0
    %v715 = vadd.f32 %v630, %v714
    %716 = vmatmul.bf16.gmra.mxu0 %v664
    %v717 = vpop.f32.mrf.mxu0
    %v718 = vadd.f32 %v633, %v717
    %v719 = vpop.f32.mrf.mxu0
    %v720 = vadd.f32 %v635, %v719
    %721 = vmatmul.bf16.gmra.mxu0 %v665
    %v722 = vpop.f32.mrf.mxu0
    %v723 = vadd.f32 %v638, %v722
    %v724 = vpop.f32.mrf.mxu0
    %v725 = vadd.f32 %v640, %v724
    %726 = vmatmul.bf16.gmra.mxu0 %v666
    %v727 = vpop.f32.mrf.mxu0
    %v728 = vadd.f32 %v643, %v727
    %v729 = vpop.f32.mrf.mxu0
    %v730 = vadd.f32 %v645, %v729
    %731 = vdwg.mxu0
    %v732 = vld [vmem:[#allocation11 + $0x40] sm:$0xf]
    %v733 = vld [vmem:[#allocation11 + $0x44] sm:$0xf]
    %v734 = vld [vmem:[#allocation11 + $0x48] sm:$0xf]
    %v735 = vld [vmem:[#allocation11 + $0x4c] sm:$0xf]
    %v736 = vld [vmem:[#allocation11 + $0x50] sm:$0xf]
    %v737 = vld [vmem:[#allocation11 + $0x54] sm:$0xf]
    %v738 = vld [vmem:[#allocation11 + $0x58] sm:$0xf]
    %v739 = vld [vmem:[#allocation11 + $0x5c] sm:$0xf]
    %v748 = vunpack.c.l.b16 %v732
    %v749 = vunpack.c.l.b16 %v733
    %v750 = vunpack.c.l.b16 %v734
    %v751 = vunpack.c.l.b16 %v735
    %v752 = vunpack.c.l.b16 %v736
    %v753 = vunpack.c.l.b16 %v737
    %v754 = vunpack.c.l.b16 %v738
    %v755 = vunpack.c.l.b16 %v739
    %v756 = vpack.c.b16 %v749, %v748
    %v757 = vpack.c.b16 %v751, %v750
    %v758 = vpack.c.b16 %v753, %v752
    %v759 = vpack.c.b16 %v755, %v754
    %v780 = vunpack.c.l.b16 %v499
    %v781 = vunpack.c.l.b16 %v501
    %v782 = vunpack.c.l.b16 %v503
    %v783 = vunpack.c.l.b16 %v505
    %v784 = vunpack.c.l.b16 %v507
    %v785 = vunpack.c.l.b16 %v509
    %v786 = vunpack.c.l.b16 %v511
    %v787 = vunpack.c.l.b16 %v513
    %v788 = vunpack.c.l.b16 %v515
    %v789 = vunpack.c.l.b16 %v517
    %v790 = vunpack.c.l.b16 %v519
    %v791 = vunpack.c.l.b16 %v521
    %v792 = vunpack.c.l.b16 %v523
    %v793 = vunpack.c.l.b16 %v525
    %v794 = vunpack.c.l.b16 %v527
    %v795 = vunpack.c.l.b16 %v529
    %v796 = vpack.c.b16 %v781, %v780
    %v797 = vpack.c.b16 %v783, %v782
    %v798 = vpack.c.b16 %v785, %v784
    %v799 = vpack.c.b16 %v787, %v786
    %v800 = vpack.c.b16 %v789, %v788
    %v801 = vpack.c.b16 %v791, %v790
    %v802 = vpack.c.b16 %v793, %v792
    %v803 = vpack.c.b16 %v795, %v794
    %812 = vmatpush.bf16.msra.mxu0 %v803
    %813 = vmatpush.bf16.msra.mxu0 %v802
    %814 = vmatpush.bf16.msra.mxu0 %v801
    %815 = vmatpush.bf16.msra.mxu0 %v800
    %816 = vmatpush.bf16.msra.mxu0 %v799
    %817 = vmatpush.bf16.msra.mxu0 %v798
    %818 = vmatpush.bf16.msra.mxu0 %v797
    %819 = vmatpush.bf16.msra.mxu0 %v796
    %820 = vmatmul.bf16.gmra.mxu0 %v756
    %v821 = vpop.f32.mrf.mxu0
    %v822 = vadd.f32 0.0, %v821
    %v823 = vpop.f32.mrf.mxu0
    %v824 = vadd.f32 0.0, %v823
    %825 = vmatmul.bf16.gmra.mxu0 %v757
    %v826 = vpop.f32.mrf.mxu0
    %v827 = vadd.f32 0.0, %v826
    %v828 = vpop.f32.mrf.mxu0
    %v829 = vadd.f32 0.0, %v828
    %830 = vmatmul.bf16.gmra.mxu0 %v758
    %v831 = vpop.f32.mrf.mxu0
    %v832 = vadd.f32 0.0, %v831
    %v833 = vpop.f32.mrf.mxu0
    %v834 = vadd.f32 0.0, %v833
    %835 = vmatmul.bf16.gmra.mxu0 %v759
    %v836 = vpop.f32.mrf.mxu0
    %v837 = vadd.f32 0.0, %v836
    %v838 = vpop.f32.mrf.mxu0
    %v839 = vadd.f32 0.0, %v838
    %840 = vdwg.mxu0
    %v841 = vadd.f32 %v713, %v822
    %v842 = vadd.f32 %v715, %v824
    %v843 = vadd.f32 %v718, %v827
    %v844 = vadd.f32 %v720, %v829
    %v845 = vadd.f32 %v723, %v832
    %v846 = vadd.f32 %v725, %v834
    %v847 = vadd.f32 %v728, %v837
    %v848 = vadd.f32 %v730, %v839
    %v849 = vadd.f32 %v841, %v842
    %v850 = vadd.f32 %v849, %v843
    %v851 = vadd.f32 %v850, %v844
    %v852 = vadd.f32 %v851, %v845
    %v853 = vadd.f32 %v852, %v846
    %v854 = vadd.f32 %v853, %v847
    %v855 = vadd.f32 %v854, %v848
    %v856 = vrot.slane %v855, 4
    %v857 = vadd.f32 %v855, %v856
    %v858 = vrot.slane %v857, 2
    %v859 = vadd.f32 %v857, %v858
    %v860 = vrot.slane %v859, 1
    %v861 = vadd.f32 %v859, %v860
    %v862 = vmul.f32 %v861, 0.015625
    %v863 = vmul.f32 %v841, %v841
    %v864 = vmul.f32 %v842, %v842
    %v865 = vmul.f32 %v843, %v843
    %v866 = vmul.f32 %v844, %v844
    %v867 = vmul.f32 %v845, %v845
    %v868 = vmul.f32 %v846, %v846
    %v869 = vmul.f32 %v847, %v847
    %v870 = vmul.f32 %v848, %v848
    %v871 = vadd.f32 %v863, %v864
    %v872 = vadd.f32 %v871, %v865
    %v873 = vadd.f32 %v872, %v866
    %v874 = vadd.f32 %v873, %v867
    %v875 = vadd.f32 %v874, %v868
    %v876 = vadd.f32 %v875, %v869
    %v877 = vadd.f32 %v876, %v870
    %v878 = vrot.slane %v877, 4
    %v879 = vadd.f32 %v877, %v878
    %v880 = vrot.slane %v879, 2
    %v881 = vadd.f32 %v879, %v880
    %v882 = vrot.slane %v881, 1
    %v883 = vadd.f32 %v881, %v882
    %v884 = vmul.f32 %v883, 0.015625
    %v885 = vmul.f32 %v862, %v862
    %v886 = vsub.f32 %v884, %v885
    %v887 = vmax.f32 %v886, 0.0
    %v888 = vld [vmem:[%s7] ss:$0 sm:$0xff]
    %v889 = vld [vmem:[%s7 + $0x1] ss:$0 sm:$0xff]
    %v890 = vadd.f32 %v887, 1e-05
    %v891 = vrsqrt.pop %v890
    %v892 = vmul.f32 %v891, %v890
    %v893 = vmul.f32 %v892, %v891
    %v894 = vmul.f32 0.5, %v893
    %v895 = vsub.f32 1.5, %v894
    %v896 = vmul.f32 %v891, %v895
    %vm897 = vweird.f32 %v890
    %vm898 = vweird.f32 %v891
    %vm899 = vmor %vm897, %vm898
    %v900 = vsel %vm899, %v891, %v896
    %v901 = vmul.f32 %v900, %v888
    %v902 = vmul.f32 %v841, %v901
    %v903 = vmul.f32 %v842, %v901
    %v904 = vmul.f32 %v843, %v901
    %v905 = vmul.f32 %v844, %v901
    %v906 = vmul.f32 %v845, %v901
    %v907 = vmul.f32 %v846, %v901
    %v908 = vmul.f32 %v847, %v901
    %v909 = vmul.f32 %v848, %v901
    %v910 = vmul.f32 %v862, %v901
    %v911 = vsub.f32 %v889, %v910
    %v912 = vadd.f32 %v902, %v911
    %v913 = vadd.f32 %v903, %v911
    %v914 = vadd.f32 %v904, %v911
    %v915 = vadd.f32 %v905, %v911
    %v916 = vadd.f32 %v906, %v911
    %v917 = vadd.f32 %v907, %v911
    %v918 = vadd.f32 %v908, %v911
    %v919 = vadd.f32 %v909, %v911
    %vm920 = vcmp.ge.f32.partialorder %v912, 0.0
    %vm921 = vcmp.ge.f32.partialorder %v913, 0.0
    %vm922 = vcmp.ge.f32.partialorder %v914, 0.0
    %vm923 = vcmp.ge.f32.partialorder %v915, 0.0
    %vm924 = vcmp.ge.f32.partialorder %v916, 0.0
    %vm925 = vcmp.ge.f32.partialorder %v917, 0.0
    %vm926 = vcmp.ge.f32.partialorder %v918, 0.0
    %vm927 = vcmp.ge.f32.partialorder %v919, 0.0
    %v928 = vmul.f32 %v912, 0.01
    %v929 = vmul.f32 %v913, 0.01
    %v930 = vmul.f32 %v914, 0.01
    %v931 = vmul.f32 %v915, 0.01
    %v932 = vmul.f32 %v916, 0.01
    %v933 = vmul.f32 %v917, 0.01
    %v934 = vmul.f32 %v918, 0.01
    %v935 = vmul.f32 %v919, 0.01
    %v936 = vsel %vm920, %v912, %v928
    %v937 = vsel %vm921, %v913, %v929
    %v938 = vsel %vm922, %v914, %v930
    %v939 = vsel %vm923, %v915, %v931
    %v940 = vsel %vm924, %v916, %v932
    %v941 = vsel %vm925, %v917, %v933
    %v942 = vsel %vm926, %v918, %v934
    %v943 = vsel %vm927, %v919, %v935
    %v944 = vpack.c.bf16 %v937, %v936
    %v945 = vpack.c.bf16 %v939, %v938
    %v946 = vpack.c.bf16 %v941, %v940
    %v947 = vpack.c.bf16 %v943, %v942
    %v948 = vld [vmem:[#allocation5 + $0xc0] sm:$0xff]
    %v949 = vld [vmem:[#allocation5 + $0xc8] sm:$0xf]
    %v950 = vld [vmem:[#allocation5 + $0xcc] sm:$0xff]
    %v951 = vld [vmem:[#allocation5 + $0xd4] sm:$0xf]
    %v952 = vld [vmem:[#allocation5 + $0xd8] sm:$0xff]
    %v953 = vld [vmem:[#allocation5 + $0xe0] sm:$0xf]
    %v954 = vld [vmem:[#allocation5 + $0xe4] sm:$0xff]
    %v955 = vld [vmem:[#allocation5 + $0xec] sm:$0xf]
    %v956 = vld [vmem:[#allocation5 + $0xf0] sm:$0xff]
    %v957 = vld [vmem:[#allocation5 + $0xf8] sm:$0xf]
    %v958 = vld [vmem:[#allocation5 + $0xfc] sm:$0xff]
    %v959 = vld [vmem:[#allocation5 + $0x104] sm:$0xf]
    %v960 = vld [vmem:[#allocation5 + $0x108] sm:$0xff]
    %v961 = vld [vmem:[#allocation5 + $0x110] sm:$0xf]
    %v962 = vld [vmem:[#allocation5 + $0x114] sm:$0xff]
    %v963 = vld [vmem:[#allocation5 + $0x11c] sm:$0xf]
    %v964 = vld [vmem:[#allocation5 + $0x120] sm:$0xff]
    %v965 = vld [vmem:[#allocation5 + $0x128] sm:$0xf]
    %v966 = vld [vmem:[#allocation5 + $0x12c] sm:$0xff]
    %v967 = vld [vmem:[#allocation5 + $0x134] sm:$0xf]
    %v968 = vld [vmem:[#allocation5 + $0x138] sm:$0xff]
    %v969 = vld [vmem:[#allocation5 + $0x140] sm:$0xf]
    %v970 = vld [vmem:[#allocation5 + $0x144] sm:$0xff]
    %v971 = vld [vmem:[#allocation5 + $0x14c] sm:$0xf]
    %v972 = vld [vmem:[#allocation5 + $0x150] sm:$0xff]
    %v973 = vld [vmem:[#allocation5 + $0x158] sm:$0xf]
    %v974 = vld [vmem:[#allocation5 + $0x15c] sm:$0xff]
    %v975 = vld [vmem:[#allocation5 + $0x164] sm:$0xf]
    %v976 = vld [vmem:[#allocation5 + $0x168] sm:$0xff]
    %v977 = vld [vmem:[#allocation5 + $0x170] sm:$0xf]
    %v978 = vld [vmem:[#allocation5 + $0x174] sm:$0xff]
    %v979 = vld [vmem:[#allocation5 + $0x17c] sm:$0xf]
    %v1012 = vunpack.c.l.b16 %v948
    %v1013 = vunpack.c.h.b16 %v948
    %v1014 = vunpack.c.l.b16 %v949
    %v1015 = vunpack.c.l.b16 %v950
    %v1016 = vunpack.c.h.b16 %v950
    %v1017 = vunpack.c.l.b16 %v951
    %v1018 = vunpack.c.l.b16 %v952
    %v1019 = vunpack.c.h.b16 %v952
    %v1020 = vunpack.c.l.b16 %v953
    %v1021 = vunpack.c.l.b16 %v954
    %v1022 = vunpack.c.h.b16 %v954
    %v1023 = vunpack.c.l.b16 %v955
    %v1024 = vunpack.c.l.b16 %v956
    %v1025 = vunpack.c.h.b16 %v956
    %v1026 = vunpack.c.l.b16 %v957
    %v1027 = vunpack.c.l.b16 %v958
    %v1028 = vunpack.c.h.b16 %v958
    %v1029 = vunpack.c.l.b16 %v959
    %v1030 = vunpack.c.l.b16 %v960
    %v1031 = vunpack.c.h.b16 %v960
    %v1032 = vunpack.c.l.b16 %v961
    %v1033 = vunpack.c.l.b16 %v962
    %v1034 = vunpack.c.h.b16 %v962
    %v1035 = vunpack.c.l.b16 %v963
    %v1036 = vunpack.c.l.b16 %v964
    %v1037 = vunpack.c.h.b16 %v964
    %v1038 = vunpack.c.l.b16 %v965
    %v1039 = vunpack.c.l.b16 %v966
    %v1040 = vunpack.c.h.b16 %v966
    %v1041 = vunpack.c.l.b16 %v967
    %v1042 = vunpack.c.l.b16 %v968
    %v1043 = vunpack.c.h.b16 %v968
    %v1044 = vunpack.c.l.b16 %v969
    %v1045 = vunpack.c.l.b16 %v970
    %v1046 = vunpack.c.h.b16 %v970
    %v1047 = vunpack.c.l.b16 %v971
    %v1048 = vunpack.c.l.b16 %v972
    %v1049 = vunpack.c.h.b16 %v972
    %v1050 = vunpack.c.l.b16 %v973
    %v1051 = vunpack.c.l.b16 %v974
    %v1052 = vunpack.c.h.b16 %v974
    %v1053 = vunpack.c.l.b16 %v975
    %v1054 = vunpack.c.l.b16 %v976
    %v1055 = vunpack.c.h.b16 %v976
    %v1056 = vunpack.c.l.b16 %v977
    %v1057 = vunpack.c.l.b16 %v978
    %v1058 = vunpack.c.h.b16 %v978
    %v1059 = vunpack.c.l.b16 %v979
    %v1060 = vpack.c.b16 %v1015, %v1012
    %v1061 = vpack.c.b16 %v1016, %v1013
    %v1062 = vpack.c.b16 %v1017, %v1014
    %v1063 = vpack.c.b16 %v1021, %v1018
    %v1064 = vpack.c.b16 %v1022, %v1019
    %v1065 = vpack.c.b16 %v1023, %v1020
    %v1066 = vpack.c.b16 %v1027, %v1024
    %v1067 = vpack.c.b16 %v1028, %v1025
    %v1068 = vpack.c.b16 %v1029, %v1026
    %v1069 = vpack.c.b16 %v1033, %v1030
    %v1070 = vpack.c.b16 %v1034, %v1031
    %v1071 = vpack.c.b16 %v1035, %v1032
    %v1072 = vpack.c.b16 %v1039, %v1036
    %v1073 = vpack.c.b16 %v1040, %v1037
    %v1074 = vpack.c.b16 %v1041, %v1038
    %v1075 = vpack.c.b16 %v1045, %v1042
    %v1076 = vpack.c.b16 %v1046, %v1043
    %v1077 = vpack.c.b16 %v1047, %v1044
    %v1078 = vpack.c.b16 %v1051, %v1048
    %v1079 = vpack.c.b16 %v1052, %v1049
    %v1080 = vpack.c.b16 %v1053, %v1050
    %v1081 = vpack.c.b16 %v1057, %v1054
    %v1082 = vpack.c.b16 %v1058, %v1055
    %v1083 = vpack.c.b16 %v1059, %v1056
    %1108 = vmatpush.bf16.msra.mxu0 %v1081
    %1109 = vmatpush.bf16.msra.mxu0 %v1078
    %1110 = vmatpush.bf16.msra.mxu0 %v1075
    %1111 = vmatpush.bf16.msra.mxu0 %v1072
    %1112 = vmatpush.bf16.msra.mxu0 %v1069
    %1113 = vmatpush.bf16.msra.mxu0 %v1066
    %1114 = vmatpush.bf16.msra.mxu0 %v1063
    %1115 = vmatpush.bf16.msra.mxu0 %v1060
    %1116 = vmatmul.bf16.gmra.mxu0 %v944
    %v1117 = vpop.f32.mrf.mxu0
    %v1118 = vadd.f32 0.0, %v1117
    %v1119 = vpop.f32.mrf.mxu0
    %v1120 = vadd.f32 0.0, %v1119
    %1121 = vmatmul.bf16.gmra.mxu0 %v945
    %v1122 = vpop.f32.mrf.mxu0
    %v1123 = vadd.f32 0.0, %v1122
    %v1124 = vpop.f32.mrf.mxu0
    %v1125 = vadd.f32 0.0, %v1124
    %1126 = vmatmul.bf16.gmra.mxu0 %v946
    %v1127 = vpop.f32.mrf.mxu0
    %v1128 = vadd.f32 0.0, %v1127
    %v1129 = vpop.f32.mrf.mxu0
    %v1130 = vadd.f32 0.0, %v1129
    %1131 = vmatmul.bf16.gmra.mxu0 %v947
    %v1132 = vpop.f32.mrf.mxu0
    %v1133 = vadd.f32 0.0, %v1132
    %v1134 = vpop.f32.mrf.mxu0
    %v1135 = vadd.f32 0.0, %v1134
    %1136 = vdwg.mxu0
    %1137 = vmatpush.bf16.msra.mxu0 %v1082
    %1138 = vmatpush.bf16.msra.mxu0 %v1079
    %1139 = vmatpush.bf16.msra.mxu0 %v1076
    %1140 = vmatpush.bf16.msra.mxu0 %v1073
    %1141 = vmatpush.bf16.msra.mxu0 %v1070
    %1142 = vmatpush.bf16.msra.mxu0 %v1067
    %1143 = vmatpush.bf16.msra.mxu0 %v1064
    %1144 = vmatpush.bf16.msra.mxu0 %v1061
    %1145 = vmatmul.bf16.gmra.mxu0 %v944
    %v1146 = vpop.f32.mrf.mxu0
    %v1147 = vadd.f32 0.0, %v1146
    %v1148 = vpop.f32.mrf.mxu0
    %v1149 = vadd.f32 0.0, %v1148
    %1150 = vmatmul.bf16.gmra.mxu0 %v945
    %v1151 = vpop.f32.mrf.mxu0
    %v1152 = vadd.f32 0.0, %v1151
    %v1153 = vpop.f32.mrf.mxu0
    %v1154 = vadd.f32 0.0, %v1153
    %1155 = vmatmul.bf16.gmra.mxu0 %v946
    %v1156 = vpop.f32.mrf.mxu0
    %v1157 = vadd.f32 0.0, %v1156
    %v1158 = vpop.f32.mrf.mxu0
    %v1159 = vadd.f32 0.0, %v1158
    %1160 = vmatmul.bf16.gmra.mxu0 %v947
    %v1161 = vpop.f32.mrf.mxu0
    %v1162 = vadd.f32 0.0, %v1161
    %v1163 = vpop.f32.mrf.mxu0
    %v1164 = vadd.f32 0.0, %v1163
    %1165 = vdwg.mxu0
    %1166 = vmatpush.bf16.msra.mxu0 %v1083
    %1167 = vmatpush.bf16.msra.mxu0 %v1080
    %1168 = vmatpush.bf16.msra.mxu0 %v1077
    %1169 = vmatpush.bf16.msra.mxu0 %v1074
    %1170 = vmatpush.bf16.msra.mxu0 %v1071
    %1171 = vmatpush.bf16.msra.mxu0 %v1068
    %1172 = vmatpush.bf16.msra.mxu0 %v1065
    %1173 = vmatpush.bf16.msra.mxu0 %v1062
    %1174 = vmatmul.bf16.gmra.mxu0 %v944
    %v1175 = vpop.f32.mrf.mxu0
    %v1176 = vadd.f32 0.0, %v1175
    %v1177 = vpop.f32.mrf.mxu0
    %v1178 = vadd.f32 0.0, %v1177
    %1179 = vmatmul.bf16.gmra.mxu0 %v945
    %v1180 = vpop.f32.mrf.mxu0
    %v1181 = vadd.f32 0.0, %v1180
    %v1182 = vpop.f32.mrf.mxu0
    %v1183 = vadd.f32 0.0, %v1182
    %1184 = vmatmul.bf16.gmra.mxu0 %v946
    %v1185 = vpop.f32.mrf.mxu0
    %v1186 = vadd.f32 0.0, %v1185
    %v1187 = vpop.f32.mrf.mxu0
    %v1188 = vadd.f32 0.0, %v1187
    %1189 = vmatmul.bf16.gmra.mxu0 %v947
    %v1190 = vpop.f32.mrf.mxu0
    %v1191 = vadd.f32 0.0, %v1190
    %v1192 = vpop.f32.mrf.mxu0
    %v1193 = vadd.f32 0.0, %v1192
    %1194 = vdwg.mxu0
    %v1195 = vpack.c.bf16 %v1147, %v1118
    %v1196 = vpack.c.bf16 %v1176, %v1176
    %v1197 = vpack.c.bf16 %v1149, %v1120
    %v1198 = vpack.c.bf16 %v1178, %v1178
    %v1199 = vpack.c.bf16 %v1152, %v1123
    %v1200 = vpack.c.bf16 %v1181, %v1181
    %v1201 = vpack.c.bf16 %v1154, %v1125
    %v1202 = vpack.c.bf16 %v1183, %v1183
    %v1203 = vpack.c.bf16 %v1157, %v1128
    %v1204 = vpack.c.bf16 %v1186, %v1186
    %v1205 = vpack.c.bf16 %v1159, %v1130
    %v1206 = vpack.c.bf16 %v1188, %v1188
    %v1207 = vpack.c.bf16 %v1162, %v1133
    %v1208 = vpack.c.bf16 %v1191, %v1191
    %v1209 = vpack.c.bf16 %v1164, %v1135
    %v1210 = vpack.c.bf16 %v1193, %v1193
    %v1211 = vld [vmem:[#allocation11 + $0x60] sm:$0xf]
    %v1212 = vld [vmem:[#allocation11 + $0x64] sm:$0xf]
    %v1213 = vld [vmem:[#allocation11 + $0x68] sm:$0xf]
    %v1214 = vld [vmem:[#allocation11 + $0x6c] sm:$0xf]
    %v1215 = vld [vmem:[#allocation11 + $0x70] sm:$0xf]
    %v1216 = vld [vmem:[#allocation11 + $0x74] sm:$0xf]
    %v1217 = vld [vmem:[#allocation11 + $0x78] sm:$0xf]
    %v1218 = vld [vmem:[#allocation11 + $0x7c] sm:$0xf]
    %v1223 = vunpack.c.l.b16 %v1215
    %v1224 = vunpack.c.l.b16 %v1216
    %v1225 = vunpack.c.l.b16 %v1217
    %v1226 = vunpack.c.l.b16 %v1218
    %v1227 = vpack.c.b16 %v1224, %v1223
    %v1228 = vpack.c.b16 %v1226, %v1225
    %v1237 = vunpack.c.h.b16 %v1195
    %v1238 = vunpack.c.h.b16 %v1197
    %v1239 = vunpack.c.h.b16 %v1199
    %v1240 = vunpack.c.h.b16 %v1201
    %v1241 = vunpack.c.h.b16 %v1203
    %v1242 = vunpack.c.h.b16 %v1205
    %v1243 = vunpack.c.h.b16 %v1207
    %v1244 = vunpack.c.h.b16 %v1209
    %v1245 = vpack.c.b16 %v1238, %v1237
    %v1246 = vpack.c.b16 %v1240, %v1239
    %v1247 = vpack.c.b16 %v1242, %v1241
    %v1248 = vpack.c.b16 %v1244, %v1243
    %vm1253 = vcmask 523264
    %v1255 = vsel %vm1253, %v1227, 0
    %v1258 = vsel %vm1253, %v1228, 0
    %1260 = vmatpush.bf16.msra.mxu0 0
    %1261 = vmatpush.bf16.msra.mxu0 0
    %1262 = vmatpush.bf16.msra.mxu0 0
    %1263 = vmatpush.bf16.msra.mxu0 0
    %1264 = vmatpush.bf16.msra.mxu0 %v1248
    %1265 = vmatpush.bf16.msra.mxu0 %v1247
    %1266 = vmatpush.bf16.msra.mxu0 %v1246
    %1267 = vmatpush.bf16.msra.mxu0 %v1245
    %1268 = vmatmul.bf16.gmra.mxu0 %v1255
    %v1269 = vpop.f32.mrf.mxu0
    %v1270 = vadd.f32 0.0, %v1269
    %v1271 = vpop.f32.mrf.mxu0
    %v1272 = vadd.f32 0.0, %v1271
    %1273 = vmatmul.bf16.gmra.mxu0 %v1258
    %v1274 = vpop.f32.mrf.mxu0
    %v1275 = vadd.f32 0.0, %v1274
    %v1276 = vpop.f32.mrf.mxu0
    %v1277 = vadd.f32 0.0, %v1276
    %1278 = vdwg.mxu0
    %v1283 = vunpack.c.l.b16 %v1211
    %v1284 = vunpack.c.l.b16 %v1212
    %v1285 = vunpack.c.l.b16 %v1213
    %v1286 = vunpack.c.l.b16 %v1214
    %v1287 = vpack.c.b16 %v1284, %v1283
    %v1288 = vpack.c.b16 %v1286, %v1285
    %v1289 = vunpack.c.l.b16 %v1195
    %v1290 = vunpack.c.l.b16 %v1197
    %v1291 = vunpack.c.l.b16 %v1199
    %v1292 = vunpack.c.l.b16 %v1201
    %v1293 = vunpack.c.l.b16 %v1203
    %v1294 = vunpack.c.l.b16 %v1205
    %v1295 = vunpack.c.l.b16 %v1207
    %v1296 = vunpack.c.l.b16 %v1209
    %v1297 = vpack.c.b16 %v1290, %v1289
    %v1298 = vpack.c.b16 %v1292, %v1291
    %v1299 = vpack.c.b16 %v1294, %v1293
    %v1300 = vpack.c.b16 %v1296, %v1295
    %v1306 = vsel %vm1253, %v1287, 0
    %v1309 = vsel %vm1253, %v1288, 0
    %1311 = vmatpush.bf16.msra.mxu0 0
    %1312 = vmatpush.bf16.msra.mxu0 0
    %1313 = vmatpush.bf16.msra.mxu0 0
    %1314 = vmatpush.bf16.msra.mxu0 0
    %1315 = vmatpush.bf16.msra.mxu0 %v1300
    %1316 = vmatpush.bf16.msra.mxu0 %v1299
    %1317 = vmatpush.bf16.msra.mxu0 %v1298
    %1318 = vmatpush.bf16.msra.mxu0 %v1297
    %1319 = vmatmul.bf16.gmra.mxu0 %v1306
    %v1320 = vpop.f32.mrf.mxu0
    %v1321 = vadd.f32 %v1270, %v1320
    %v1322 = vpop.f32.mrf.mxu0
    %v1323 = vadd.f32 %v1272, %v1322
    %1324 = vmatmul.bf16.gmra.mxu0 %v1309
    %v1325 = vpop.f32.mrf.mxu0
    %v1326 = vadd.f32 %v1275, %v1325
    %v1327 = vpop.f32.mrf.mxu0
    %v1328 = vadd.f32 %v1277, %v1327
    %1329 = vdwg.mxu0
    %v1330 = vld [vmem:[#allocation11 + $0x80] sm:$0xf]
    %v1331 = vld [vmem:[#allocation11 + $0x84] sm:$0xf]
    %v1332 = vld [vmem:[#allocation11 + $0x88] sm:$0xf]
    %v1333 = vld [vmem:[#allocation11 + $0x8c] sm:$0xf]
    %v1338 = vunpack.c.l.b16 %v1330
    %v1339 = vunpack.c.l.b16 %v1331
    %v1340 = vunpack.c.l.b16 %v1332
    %v1341 = vunpack.c.l.b16 %v1333
    %v1342 = vpack.c.b16 %v1339, %v1338
    %v1343 = vpack.c.b16 %v1341, %v1340
    %v1352 = vunpack.c.l.b16 %v1196
    %v1353 = vunpack.c.l.b16 %v1198
    %v1354 = vunpack.c.l.b16 %v1200
    %v1355 = vunpack.c.l.b16 %v1202
    %v1356 = vunpack.c.l.b16 %v1204
    %v1357 = vunpack.c.l.b16 %v1206
    %v1358 = vunpack.c.l.b16 %v1208
    %v1359 = vunpack.c.l.b16 %v1210
    %v1360 = vpack.c.b16 %v1353, %v1352
    %v1361 = vpack.c.b16 %v1355, %v1354
    %v1362 = vpack.c.b16 %v1357, %v1356
    %v1363 = vpack.c.b16 %v1359, %v1358
    %v1369 = vsel %vm1253, %v1342, 0
    %v1372 = vsel %vm1253, %v1343, 0
    %1374 = vmatpush.bf16.msra.mxu0 0
    %1375 = vmatpush.bf16.msra.mxu0 0
    %1376 = vmatpush.bf16.msra.mxu0 0
    %1377 = vmatpush.bf16.msra.mxu0 0
    %1378 = vmatpush.bf16.msra.mxu0 %v1363
    %1379 = vmatpush.bf16.msra.mxu0 %v1362
    %1380 = vmatpush.bf16.msra.mxu0 %v1361
    %1381 = vmatpush.bf16.msra.mxu0 %v1360
    %1382 = vmatmul.bf16.gmra.mxu0 %v1369
    %v1383 = vpop.f32.mrf.mxu0
    %v1384 = vadd.f32 0.0, %v1383
    %v1385 = vpop.f32.mrf.mxu0
    %v1386 = vadd.f32 0.0, %v1385
    %1387 = vmatmul.bf16.gmra.mxu0 %v1372
    %v1388 = vpop.f32.mrf.mxu0
    %v1389 = vadd.f32 0.0, %v1388
    %v1390 = vpop.f32.mrf.mxu0
    %v1391 = vadd.f32 0.0, %v1390
    %1392 = vdwg.mxu0
    %v1393 = vadd.f32 %v1321, %v1384
    %v1394 = vadd.f32 %v1323, %v1386
    %v1395 = vadd.f32 %v1326, %v1389
    %v1396 = vadd.f32 %v1328, %v1391
    %v1397 = vadd.f32 %v1393, %v1394
    %v1398 = vadd.f32 %v1397, %v1395
    %v1399 = vadd.f32 %v1398, %v1396
    %v1400 = vrot.slane %v1399, 4
    %v1401 = vadd.f32 %v1399, %v1400
    %v1402 = vrot.slane %v1401, 2
    %v1403 = vadd.f32 %v1401, %v1402
    %v1404 = vrot.slane %v1403, 1
    %v1405 = vadd.f32 %v1403, %v1404
    %v1406 = vmul.f32 %v1405, 0.03125
    %v1407 = vmul.f32 %v1393, %v1393
    %v1408 = vmul.f32 %v1394, %v1394
    %v1409 = vmul.f32 %v1395, %v1395
    %v1410 = vmul.f32 %v1396, %v1396
    %v1411 = vadd.f32 %v1407, %v1408
    %v1412 = vadd.f32 %v1411, %v1409
    %v1413 = vadd.f32 %v1412, %v1410
    %v1414 = vrot.slane %v1413, 4
    %v1415 = vadd.f32 %v1413, %v1414
    %v1416 = vrot.slane %v1415, 2
    %v1417 = vadd.f32 %v1415, %v1416
    %v1418 = vrot.slane %v1417, 1
    %v1419 = vadd.f32 %v1417, %v1418
    %v1420 = vmul.f32 %v1419, 0.03125
    %v1421 = vmul.f32 %v1406, %v1406
    %v1422 = vsub.f32 %v1420, %v1421
    %v1423 = vmax.f32 %v1422, 0.0
    %v1424 = vld [vmem:[%s7 + $0x2] ss:$0 sm:$0xff]
    %v1425 = vld [vmem:[%s7 + $0x3] ss:$0 sm:$0xff]
    %v1426 = vadd.f32 %v1423, 1e-05
    %v1427 = vrsqrt.pop %v1426
    %v1428 = vmul.f32 %v1427, %v1426
    %v1429 = vmul.f32 %v1428, %v1427
    %v1430 = vmul.f32 0.5, %v1429
    %v1431 = vsub.f32 1.5, %v1430
    %v1432 = vmul.f32 %v1427, %v1431
    %vm1433 = vweird.f32 %v1426
    %vm1434 = vweird.f32 %v1427
    %vm1435 = vmor %vm1433, %vm1434
    %v1436 = vsel %vm1435, %v1427, %v1432
    %v1437 = vmul.f32 %v1436, %v1424
    %v1438 = vmul.f32 %v1393, %v1437
    %v1439 = vmul.f32 %v1394, %v1437
    %v1440 = vmul.f32 %v1395, %v1437
    %v1441 = vmul.f32 %v1396, %v1437
    %v1442 = vmul.f32 %v1406, %v1437
    %v1443 = vsub.f32 %v1425, %v1442
    %v1444 = vadd.f32 %v1438, %v1443
    %v1445 = vadd.f32 %v1439, %v1443
    %v1446 = vadd.f32 %v1440, %v1443
    %v1447 = vadd.f32 %v1441, %v1443
    %vm1448 = vcmp.ge.f32.partialorder %v1444, 0.0
    %vm1449 = vcmp.ge.f32.partialorder %v1445, 0.0
    %vm1450 = vcmp.ge.f32.partialorder %v1446, 0.0
    %vm1451 = vcmp.ge.f32.partialorder %v1447, 0.0
    %v1452 = vmul.f32 %v1444, 0.01
    %v1453 = vmul.f32 %v1445, 0.01
    %v1454 = vmul.f32 %v1446, 0.01
    %v1455 = vmul.f32 %v1447, 0.01
    %v1456 = vsel %vm1448, %v1444, %v1452
    %v1457 = vsel %vm1449, %v1445, %v1453
    %v1458 = vsel %vm1450, %v1446, %v1454
    %v1459 = vsel %vm1451, %v1447, %v1455
    %v1460 = vpack.c.bf16 %v1457, %v1456
    %v1461 = vpack.c.bf16 %v1459, %v1458
    %v1462 = vld [vmem:[#allocation5 + $0x180] sm:$0xff]
    %v1463 = vld [vmem:[#allocation5 + $0x188] sm:$0xf]
    %v1464 = vld [vmem:[#allocation5 + $0x18c] sm:$0xff]
    %v1465 = vld [vmem:[#allocation5 + $0x194] sm:$0xf]
    %v1466 = vld [vmem:[#allocation5 + $0x198] sm:$0xff]
    %v1467 = vld [vmem:[#allocation5 + $0x1a0] sm:$0xf]
    %v1468 = vld [vmem:[#allocation5 + $0x1a4] sm:$0xff]
    %v1469 = vld [vmem:[#allocation5 + $0x1ac] sm:$0xf]
    %v1470 = vld [vmem:[#allocation5 + $0x1b0] sm:$0xff]
    %v1471 = vld [vmem:[#allocation5 + $0x1b8] sm:$0xf]
    %v1472 = vld [vmem:[#allocation5 + $0x1bc] sm:$0xff]
    %v1473 = vld [vmem:[#allocation5 + $0x1c4] sm:$0xf]
    %v1474 = vld [vmem:[#allocation5 + $0x1c8] sm:$0xff]
    %v1475 = vld [vmem:[#allocation5 + $0x1d0] sm:$0xf]
    %v1476 = vld [vmem:[#allocation5 + $0x1d4] sm:$0xff]
    %v1477 = vld [vmem:[#allocation5 + $0x1dc] sm:$0xf]
    %v1478 = vld [vmem:[#allocation5 + $0x1e0] sm:$0xff]
    %v1479 = vld [vmem:[#allocation5 + $0x1e8] sm:$0xf]
    %v1480 = vld [vmem:[#allocation5 + $0x1ec] sm:$0xff]
    %v1481 = vld [vmem:[#allocation5 + $0x1f4] sm:$0xf]
    %v1482 = vld [vmem:[#allocation5 + $0x1f8] sm:$0xff]
    %v1483 = vld [vmem:[#allocation5 + $0x200] sm:$0xf]
    %v1484 = vld [vmem:[#allocation5 + $0x204] sm:$0xff]
    %v1485 = vld [vmem:[#allocation5 + $0x20c] sm:$0xf]
    %v1486 = vld [vmem:[#allocation5 + $0x210] sm:$0xff]
    %v1487 = vld [vmem:[#allocation5 + $0x218] sm:$0xf]
    %v1488 = vld [vmem:[#allocation5 + $0x21c] sm:$0xff]
    %v1489 = vld [vmem:[#allocation5 + $0x224] sm:$0xf]
    %v1490 = vld [vmem:[#allocation5 + $0x228] sm:$0xff]
    %v1491 = vld [vmem:[#allocation5 + $0x230] sm:$0xf]
    %v1492 = vld [vmem:[#allocation5 + $0x234] sm:$0xff]
    %v1493 = vld [vmem:[#allocation5 + $0x23c] sm:$0xf]
    %v1526 = vunpack.c.l.b16 %v1462
    %v1527 = vunpack.c.h.b16 %v1462
    %v1528 = vunpack.c.l.b16 %v1463
    %v1529 = vunpack.c.l.b16 %v1464
    %v1530 = vunpack.c.h.b16 %v1464
    %v1531 = vunpack.c.l.b16 %v1465
    %v1532 = vunpack.c.l.b16 %v1466
    %v1533 = vunpack.c.h.b16 %v1466
    %v1534 = vunpack.c.l.b16 %v1467
    %v1535 = vunpack.c.l.b16 %v1468
    %v1536 = vunpack.c.h.b16 %v1468
    %v1537 = vunpack.c.l.b16 %v1469
    %v1538 = vunpack.c.l.b16 %v1470
    %v1539 = vunpack.c.h.b16 %v1470
    %v1540 = vunpack.c.l.b16 %v1471
    %v1541 = vunpack.c.l.b16 %v1472
    %v1542 = vunpack.c.h.b16 %v1472
    %v1543 = vunpack.c.l.b16 %v1473
    %v1544 = vunpack.c.l.b16 %v1474
    %v1545 = vunpack.c.h.b16 %v1474
    %v1546 = vunpack.c.l.b16 %v1475
    %v1547 = vunpack.c.l.b16 %v1476
    %v1548 = vunpack.c.h.b16 %v1476
    %v1549 = vunpack.c.l.b16 %v1477
    %v1550 = vunpack.c.l.b16 %v1478
    %v1551 = vunpack.c.h.b16 %v1478
    %v1552 = vunpack.c.l.b16 %v1479
    %v1553 = vunpack.c.l.b16 %v1480
    %v1554 = vunpack.c.h.b16 %v1480
    %v1555 = vunpack.c.l.b16 %v1481
    %v1556 = vunpack.c.l.b16 %v1482
    %v1557 = vunpack.c.h.b16 %v1482
    %v1558 = vunpack.c.l.b16 %v1483
    %v1559 = vunpack.c.l.b16 %v1484
    %v1560 = vunpack.c.h.b16 %v1484
    %v1561 = vunpack.c.l.b16 %v1485
    %v1562 = vunpack.c.l.b16 %v1486
    %v1563 = vunpack.c.h.b16 %v1486
    %v1564 = vunpack.c.l.b16 %v1487
    %v1565 = vunpack.c.l.b16 %v1488
    %v1566 = vunpack.c.h.b16 %v1488
    %v1567 = vunpack.c.l.b16 %v1489
    %v1568 = vunpack.c.l.b16 %v1490
    %v1569 = vunpack.c.h.b16 %v1490
    %v1570 = vunpack.c.l.b16 %v1491
    %v1571 = vunpack.c.l.b16 %v1492
    %v1572 = vunpack.c.h.b16 %v1492
    %v1573 = vunpack.c.l.b16 %v1493
    %v1574 = vpack.c.b16 %v1529, %v1526
    %v1575 = vpack.c.b16 %v1530, %v1527
    %v1576 = vpack.c.b16 %v1531, %v1528
    %v1577 = vpack.c.b16 %v1535, %v1532
    %v1578 = vpack.c.b16 %v1536, %v1533
    %v1579 = vpack.c.b16 %v1537, %v1534
    %v1580 = vpack.c.b16 %v1541, %v1538
    %v1581 = vpack.c.b16 %v1542, %v1539
    %v1582 = vpack.c.b16 %v1543, %v1540
    %v1583 = vpack.c.b16 %v1547, %v1544
    %v1584 = vpack.c.b16 %v1548, %v1545
    %v1585 = vpack.c.b16 %v1549, %v1546
    %v1586 = vpack.c.b16 %v1553, %v1550
    %v1587 = vpack.c.b16 %v1554, %v1551
    %v1588 = vpack.c.b16 %v1555, %v1552
    %v1589 = vpack.c.b16 %v1559, %v1556
    %v1590 = vpack.c.b16 %v1560, %v1557
    %v1591 = vpack.c.b16 %v1561, %v1558
    %v1592 = vpack.c.b16 %v1565, %v1562
    %v1593 = vpack.c.b16 %v1566, %v1563
    %v1594 = vpack.c.b16 %v1567, %v1564
    %v1595 = vpack.c.b16 %v1571, %v1568
    %v1596 = vpack.c.b16 %v1572, %v1569
    %v1597 = vpack.c.b16 %v1573, %v1570
    %1622 = vmatpush.bf16.msra.mxu0 %v1595
    %1623 = vmatpush.bf16.msra.mxu0 %v1592
    %1624 = vmatpush.bf16.msra.mxu0 %v1589
    %1625 = vmatpush.bf16.msra.mxu0 %v1586
    %1626 = vmatpush.bf16.msra.mxu0 %v1583
    %1627 = vmatpush.bf16.msra.mxu0 %v1580
    %1628 = vmatpush.bf16.msra.mxu0 %v1577
    %1629 = vmatpush.bf16.msra.mxu0 %v1574
    %1630 = vmatmul.bf16.gmra.mxu0 %v1460
    %v1631 = vpop.f32.mrf.mxu0
    %v1632 = vadd.f32 0.0, %v1631
    %v1633 = vpop.f32.mrf.mxu0
    %v1634 = vadd.f32 0.0, %v1633
    %1635 = vmatmul.bf16.gmra.mxu0 %v1461
    %v1636 = vpop.f32.mrf.mxu0
    %v1637 = vadd.f32 0.0, %v1636
    %v1638 = vpop.f32.mrf.mxu0
    %v1639 = vadd.f32 0.0, %v1638
    %1640 = vdwg.mxu0
    %1641 = vmatpush.bf16.msra.mxu0 %v1596
    %1642 = vmatpush.bf16.msra.mxu0 %v1593
    %1643 = vmatpush.bf16.msra.mxu0 %v1590
    %1644 = vmatpush.bf16.msra.mxu0 %v1587
    %1645 = vmatpush.bf16.msra.mxu0 %v1584
    %1646 = vmatpush.bf16.msra.mxu0 %v1581
    %1647 = vmatpush.bf16.msra.mxu0 %v1578
    %1648 = vmatpush.bf16.msra.mxu0 %v1575
    %1649 = vmatmul.bf16.gmra.mxu0 %v1460
    %v1650 = vpop.f32.mrf.mxu0
    %v1651 = vadd.f32 0.0, %v1650
    %v1652 = vpop.f32.mrf.mxu0
    %v1653 = vadd.f32 0.0, %v1652
    %1654 = vmatmul.bf16.gmra.mxu0 %v1461
    %v1655 = vpop.f32.mrf.mxu0
    %v1656 = vadd.f32 0.0, %v1655
    %v1657 = vpop.f32.mrf.mxu0
    %v1658 = vadd.f32 0.0, %v1657
    %1659 = vdwg.mxu0
    %1660 = vmatpush.bf16.msra.mxu0 %v1597
    %1661 = vmatpush.bf16.msra.mxu0 %v1594
    %1662 = vmatpush.bf16.msra.mxu0 %v1591
    %1663 = vmatpush.bf16.msra.mxu0 %v1588
    %1664 = vmatpush.bf16.msra.mxu0 %v1585
    %1665 = vmatpush.bf16.msra.mxu0 %v1582
    %1666 = vmatpush.bf16.msra.mxu0 %v1579
    %1667 = vmatpush.bf16.msra.mxu0 %v1576
    %1668 = vmatmul.bf16.gmra.mxu0 %v1460
    %v1669 = vpop.f32.mrf.mxu0
    %v1670 = vadd.f32 0.0, %v1669
    %v1671 = vpop.f32.mrf.mxu0
    %v1672 = vadd.f32 0.0, %v1671
    %1673 = vmatmul.bf16.gmra.mxu0 %v1461
    %v1674 = vpop.f32.mrf.mxu0
    %v1675 = vadd.f32 0.0, %v1674
    %v1676 = vpop.f32.mrf.mxu0
    %v1677 = vadd.f32 0.0, %v1676
    %1678 = vdwg.mxu0
    %v1679 = vpack.c.bf16 %v1651, %v1632
    %v1680 = vpack.c.bf16 %v1670, %v1670
    %v1681 = vpack.c.bf16 %v1653, %v1634
    %v1682 = vpack.c.bf16 %v1672, %v1672
    %v1683 = vpack.c.bf16 %v1656, %v1637
    %v1684 = vpack.c.bf16 %v1675, %v1675
    %v1685 = vpack.c.bf16 %v1658, %v1639
    %v1686 = vpack.c.bf16 %v1677, %v1677
    %v1687 = vld [vmem:[#allocation11 + $0x90] sm:$0xf]
    %v1688 = vld [vmem:[#allocation11 + $0x94] sm:$0xf]
    %v1689 = vld [vmem:[#allocation11 + $0x98] sm:$0xf]
    %v1690 = vld [vmem:[#allocation11 + $0x9c] sm:$0xf]
    %v1693 = vunpack.c.l.b16 %v1689
    %v1694 = vunpack.c.l.b16 %v1690
    %v1695 = vpack.c.b16 %v1694, %v1693
    %v1700 = vunpack.c.h.b16 %v1679
    %v1701 = vunpack.c.h.b16 %v1681
    %v1702 = vunpack.c.h.b16 %v1683
    %v1703 = vunpack.c.h.b16 %v1685
    %v1704 = vpack.c.b16 %v1701, %v1700
    %v1705 = vpack.c.b16 %v1703, %v1702
    %vm1708 = vcmask 261120
    %v1710 = vsel %vm1708, %v1695, 0
    %1712 = vmatpush.bf16.msra.mxu0 0
    %1713 = vmatpush.bf16.msra.mxu0 0
    %1714 = vmatpush.bf16.msra.mxu0 0
    %1715 = vmatpush.bf16.msra.mxu0 0
    %1716 = vmatpush.bf16.msra.mxu0 0
    %1717 = vmatpush.bf16.msra.mxu0 0
    %1718 = vmatpush.bf16.msra.mxu0 %v1705
    %1719 = vmatpush.bf16.msra.mxu0 %v1704
    %1720 = vmatmul.bf16.gmra.mxu0 %v1710
    %v1721 = vpop.f32.mrf.mxu0
    %v1722 = vadd.f32 0.0, %v1721
    %v1723 = vpop.f32.mrf.mxu0
    %v1724 = vadd.f32 0.0, %v1723
    %1725 = vdwg.mxu0
    %v1728 = vunpack.c.l.b16 %v1687
    %v1729 = vunpack.c.l.b16 %v1688
    %v1730 = vpack.c.b16 %v1729, %v1728
    %v1731 = vunpack.c.l.b16 %v1679
    %v1732 = vunpack.c.l.b16 %v1681
    %v1733 = vunpack.c.l.b16 %v1683
    %v1734 = vunpack.c.l.b16 %v1685
    %v1735 = vpack.c.b16 %v1732, %v1731
    %v1736 = vpack.c.b16 %v1734, %v1733
    %v1740 = vsel %vm1708, %v1730, 0
    %1742 = vmatpush.bf16.msra.mxu0 0
    %1743 = vmatpush.bf16.msra.mxu0 0
    %1744 = vmatpush.bf16.msra.mxu0 0
    %1745 = vmatpush.bf16.msra.mxu0 0
    %1746 = vmatpush.bf16.msra.mxu0 0
    %1747 = vmatpush.bf16.msra.mxu0 0
    %1748 = vmatpush.bf16.msra.mxu0 %v1736
    %1749 = vmatpush.bf16.msra.mxu0 %v1735
    %1750 = vmatmul.bf16.gmra.mxu0 %v1740
    %v1751 = vpop.f32.mrf.mxu0
    %v1752 = vadd.f32 %v1722, %v1751
    %v1753 = vpop.f32.mrf.mxu0
    %v1754 = vadd.f32 %v1724, %v1753
    %1755 = vdwg.mxu0
    %v1756 = vld [vmem:[#allocation11 + $0xa0] sm:$0xf]
    %v1757 = vld [vmem:[#allocation11 + $0xa4] sm:$0xf]
    %v1760 = vunpack.c.l.b16 %v1756
    %v1761 = vunpack.c.l.b16 %v1757
    %v1762 = vpack.c.b16 %v1761, %v1760
    %v1767 = vunpack.c.l.b16 %v1680
    %v1768 = vunpack.c.l.b16 %v1682
    %v1769 = vunpack.c.l.b16 %v1684
    %v1770 = vunpack.c.l.b16 %v1686
    %v1771 = vpack.c.b16 %v1768, %v1767
    %v1772 = vpack.c.b16 %v1770, %v1769
    %v1776 = vsel %vm1708, %v1762, 0
    %1778 = vmatpush.bf16.msra.mxu0 0
    %1779 = vmatpush.bf16.msra.mxu0 0
    %1780 = vmatpush.bf16.msra.mxu0 0
    %1781 = vmatpush.bf16.msra.mxu0 0
    %1782 = vmatpush.bf16.msra.mxu0 0
    %1783 = vmatpush.bf16.msra.mxu0 0
    %1784 = vmatpush.bf16.msra.mxu0 %v1772
    %1785 = vmatpush.bf16.msra.mxu0 %v1771
    %1786 = vmatmul.bf16.gmra.mxu0 %v1776
    %v1787 = vpop.f32.mrf.mxu0
    %v1788 = vadd.f32 0.0, %v1787
    %v1789 = vpop.f32.mrf.mxu0
    %v1790 = vadd.f32 0.0, %v1789
    %1791 = vdwg.mxu0
    %v1792 = vadd.f32 %v1752, %v1788
    %v1793 = vadd.f32 %v1754, %v1790
    %v1794 = vadd.f32 %v1792, %v1793
    %v1795 = vrot.slane %v1794, 4
    %v1796 = vadd.f32 %v1794, %v1795
    %v1797 = vrot.slane %v1796, 2
    %v1798 = vadd.f32 %v1796, %v1797
    %v1799 = vrot.slane %v1798, 1
    %v1800 = vadd.f32 %v1798, %v1799
    %v1801 = vmul.f32 %v1800, 0.0625
    %v1802 = vmul.f32 %v1792, %v1792
    %v1803 = vmul.f32 %v1793, %v1793
    %v1804 = vadd.f32 %v1802, %v1803
    %v1805 = vrot.slane %v1804, 4
    %v1806 = vadd.f32 %v1804, %v1805
    %v1807 = vrot.slane %v1806, 2
    %v1808 = vadd.f32 %v1806, %v1807
    %v1809 = vrot.slane %v1808, 1
    %v1810 = vadd.f32 %v1808, %v1809
    %v1811 = vmul.f32 %v1810, 0.0625
    %v1812 = vmul.f32 %v1801, %v1801
    %v1813 = vsub.f32 %v1811, %v1812
    %v1814 = vmax.f32 %v1813, 0.0
    %v1815 = vld [vmem:[%s7 + $0x4] ss:$0 sm:$0xff]
    %v1816 = vld [vmem:[%s7 + $0x5] ss:$0 sm:$0xff]
    %v1817 = vadd.f32 %v1814, 1e-05
    %v1818 = vrsqrt.pop %v1817
    %v1819 = vmul.f32 %v1818, %v1817
    %v1820 = vmul.f32 %v1819, %v1818
    %v1821 = vmul.f32 0.5, %v1820
    %v1822 = vsub.f32 1.5, %v1821
    %v1823 = vmul.f32 %v1818, %v1822
    %vm1824 = vweird.f32 %v1817
    %vm1825 = vweird.f32 %v1818
    %vm1826 = vmor %vm1824, %vm1825
    %v1827 = vsel %vm1826, %v1818, %v1823
    %v1828 = vmul.f32 %v1827, %v1815
    %v1829 = vmul.f32 %v1792, %v1828
    %v1830 = vmul.f32 %v1793, %v1828
    %v1831 = vmul.f32 %v1801, %v1828
    %v1832 = vsub.f32 %v1816, %v1831
    %v1833 = vadd.f32 %v1829, %v1832
    %v1834 = vadd.f32 %v1830, %v1832
    %vm1835 = vcmp.ge.f32.partialorder %v1833, 0.0
    %vm1836 = vcmp.ge.f32.partialorder %v1834, 0.0
    %v1837 = vmul.f32 %v1833, 0.01
    %v1838 = vmul.f32 %v1834, 0.01
    %v1839 = vsel %vm1835, %v1833, %v1837
    %v1840 = vsel %vm1836, %v1834, %v1838
    %v1841 = vpack.c.bf16 %v1840, %v1839
    %v1842 = vld [vmem:[#allocation5 + $0x240] sm:$0xff]
    %v1843 = vld [vmem:[#allocation5 + $0x248] sm:$0xf]
    %v1844 = vld [vmem:[#allocation5 + $0x24c] sm:$0xff]
    %v1845 = vld [vmem:[#allocation5 + $0x254] sm:$0xf]
    %v1846 = vld [vmem:[#allocation5 + $0x258] sm:$0xff]
    %v1847 = vld [vmem:[#allocation5 + $0x260] sm:$0xf]
    %v1848 = vld [vmem:[#allocation5 + $0x264] sm:$0xff]
    %v1849 = vld [vmem:[#allocation5 + $0x26c] sm:$0xf]
    %v1850 = vld [vmem:[#allocation5 + $0x270] sm:$0xff]
    %v1851 = vld [vmem:[#allocation5 + $0x278] sm:$0xf]
    %v1852 = vld [vmem:[#allocation5 + $0x27c] sm:$0xff]
    %v1853 = vld [vmem:[#allocation5 + $0x284] sm:$0xf]
    %v1854 = vld [vmem:[#allocation5 + $0x288] sm:$0xff]
    %v1855 = vld [vmem:[#allocation5 + $0x290] sm:$0xf]
    %v1856 = vld [vmem:[#allocation5 + $0x294] sm:$0xff]
    %v1857 = vld [vmem:[#allocation5 + $0x29c] sm:$0xf]
    %v1858 = vld [vmem:[#allocation5 + $0x2a0] sm:$0xff]
    %v1859 = vld [vmem:[#allocation5 + $0x2a8] sm:$0xf]
    %v1860 = vld [vmem:[#allocation5 + $0x2ac] sm:$0xff]
    %v1861 = vld [vmem:[#allocation5 + $0x2b4] sm:$0xf]
    %v1862 = vld [vmem:[#allocation5 + $0x2b8] sm:$0xff]
    %v1863 = vld [vmem:[#allocation5 + $0x2c0] sm:$0xf]
    %v1864 = vld [vmem:[#allocation5 + $0x2c4] sm:$0xff]
    %v1865 = vld [vmem:[#allocation5 + $0x2cc] sm:$0xf]
    %v1866 = vld [vmem:[#allocation5 + $0x2d0] sm:$0xff]
    %v1867 = vld [vmem:[#allocation5 + $0x2d8] sm:$0xf]
    %v1868 = vld [vmem:[#allocation5 + $0x2dc] sm:$0xff]
    %v1869 = vld [vmem:[#allocation5 + $0x2e4] sm:$0xf]
    %v1870 = vld [vmem:[#allocation5 + $0x2e8] sm:$0xff]
    %v1871 = vld [vmem:[#allocation5 + $0x2f0] sm:$0xf]
    %v1872 = vld [vmem:[#allocation5 + $0x2f4] sm:$0xff]
    %v1873 = vld [vmem:[#allocation5 + $0x2fc] sm:$0xf]
    %v1906 = vunpack.c.l.b16 %v1842
    %v1907 = vunpack.c.h.b16 %v1842
    %v1908 = vunpack.c.l.b16 %v1843
    %v1909 = vunpack.c.l.b16 %v1844
    %v1910 = vunpack.c.h.b16 %v1844
    %v1911 = vunpack.c.l.b16 %v1845
    %v1912 = vunpack.c.l.b16 %v1846
    %v1913 = vunpack.c.h.b16 %v1846
    %v1914 = vunpack.c.l.b16 %v1847
    %v1915 = vunpack.c.l.b16 %v1848
    %v1916 = vunpack.c.h.b16 %v1848
    %v1917 = vunpack.c.l.b16 %v1849
    %v1918 = vunpack.c.l.b16 %v1850
    %v1919 = vunpack.c.h.b16 %v1850
    %v1920 = vunpack.c.l.b16 %v1851
    %v1921 = vunpack.c.l.b16 %v1852
    %v1922 = vunpack.c.h.b16 %v1852
    %v1923 = vunpack.c.l.b16 %v1853
    %v1924 = vunpack.c.l.b16 %v1854
    %v1925 = vunpack.c.h.b16 %v1854
    %v1926 = vunpack.c.l.b16 %v1855
    %v1927 = vunpack.c.l.b16 %v1856
    %v1928 = vunpack.c.h.b16 %v1856
    %v1929 = vunpack.c.l.b16 %v1857
    %v1930 = vunpack.c.l.b16 %v1858
    %v1931 = vunpack.c.h.b16 %v1858
    %v1932 = vunpack.c.l.b16 %v1859
    %v1933 = vunpack.c.l.b16 %v1860
    %v1934 = vunpack.c.h.b16 %v1860
    %v1935 = vunpack.c.l.b16 %v1861
    %v1936 = vunpack.c.l.b16 %v1862
    %v1937 = vunpack.c.h.b16 %v1862
    %v1938 = vunpack.c.l.b16 %v1863
    %v1939 = vunpack.c.l.b16 %v1864
    %v1940 = vunpack.c.h.b16 %v1864
    %v1941 = vunpack.c.l.b16 %v1865
    %v1942 = vunpack.c.l.b16 %v1866
    %v1943 = vunpack.c.h.b16 %v1866
    %v1944 = vunpack.c.l.b16 %v1867
    %v1945 = vunpack.c.l.b16 %v1868
    %v1946 = vunpack.c.h.b16 %v1868
    %v1947 = vunpack.c.l.b16 %v1869
    %v1948 = vunpack.c.l.b16 %v1870
    %v1949 = vunpack.c.h.b16 %v1870
    %v1950 = vunpack.c.l.b16 %v1871
    %v1951 = vunpack.c.l.b16 %v1872
    %v1952 = vunpack.c.h.b16 %v1872
    %v1953 = vunpack.c.l.b16 %v1873
    %v1954 = vpack.c.b16 %v1909, %v1906
    %v1955 = vpack.c.b16 %v1910, %v1907
    %v1956 = vpack.c.b16 %v1911, %v1908
    %v1957 = vpack.c.b16 %v1915, %v1912
    %v1958 = vpack.c.b16 %v1916, %v1913
    %v1959 = vpack.c.b16 %v1917, %v1914
    %v1960 = vpack.c.b16 %v1921, %v1918
    %v1961 = vpack.c.b16 %v1922, %v1919
    %v1962 = vpack.c.b16 %v1923, %v1920
    %v1963 = vpack.c.b16 %v1927, %v1924
    %v1964 = vpack.c.b16 %v1928, %v1925
    %v1965 = vpack.c.b16 %v1929, %v1926
    %v1966 = vpack.c.b16 %v1933, %v1930
    %v1967 = vpack.c.b16 %v1934, %v1931
    %v1968 = vpack.c.b16 %v1935, %v1932
    %v1969 = vpack.c.b16 %v1939, %v1936
    %v1970 = vpack.c.b16 %v1940, %v1937
    %v1971 = vpack.c.b16 %v1941, %v1938
    %v1972 = vpack.c.b16 %v1945, %v1942
    %v1973 = vpack.c.b16 %v1946, %v1943
    %v1974 = vpack.c.b16 %v1947, %v1944
    %v1975 = vpack.c.b16 %v1951, %v1948
    %v1976 = vpack.c.b16 %v1952, %v1949
    %v1977 = vpack.c.b16 %v1953, %v1950
    %2002 = vmatpush.bf16.msra.mxu0 %v1975
    %2003 = vmatpush.bf16.msra.mxu0 %v1972
    %2004 = vmatpush.bf16.msra.mxu0 %v1969
    %2005 = vmatpush.bf16.msra.mxu0 %v1966
    %2006 = vmatpush.bf16.msra.mxu0 %v1963
    %2007 = vmatpush.bf16.msra.mxu0 %v1960
    %2008 = vmatpush.bf16.msra.mxu0 %v1957
    %2009 = vmatpush.bf16.msra.mxu0 %v1954
    %2010 = vmatmul.bf16.gmra.mxu0 %v1841
    %v2011 = vpop.f32.mrf.mxu0
    %v2012 = vadd.f32 0.0, %v2011
    %v2013 = vpop.f32.mrf.mxu0
    %v2014 = vadd.f32 0.0, %v2013
    %2015 = vdwg.mxu0
    %2016 = vmatpush.bf16.msra.mxu0 %v1976
    %2017 = vmatpush.bf16.msra.mxu0 %v1973
    %2018 = vmatpush.bf16.msra.mxu0 %v1970
    %2019 = vmatpush.bf16.msra.mxu0 %v1967
    %2020 = vmatpush.bf16.msra.mxu0 %v1964
    %2021 = vmatpush.bf16.msra.mxu0 %v1961
    %2022 = vmatpush.bf16.msra.mxu0 %v1958
    %2023 = vmatpush.bf16.msra.mxu0 %v1955
    %2024 = vmatmul.bf16.gmra.mxu0 %v1841
    %v2025 = vpop.f32.mrf.mxu0
    %v2026 = vadd.f32 0.0, %v2025
    %v2027 = vpop.f32.mrf.mxu0
    %v2028 = vadd.f32 0.0, %v2027
    %2029 = vdwg.mxu0
    %2030 = vmatpush.bf16.msra.mxu0 %v1977
    %2031 = vmatpush.bf16.msra.mxu0 %v1974
    %2032 = vmatpush.bf16.msra.mxu0 %v1971
    %2033 = vmatpush.bf16.msra.mxu0 %v1968
    %2034 = vmatpush.bf16.msra.mxu0 %v1965
    %2035 = vmatpush.bf16.msra.mxu0 %v1962
    %2036 = vmatpush.bf16.msra.mxu0 %v1959
    %2037 = vmatpush.bf16.msra.mxu0 %v1956
    %2038 = vmatmul.bf16.gmra.mxu0 %v1841
    %v2039 = vpop.f32.mrf.mxu0
    %v2040 = vadd.f32 0.0, %v2039
    %v2041 = vpop.f32.mrf.mxu0
    %v2042 = vadd.f32 0.0, %v2041
    %2043 = vdwg.mxu0
    %v2044 = vpack.c.bf16 %v2026, %v2012
    %v2045 = vpack.c.bf16 %v2040, %v2040
    %v2046 = vpack.c.bf16 %v2028, %v2014
    %v2047 = vpack.c.bf16 %v2042, %v2042
    %v2048 = vld [vmem:[#allocation11 + $0xa8] sm:$0xf]
    %v2049 = vld [vmem:[#allocation11 + $0xac] sm:$0xf]
    %v2052 = vunpack.c.h.b16 %v2044
    %v2053 = vunpack.c.h.b16 %v2046
    %v2054 = vpack.c.b16 %v2053, %v2052
    %vm2056 = vcmask 130048
    %v2058 = vsel %vm2056, %v2049, 0
    %2060 = vmatpush.bf16.msra.mxu0 0
    %2061 = vmatpush.bf16.msra.mxu0 0
    %2062 = vmatpush.bf16.msra.mxu0 0
    %2063 = vmatpush.bf16.msra.mxu0 0
    %2064 = vmatpush.bf16.msra.mxu0 0
    %2065 = vmatpush.bf16.msra.mxu0 0
    %2066 = vmatpush.bf16.msra.mxu0 0
    %2067 = vmatpush.bf16.msra.mxu0 %v2054
    %2068 = vmatmul.bf16.gmra.mxu0 %v2058
    %v2069 = vpop.f32.mrf.mxu0
    %v2070 = vadd.f32 0.0, %v2069
    %v2071 = vpop.f32.mrf.mxu0
    %2072 = vdwg.mxu0
    %v2073 = vunpack.c.l.b16 %v2044
    %v2074 = vunpack.c.l.b16 %v2046
    %v2075 = vpack.c.b16 %v2074, %v2073
    %v2078 = vsel %vm2056, %v2048, 0
    %2080 = vmatpush.bf16.msra.mxu0 0
    %2081 = vmatpush.bf16.msra.mxu0 0
    %2082 = vmatpush.bf16.msra.mxu0 0
    %2083 = vmatpush.bf16.msra.mxu0 0
    %2084 = vmatpush.bf16.msra.mxu0 0
    %2085 = vmatpush.bf16.msra.mxu0 0
    %2086 = vmatpush.bf16.msra.mxu0 0
    %2087 = vmatpush.bf16.msra.mxu0 %v2075
    %2088 = vmatmul.bf16.gmra.mxu0 %v2078
    %v2089 = vpop.f32.mrf.mxu0
    %v2090 = vadd.f32 %v2070, %v2089
    %v2091 = vpop.f32.mrf.mxu0
    %2092 = vdwg.mxu0
    %v2093 = vld [vmem:[#allocation11 + $0xb0] sm:$0xf]
    %v2096 = vunpack.c.l.b16 %v2045
    %v2097 = vunpack.c.l.b16 %v2047
    %v2098 = vpack.c.b16 %v2097, %v2096
    %v2101 = vsel %vm2056, %v2093, 0
    %2103 = vmatpush.bf16.msra.mxu0 0
    %2104 = vmatpush.bf16.msra.mxu0 0
    %2105 = vmatpush.bf16.msra.mxu0 0
    %2106 = vmatpush.bf16.msra.mxu0 0
    %2107 = vmatpush.bf16.msra.mxu0 0
    %2108 = vmatpush.bf16.msra.mxu0 0
    %2109 = vmatpush.bf16.msra.mxu0 0
    %2110 = vmatpush.bf16.msra.mxu0 %v2098
    %2111 = vmatmul.bf16.gmra.mxu0 %v2101
    %v2112 = vpop.f32.mrf.mxu0
    %v2113 = vadd.f32 0.0, %v2112
    %v2114 = vpop.f32.mrf.mxu0
    %2115 = vdwg.mxu0
    %v2116 = vadd.f32 %v2090, %v2113
    %v2117 = vrot.slane %v2116, 4
    %v2118 = vadd.f32 %v2116, %v2117
    %v2119 = vrot.slane %v2118, 2
    %v2120 = vadd.f32 %v2118, %v2119
    %v2121 = vrot.slane %v2120, 1
    %v2122 = vadd.f32 %v2120, %v2121
    %v2123 = vmul.f32 %v2122, 0.125
    %v2124 = vmul.f32 %v2116, %v2116
    %v2125 = vrot.slane %v2124, 4
    %v2126 = vadd.f32 %v2124, %v2125
    %v2127 = vrot.slane %v2126, 2
    %v2128 = vadd.f32 %v2126, %v2127
    %v2129 = vrot.slane %v2128, 1
    %v2130 = vadd.f32 %v2128, %v2129
    %v2131 = vmul.f32 %v2130, 0.125
    %v2132 = vmul.f32 %v2123, %v2123
    %v2133 = vsub.f32 %v2131, %v2132
    %v2134 = vmax.f32 %v2133, 0.0
    %v2135 = vld [vmem:[%s7 + $0x6] ss:$0 sm:$0xff]
    %v2136 = vld [vmem:[%s7 + $0x7] ss:$0 sm:$0xff]
    %v2137 = vadd.f32 %v2134, 1e-05
    %v2138 = vrsqrt.pop %v2137
    %v2139 = vmul.f32 %v2138, %v2137
    %v2140 = vmul.f32 %v2139, %v2138
    %v2141 = vmul.f32 0.5, %v2140
    %v2142 = vsub.f32 1.5, %v2141
    %v2143 = vmul.f32 %v2138, %v2142
    %vm2144 = vweird.f32 %v2137
    %vm2145 = vweird.f32 %v2138
    %vm2146 = vmor %vm2144, %vm2145
    %v2147 = vsel %vm2146, %v2138, %v2143
    %v2148 = vmul.f32 %v2147, %v2135
    %v2149 = vmul.f32 %v2116, %v2148
    %v2150 = vmul.f32 %v2123, %v2148
    %v2151 = vsub.f32 %v2136, %v2150
    %v2152 = vadd.f32 %v2149, %v2151
    %vm2153 = vcmp.ge.f32.partialorder %v2152, 0.0
    %v2154 = vmul.f32 %v2152, 0.01
    %v2155 = vsel %vm2153, %v2152, %v2154
    %v2156 = vpack.c.bf16 %v2155, %v2155
    %v2157 = vld [vmem:[#allocation10] sm:$0xff]
    %v2158 = vld [vmem:[#allocation10 + $0x8] sm:$0xff]
    %v2159 = vld [vmem:[#allocation10 + $0x10] sm:$0xff]
    %v2160 = vld [vmem:[#allocation10 + $0x18] sm:$0xff]
    %v2161 = vld [vmem:[#allocation10 + $0x20] sm:$0xff]
    %v2162 = vld [vmem:[#allocation10 + $0x28] sm:$0xff]
    %v2163 = vld [vmem:[#allocation10 + $0x30] sm:$0xff]
    %v2164 = vld [vmem:[#allocation10 + $0x38] sm:$0xff]
    %v2165 = vld [vmem:[#allocation10 + $0x40] sm:$0xff]
    %v2166 = vld [vmem:[#allocation10 + $0x48] sm:$0xff]
    %v2167 = vld [vmem:[#allocation10 + $0x50] sm:$0xff]
    %v2168 = vld [vmem:[#allocation10 + $0x58] sm:$0xff]
    %v2169 = vld [vmem:[#allocation10 + $0x60] sm:$0xff]
    %v2170 = vld [vmem:[#allocation10 + $0x68] sm:$0xff]
    %v2171 = vld [vmem:[#allocation10 + $0x70] sm:$0xff]
    %v2172 = vld [vmem:[#allocation10 + $0x78] sm:$0xff]
    %v2173 = vld [vmem:[#allocation10 + $0x80] sm:$0xff]
    %v2174 = vld [vmem:[#allocation10 + $0x88] sm:$0xff]
    %v2175 = vld [vmem:[#allocation10 + $0x90] sm:$0xff]
    %v2176 = vld [vmem:[#allocation10 + $0x98] sm:$0xff]
    %v2177 = vld [vmem:[#allocation10 + $0xa0] sm:$0xff]
    %v2178 = vld [vmem:[#allocation10 + $0xa8] sm:$0xff]
    %v2179 = vld [vmem:[#allocation10 + $0xb0] sm:$0xff]
    %v2180 = vld [vmem:[#allocation10 + $0xb8] sm:$0xff]
    %v2181 = vld [vmem:[#allocation10 + $0xc0] sm:$0xff]
    %v2182 = vld [vmem:[#allocation10 + $0xc8] sm:$0xff]
    %v2183 = vld [vmem:[#allocation10 + $0xd0] sm:$0xff]
    %v2184 = vld [vmem:[#allocation10 + $0xd8] sm:$0xff]
    %v2185 = vld [vmem:[#allocation10 + $0xe0] sm:$0xff]
    %v2186 = vld [vmem:[#allocation10 + $0xe8] sm:$0xff]
    %v2187 = vld [vmem:[#allocation10 + $0xf0] sm:$0xff]
    %v2188 = vld [vmem:[#allocation10 + $0xf8] sm:$0xff]
    %v2189 = vld [vmem:[#allocation10 + $0x100] sm:$0xff]
    %v2190 = vld [vmem:[#allocation10 + $0x108] sm:$0xff]
    %v2191 = vld [vmem:[#allocation10 + $0x110] sm:$0xff]
    %v2192 = vld [vmem:[#allocation10 + $0x118] sm:$0xff]
    %v2193 = vld [vmem:[#allocation10 + $0x120] sm:$0xff]
    %v2194 = vld [vmem:[#allocation10 + $0x128] sm:$0xff]
    %v2195 = vld [vmem:[#allocation10 + $0x130] sm:$0xff]
    %v2196 = vld [vmem:[#allocation10 + $0x138] sm:$0xff]
    %v2197 = vld [vmem:[#allocation10 + $0x140] sm:$0xff]
    %v2198 = vld [vmem:[#allocation10 + $0x148] sm:$0xff]
    %v2199 = vld [vmem:[#allocation10 + $0x150] sm:$0xff]
    %v2200 = vld [vmem:[#allocation10 + $0x158] sm:$0xff]
    %v2201 = vld [vmem:[#allocation10 + $0x160] sm:$0xff]
    %v2202 = vld [vmem:[#allocation10 + $0x168] sm:$0xff]
    %v2203 = vld [vmem:[#allocation10 + $0x170] sm:$0xff]
    %v2204 = vld [vmem:[#allocation10 + $0x178] sm:$0xff]
    %v2253 = vunpack.c.l.b16 %v2157
    %v2254 = vunpack.c.h.b16 %v2157
    %v2255 = vunpack.c.l.b16 %v2158
    %v2256 = vunpack.c.h.b16 %v2158
    %v2257 = vunpack.c.l.b16 %v2159
    %v2258 = vunpack.c.h.b16 %v2159
    %v2259 = vunpack.c.l.b16 %v2160
    %v2260 = vunpack.c.h.b16 %v2160
    %v2261 = vunpack.c.l.b16 %v2161
    %v2262 = vunpack.c.h.b16 %v2161
    %v2263 = vunpack.c.l.b16 %v2162
    %v2264 = vunpack.c.h.b16 %v2162
    %v2265 = vunpack.c.l.b16 %v2163
    %v2266 = vunpack.c.h.b16 %v2163
    %v2267 = vunpack.c.l.b16 %v2164
    %v2268 = vunpack.c.h.b16 %v2164
    %v2269 = vunpack.c.l.b16 %v2165
    %v2270 = vunpack.c.h.b16 %v2165
    %v2271 = vunpack.c.l.b16 %v2166
    %v2272 = vunpack.c.h.b16 %v2166
    %v2273 = vunpack.c.l.b16 %v2167
    %v2274 = vunpack.c.h.b16 %v2167
    %v2275 = vunpack.c.l.b16 %v2168
    %v2276 = vunpack.c.h.b16 %v2168
    %v2277 = vunpack.c.l.b16 %v2169
    %v2278 = vunpack.c.h.b16 %v2169
    %v2279 = vunpack.c.l.b16 %v2170
    %v2280 = vunpack.c.h.b16 %v2170
    %v2281 = vunpack.c.l.b16 %v2171
    %v2282 = vunpack.c.h.b16 %v2171
    %v2283 = vunpack.c.l.b16 %v2172
    %v2284 = vunpack.c.h.b16 %v2172
    %v2285 = vunpack.c.l.b16 %v2173
    %v2286 = vunpack.c.h.b16 %v2173
    %v2287 = vunpack.c.l.b16 %v2174
    %v2288 = vunpack.c.h.b16 %v2174
    %v2289 = vunpack.c.l.b16 %v2175
    %v2290 = vunpack.c.h.b16 %v2175
    %v2291 = vunpack.c.l.b16 %v2176
    %v2292 = vunpack.c.h.b16 %v2176
    %v2293 = vunpack.c.l.b16 %v2177
    %v2294 = vunpack.c.h.b16 %v2177
    %v2295 = vunpack.c.l.b16 %v2178
    %v2296 = vunpack.c.h.b16 %v2178
    %v2297 = vunpack.c.l.b16 %v2179
    %v2298 = vunpack.c.h.b16 %v2179
    %v2299 = vunpack.c.l.b16 %v2180
    %v2300 = vunpack.c.h.b16 %v2180
    %v2301 = vunpack.c.l.b16 %v2181
    %v2302 = vunpack.c.h.b16 %v2181
    %v2303 = vunpack.c.l.b16 %v2182
    %v2304 = vunpack.c.h.b16 %v2182
    %v2305 = vunpack.c.l.b16 %v2183
    %v2306 = vunpack.c.h.b16 %v2183
    %v2307 = vunpack.c.l.b16 %v2184
    %v2308 = vunpack.c.h.b16 %v2184
    %v2309 = vunpack.c.l.b16 %v2185
    %v2310 = vunpack.c.h.b16 %v2185
    %v2311 = vunpack.c.l.b16 %v2186
    %v2312 = vunpack.c.h.b16 %v2186
    %v2313 = vunpack.c.l.b16 %v2187
    %v2314 = vunpack.c.h.b16 %v2187
    %v2315 = vunpack.c.l.b16 %v2188
    %v2316 = vunpack.c.h.b16 %v2188
    %v2317 = vunpack.c.l.b16 %v2189
    %v2318 = vunpack.c.h.b16 %v2189
    %v2319 = vunpack.c.l.b16 %v2190
    %v2320 = vunpack.c.h.b16 %v2190
    %v2321 = vunpack.c.l.b16 %v2191
    %v2322 = vunpack.c.h.b16 %v2191
    %v2323 = vunpack.c.l.b16 %v2192
    %v2324 = vunpack.c.h.b16 %v2192
    %v2325 = vunpack.c.l.b16 %v2193
    %v2326 = vunpack.c.h.b16 %v2193
    %v2327 = vunpack.c.l.b16 %v2194
    %v2328 = vunpack.c.h.b16 %v2194
    %v2329 = vunpack.c.l.b16 %v2195
    %v2330 = vunpack.c.h.b16 %v2195
    %v2331 = vunpack.c.l.b16 %v2196
    %v2332 = vunpack.c.h.b16 %v2196
    %v2333 = vunpack.c.l.b16 %v2197
    %v2334 = vunpack.c.h.b16 %v2197
    %v2335 = vunpack.c.l.b16 %v2198
    %v2336 = vunpack.c.h.b16 %v2198
    %v2337 = vunpack.c.l.b16 %v2199
    %v2338 = vunpack.c.h.b16 %v2199
    %v2339 = vunpack.c.l.b16 %v2200
    %v2340 = vunpack.c.h.b16 %v2200
    %v2341 = vunpack.c.l.b16 %v2201
    %v2342 = vunpack.c.h.b16 %v2201
    %v2343 = vunpack.c.l.b16 %v2202
    %v2344 = vunpack.c.h.b16 %v2202
    %v2345 = vunpack.c.l.b16 %v2203
    %v2346 = vunpack.c.h.b16 %v2203
    %v2347 = vunpack.c.l.b16 %v2204
    %v2348 = vunpack.c.h.b16 %v2204
    %v2349 = vpack.c.b16 %v2259, %v2253
    %v2350 = vpack.c.b16 %v2260, %v2254
    %v2351 = vpack.c.b16 %v2261, %v2255
    %v2352 = vpack.c.b16 %v2262, %v2256
    %v2353 = vpack.c.b16 %v2263, %v2257
    %v2354 = vpack.c.b16 %v2264, %v2258
    %v2355 = vpack.c.b16 %v2271, %v2265
    %v2356 = vpack.c.b16 %v2272, %v2266
    %v2357 = vpack.c.b16 %v2273, %v2267
    %v2358 = vpack.c.b16 %v2274, %v2268
    %v2359 = vpack.c.b16 %v2275, %v2269
    %v2360 = vpack.c.b16 %v2276, %v2270
    %v2361 = vpack.c.b16 %v2283, %v2277
    %v2362 = vpack.c.b16 %v2284, %v2278
    %v2363 = vpack.c.b16 %v2285, %v2279
    %v2364 = vpack.c.b16 %v2286, %v2280
    %v2365 = vpack.c.b16 %v2287, %v2281
    %v2366 = vpack.c.b16 %v2288, %v2282
    %v2367 = vpack.c.b16 %v2295, %v2289
    %v2368 = vpack.c.b16 %v2296, %v2290
    %v2369 = vpack.c.b16 %v2297, %v2291
    %v2370 = vpack.c.b16 %v2298, %v2292
    %v2371 = vpack.c.b16 %v2299, %v2293
    %v2372 = vpack.c.b16 %v2300, %v2294
    %v2373 = vpack.c.b16 %v2307, %v2301
    %v2374 = vpack.c.b16 %v2308, %v2302
    %v2375 = vpack.c.b16 %v2309, %v2303
    %v2376 = vpack.c.b16 %v2310, %v2304
    %v2377 = vpack.c.b16 %v2311, %v2305
    %v2378 = vpack.c.b16 %v2312, %v2306
    %v2379 = vpack.c.b16 %v2319, %v2313
    %v2380 = vpack.c.b16 %v2320, %v2314
    %v2381 = vpack.c.b16 %v2321, %v2315
    %v2382 = vpack.c.b16 %v2322, %v2316
    %v2383 = vpack.c.b16 %v2323, %v2317
    %v2384 = vpack.c.b16 %v2324, %v2318
    %v2385 = vpack.c.b16 %v2331, %v2325
    %v2386 = vpack.c.b16 %v2332, %v2326
    %v2387 = vpack.c.b16 %v2333, %v2327
    %v2388 = vpack.c.b16 %v2334, %v2328
    %v2389 = vpack.c.b16 %v2335, %v2329
    %v2390 = vpack.c.b16 %v2336, %v2330
    %v2391 = vpack.c.b16 %v2343, %v2337
    %v2392 = vpack.c.b16 %v2344, %v2338
    %v2393 = vpack.c.b16 %v2345, %v2339
    %v2394 = vpack.c.b16 %v2346, %v2340
    %v2395 = vpack.c.b16 %v2347, %v2341
    %v2396 = vpack.c.b16 %v2348, %v2342
    %2445 = vmatpush.bf16.msra.mxu0 %v2391
    %2446 = vmatpush.bf16.msra.mxu0 %v2385
    %2447 = vmatpush.bf16.msra.mxu0 %v2379
    %2448 = vmatpush.bf16.msra.mxu0 %v2373
    %2449 = vmatpush.bf16.msra.mxu0 %v2367
    %2450 = vmatpush.bf16.msra.mxu0 %v2361
    %2451 = vmatpush.bf16.msra.mxu0 %v2355
    %2452 = vmatpush.bf16.msra.mxu0 %v2349
    %2453 = vmatmul.bf16.gmra.mxu0 %v2156
    %v2454 = vpop.f32.mrf.mxu0
    %v2455 = vadd.f32 0.0, %v2454
    %v2456 = vpop.f32.mrf.mxu0
    %2457 = vdwg.mxu0
    %2458 = vmatpush.bf16.msra.mxu0 %v2392
    %2459 = vmatpush.bf16.msra.mxu0 %v2386
    %2460 = vmatpush.bf16.msra.mxu0 %v2380
    %2461 = vmatpush.bf16.msra.mxu0 %v2374
    %2462 = vmatpush.bf16.msra.mxu0 %v2368
    %2463 = vmatpush.bf16.msra.mxu0 %v2362
    %2464 = vmatpush.bf16.msra.mxu0 %v2356
    %2465 = vmatpush.bf16.msra.mxu0 %v2350
    %2466 = vmatmul.bf16.gmra.mxu0 %v2156
    %v2467 = vpop.f32.mrf.mxu0
    %v2468 = vadd.f32 0.0, %v2467
    %v2469 = vpop.f32.mrf.mxu0
    %2470 = vdwg.mxu0
    %2471 = vmatpush.bf16.msra.mxu0 %v2393
    %2472 = vmatpush.bf16.msra.mxu0 %v2387
    %2473 = vmatpush.bf16.msra.mxu0 %v2381
    %2474 = vmatpush.bf16.msra.mxu0 %v2375
    %2475 = vmatpush.bf16.msra.mxu0 %v2369
    %2476 = vmatpush.bf16.msra.mxu0 %v2363
    %2477 = vmatpush.bf16.msra.mxu0 %v2357
    %2478 = vmatpush.bf16.msra.mxu0 %v2351
    %2479 = vmatmul.bf16.gmra.mxu0 %v2156
    %v2480 = vpop.f32.mrf.mxu0
    %v2481 = vadd.f32 0.0, %v2480
    %v2482 = vpop.f32.mrf.mxu0
    %2483 = vdwg.mxu0
    %2484 = vmatpush.bf16.msra.mxu0 %v2394
    %2485 = vmatpush.bf16.msra.mxu0 %v2388
    %2486 = vmatpush.bf16.msra.mxu0 %v2382
    %2487 = vmatpush.bf16.msra.mxu0 %v2376
    %2488 = vmatpush.bf16.msra.mxu0 %v2370
    %2489 = vmatpush.bf16.msra.mxu0 %v2364
    %2490 = vmatpush.bf16.msra.mxu0 %v2358
    %2491 = vmatpush.bf16.msra.mxu0 %v2352
    %2492 = vmatmul.bf16.gmra.mxu0 %v2156
    %v2493 = vpop.f32.mrf.mxu0
    %v2494 = vadd.f32 0.0, %v2493
    %v2495 = vpop.f32.mrf.mxu0
    %2496 = vdwg.mxu0
    %2497 = vmatpush.bf16.msra.mxu0 %v2395
    %2498 = vmatpush.bf16.msra.mxu0 %v2389
    %2499 = vmatpush.bf16.msra.mxu0 %v2383
    %2500 = vmatpush.bf16.msra.mxu0 %v2377
    %2501 = vmatpush.bf16.msra.mxu0 %v2371
    %2502 = vmatpush.bf16.msra.mxu0 %v2365
    %2503 = vmatpush.bf16.msra.mxu0 %v2359
    %2504 = vmatpush.bf16.msra.mxu0 %v2353
    %2505 = vmatmul.bf16.gmra.mxu0 %v2156
    %v2506 = vpop.f32.mrf.mxu0
    %v2507 = vadd.f32 0.0, %v2506
    %v2508 = vpop.f32.mrf.mxu0
    %2509 = vdwg.mxu0
    %2510 = vmatpush.bf16.msra.mxu0 %v2396
    %2511 = vmatpush.bf16.msra.mxu0 %v2390
    %2512 = vmatpush.bf16.msra.mxu0 %v2384
    %2513 = vmatpush.bf16.msra.mxu0 %v2378
    %2514 = vmatpush.bf16.msra.mxu0 %v2372
    %2515 = vmatpush.bf16.msra.mxu0 %v2366
    %2516 = vmatpush.bf16.msra.mxu0 %v2360
    %2517 = vmatpush.bf16.msra.mxu0 %v2354
    %2518 = vmatmul.bf16.gmra.mxu0 %v2156
    %v2519 = vpop.f32.mrf.mxu0
    %v2520 = vadd.f32 0.0, %v2519
    %v2521 = vpop.f32.mrf.mxu0
    %2522 = vdwg.mxu0
    %v2523 = vpack.c.bf16 %v2468, %v2455
    %v2524 = vpack.c.bf16 %v2494, %v2481
    %v2525 = vpack.c.bf16 %v2520, %v2507
    %v2526 = vld [vmem:[#allocation11 + $0xb4] sm:$0x3]
    %v2527 = vld [vmem:[#allocation11 + $0xb8] sm:$0x3]
    %v2529 = vunpack.c.l.b16 %v2524
    %v2530 = vunpack.c.h.b16 %v2524
    %v2531 = vpack.c.b16 %v2529, %v2529
    %v2532 = vpack.c.b16 %v2530, %v2530
    %vm2533 = vcmask 64512
    %v2535 = vsel %vm2533, %v2527, 0
    %vm2537 = vcmask 1043456
    %v2539 = vsel %vm2537, %v2531, 0
    %v2542 = vsel %vm2537, %v2532, 0
    %2544 = vmatpush.bf16.msra.mxu0 0
    %2545 = vmatpush.bf16.msra.mxu0 0
    %2546 = vmatpush.bf16.msra.mxu0 0
    %2547 = vmatpush.bf16.msra.mxu0 0
    %2548 = vmatpush.bf16.msra.mxu0 0
    %2549 = vmatpush.bf16.msra.mxu0 0
    %2550 = vmatpush.bf16.msra.mxu0 0
    %2551 = vmatpush.bf16.msra.mxu0 %v2539
    %2552 = vmatmul.bf16.gmra.mxu0 %v2535
    %v2553 = vpop.f32.mrf.mxu0
    %v2554 = vadd.f32 0.0, %v2553
    %v2555 = vpop.f32.mrf.mxu0
    %2556 = vdwg.mxu0
    %2557 = vmatpush.bf16.msra.mxu0 0
    %2558 = vmatpush.bf16.msra.mxu0 0
    %2559 = vmatpush.bf16.msra.mxu0 0
    %2560 = vmatpush.bf16.msra.mxu0 0
    %2561 = vmatpush.bf16.msra.mxu0 0
    %2562 = vmatpush.bf16.msra.mxu0 0
    %2563 = vmatpush.bf16.msra.mxu0 0
    %2564 = vmatpush.bf16.msra.mxu0 %v2542
    %2565 = vmatmul.bf16.gmra.mxu0 %v2535
    %v2566 = vpop.f32.mrf.mxu0
    %v2567 = vadd.f32 0.0, %v2566
    %v2568 = vpop.f32.mrf.mxu0
    %2569 = vdwg.mxu0
    %v2571 = vunpack.c.l.b16 %v2523
    %v2572 = vunpack.c.h.b16 %v2523
    %v2573 = vpack.c.b16 %v2571, %v2571
    %v2574 = vpack.c.b16 %v2572, %v2572
    %v2576 = vsel %vm2533, %v2526, 0
    %v2579 = vsel %vm2537, %v2573, 0
    %v2582 = vsel %vm2537, %v2574, 0
    %2584 = vmatpush.bf16.msra.mxu0 0
    %2585 = vmatpush.bf16.msra.mxu0 0
    %2586 = vmatpush.bf16.msra.mxu0 0
    %2587 = vmatpush.bf16.msra.mxu0 0
    %2588 = vmatpush.bf16.msra.mxu0 0
    %2589 = vmatpush.bf16.msra.mxu0 0
    %2590 = vmatpush.bf16.msra.mxu0 0
    %2591 = vmatpush.bf16.msra.mxu0 %v2579
    %2592 = vmatmul.bf16.gmra.mxu0 %v2576
    %v2593 = vpop.f32.mrf.mxu0
    %v2594 = vadd.f32 %v2554, %v2593
    %v2595 = vpop.f32.mrf.mxu0
    %2596 = vdwg.mxu0
    %2597 = vmatpush.bf16.msra.mxu0 0
    %2598 = vmatpush.bf16.msra.mxu0 0
    %2599 = vmatpush.bf16.msra.mxu0 0
    %2600 = vmatpush.bf16.msra.mxu0 0
    %2601 = vmatpush.bf16.msra.mxu0 0
    %2602 = vmatpush.bf16.msra.mxu0 0
    %2603 = vmatpush.bf16.msra.mxu0 0
    %2604 = vmatpush.bf16.msra.mxu0 %v2582
    %2605 = vmatmul.bf16.gmra.mxu0 %v2576
    %v2606 = vpop.f32.mrf.mxu0
    %v2607 = vadd.f32 %v2567, %v2606
    %v2608 = vpop.f32.mrf.mxu0
    %2609 = vdwg.mxu0
    %v2610 = vld [vmem:[#allocation11 + $0xbc] sm:$0x3]
    %v2612 = vunpack.c.l.b16 %v2525
    %v2613 = vunpack.c.h.b16 %v2525
    %v2614 = vpack.c.b16 %v2612, %v2612
    %v2615 = vpack.c.b16 %v2613, %v2613
    %v2617 = vsel %vm2533, %v2610, 0
    %v2620 = vsel %vm2537, %v2614, 0
    %v2623 = vsel %vm2537, %v2615, 0
    %2625 = vmatpush.bf16.msra.mxu0 0
    %2626 = vmatpush.bf16.msra.mxu0 0
    %2627 = vmatpush.bf16.msra.mxu0 0
    %2628 = vmatpush.bf16.msra.mxu0 0
    %2629 = vmatpush.bf16.msra.mxu0 0
    %2630 = vmatpush.bf16.msra.mxu0 0
    %2631 = vmatpush.bf16.msra.mxu0 0
    %2632 = vmatpush.bf16.msra.mxu0 %v2620
    %2633 = vmatmul.bf16.gmra.mxu0 %v2617
    %v2634 = vpop.f32.mrf.mxu0
    %v2635 = vadd.f32 0.0, %v2634
    %v2636 = vpop.f32.mrf.mxu0
    %2637 = vdwg.mxu0
    %2638 = vmatpush.bf16.msra.mxu0 0
    %2639 = vmatpush.bf16.msra.mxu0 0
    %2640 = vmatpush.bf16.msra.mxu0 0
    %2641 = vmatpush.bf16.msra.mxu0 0
    %2642 = vmatpush.bf16.msra.mxu0 0
    %2643 = vmatpush.bf16.msra.mxu0 0
    %2644 = vmatpush.bf16.msra.mxu0 0
    %2645 = vmatpush.bf16.msra.mxu0 %v2623
    %2646 = vmatmul.bf16.gmra.mxu0 %v2617
    %v2647 = vpop.f32.mrf.mxu0
    %v2648 = vadd.f32 0.0, %v2647
    %v2649 = vpop.f32.mrf.mxu0
    %2650 = vdwg.mxu0
    %v2651 = vadd.f32 %v2594, %v2635
    %v2652 = vadd.f32 %v2607, %v2648
    %v2653 = vsel %vm2537, %v2651, 0.0
    %v2654 = vrot.slane %v2653, 4
    %v2655 = vadd.f32 %v2653, %v2654
    %v2656 = vrot.slane %v2655, 2
    %v2657 = vadd.f32 %v2655, %v2656
    %v2658 = vrot.slane %v2657, 1
    %v2659 = vadd.f32 %v2657, %v2658
    %v2660 = vsel %vm2537, %v2652, 0.0
    %v2661 = vrot.slane %v2660, 4
    %v2662 = vadd.f32 %v2660, %v2661
    %v2663 = vrot.slane %v2662, 2
    %v2664 = vadd.f32 %v2662, %v2663
    %v2665 = vrot.slane %v2664, 1
    %v2666 = vadd.f32 %v2664, %v2665
    %v2667 = vmul.f32 %v2659, 0.25
    %v2668 = vmul.f32 %v2666, 0.25
    %v2669 = vmul.f32 %v2651, %v2651
    %v2670 = vmul.f32 %v2652, %v2652
    %v2671 = vsel %vm2537, %v2669, 0.0
    %v2672 = vrot.slane %v2671, 4
    %v2673 = vadd.f32 %v2671, %v2672
    %v2674 = vrot.slane %v2673, 2
    %v2675 = vadd.f32 %v2673, %v2674
    %v2676 = vrot.slane %v2675, 1
    %v2677 = vadd.f32 %v2675, %v2676
    %v2678 = vsel %vm2537, %v2670, 0.0
    %v2679 = vrot.slane %v2678, 4
    %v2680 = vadd.f32 %v2678, %v2679
    %v2681 = vrot.slane %v2680, 2
    %v2682 = vadd.f32 %v2680, %v2681
    %v2683 = vrot.slane %v2682, 1
    %v2684 = vadd.f32 %v2682, %v2683
    %v2685 = vmul.f32 %v2677, 0.25
    %v2686 = vmul.f32 %v2684, 0.25
    %v2687 = vmul.f32 %v2667, %v2667
    %v2688 = vmul.f32 %v2668, %v2668
    %v2689 = vsub.f32 %v2685, %v2687
    %v2690 = vsub.f32 %v2686, %v2688
    %v2691 = vmax.f32 %v2689, 0.0
    %v2692 = vmax.f32 %v2690, 0.0
    %s2693 = scalar_lea.vmem %s7, 32
    %v2694 = vld [vmem:[%s2693] ss:$8 sm:$0x3]
    %s2695 = scalar_lea.vmem %s7, 33
    %v2696 = vld [vmem:[%s2695] ss:$8 sm:$0x3]
    %v2697 = vadd.f32 %v2691, 1e-05
    %v2698 = vadd.f32 %v2692, 1e-05
    %v2699 = vrsqrt.pop %v2697
    %v2700 = vmul.f32 %v2699, %v2697
    %v2701 = vmul.f32 %v2700, %v2699
    %v2702 = vmul.f32 0.5, %v2701
    %v2703 = vsub.f32 1.5, %v2702
    %v2704 = vmul.f32 %v2699, %v2703
    %vm2705 = vweird.f32 %v2697
    %vm2706 = vweird.f32 %v2699
    %vm2707 = vmor %vm2705, %vm2706
    %v2708 = vsel %vm2707, %v2699, %v2704
    %v2709 = vrsqrt.pop %v2698
    %v2710 = vmul.f32 %v2709, %v2698
    %v2711 = vmul.f32 %v2710, %v2709
    %v2712 = vmul.f32 0.5, %v2711
    %v2713 = vsub.f32 1.5, %v2712
    %v2714 = vmul.f32 %v2709, %v2713
    %vm2715 = vweird.f32 %v2698
    %vm2716 = vweird.f32 %v2709
    %vm2717 = vmor %vm2715, %vm2716
    %v2718 = vsel %vm2717, %v2709, %v2714
    %v2720 = vperm.slane %v2694, 0
    %v2721 = vperm.slane %v2694, 1
    %v2724 = vmul.f32 %v2708, %v2720
    %v2725 = vmul.f32 %v2718, %v2721
    %v2726 = vperm.slane %v2724, 0
    %v2727 = vperm.slane %v2725, 0
    %v2728 = vmul.f32 %v2651, %v2726
    %v2729 = vmul.f32 %v2652, %v2727
    %v2730 = vmul.f32 %v2667, %v2724
    %v2731 = vmul.f32 %v2668, %v2725
    %v2734 = vrot.slane %v2731, 7
    %vm2735 = vcmask 1040384
    %v2736 = vsel %vm2735, %v2730, %v2734
    %v2738 = vsub.f32 %v2696, %v2736
    %v2740 = vperm.slane %v2738, 0
    %v2741 = vperm.slane %v2738, 1
    %v2744 = vadd.f32 %v2728, %v2740
    %v2745 = vadd.f32 %v2729, %v2741
    %vm2746 = vcmp.ge.f32.partialorder %v2744, 0.0
    %vm2747 = vcmp.ge.f32.partialorder %v2745, 0.0
    %v2748 = vmul.f32 %v2744, 0.01
    %v2749 = vmul.f32 %v2745, 0.01
    %v2750 = vsel %vm2746, %v2744, %v2748
    %v2751 = vsel %vm2747, %v2745, %v2749
    %v2752 = vpack.c.bf16 %v2750, %v2750
    %v2753 = vpack.c.bf16 %v2751, %v2751
    %v2754 = vld [vmem:[#allocation7] sm:$0xff]
    %v2755 = vld [vmem:[#allocation7 + $0x8] sm:$0xff]
    %v2756 = vld [vmem:[#allocation7 + $0x10] sm:$0xff]
    %v2757 = vld [vmem:[#allocation7 + $0x18] sm:$0xff]
    %v2758 = vld [vmem:[#allocation7 + $0x20] sm:$0xff]
    %v2759 = vld [vmem:[#allocation7 + $0x28] sm:$0xff]
    %v2760 = vld [vmem:[#allocation7 + $0x30] sm:$0xff]
    %v2761 = vld [vmem:[#allocation7 + $0x38] sm:$0xff]
    %v2762 = vld [vmem:[#allocation7 + $0x40] sm:$0xff]
    %v2763 = vld [vmem:[#allocation7 + $0x48] sm:$0xff]
    %v2764 = vld [vmem:[#allocation7 + $0x50] sm:$0xff]
    %v2765 = vld [vmem:[#allocation7 + $0x58] sm:$0xff]
    %v2766 = vld [vmem:[#allocation7 + $0x60] sm:$0xff]
    %v2767 = vld [vmem:[#allocation7 + $0x68] sm:$0xff]
    %v2768 = vld [vmem:[#allocation7 + $0x70] sm:$0xff]
    %v2769 = vld [vmem:[#allocation7 + $0x78] sm:$0xff]
    %v2770 = vld [vmem:[#allocation7 + $0x80] sm:$0xff]
    %v2771 = vld [vmem:[#allocation7 + $0x88] sm:$0xff]
    %v2772 = vld [vmem:[#allocation7 + $0x90] sm:$0xff]
    %v2773 = vld [vmem:[#allocation7 + $0x98] sm:$0xff]
    %v2774 = vld [vmem:[#allocation7 + $0xa0] sm:$0xff]
    %v2775 = vld [vmem:[#allocation7 + $0xa8] sm:$0xff]
    %v2776 = vld [vmem:[#allocation7 + $0xb0] sm:$0xff]
    %v2777 = vld [vmem:[#allocation7 + $0xb8] sm:$0xff]
    %v2778 = vld [vmem:[#allocation7 + $0xc0] sm:$0xff]
    %v2779 = vld [vmem:[#allocation7 + $0xc8] sm:$0xff]
    %v2780 = vld [vmem:[#allocation7 + $0xd0] sm:$0xff]
    %v2781 = vld [vmem:[#allocation7 + $0xd8] sm:$0xff]
    %v2782 = vld [vmem:[#allocation7 + $0xe0] sm:$0xff]
    %v2783 = vld [vmem:[#allocation7 + $0xe8] sm:$0xff]
    %v2784 = vld [vmem:[#allocation7 + $0xf0] sm:$0xff]
    %v2785 = vld [vmem:[#allocation7 + $0xf8] sm:$0xff]
    %v2786 = vld [vmem:[#allocation7 + $0x100] sm:$0xff]
    %v2787 = vld [vmem:[#allocation7 + $0x108] sm:$0xff]
    %v2788 = vld [vmem:[#allocation7 + $0x110] sm:$0xff]
    %v2789 = vld [vmem:[#allocation7 + $0x118] sm:$0xff]
    %v2790 = vld [vmem:[#allocation7 + $0x120] sm:$0xff]
    %v2791 = vld [vmem:[#allocation7 + $0x128] sm:$0xff]
    %v2792 = vld [vmem:[#allocation7 + $0x130] sm:$0xff]
    %v2793 = vld [vmem:[#allocation7 + $0x138] sm:$0xff]
    %v2794 = vld [vmem:[#allocation7 + $0x140] sm:$0xff]
    %v2795 = vld [vmem:[#allocation7 + $0x148] sm:$0xff]
    %v2796 = vld [vmem:[#allocation7 + $0x150] sm:$0xff]
    %v2797 = vld [vmem:[#allocation7 + $0x158] sm:$0xff]
    %v2798 = vld [vmem:[#allocation7 + $0x160] sm:$0xff]
    %v2799 = vld [vmem:[#allocation7 + $0x168] sm:$0xff]
    %v2800 = vld [vmem:[#allocation7 + $0x170] sm:$0xff]
    %v2801 = vld [vmem:[#allocation7 + $0x178] sm:$0xff]
    %v2802 = vld [vmem:[#allocation7 + $0x180] sm:$0xff]
    %v2803 = vld [vmem:[#allocation7 + $0x188] sm:$0xff]
    %v2804 = vld [vmem:[#allocation7 + $0x190] sm:$0xff]
    %v2805 = vld [vmem:[#allocation7 + $0x198] sm:$0xff]
    %v2806 = vld [vmem:[#allocation7 + $0x1a0] sm:$0xff]
    %v2807 = vld [vmem:[#allocation7 + $0x1a8] sm:$0xff]
    %v2808 = vld [vmem:[#allocation7 + $0x1b0] sm:$0xff]
    %v2809 = vld [vmem:[#allocation7 + $0x1b8] sm:$0xff]
    %v2810 = vld [vmem:[#allocation7 + $0x1c0] sm:$0xff]
    %v2811 = vld [vmem:[#allocation7 + $0x1c8] sm:$0xff]
    %v2812 = vld [vmem:[#allocation7 + $0x1d0] sm:$0xff]
    %v2813 = vld [vmem:[#allocation7 + $0x1d8] sm:$0xff]
    %v2814 = vld [vmem:[#allocation7 + $0x1e0] sm:$0xff]
    %v2815 = vld [vmem:[#allocation7 + $0x1e8] sm:$0xff]
    %v2816 = vld [vmem:[#allocation7 + $0x1f0] sm:$0xff]
    %v2817 = vld [vmem:[#allocation7 + $0x1f8] sm:$0xff]
    %v2882 = vunpack.c.l.b16 %v2754
    %v2883 = vunpack.c.h.b16 %v2754
    %v2884 = vunpack.c.l.b16 %v2755
    %v2885 = vunpack.c.h.b16 %v2755
    %v2886 = vunpack.c.l.b16 %v2756
    %v2887 = vunpack.c.h.b16 %v2756
    %v2888 = vunpack.c.l.b16 %v2757
    %v2889 = vunpack.c.h.b16 %v2757
    %v2890 = vunpack.c.l.b16 %v2758
    %v2891 = vunpack.c.h.b16 %v2758
    %v2892 = vunpack.c.l.b16 %v2759
    %v2893 = vunpack.c.h.b16 %v2759
    %v2894 = vunpack.c.l.b16 %v2760
    %v2895 = vunpack.c.h.b16 %v2760
    %v2896 = vunpack.c.l.b16 %v2761
    %v2897 = vunpack.c.h.b16 %v2761
    %v2898 = vunpack.c.l.b16 %v2762
    %v2899 = vunpack.c.h.b16 %v2762
    %v2900 = vunpack.c.l.b16 %v2763
    %v2901 = vunpack.c.h.b16 %v2763
    %v2902 = vunpack.c.l.b16 %v2764
    %v2903 = vunpack.c.h.b16 %v2764
    %v2904 = vunpack.c.l.b16 %v2765
    %v2905 = vunpack.c.h.b16 %v2765
    %v2906 = vunpack.c.l.b16 %v2766
    %v2907 = vunpack.c.h.b16 %v2766
    %v2908 = vunpack.c.l.b16 %v2767
    %v2909 = vunpack.c.h.b16 %v2767
    %v2910 = vunpack.c.l.b16 %v2768
    %v2911 = vunpack.c.h.b16 %v2768
    %v2912 = vunpack.c.l.b16 %v2769
    %v2913 = vunpack.c.h.b16 %v2769
    %v2914 = vunpack.c.l.b16 %v2770
    %v2915 = vunpack.c.h.b16 %v2770
    %v2916 = vunpack.c.l.b16 %v2771
    %v2917 = vunpack.c.h.b16 %v2771
    %v2918 = vunpack.c.l.b16 %v2772
    %v2919 = vunpack.c.h.b16 %v2772
    %v2920 = vunpack.c.l.b16 %v2773
    %v2921 = vunpack.c.h.b16 %v2773
    %v2922 = vunpack.c.l.b16 %v2774
    %v2923 = vunpack.c.h.b16 %v2774
    %v2924 = vunpack.c.l.b16 %v2775
    %v2925 = vunpack.c.h.b16 %v2775
    %v2926 = vunpack.c.l.b16 %v2776
    %v2927 = vunpack.c.h.b16 %v2776
    %v2928 = vunpack.c.l.b16 %v2777
    %v2929 = vunpack.c.h.b16 %v2777
    %v2930 = vunpack.c.l.b16 %v2778
    %v2931 = vunpack.c.h.b16 %v2778
    %v2932 = vunpack.c.l.b16 %v2779
    %v2933 = vunpack.c.h.b16 %v2779
    %v2934 = vunpack.c.l.b16 %v2780
    %v2935 = vunpack.c.h.b16 %v2780
    %v2936 = vunpack.c.l.b16 %v2781
    %v2937 = vunpack.c.h.b16 %v2781
    %v2938 = vunpack.c.l.b16 %v2782
    %v2939 = vunpack.c.h.b16 %v2782
    %v2940 = vunpack.c.l.b16 %v2783
    %v2941 = vunpack.c.h.b16 %v2783
    %v2942 = vunpack.c.l.b16 %v2784
    %v2943 = vunpack.c.h.b16 %v2784
    %v2944 = vunpack.c.l.b16 %v2785
    %v2945 = vunpack.c.h.b16 %v2785
    %v2946 = vunpack.c.l.b16 %v2786
    %v2947 = vunpack.c.h.b16 %v2786
    %v2948 = vunpack.c.l.b16 %v2787
    %v2949 = vunpack.c.h.b16 %v2787
    %v2950 = vunpack.c.l.b16 %v2788
    %v2951 = vunpack.c.h.b16 %v2788
    %v2952 = vunpack.c.l.b16 %v2789
    %v2953 = vunpack.c.h.b16 %v2789
    %v2954 = vunpack.c.l.b16 %v2790
    %v2955 = vunpack.c.h.b16 %v2790
    %v2956 = vunpack.c.l.b16 %v2791
    %v2957 = vunpack.c.h.b16 %v2791
    %v2958 = vunpack.c.l.b16 %v2792
    %v2959 = vunpack.c.h.b16 %v2792
    %v2960 = vunpack.c.l.b16 %v2793
    %v2961 = vunpack.c.h.b16 %v2793
    %v2962 = vunpack.c.l.b16 %v2794
    %v2963 = vunpack.c.h.b16 %v2794
    %v2964 = vunpack.c.l.b16 %v2795
    %v2965 = vunpack.c.h.b16 %v2795
    %v2966 = vunpack.c.l.b16 %v2796
    %v2967 = vunpack.c.h.b16 %v2796
    %v2968 = vunpack.c.l.b16 %v2797
    %v2969 = vunpack.c.h.b16 %v2797
    %v2970 = vunpack.c.l.b16 %v2798
    %v2971 = vunpack.c.h.b16 %v2798
    %v2972 = vunpack.c.l.b16 %v2799
    %v2973 = vunpack.c.h.b16 %v2799
    %v2974 = vunpack.c.l.b16 %v2800
    %v2975 = vunpack.c.h.b16 %v2800
    %v2976 = vunpack.c.l.b16 %v2801
    %v2977 = vunpack.c.h.b16 %v2801
    %v2978 = vunpack.c.l.b16 %v2802
    %v2979 = vunpack.c.h.b16 %v2802
    %v2980 = vunpack.c.l.b16 %v2803
    %v2981 = vunpack.c.h.b16 %v2803
    %v2982 = vunpack.c.l.b16 %v2804
    %v2983 = vunpack.c.h.b16 %v2804
    %v2984 = vunpack.c.l.b16 %v2805
    %v2985 = vunpack.c.h.b16 %v2805
    %v2986 = vunpack.c.l.b16 %v2806
    %v2987 = vunpack.c.h.b16 %v2806
    %v2988 = vunpack.c.l.b16 %v2807
    %v2989 = vunpack.c.h.b16 %v2807
    %v2990 = vunpack.c.l.b16 %v2808
    %v2991 = vunpack.c.h.b16 %v2808
    %v2992 = vunpack.c.l.b16 %v2809
    %v2993 = vunpack.c.h.b16 %v2809
    %v2994 = vunpack.c.l.b16 %v2810
    %v2995 = vunpack.c.h.b16 %v2810
    %v2996 = vunpack.c.l.b16 %v2811
    %v2997 = vunpack.c.h.b16 %v2811
    %v2998 = vunpack.c.l.b16 %v2812
    %v2999 = vunpack.c.h.b16 %v2812
    %v3000 = vunpack.c.l.b16 %v2813
    %v3001 = vunpack.c.h.b16 %v2813
    %v3002 = vunpack.c.l.b16 %v2814
    %v3003 = vunpack.c.h.b16 %v2814
    %v3004 = vunpack.c.l.b16 %v2815
    %v3005 = vunpack.c.h.b16 %v2815
    %v3006 = vunpack.c.l.b16 %v2816
    %v3007 = vunpack.c.h.b16 %v2816
    %v3008 = vunpack.c.l.b16 %v2817
    %v3009 = vunpack.c.h.b16 %v2817
    %v3010 = vpack.c.b16 %v2886, %v2882
    %v3011 = vpack.c.b16 %v2887, %v2883
    %v3012 = vpack.c.b16 %v2888, %v2884
    %v3013 = vpack.c.b16 %v2889, %v2885
    %v3014 = vpack.c.b16 %v2894, %v2890
    %v3015 = vpack.c.b16 %v2895, %v2891
    %v3016 = vpack.c.b16 %v2896, %v2892
    %v3017 = vpack.c.b16 %v2897, %v2893
    %v3018 = vpack.c.b16 %v2902, %v2898
    %v3019 = vpack.c.b16 %v2903, %v2899
    %v3020 = vpack.c.b16 %v2904, %v2900
    %v3021 = vpack.c.b16 %v2905, %v2901
    %v3022 = vpack.c.b16 %v2910, %v2906
    %v3023 = vpack.c.b16 %v2911, %v2907
    %v3024 = vpack.c.b16 %v2912, %v2908
    %v3025 = vpack.c.b16 %v2913, %v2909
    %v3026 = vpack.c.b16 %v2918, %v2914
    %v3027 = vpack.c.b16 %v2919, %v2915
    %v3028 = vpack.c.b16 %v2920, %v2916
    %v3029 = vpack.c.b16 %v2921, %v2917
    %v3030 = vpack.c.b16 %v2926, %v2922
    %v3031 = vpack.c.b16 %v2927, %v2923
    %v3032 = vpack.c.b16 %v2928, %v2924
    %v3033 = vpack.c.b16 %v2929, %v2925
    %v3034 = vpack.c.b16 %v2934, %v2930
    %v3035 = vpack.c.b16 %v2935, %v2931
    %v3036 = vpack.c.b16 %v2936, %v2932
    %v3037 = vpack.c.b16 %v2937, %v2933
    %v3038 = vpack.c.b16 %v2942, %v2938
    %v3039 = vpack.c.b16 %v2943, %v2939
    %v3040 = vpack.c.b16 %v2944, %v2940
    %v3041 = vpack.c.b16 %v2945, %v2941
    %v3042 = vpack.c.b16 %v2950, %v2946
    %v3043 = vpack.c.b16 %v2951, %v2947
    %v3044 = vpack.c.b16 %v2952, %v2948
    %v3045 = vpack.c.b16 %v2953, %v2949
    %v3046 = vpack.c.b16 %v2958, %v2954
    %v3047 = vpack.c.b16 %v2959, %v2955
    %v3048 = vpack.c.b16 %v2960, %v2956
    %v3049 = vpack.c.b16 %v2961, %v2957
    %v3050 = vpack.c.b16 %v2966, %v2962
    %v3051 = vpack.c.b16 %v2967, %v2963
    %v3052 = vpack.c.b16 %v2968, %v2964
    %v3053 = vpack.c.b16 %v2969, %v2965
    %v3054 = vpack.c.b16 %v2974, %v2970
    %v3055 = vpack.c.b16 %v2975, %v2971
    %v3056 = vpack.c.b16 %v2976, %v2972
    %v3057 = vpack.c.b16 %v2977, %v2973
    %v3058 = vpack.c.b16 %v2982, %v2978
    %v3059 = vpack.c.b16 %v2983, %v2979
    %v3060 = vpack.c.b16 %v2984, %v2980
    %v3061 = vpack.c.b16 %v2985, %v2981
    %v3062 = vpack.c.b16 %v2990, %v2986
    %v3063 = vpack.c.b16 %v2991, %v2987
    %v3064 = vpack.c.b16 %v2992, %v2988
    %v3065 = vpack.c.b16 %v2993, %v2989
    %v3066 = vpack.c.b16 %v2998, %v2994
    %v3067 = vpack.c.b16 %v2999, %v2995
    %v3068 = vpack.c.b16 %v3000, %v2996
    %v3069 = vpack.c.b16 %v3001, %v2997
    %v3070 = vpack.c.b16 %v3006, %v3002
    %v3071 = vpack.c.b16 %v3007, %v3003
    %v3072 = vpack.c.b16 %v3008, %v3004
    %v3073 = vpack.c.b16 %v3009, %v3005
    %3138 = vmatpush.bf16.msra.mxu0 %v3038
    %3139 = vmatpush.bf16.msra.mxu0 %v3034
    %3140 = vmatpush.bf16.msra.mxu0 %v3030
    %3141 = vmatpush.bf16.msra.mxu0 %v3026
    %3142 = vmatpush.bf16.msra.mxu0 %v3022
    %3143 = vmatpush.bf16.msra.mxu0 %v3018
    %3144 = vmatpush.bf16.msra.mxu0 %v3014
    %3145 = vmatpush.bf16.msra.mxu0 %v3010
    %3146 = vmatmul.bf16.gmra.mxu0 %v2752
    %v3147 = vpop.f32.mrf.mxu0
    %v3148 = vadd.f32 0.0, %v3147
    %v3149 = vpop.f32.mrf.mxu0
    %3150 = vdwg.mxu0
    %3151 = vmatpush.bf16.msra.mxu0 %v3070
    %3152 = vmatpush.bf16.msra.mxu0 %v3066
    %3153 = vmatpush.bf16.msra.mxu0 %v3062
    %3154 = vmatpush.bf16.msra.mxu0 %v3058
    %3155 = vmatpush.bf16.msra.mxu0 %v3054
    %3156 = vmatpush.bf16.msra.mxu0 %v3050
    %3157 = vmatpush.bf16.msra.mxu0 %v3046
    %3158 = vmatpush.bf16.msra.mxu0 %v3042
    %3159 = vmatmul.bf16.gmra.mxu0 %v2753
    %v3160 = vpop.f32.mrf.mxu0
    %v3161 = vadd.f32 %v3148, %v3160
    %v3162 = vpop.f32.mrf.mxu0
    %3163 = vdwg.mxu0
    %3164 = vmatpush.bf16.msra.mxu0 %v3039
    %3165 = vmatpush.bf16.msra.mxu0 %v3035
    %3166 = vmatpush.bf16.msra.mxu0 %v3031
    %3167 = vmatpush.bf16.msra.mxu0 %v3027
    %3168 = vmatpush.bf16.msra.mxu0 %v3023
    %3169 = vmatpush.bf16.msra.mxu0 %v3019
    %3170 = vmatpush.bf16.msra.mxu0 %v3015
    %3171 = vmatpush.bf16.msra.mxu0 %v3011
    %3172 = vmatmul.bf16.gmra.mxu0 %v2752
    %v3173 = vpop.f32.mrf.mxu0
    %v3174 = vadd.f32 0.0, %v3173
    %v3175 = vpop.f32.mrf.mxu0
    %3176 = vdwg.mxu0
    %3177 = vmatpush.bf16.msra.mxu0 %v3071
    %3178 = vmatpush.bf16.msra.mxu0 %v3067
    %3179 = vmatpush.bf16.msra.mxu0 %v3063
    %3180 = vmatpush.bf16.msra.mxu0 %v3059
    %3181 = vmatpush.bf16.msra.mxu0 %v3055
    %3182 = vmatpush.bf16.msra.mxu0 %v3051
    %3183 = vmatpush.bf16.msra.mxu0 %v3047
    %3184 = vmatpush.bf16.msra.mxu0 %v3043
    %3185 = vmatmul.bf16.gmra.mxu0 %v2753
    %v3186 = vpop.f32.mrf.mxu0
    %v3187 = vadd.f32 %v3174, %v3186
    %v3188 = vpop.f32.mrf.mxu0
    %3189 = vdwg.mxu0
    %3190 = vmatpush.bf16.msra.mxu0 %v3040
    %3191 = vmatpush.bf16.msra.mxu0 %v3036
    %3192 = vmatpush.bf16.msra.mxu0 %v3032
    %3193 = vmatpush.bf16.msra.mxu0 %v3028
    %3194 = vmatpush.bf16.msra.mxu0 %v3024
    %3195 = vmatpush.bf16.msra.mxu0 %v3020
    %3196 = vmatpush.bf16.msra.mxu0 %v3016
    %3197 = vmatpush.bf16.msra.mxu0 %v3012
    %3198 = vmatmul.bf16.gmra.mxu0 %v2752
    %v3199 = vpop.f32.mrf.mxu0
    %v3200 = vadd.f32 0.0, %v3199
    %v3201 = vpop.f32.mrf.mxu0
    %3202 = vdwg.mxu0
    %3203 = vmatpush.bf16.msra.mxu0 %v3072
    %3204 = vmatpush.bf16.msra.mxu0 %v3068
    %3205 = vmatpush.bf16.msra.mxu0 %v3064
    %3206 = vmatpush.bf16.msra.mxu0 %v3060
    %3207 = vmatpush.bf16.msra.mxu0 %v3056
    %3208 = vmatpush.bf16.msra.mxu0 %v3052
    %3209 = vmatpush.bf16.msra.mxu0 %v3048
    %3210 = vmatpush.bf16.msra.mxu0 %v3044
    %3211 = vmatmul.bf16.gmra.mxu0 %v2753
    %v3212 = vpop.f32.mrf.mxu0
    %v3213 = vadd.f32 %v3200, %v3212
    %v3214 = vpop.f32.mrf.mxu0
    %3215 = vdwg.mxu0
    %3216 = vmatpush.bf16.msra.mxu0 %v3041
    %3217 = vmatpush.bf16.msra.mxu0 %v3037
    %3218 = vmatpush.bf16.msra.mxu0 %v3033
    %3219 = vmatpush.bf16.msra.mxu0 %v3029
    %3220 = vmatpush.bf16.msra.mxu0 %v3025
    %3221 = vmatpush.bf16.msra.mxu0 %v3021
    %3222 = vmatpush.bf16.msra.mxu0 %v3017
    %3223 = vmatpush.bf16.msra.mxu0 %v3013
    %3224 = vmatmul.bf16.gmra.mxu0 %v2752
    %v3225 = vpop.f32.mrf.mxu0
    %v3226 = vadd.f32 0.0, %v3225
    %v3227 = vpop.f32.mrf.mxu0
    %3228 = vdwg.mxu0
    %3229 = vmatpush.bf16.msra.mxu0 %v3073
    %3230 = vmatpush.bf16.msra.mxu0 %v3069
    %3231 = vmatpush.bf16.msra.mxu0 %v3065
    %3232 = vmatpush.bf16.msra.mxu0 %v3061
    %3233 = vmatpush.bf16.msra.mxu0 %v3057
    %3234 = vmatpush.bf16.msra.mxu0 %v3053
    %3235 = vmatpush.bf16.msra.mxu0 %v3049
    %3236 = vmatpush.bf16.msra.mxu0 %v3045
    %3237 = vmatmul.bf16.gmra.mxu0 %v2753
    %v3238 = vpop.f32.mrf.mxu0
    %v3239 = vadd.f32 %v3226, %v3238
    %v3240 = vpop.f32.mrf.mxu0
    %3241 = vdwg.mxu0
    %v3242 = vsel %vm2537, %v3161, 0.0
    %v3243 = vrot.slane %v3242, 4
    %v3244 = vadd.f32 %v3242, %v3243
    %v3245 = vrot.slane %v3244, 2
    %v3246 = vadd.f32 %v3244, %v3245
    %v3247 = vrot.slane %v3246, 1
    %v3248 = vadd.f32 %v3246, %v3247
    %v3249 = vsel %vm2537, %v3187, 0.0
    %v3250 = vrot.slane %v3249, 4
    %v3251 = vadd.f32 %v3249, %v3250
    %v3252 = vrot.slane %v3251, 2
    %v3253 = vadd.f32 %v3251, %v3252
    %v3254 = vrot.slane %v3253, 1
    %v3255 = vadd.f32 %v3253, %v3254
    %v3256 = vsel %vm2537, %v3213, 0.0
    %v3257 = vrot.slane %v3256, 4
    %v3258 = vadd.f32 %v3256, %v3257
    %v3259 = vrot.slane %v3258, 2
    %v3260 = vadd.f32 %v3258, %v3259
    %v3261 = vrot.slane %v3260, 1
    %v3262 = vadd.f32 %v3260, %v3261
    %v3263 = vsel %vm2537, %v3239, 0.0
    %v3264 = vrot.slane %v3263, 4
    %v3265 = vadd.f32 %v3263, %v3264
    %v3266 = vrot.slane %v3265, 2
    %v3267 = vadd.f32 %v3265, %v3266
    %v3268 = vrot.slane %v3267, 1
    %v3269 = vadd.f32 %v3267, %v3268
    %v3270 = vmul.f32 %v3248, 0.25
    %v3271 = vmul.f32 %v3255, 0.25
    %v3272 = vmul.f32 %v3262, 0.25
    %v3273 = vmul.f32 %v3269, 0.25
    %v3274 = vmul.f32 %v3161, %v3161
    %v3275 = vmul.f32 %v3187, %v3187
    %v3276 = vmul.f32 %v3213, %v3213
    %v3277 = vmul.f32 %v3239, %v3239
    %v3278 = vsel %vm2537, %v3274, 0.0
    %v3279 = vrot.slane %v3278, 4
    %v3280 = vadd.f32 %v3278, %v3279
    %v3281 = vrot.slane %v3280, 2
    %v3282 = vadd.f32 %v3280, %v3281
    %v3283 = vrot.slane %v3282, 1
    %v3284 = vadd.f32 %v3282, %v3283
    %v3285 = vsel %vm2537, %v3275, 0.0
    %v3286 = vrot.slane %v3285, 4
    %v3287 = vadd.f32 %v3285, %v3286
    %v3288 = vrot.slane %v3287, 2
    %v3289 = vadd.f32 %v3287, %v3288
    %v3290 = vrot.slane %v3289, 1
    %v3291 = vadd.f32 %v3289, %v3290
    %v3292 = vsel %vm2537, %v3276, 0.0
    %v3293 = vrot.slane %v3292, 4
    %v3294 = vadd.f32 %v3292, %v3293
    %v3295 = vrot.slane %v3294, 2
    %v3296 = vadd.f32 %v3294, %v3295
    %v3297 = vrot.slane %v3296, 1
    %v3298 = vadd.f32 %v3296, %v3297
    %v3299 = vsel %vm2537, %v3277, 0.0
    %v3300 = vrot.slane %v3299, 4
    %v3301 = vadd.f32 %v3299, %v3300
    %v3302 = vrot.slane %v3301, 2
    %v3303 = vadd.f32 %v3301, %v3302
    %v3304 = vrot.slane %v3303, 1
    %v3305 = vadd.f32 %v3303, %v3304
    %v3306 = vmul.f32 %v3284, 0.25
    %v3307 = vmul.f32 %v3291, 0.25
    %v3308 = vmul.f32 %v3298, 0.25
    %v3309 = vmul.f32 %v3305, 0.25
    %v3310 = vmul.f32 %v3270, %v3270
    %v3311 = vmul.f32 %v3271, %v3271
    %v3312 = vmul.f32 %v3272, %v3272
    %v3313 = vmul.f32 %v3273, %v3273
    %v3314 = vsub.f32 %v3306, %v3310
    %v3315 = vsub.f32 %v3307, %v3311
    %v3316 = vsub.f32 %v3308, %v3312
    %v3317 = vsub.f32 %v3309, %v3313
    %v3318 = vmax.f32 %v3314, 0.0
    %v3319 = vmax.f32 %v3315, 0.0
    %v3320 = vmax.f32 %v3316, 0.0
    %v3321 = vmax.f32 %v3317, 0.0
    %s3322 = scalar_lea.vmem %s7, 34
    %v3323 = vld [vmem:[%s3322] ss:$8 sm:$0xf]
    %s3324 = scalar_lea.vmem %s7, 35
    %v3325 = vld [vmem:[%s3324] ss:$8 sm:$0xf]
    %v3326 = vadd.f32 %v3318, 1e-05
    %v3327 = vadd.f32 %v3319, 1e-05
    %v3328 = vadd.f32 %v3320, 1e-05
    %v3329 = vadd.f32 %v3321, 1e-05
    %v3330 = vrsqrt.pop %v3326
    %v3331 = vmul.f32 %v3330, %v3326
    %v3332 = vmul.f32 %v3331, %v3330
    %v3333 = vmul.f32 0.5, %v3332
    %v3334 = vsub.f32 1.5, %v3333
    %v3335 = vmul.f32 %v3330, %v3334
    %vm3336 = vweird.f32 %v3326
    %vm3337 = vweird.f32 %v3330
    %vm3338 = vmor %vm3336, %vm3337
    %v3339 = vsel %vm3338, %v3330, %v3335
    %v3340 = vrsqrt.pop %v3327
    %v3341 = vmul.f32 %v3340, %v3327
    %v3342 = vmul.f32 %v3341, %v3340
    %v3343 = vmul.f32 0.5, %v3342
    %v3344 = vsub.f32 1.5, %v3343
    %v3345 = vmul.f32 %v3340, %v3344
    %vm3346 = vweird.f32 %v3327
    %vm3347 = vweird.f32 %v3340
    %vm3348 = vmor %vm3346, %vm3347
    %v3349 = vsel %vm3348, %v3340, %v3345
    %v3350 = vrsqrt.pop %v3328
    %v3351 = vmul.f32 %v3350, %v3328
    %v3352 = vmul.f32 %v3351, %v3350
    %v3353 = vmul.f32 0.5, %v3352
    %v3354 = vsub.f32 1.5, %v3353
    %v3355 = vmul.f32 %v3350, %v3354
    %vm3356 = vweird.f32 %v3328
    %vm3357 = vweird.f32 %v3350
    %vm3358 = vmor %vm3356, %vm3357
    %v3359 = vsel %vm3358, %v3350, %v3355
    %v3360 = vrsqrt.pop %v3329
    %v3361 = vmul.f32 %v3360, %v3329
    %v3362 = vmul.f32 %v3361, %v3360
    %v3363 = vmul.f32 0.5, %v3362
    %v3364 = vsub.f32 1.5, %v3363
    %v3365 = vmul.f32 %v3360, %v3364
    %vm3366 = vweird.f32 %v3329
    %vm3367 = vweird.f32 %v3360
    %vm3368 = vmor %vm3366, %vm3367
    %v3369 = vsel %vm3368, %v3360, %v3365
    %v3371 = vperm.slane %v3323, 0
    %v3372 = vperm.slane %v3323, 1
    %v3373 = vperm.slane %v3323, 2
    %v3374 = vperm.slane %v3323, 3
    %v3379 = vmul.f32 %v3339, %v3371
    %v3380 = vmul.f32 %v3349, %v3372
    %v3381 = vmul.f32 %v3359, %v3373
    %v3382 = vmul.f32 %v3369, %v3374
    %v3383 = vperm.slane %v3379, 0
    %v3384 = vperm.slane %v3380, 0
    %v3385 = vperm.slane %v3381, 0
    %v3386 = vperm.slane %v3382, 0
    %v3387 = vmul.f32 %v3161, %v3383
    %v3388 = vmul.f32 %v3187, %v3384
    %v3389 = vmul.f32 %v3213, %v3385
    %v3390 = vmul.f32 %v3239, %v3386
    %v3391 = vmul.f32 %v3270, %v3379
    %v3392 = vmul.f32 %v3271, %v3380
    %v3393 = vmul.f32 %v3272, %v3381
    %v3394 = vmul.f32 %v3273, %v3382
    %v3399 = vrot.slane %v3392, 7
    %v3400 = vrot.slane %v3393, 6
    %v3401 = vrot.slane %v3394, 5
    %v3402 = vsel %vm2735, %v3391, %v3399
    %vm3403 = vcmask 1042434
    %v3404 = vsel %vm3403, %v3400, %v3401
    %vm3405 = vcmask 1041408
    %v3406 = vsel %vm3405, %v3402, %v3404
    %v3408 = vsub.f32 %v3325, %v3406
    %v3410 = vperm.slane %v3408, 0
    %v3411 = vperm.slane %v3408, 1
    %v3412 = vperm.slane %v3408, 2
    %v3413 = vperm.slane %v3408, 3
    %v3418 = vadd.f32 %v3387, %v3410
    %v3419 = vadd.f32 %v3388, %v3411
    %v3420 = vadd.f32 %v3389, %v3412
    %v3421 = vadd.f32 %v3390, %v3413
    %vm3422 = vcmp.ge.f32.partialorder %v3418, 0.0
    %vm3423 = vcmp.ge.f32.partialorder %v3419, 0.0
    %vm3424 = vcmp.ge.f32.partialorder %v3420, 0.0
    %vm3425 = vcmp.ge.f32.partialorder %v3421, 0.0
    %v3426 = vmul.f32 %v3418, 0.01
    %v3427 = vmul.f32 %v3419, 0.01
    %v3428 = vmul.f32 %v3420, 0.01
    %v3429 = vmul.f32 %v3421, 0.01
    %v3430 = vsel %vm3422, %v3418, %v3426
    %v3431 = vsel %vm3423, %v3419, %v3427
    %v3432 = vsel %vm3424, %v3420, %v3428
    %v3433 = vsel %vm3425, %v3421, %v3429
    %v3434 = vpack.c.bf16 %v3430, %v3430
    %v3435 = vpack.c.bf16 %v3431, %v3431
    %v3436 = vpack.c.bf16 %v3432, %v3432
    %v3437 = vpack.c.bf16 %v3433, %v3433
    %v3438 = vld [vmem:[#allocation2] sm:$0xff]
    %v3439 = vld [vmem:[#allocation2 + $0x8] sm:$0xff]
    %v3440 = vld [vmem:[#allocation2 + $0x10] sm:$0xff]
    %v3441 = vld [vmem:[#allocation2 + $0x18] sm:$0xff]
    %v3442 = vld [vmem:[#allocation2 + $0x20] sm:$0xff]
    %v3443 = vld [vmem:[#allocation2 + $0x28] sm:$0xff]
    %v3444 = vld [vmem:[#allocation2 + $0x30] sm:$0xff]
    %v3445 = vld [vmem:[#allocation2 + $0x38] sm:$0xff]
    %v3446 = vld [vmem:[#allocation2 + $0x40] sm:$0xff]
    %v3447 = vld [vmem:[#allocation2 + $0x48] sm:$0xff]
    %v3448 = vld [vmem:[#allocation2 + $0x50] sm:$0xff]
    %v3449 = vld [vmem:[#allocation2 + $0x58] sm:$0xff]
    %v3450 = vld [vmem:[#allocation2 + $0x60] sm:$0xff]
    %v3451 = vld [vmem:[#allocation2 + $0x68] sm:$0xff]
    %v3452 = vld [vmem:[#allocation2 + $0x70] sm:$0xff]
    %v3453 = vld [vmem:[#allocation2 + $0x78] sm:$0xff]
    %v3454 = vld [vmem:[#allocation2 + $0x80] sm:$0xff]
    %v3455 = vld [vmem:[#allocation2 + $0x88] sm:$0xff]
    %v3456 = vld [vmem:[#allocation2 + $0x90] sm:$0xff]
    %v3457 = vld [vmem:[#allocation2 + $0x98] sm:$0xff]
    %v3458 = vld [vmem:[#allocation2 + $0xa0] sm:$0xff]
    %v3459 = vld [vmem:[#allocation2 + $0xa8] sm:$0xff]
    %v3460 = vld [vmem:[#allocation2 + $0xb0] sm:$0xff]
    %v3461 = vld [vmem:[#allocation2 + $0xb8] sm:$0xff]
    %v3462 = vld [vmem:[#allocation2 + $0xc0] sm:$0xff]
    %v3463 = vld [vmem:[#allocation2 + $0xc8] sm:$0xff]
    %v3464 = vld [vmem:[#allocation2 + $0xd0] sm:$0xff]
    %v3465 = vld [vmem:[#allocation2 + $0xd8] sm:$0xff]
    %v3466 = vld [vmem:[#allocation2 + $0xe0] sm:$0xff]
    %v3467 = vld [vmem:[#allocation2 + $0xe8] sm:$0xff]
    %v3468 = vld [vmem:[#allocation2 + $0xf0] sm:$0xff]
    %v3469 = vld [vmem:[#allocation2 + $0xf8] sm:$0xff]
    %v3470 = vld [vmem:[#allocation2 + $0x100] sm:$0xff]
    %v3471 = vld [vmem:[#allocation2 + $0x108] sm:$0xff]
    %v3472 = vld [vmem:[#allocation2 + $0x110] sm:$0xff]
    %v3473 = vld [vmem:[#allocation2 + $0x118] sm:$0xff]
    %v3474 = vld [vmem:[#allocation2 + $0x120] sm:$0xff]
    %v3475 = vld [vmem:[#allocation2 + $0x128] sm:$0xff]
    %v3476 = vld [vmem:[#allocation2 + $0x130] sm:$0xff]
    %v3477 = vld [vmem:[#allocation2 + $0x138] sm:$0xff]
    %v3478 = vld [vmem:[#allocation2 + $0x140] sm:$0xff]
    %v3479 = vld [vmem:[#allocation2 + $0x148] sm:$0xff]
    %v3480 = vld [vmem:[#allocation2 + $0x150] sm:$0xff]
    %v3481 = vld [vmem:[#allocation2 + $0x158] sm:$0xff]
    %v3482 = vld [vmem:[#allocation2 + $0x160] sm:$0xff]
    %v3483 = vld [vmem:[#allocation2 + $0x168] sm:$0xff]
    %v3484 = vld [vmem:[#allocation2 + $0x170] sm:$0xff]
    %v3485 = vld [vmem:[#allocation2 + $0x178] sm:$0xff]
    %v3486 = vld [vmem:[#allocation2 + $0x180] sm:$0xff]
    %v3487 = vld [vmem:[#allocation2 + $0x188] sm:$0xff]
    %v3488 = vld [vmem:[#allocation2 + $0x190] sm:$0xff]
    %v3489 = vld [vmem:[#allocation2 + $0x198] sm:$0xff]
    %v3490 = vld [vmem:[#allocation2 + $0x1a0] sm:$0xff]
    %v3491 = vld [vmem:[#allocation2 + $0x1a8] sm:$0xff]
    %v3492 = vld [vmem:[#allocation2 + $0x1b0] sm:$0xff]
    %v3493 = vld [vmem:[#allocation2 + $0x1b8] sm:$0xff]
    %v3494 = vld [vmem:[#allocation2 + $0x1c0] sm:$0xff]
    %v3495 = vld [vmem:[#allocation2 + $0x1c8] sm:$0xff]
    %v3496 = vld [vmem:[#allocation2 + $0x1d0] sm:$0xff]
    %v3497 = vld [vmem:[#allocation2 + $0x1d8] sm:$0xff]
    %v3498 = vld [vmem:[#allocation2 + $0x1e0] sm:$0xff]
    %v3499 = vld [vmem:[#allocation2 + $0x1e8] sm:$0xff]
    %v3500 = vld [vmem:[#allocation2 + $0x1f0] sm:$0xff]
    %v3501 = vld [vmem:[#allocation2 + $0x1f8] sm:$0xff]
    %v3566 = vunpack.c.l.b16 %v3438
    %v3567 = vunpack.c.h.b16 %v3438
    %v3568 = vunpack.c.l.b16 %v3439
    %v3569 = vunpack.c.h.b16 %v3439
    %v3570 = vunpack.c.l.b16 %v3440
    %v3571 = vunpack.c.h.b16 %v3440
    %v3572 = vunpack.c.l.b16 %v3441
    %v3573 = vunpack.c.h.b16 %v3441
    %v3574 = vunpack.c.l.b16 %v3442
    %v3575 = vunpack.c.h.b16 %v3442
    %v3576 = vunpack.c.l.b16 %v3443
    %v3577 = vunpack.c.h.b16 %v3443
    %v3578 = vunpack.c.l.b16 %v3444
    %v3579 = vunpack.c.h.b16 %v3444
    %v3580 = vunpack.c.l.b16 %v3445
    %v3581 = vunpack.c.h.b16 %v3445
    %v3582 = vunpack.c.l.b16 %v3446
    %v3583 = vunpack.c.h.b16 %v3446
    %v3584 = vunpack.c.l.b16 %v3447
    %v3585 = vunpack.c.h.b16 %v3447
    %v3586 = vunpack.c.l.b16 %v3448
    %v3587 = vunpack.c.h.b16 %v3448
    %v3588 = vunpack.c.l.b16 %v3449
    %v3589 = vunpack.c.h.b16 %v3449
    %v3590 = vunpack.c.l.b16 %v3450
    %v3591 = vunpack.c.h.b16 %v3450
    %v3592 = vunpack.c.l.b16 %v3451
    %v3593 = vunpack.c.h.b16 %v3451
    %v3594 = vunpack.c.l.b16 %v3452
    %v3595 = vunpack.c.h.b16 %v3452
    %v3596 = vunpack.c.l.b16 %v3453
    %v3597 = vunpack.c.h.b16 %v3453
    %v3598 = vunpack.c.l.b16 %v3454
    %v3599 = vunpack.c.h.b16 %v3454
    %v3600 = vunpack.c.l.b16 %v3455
    %v3601 = vunpack.c.h.b16 %v3455
    %v3602 = vunpack.c.l.b16 %v3456
    %v3603 = vunpack.c.h.b16 %v3456
    %v3604 = vunpack.c.l.b16 %v3457
    %v3605 = vunpack.c.h.b16 %v3457
    %v3606 = vunpack.c.l.b16 %v3458
    %v3607 = vunpack.c.h.b16 %v3458
    %v3608 = vunpack.c.l.b16 %v3459
    %v3609 = vunpack.c.h.b16 %v3459
    %v3610 = vunpack.c.l.b16 %v3460
    %v3611 = vunpack.c.h.b16 %v3460
    %v3612 = vunpack.c.l.b16 %v3461
    %v3613 = vunpack.c.h.b16 %v3461
    %v3614 = vunpack.c.l.b16 %v3462
    %v3615 = vunpack.c.h.b16 %v3462
    %v3616 = vunpack.c.l.b16 %v3463
    %v3617 = vunpack.c.h.b16 %v3463
    %v3618 = vunpack.c.l.b16 %v3464
    %v3619 = vunpack.c.h.b16 %v3464
    %v3620 = vunpack.c.l.b16 %v3465
    %v3621 = vunpack.c.h.b16 %v3465
    %v3622 = vunpack.c.l.b16 %v3466
    %v3623 = vunpack.c.h.b16 %v3466
    %v3624 = vunpack.c.l.b16 %v3467
    %v3625 = vunpack.c.h.b16 %v3467
    %v3626 = vunpack.c.l.b16 %v3468
    %v3627 = vunpack.c.h.b16 %v3468
    %v3628 = vunpack.c.l.b16 %v3469
    %v3629 = vunpack.c.h.b16 %v3469
    %v3630 = vunpack.c.l.b16 %v3470
    %v3631 = vunpack.c.h.b16 %v3470
    %v3632 = vunpack.c.l.b16 %v3471
    %v3633 = vunpack.c.h.b16 %v3471
    %v3634 = vunpack.c.l.b16 %v3472
    %v3635 = vunpack.c.h.b16 %v3472
    %v3636 = vunpack.c.l.b16 %v3473
    %v3637 = vunpack.c.h.b16 %v3473
    %v3638 = vunpack.c.l.b16 %v3474
    %v3639 = vunpack.c.h.b16 %v3474
    %v3640 = vunpack.c.l.b16 %v3475
    %v3641 = vunpack.c.h.b16 %v3475
    %v3642 = vunpack.c.l.b16 %v3476
    %v3643 = vunpack.c.h.b16 %v3476
    %v3644 = vunpack.c.l.b16 %v3477
    %v3645 = vunpack.c.h.b16 %v3477
    %v3646 = vunpack.c.l.b16 %v3478
    %v3647 = vunpack.c.h.b16 %v3478
    %v3648 = vunpack.c.l.b16 %v3479
    %v3649 = vunpack.c.h.b16 %v3479
    %v3650 = vunpack.c.l.b16 %v3480
    %v3651 = vunpack.c.h.b16 %v3480
    %v3652 = vunpack.c.l.b16 %v3481
    %v3653 = vunpack.c.h.b16 %v3481
    %v3654 = vunpack.c.l.b16 %v3482
    %v3655 = vunpack.c.h.b16 %v3482
    %v3656 = vunpack.c.l.b16 %v3483
    %v3657 = vunpack.c.h.b16 %v3483
    %v3658 = vunpack.c.l.b16 %v3484
    %v3659 = vunpack.c.h.b16 %v3484
    %v3660 = vunpack.c.l.b16 %v3485
    %v3661 = vunpack.c.h.b16 %v3485
    %v3662 = vunpack.c.l.b16 %v3486
    %v3663 = vunpack.c.h.b16 %v3486
    %v3664 = vunpack.c.l.b16 %v3487
    %v3665 = vunpack.c.h.b16 %v3487
    %v3666 = vunpack.c.l.b16 %v3488
    %v3667 = vunpack.c.h.b16 %v3488
    %v3668 = vunpack.c.l.b16 %v3489
    %v3669 = vunpack.c.h.b16 %v3489
    %v3670 = vunpack.c.l.b16 %v3490
    %v3671 = vunpack.c.h.b16 %v3490
    %v3672 = vunpack.c.l.b16 %v3491
    %v3673 = vunpack.c.h.b16 %v3491
    %v3674 = vunpack.c.l.b16 %v3492
    %v3675 = vunpack.c.h.b16 %v3492
    %v3676 = vunpack.c.l.b16 %v3493
    %v3677 = vunpack.c.h.b16 %v3493
    %v3678 = vunpack.c.l.b16 %v3494
    %v3679 = vunpack.c.h.b16 %v3494
    %v3680 = vunpack.c.l.b16 %v3495
    %v3681 = vunpack.c.h.b16 %v3495
    %v3682 = vunpack.c.l.b16 %v3496
    %v3683 = vunpack.c.h.b16 %v3496
    %v3684 = vunpack.c.l.b16 %v3497
    %v3685 = vunpack.c.h.b16 %v3497
    %v3686 = vunpack.c.l.b16 %v3498
    %v3687 = vunpack.c.h.b16 %v3498
    %v3688 = vunpack.c.l.b16 %v3499
    %v3689 = vunpack.c.h.b16 %v3499
    %v3690 = vunpack.c.l.b16 %v3500
    %v3691 = vunpack.c.h.b16 %v3500
    %v3692 = vunpack.c.l.b16 %v3501
    %v3693 = vunpack.c.h.b16 %v3501
    %v3694 = vpack.c.b16 %v3568, %v3566
    %v3695 = vpack.c.b16 %v3569, %v3567
    %v3696 = vpack.c.b16 %v3572, %v3570
    %v3697 = vpack.c.b16 %v3573, %v3571
    %v3698 = vpack.c.b16 %v3576, %v3574
    %v3699 = vpack.c.b16 %v3577, %v3575
    %v3700 = vpack.c.b16 %v3580, %v3578
    %v3701 = vpack.c.b16 %v3581, %v3579
    %v3702 = vpack.c.b16 %v3584, %v3582
    %v3703 = vpack.c.b16 %v3585, %v3583
    %v3704 = vpack.c.b16 %v3588, %v3586
    %v3705 = vpack.c.b16 %v3589, %v3587
    %v3706 = vpack.c.b16 %v3592, %v3590
    %v3707 = vpack.c.b16 %v3593, %v3591
    %v3708 = vpack.c.b16 %v3596, %v3594
    %v3709 = vpack.c.b16 %v3597, %v3595
    %v3710 = vpack.c.b16 %v3600, %v3598
    %v3711 = vpack.c.b16 %v3601, %v3599
    %v3712 = vpack.c.b16 %v3604, %v3602
    %v3713 = vpack.c.b16 %v3605, %v3603
    %v3714 = vpack.c.b16 %v3608, %v3606
    %v3715 = vpack.c.b16 %v3609, %v3607
    %v3716 = vpack.c.b16 %v3612, %v3610
    %v3717 = vpack.c.b16 %v3613, %v3611
    %v3718 = vpack.c.b16 %v3616, %v3614
    %v3719 = vpack.c.b16 %v3617, %v3615
    %v3720 = vpack.c.b16 %v3620, %v3618
    %v3721 = vpack.c.b16 %v3621, %v3619
    %v3722 = vpack.c.b16 %v3624, %v3622
    %v3723 = vpack.c.b16 %v3625, %v3623
    %v3724 = vpack.c.b16 %v3628, %v3626
    %v3725 = vpack.c.b16 %v3629, %v3627
    %v3726 = vpack.c.b16 %v3632, %v3630
    %v3727 = vpack.c.b16 %v3633, %v3631
    %v3728 = vpack.c.b16 %v3636, %v3634
    %v3729 = vpack.c.b16 %v3637, %v3635
    %v3730 = vpack.c.b16 %v3640, %v3638
    %v3731 = vpack.c.b16 %v3641, %v3639
    %v3732 = vpack.c.b16 %v3644, %v3642
    %v3733 = vpack.c.b16 %v3645, %v3643
    %v3734 = vpack.c.b16 %v3648, %v3646
    %v3735 = vpack.c.b16 %v3649, %v3647
    %v3736 = vpack.c.b16 %v3652, %v3650
    %v3737 = vpack.c.b16 %v3653, %v3651
    %v3738 = vpack.c.b16 %v3656, %v3654
    %v3739 = vpack.c.b16 %v3657, %v3655
    %v3740 = vpack.c.b16 %v3660, %v3658
    %v3741 = vpack.c.b16 %v3661, %v3659
    %v3742 = vpack.c.b16 %v3664, %v3662
    %v3743 = vpack.c.b16 %v3665, %v3663
    %v3744 = vpack.c.b16 %v3668, %v3666
    %v3745 = vpack.c.b16 %v3669, %v3667
    %v3746 = vpack.c.b16 %v3672, %v3670
    %v3747 = vpack.c.b16 %v3673, %v3671
    %v3748 = vpack.c.b16 %v3676, %v3674
    %v3749 = vpack.c.b16 %v3677, %v3675
    %v3750 = vpack.c.b16 %v3680, %v3678
    %v3751 = vpack.c.b16 %v3681, %v3679
    %v3752 = vpack.c.b16 %v3684, %v3682
    %v3753 = vpack.c.b16 %v3685, %v3683
    %v3754 = vpack.c.b16 %v3688, %v3686
    %v3755 = vpack.c.b16 %v3689, %v3687
    %v3756 = vpack.c.b16 %v3692, %v3690
    %v3757 = vpack.c.b16 %v3693, %v3691
    %3822 = vmatpush.bf16.msra.mxu0 %v3708
    %3823 = vmatpush.bf16.msra.mxu0 %v3706
    %3824 = vmatpush.bf16.msra.mxu0 %v3704
    %3825 = vmatpush.bf16.msra.mxu0 %v3702
    %3826 = vmatpush.bf16.msra.mxu0 %v3700
    %3827 = vmatpush.bf16.msra.mxu0 %v3698
    %3828 = vmatpush.bf16.msra.mxu0 %v3696
    %3829 = vmatpush.bf16.msra.mxu0 %v3694
    %3830 = vmatmul.bf16.gmra.mxu0 %v3434
    %v3831 = vpop.f32.mrf.mxu0
    %v3832 = vadd.f32 0.0, %v3831
    %v3833 = vpop.f32.mrf.mxu0
    %3834 = vdwg.mxu0
    %3835 = vmatpush.bf16.msra.mxu0 %v3724
    %3836 = vmatpush.bf16.msra.mxu0 %v3722
    %3837 = vmatpush.bf16.msra.mxu0 %v3720
    %3838 = vmatpush.bf16.msra.mxu0 %v3718
    %3839 = vmatpush.bf16.msra.mxu0 %v3716
    %3840 = vmatpush.bf16.msra.mxu0 %v3714
    %3841 = vmatpush.bf16.msra.mxu0 %v3712
    %3842 = vmatpush.bf16.msra.mxu0 %v3710
    %3843 = vmatmul.bf16.gmra.mxu0 %v3435
    %v3844 = vpop.f32.mrf.mxu0
    %v3845 = vadd.f32 %v3832, %v3844
    %v3846 = vpop.f32.mrf.mxu0
    %3847 = vdwg.mxu0
    %3848 = vmatpush.bf16.msra.mxu0 %v3740
    %3849 = vmatpush.bf16.msra.mxu0 %v3738
    %3850 = vmatpush.bf16.msra.mxu0 %v3736
    %3851 = vmatpush.bf16.msra.mxu0 %v3734
    %3852 = vmatpush.bf16.msra.mxu0 %v3732
    %3853 = vmatpush.bf16.msra.mxu0 %v3730
    %3854 = vmatpush.bf16.msra.mxu0 %v3728
    %3855 = vmatpush.bf16.msra.mxu0 %v3726
    %3856 = vmatmul.bf16.gmra.mxu0 %v3436
    %v3857 = vpop.f32.mrf.mxu0
    %v3858 = vadd.f32 %v3845, %v3857
    %v3859 = vpop.f32.mrf.mxu0
    %3860 = vdwg.mxu0
    %3861 = vmatpush.bf16.msra.mxu0 %v3756
    %3862 = vmatpush.bf16.msra.mxu0 %v3754
    %3863 = vmatpush.bf16.msra.mxu0 %v3752
    %3864 = vmatpush.bf16.msra.mxu0 %v3750
    %3865 = vmatpush.bf16.msra.mxu0 %v3748
    %3866 = vmatpush.bf16.msra.mxu0 %v3746
    %3867 = vmatpush.bf16.msra.mxu0 %v3744
    %3868 = vmatpush.bf16.msra.mxu0 %v3742
    %3869 = vmatmul.bf16.gmra.mxu0 %v3437
    %v3870 = vpop.f32.mrf.mxu0
    %v3871 = vadd.f32 %v3858, %v3870
    %v3872 = vpop.f32.mrf.mxu0
    %3873 = vdwg.mxu0
    %3874 = vmatpush.bf16.msra.mxu0 %v3709
    %3875 = vmatpush.bf16.msra.mxu0 %v3707
    %3876 = vmatpush.bf16.msra.mxu0 %v3705
    %3877 = vmatpush.bf16.msra.mxu0 %v3703
    %3878 = vmatpush.bf16.msra.mxu0 %v3701
    %3879 = vmatpush.bf16.msra.mxu0 %v3699
    %3880 = vmatpush.bf16.msra.mxu0 %v3697
    %3881 = vmatpush.bf16.msra.mxu0 %v3695
    %3882 = vmatmul.bf16.gmra.mxu0 %v3434
    %v3883 = vpop.f32.mrf.mxu0
    %v3884 = vadd.f32 0.0, %v3883
    %v3885 = vpop.f32.mrf.mxu0
    %3886 = vdwg.mxu0
    %3887 = vmatpush.bf16.msra.mxu0 %v3725
    %3888 = vmatpush.bf16.msra.mxu0 %v3723
    %3889 = vmatpush.bf16.msra.mxu0 %v3721
    %3890 = vmatpush.bf16.msra.mxu0 %v3719
    %3891 = vmatpush.bf16.msra.mxu0 %v3717
    %3892 = vmatpush.bf16.msra.mxu0 %v3715
    %3893 = vmatpush.bf16.msra.mxu0 %v3713
    %3894 = vmatpush.bf16.msra.mxu0 %v3711
    %3895 = vmatmul.bf16.gmra.mxu0 %v3435
    %v3896 = vpop.f32.mrf.mxu0
    %v3897 = vadd.f32 %v3884, %v3896
    %v3898 = vpop.f32.mrf.mxu0
    %3899 = vdwg.mxu0
    %3900 = vmatpush.bf16.msra.mxu0 %v3741
    %3901 = vmatpush.bf16.msra.mxu0 %v3739
    %3902 = vmatpush.bf16.msra.mxu0 %v3737
    %3903 = vmatpush.bf16.msra.mxu0 %v3735
    %3904 = vmatpush.bf16.msra.mxu0 %v3733
    %3905 = vmatpush.bf16.msra.mxu0 %v3731
    %3906 = vmatpush.bf16.msra.mxu0 %v3729
    %3907 = vmatpush.bf16.msra.mxu0 %v3727
    %3908 = vmatmul.bf16.gmra.mxu0 %v3436
    %v3909 = vpop.f32.mrf.mxu0
    %v3910 = vadd.f32 %v3897, %v3909
    %v3911 = vpop.f32.mrf.mxu0
    %3912 = vdwg.mxu0
    %3913 = vmatpush.bf16.msra.mxu0 %v3757
    %3914 = vmatpush.bf16.msra.mxu0 %v3755
    %3915 = vmatpush.bf16.msra.mxu0 %v3753
    %3916 = vmatpush.bf16.msra.mxu0 %v3751
    %3917 = vmatpush.bf16.msra.mxu0 %v3749
    %3918 = vmatpush.bf16.msra.mxu0 %v3747
    %3919 = vmatpush.bf16.msra.mxu0 %v3745
    %3920 = vmatpush.bf16.msra.mxu0 %v3743
    %3921 = vmatmul.bf16.gmra.mxu0 %v3437
    %v3922 = vpop.f32.mrf.mxu0
    %v3923 = vadd.f32 %v3910, %v3922
    %v3924 = vpop.f32.mrf.mxu0
    %3925 = vdwg.mxu0
    %v3926 = vpack.c.bf16 %v3923, %v3871
    %v3927 = vld [vmem:[#allocation11 + $0xc0] sm:$0x1]
    %v3928 = vld [vmem:[#allocation11 + $0xc4] sm:$0x1]
    %v3930 = vunpack.c.h.b16 %v3926
    %v3931 = vpack.c.b16 %v3930, %v3930
    %vm3932 = vcmask 31744
    %v3934 = vsel %vm3932, %v3928, 0
    %v3937 = vsel %vm3405, %v3931, 0
    %3939 = vmatpush.bf16.msra.mxu0 0
    %3940 = vmatpush.bf16.msra.mxu0 0
    %3941 = vmatpush.bf16.msra.mxu0 0
    %3942 = vmatpush.bf16.msra.mxu0 0
    %3943 = vmatpush.bf16.msra.mxu0 0
    %3944 = vmatpush.bf16.msra.mxu0 0
    %3945 = vmatpush.bf16.msra.mxu0 0
    %3946 = vmatpush.bf16.msra.mxu0 %v3937
    %3947 = vmatmul.bf16.gmra.mxu0 %v3934
    %v3948 = vpop.f32.mrf.mxu0
    %v3949 = vadd.f32 0.0, %v3948
    %v3950 = vpop.f32.mrf.mxu0
    %3951 = vdwg.mxu0
    %v3953 = vsel %vm3932, %v3927, 0
    %v3956 = vsel %vm3405, %v3926, 0
    %3958 = vmatpush.bf16.msra.mxu0 0
    %3959 = vmatpush.bf16.msra.mxu0 0
    %3960 = vmatpush.bf16.msra.mxu0 0
    %3961 = vmatpush.bf16.msra.mxu0 0
    %3962 = vmatpush.bf16.msra.mxu0 0
    %3963 = vmatpush.bf16.msra.mxu0 0
    %3964 = vmatpush.bf16.msra.mxu0 0
    %3965 = vmatpush.bf16.msra.mxu0 %v3956
    %3966 = vmatmul.bf16.gmra.mxu0 %v3953
    %v3967 = vpop.f32.mrf.mxu0
    %v3968 = vadd.f32 %v3949, %v3967
    %v3969 = vpop.f32.mrf.mxu0
    %3970 = vdwg.mxu0
    %v3971 = vld [vmem:[%s7 + $0x24] ss:$0 sm:$0xff]
    %v3972 = vadd.f32 %v3968, %v3971
    %3973 = vst [vmem:[#allocation13] sm:$0x3] %v3972
    %v3974 = vpack.c.bf16 %v3972, %v3972
    %v3975 = vld [vmem:[#allocation7 + $0x200] sm:$0xff]
    %v3976 = vld [vmem:[#allocation7 + $0x208] sm:$0xff]
    %v3977 = vld [vmem:[#allocation7 + $0x210] sm:$0xff]
    %v3978 = vld [vmem:[#allocation7 + $0x218] sm:$0xff]
    %v3979 = vld [vmem:[#allocation7 + $0x220] sm:$0xff]
    %v3980 = vld [vmem:[#allocation7 + $0x228] sm:$0xff]
    %v3981 = vld [vmem:[#allocation7 + $0x230] sm:$0xff]
    %v3982 = vld [vmem:[#allocation7 + $0x238] sm:$0xff]
    %v3983 = vld [vmem:[#allocation7 + $0x240] sm:$0xff]
    %v3984 = vld [vmem:[#allocation7 + $0x248] sm:$0xff]
    %v3985 = vld [vmem:[#allocation7 + $0x250] sm:$0xff]
    %v3986 = vld [vmem:[#allocation7 + $0x258] sm:$0xff]
    %v3987 = vld [vmem:[#allocation7 + $0x260] sm:$0xff]
    %v3988 = vld [vmem:[#allocation7 + $0x268] sm:$0xff]
    %v3989 = vld [vmem:[#allocation7 + $0x270] sm:$0xff]
    %v3990 = vld [vmem:[#allocation7 + $0x278] sm:$0xff]
    %v3991 = vld [vmem:[#allocation7 + $0x280] sm:$0xff]
    %v3992 = vld [vmem:[#allocation7 + $0x288] sm:$0xff]
    %v3993 = vld [vmem:[#allocation7 + $0x290] sm:$0xff]
    %v3994 = vld [vmem:[#allocation7 + $0x298] sm:$0xff]
    %v3995 = vld [vmem:[#allocation7 + $0x2a0] sm:$0xff]
    %v3996 = vld [vmem:[#allocation7 + $0x2a8] sm:$0xff]
    %v3997 = vld [vmem:[#allocation7 + $0x2b0] sm:$0xff]
    %v3998 = vld [vmem:[#allocation7 + $0x2b8] sm:$0xff]
    %v3999 = vld [vmem:[#allocation7 + $0x2c0] sm:$0xff]
    %v4000 = vld [vmem:[#allocation7 + $0x2c8] sm:$0xff]
    %v4001 = vld [vmem:[#allocation7 + $0x2d0] sm:$0xff]
    %v4002 = vld [vmem:[#allocation7 + $0x2d8] sm:$0xff]
    %v4003 = vld [vmem:[#allocation7 + $0x2e0] sm:$0xff]
    %v4004 = vld [vmem:[#allocation7 + $0x2e8] sm:$0xff]
    %v4005 = vld [vmem:[#allocation7 + $0x2f0] sm:$0xff]
    %v4006 = vld [vmem:[#allocation7 + $0x2f8] sm:$0xff]
    %s4007 = scalar_lea.vmem %s7, 37
    %v4008 = vld [vmem:[%s4007] ss:$8 sm:$0xf]
    %v4010 = vperm.slane %v4008, 0
    %v4011 = vperm.slane %v4008, 1
    %v4012 = vperm.slane %v4008, 2
    %v4013 = vperm.slane %v4008, 3
    %v4050 = vunpack.c.l.b16 %v3975
    %v4051 = vunpack.c.h.b16 %v3975
    %v4052 = vunpack.c.l.b16 %v3976
    %v4053 = vunpack.c.h.b16 %v3976
    %v4054 = vunpack.c.l.b16 %v3977
    %v4055 = vunpack.c.h.b16 %v3977
    %v4056 = vunpack.c.l.b16 %v3978
    %v4057 = vunpack.c.h.b16 %v3978
    %v4058 = vunpack.c.l.b16 %v3979
    %v4059 = vunpack.c.h.b16 %v3979
    %v4060 = vunpack.c.l.b16 %v3980
    %v4061 = vunpack.c.h.b16 %v3980
    %v4062 = vunpack.c.l.b16 %v3981
    %v4063 = vunpack.c.h.b16 %v3981
    %v4064 = vunpack.c.l.b16 %v3982
    %v4065 = vunpack.c.h.b16 %v3982
    %v4066 = vunpack.c.l.b16 %v3983
    %v4067 = vunpack.c.h.b16 %v3983
    %v4068 = vunpack.c.l.b16 %v3984
    %v4069 = vunpack.c.h.b16 %v3984
    %v4070 = vunpack.c.l.b16 %v3985
    %v4071 = vunpack.c.h.b16 %v3985
    %v4072 = vunpack.c.l.b16 %v3986
    %v4073 = vunpack.c.h.b16 %v3986
    %v4074 = vunpack.c.l.b16 %v3987
    %v4075 = vunpack.c.h.b16 %v3987
    %v4076 = vunpack.c.l.b16 %v3988
    %v4077 = vunpack.c.h.b16 %v3988
    %v4078 = vunpack.c.l.b16 %v3989
    %v4079 = vunpack.c.h.b16 %v3989
    %v4080 = vunpack.c.l.b16 %v3990
    %v4081 = vunpack.c.h.b16 %v3990
    %v4082 = vunpack.c.l.b16 %v3991
    %v4083 = vunpack.c.h.b16 %v3991
    %v4084 = vunpack.c.l.b16 %v3992
    %v4085 = vunpack.c.h.b16 %v3992
    %v4086 = vunpack.c.l.b16 %v3993
    %v4087 = vunpack.c.h.b16 %v3993
    %v4088 = vunpack.c.l.b16 %v3994
    %v4089 = vunpack.c.h.b16 %v3994
    %v4090 = vunpack.c.l.b16 %v3995
    %v4091 = vunpack.c.h.b16 %v3995
    %v4092 = vunpack.c.l.b16 %v3996
    %v4093 = vunpack.c.h.b16 %v3996
    %v4094 = vunpack.c.l.b16 %v3997
    %v4095 = vunpack.c.h.b16 %v3997
    %v4096 = vunpack.c.l.b16 %v3998
    %v4097 = vunpack.c.h.b16 %v3998
    %v4098 = vunpack.c.l.b16 %v3999
    %v4099 = vunpack.c.h.b16 %v3999
    %v4100 = vunpack.c.l.b16 %v4000
    %v4101 = vunpack.c.h.b16 %v4000
    %v4102 = vunpack.c.l.b16 %v4001
    %v4103 = vunpack.c.h.b16 %v4001
    %v4104 = vunpack.c.l.b16 %v4002
    %v4105 = vunpack.c.h.b16 %v4002
    %v4106 = vunpack.c.l.b16 %v4003
    %v4107 = vunpack.c.h.b16 %v4003
    %v4108 = vunpack.c.l.b16 %v4004
    %v4109 = vunpack.c.h.b16 %v4004
    %v4110 = vunpack.c.l.b16 %v4005
    %v4111 = vunpack.c.h.b16 %v4005
    %v4112 = vunpack.c.l.b16 %v4006
    %v4113 = vunpack.c.h.b16 %v4006
    %v4114 = vpack.c.b16 %v4054, %v4050
    %v4115 = vpack.c.b16 %v4055, %v4051
    %v4116 = vpack.c.b16 %v4056, %v4052
    %v4117 = vpack.c.b16 %v4057, %v4053
    %v4118 = vpack.c.b16 %v4062, %v4058
    %v4119 = vpack.c.b16 %v4063, %v4059
    %v4120 = vpack.c.b16 %v4064, %v4060
    %v4121 = vpack.c.b16 %v4065, %v4061
    %v4122 = vpack.c.b16 %v4070, %v4066
    %v4123 = vpack.c.b16 %v4071, %v4067
    %v4124 = vpack.c.b16 %v4072, %v4068
    %v4125 = vpack.c.b16 %v4073, %v4069
    %v4126 = vpack.c.b16 %v4078, %v4074
    %v4127 = vpack.c.b16 %v4079, %v4075
    %v4128 = vpack.c.b16 %v4080, %v4076
    %v4129 = vpack.c.b16 %v4081, %v4077
    %v4130 = vpack.c.b16 %v4086, %v4082
    %v4131 = vpack.c.b16 %v4087, %v4083
    %v4132 = vpack.c.b16 %v4088, %v4084
    %v4133 = vpack.c.b16 %v4089, %v4085
    %v4134 = vpack.c.b16 %v4094, %v4090
    %v4135 = vpack.c.b16 %v4095, %v4091
    %v4136 = vpack.c.b16 %v4096, %v4092
    %v4137 = vpack.c.b16 %v4097, %v4093
    %v4138 = vpack.c.b16 %v4102, %v4098
    %v4139 = vpack.c.b16 %v4103, %v4099
    %v4140 = vpack.c.b16 %v4104, %v4100
    %v4141 = vpack.c.b16 %v4105, %v4101
    %v4142 = vpack.c.b16 %v4110, %v4106
    %v4143 = vpack.c.b16 %v4111, %v4107
    %v4144 = vpack.c.b16 %v4112, %v4108
    %v4145 = vpack.c.b16 %v4113, %v4109
    %4178 = vmatpush.bf16.msra.mxu0 %v4142
    %4179 = vmatpush.bf16.msra.mxu0 %v4138
    %4180 = vmatpush.bf16.msra.mxu0 %v4134
    %4181 = vmatpush.bf16.msra.mxu0 %v4130
    %4182 = vmatpush.bf16.msra.mxu0 %v4126
    %4183 = vmatpush.bf16.msra.mxu0 %v4122
    %4184 = vmatpush.bf16.msra.mxu0 %v4118
    %4185 = vmatpush.bf16.msra.mxu0 %v4114
    %4186 = vmatmul.bf16.gmra.mxu0 %v3974
    %v4187 = vpop.f32.mrf.mxu0
    %v4188 = vadd.f32 %v4010, %v4187
    %v4189 = vpop.f32.mrf.mxu0
    %4190 = vdwg.mxu0
    %4191 = vmatpush.bf16.msra.mxu0 %v4143
    %4192 = vmatpush.bf16.msra.mxu0 %v4139
    %4193 = vmatpush.bf16.msra.mxu0 %v4135
    %4194 = vmatpush.bf16.msra.mxu0 %v4131
    %4195 = vmatpush.bf16.msra.mxu0 %v4127
    %4196 = vmatpush.bf16.msra.mxu0 %v4123
    %4197 = vmatpush.bf16.msra.mxu0 %v4119
    %4198 = vmatpush.bf16.msra.mxu0 %v4115
    %4199 = vmatmul.bf16.gmra.mxu0 %v3974
    %v4200 = vpop.f32.mrf.mxu0
    %v4201 = vadd.f32 %v4011, %v4200
    %v4202 = vpop.f32.mrf.mxu0
    %4203 = vdwg.mxu0
    %4204 = vmatpush.bf16.msra.mxu0 %v4144
    %4205 = vmatpush.bf16.msra.mxu0 %v4140
    %4206 = vmatpush.bf16.msra.mxu0 %v4136
    %4207 = vmatpush.bf16.msra.mxu0 %v4132
    %4208 = vmatpush.bf16.msra.mxu0 %v4128
    %4209 = vmatpush.bf16.msra.mxu0 %v4124
    %4210 = vmatpush.bf16.msra.mxu0 %v4120
    %4211 = vmatpush.bf16.msra.mxu0 %v4116
    %4212 = vmatmul.bf16.gmra.mxu0 %v3974
    %v4213 = vpop.f32.mrf.mxu0
    %v4214 = vadd.f32 %v4012, %v4213
    %v4215 = vpop.f32.mrf.mxu0
    %4216 = vdwg.mxu0
    %4217 = vmatpush.bf16.msra.mxu0 %v4145
    %4218 = vmatpush.bf16.msra.mxu0 %v4141
    %4219 = vmatpush.bf16.msra.mxu0 %v4137
    %4220 = vmatpush.bf16.msra.mxu0 %v4133
    %4221 = vmatpush.bf16.msra.mxu0 %v4129
    %4222 = vmatpush.bf16.msra.mxu0 %v4125
    %4223 = vmatpush.bf16.msra.mxu0 %v4121
    %4224 = vmatpush.bf16.msra.mxu0 %v4117
    %4225 = vmatmul.bf16.gmra.mxu0 %v3974
    %v4226 = vpop.f32.mrf.mxu0
    %v4227 = vadd.f32 %v4013, %v4226
    %v4228 = vpop.f32.mrf.mxu0
    %4229 = vdwg.mxu0
    %v4230 = vpack.c.bf16 %v4188, %v4188
    %v4231 = vpack.c.bf16 %v4201, %v4201
    %v4232 = vpack.c.bf16 %v4214, %v4214
    %v4233 = vpack.c.bf16 %v4227, %v4227
    %v4234 = vld [vmem:[#allocation7 + $0x300] sm:$0xff]
    %v4235 = vld [vmem:[#allocation7 + $0x308] sm:$0xff]
    %v4236 = vld [vmem:[#allocation7 + $0x310] sm:$0xff]
    %v4237 = vld [vmem:[#allocation7 + $0x318] sm:$0xff]
    %v4238 = vld [vmem:[#allocation7 + $0x320] sm:$0xff]
    %v4239 = vld [vmem:[#allocation7 + $0x328] sm:$0xff]
    %v4240 = vld [vmem:[#allocation7 + $0x330] sm:$0xff]
    %v4241 = vld [vmem:[#allocation7 + $0x338] sm:$0xff]
    %v4242 = vld [vmem:[#allocation7 + $0x340] sm:$0xff]
    %v4243 = vld [vmem:[#allocation7 + $0x348] sm:$0xff]
    %v4244 = vld [vmem:[#allocation7 + $0x350] sm:$0xff]
    %v4245 = vld [vmem:[#allocation7 + $0x358] sm:$0xff]
    %v4246 = vld [vmem:[#allocation7 + $0x360] sm:$0xff]
    %v4247 = vld [vmem:[#allocation7 + $0x368] sm:$0xff]
    %v4248 = vld [vmem:[#allocation7 + $0x370] sm:$0xff]
    %v4249 = vld [vmem:[#allocation7 + $0x378] sm:$0xff]
    %v4250 = vld [vmem:[#allocation7 + $0x380] sm:$0xff]
    %v4251 = vld [vmem:[#allocation7 + $0x388] sm:$0xff]
    %v4252 = vld [vmem:[#allocation7 + $0x390] sm:$0xff]
    %v4253 = vld [vmem:[#allocation7 + $0x398] sm:$0xff]
    %v4254 = vld [vmem:[#allocation7 + $0x3a0] sm:$0xff]
    %v4255 = vld [vmem:[#allocation7 + $0x3a8] sm:$0xff]
    %v4256 = vld [vmem:[#allocation7 + $0x3b0] sm:$0xff]
    %v4257 = vld [vmem:[#allocation7 + $0x3b8] sm:$0xff]
    %v4258 = vld [vmem:[#allocation7 + $0x3c0] sm:$0xff]
    %v4259 = vld [vmem:[#allocation7 + $0x3c8] sm:$0xff]
    %v4260 = vld [vmem:[#allocation7 + $0x3d0] sm:$0xff]
    %v4261 = vld [vmem:[#allocation7 + $0x3d8] sm:$0xff]
    %v4262 = vld [vmem:[#allocation7 + $0x3e0] sm:$0xff]
    %v4263 = vld [vmem:[#allocation7 + $0x3e8] sm:$0xff]
    %v4264 = vld [vmem:[#allocation7 + $0x3f0] sm:$0xff]
    %v4265 = vld [vmem:[#allocation7 + $0x3f8] sm:$0xff]
    %v4266 = vld [vmem:[#allocation7 + $0x400] sm:$0xff]
    %v4267 = vld [vmem:[#allocation7 + $0x408] sm:$0xff]
    %v4268 = vld [vmem:[#allocation7 + $0x410] sm:$0xff]
    %v4269 = vld [vmem:[#allocation7 + $0x418] sm:$0xff]
    %v4270 = vld [vmem:[#allocation7 + $0x420] sm:$0xff]
    %v4271 = vld [vmem:[#allocation7 + $0x428] sm:$0xff]
    %v4272 = vld [vmem:[#allocation7 + $0x430] sm:$0xff]
    %v4273 = vld [vmem:[#allocation7 + $0x438] sm:$0xff]
    %v4274 = vld [vmem:[#allocation7 + $0x440] sm:$0xff]
    %v4275 = vld [vmem:[#allocation7 + $0x448] sm:$0xff]
    %v4276 = vld [vmem:[#allocation7 + $0x450] sm:$0xff]
    %v4277 = vld [vmem:[#allocation7 + $0x458] sm:$0xff]
    %v4278 = vld [vmem:[#allocation7 + $0x460] sm:$0xff]
    %v4279 = vld [vmem:[#allocation7 + $0x468] sm:$0xff]
    %v4280 = vld [vmem:[#allocation7 + $0x470] sm:$0xff]
    %v4281 = vld [vmem:[#allocation7 + $0x478] sm:$0xff]
    %v4282 = vld [vmem:[#allocation7 + $0x480] sm:$0xff]
    %v4283 = vld [vmem:[#allocation7 + $0x488] sm:$0xff]
    %v4284 = vld [vmem:[#allocation7 + $0x490] sm:$0xff]
    %v4285 = vld [vmem:[#allocation7 + $0x498] sm:$0xff]
    %v4286 = vld [vmem:[#allocation7 + $0x4a0] sm:$0xff]
    %v4287 = vld [vmem:[#allocation7 + $0x4a8] sm:$0xff]
    %v4288 = vld [vmem:[#allocation7 + $0x4b0] sm:$0xff]
    %v4289 = vld [vmem:[#allocation7 + $0x4b8] sm:$0xff]
    %v4290 = vld [vmem:[#allocation7 + $0x4c0] sm:$0xff]
    %v4291 = vld [vmem:[#allocation7 + $0x4c8] sm:$0xff]
    %v4292 = vld [vmem:[#allocation7 + $0x4d0] sm:$0xff]
    %v4293 = vld [vmem:[#allocation7 + $0x4d8] sm:$0xff]
    %v4294 = vld [vmem:[#allocation7 + $0x4e0] sm:$0xff]
    %v4295 = vld [vmem:[#allocation7 + $0x4e8] sm:$0xff]
    %v4296 = vld [vmem:[#allocation7 + $0x4f0] sm:$0xff]
    %v4297 = vld [vmem:[#allocation7 + $0x4f8] sm:$0xff]
    %v4298 = vld [vmem:[#allocation7 + $0x500] sm:$0xff]
    %v4299 = vld [vmem:[#allocation7 + $0x508] sm:$0xff]
    %v4300 = vld [vmem:[#allocation7 + $0x510] sm:$0xff]
    %v4301 = vld [vmem:[#allocation7 + $0x518] sm:$0xff]
    %v4302 = vld [vmem:[#allocation7 + $0x520] sm:$0xff]
    %v4303 = vld [vmem:[#allocation7 + $0x528] sm:$0xff]
    %v4304 = vld [vmem:[#allocation7 + $0x530] sm:$0xff]
    %v4305 = vld [vmem:[#allocation7 + $0x538] sm:$0xff]
    %v4306 = vld [vmem:[#allocation7 + $0x540] sm:$0xff]
    %v4307 = vld [vmem:[#allocation7 + $0x548] sm:$0xff]
    %v4308 = vld [vmem:[#allocation7 + $0x550] sm:$0xff]
    %v4309 = vld [vmem:[#allocation7 + $0x558] sm:$0xff]
    %v4310 = vld [vmem:[#allocation7 + $0x560] sm:$0xff]
    %v4311 = vld [vmem:[#allocation7 + $0x568] sm:$0xff]
    %v4312 = vld [vmem:[#allocation7 + $0x570] sm:$0xff]
    %v4313 = vld [vmem:[#allocation7 + $0x578] sm:$0xff]
    %v4314 = vld [vmem:[#allocation7 + $0x580] sm:$0xff]
    %v4315 = vld [vmem:[#allocation7 + $0x588] sm:$0xff]
    %v4316 = vld [vmem:[#allocation7 + $0x590] sm:$0xff]
    %v4317 = vld [vmem:[#allocation7 + $0x598] sm:$0xff]
    %v4318 = vld [vmem:[#allocation7 + $0x5a0] sm:$0xff]
    %v4319 = vld [vmem:[#allocation7 + $0x5a8] sm:$0xff]
    %v4320 = vld [vmem:[#allocation7 + $0x5b0] sm:$0xff]
    %v4321 = vld [vmem:[#allocation7 + $0x5b8] sm:$0xff]
    %v4322 = vld [vmem:[#allocation7 + $0x5c0] sm:$0xff]
    %v4323 = vld [vmem:[#allocation7 + $0x5c8] sm:$0xff]
    %v4324 = vld [vmem:[#allocation7 + $0x5d0] sm:$0xff]
    %v4325 = vld [vmem:[#allocation7 + $0x5d8] sm:$0xff]
    %v4326 = vld [vmem:[#allocation7 + $0x5e0] sm:$0xff]
    %v4327 = vld [vmem:[#allocation7 + $0x5e8] sm:$0xff]
    %v4328 = vld [vmem:[#allocation7 + $0x5f0] sm:$0xff]
    %v4329 = vld [vmem:[#allocation7 + $0x5f8] sm:$0xff]
    %v4330 = vld [vmem:[#allocation7 + $0x600] sm:$0xff]
    %v4331 = vld [vmem:[#allocation7 + $0x608] sm:$0xff]
    %v4332 = vld [vmem:[#allocation7 + $0x610] sm:$0xff]
    %v4333 = vld [vmem:[#allocation7 + $0x618] sm:$0xff]
    %v4334 = vld [vmem:[#allocation7 + $0x620] sm:$0xff]
    %v4335 = vld [vmem:[#allocation7 + $0x628] sm:$0xff]
    %v4336 = vld [vmem:[#allocation7 + $0x630] sm:$0xff]
    %v4337 = vld [vmem:[#allocation7 + $0x638] sm:$0xff]
    %v4338 = vld [vmem:[#allocation7 + $0x640] sm:$0xff]
    %v4339 = vld [vmem:[#allocation7 + $0x648] sm:$0xff]
    %v4340 = vld [vmem:[#allocation7 + $0x650] sm:$0xff]
    %v4341 = vld [vmem:[#allocation7 + $0x658] sm:$0xff]
    %v4342 = vld [vmem:[#allocation7 + $0x660] sm:$0xff]
    %v4343 = vld [vmem:[#allocation7 + $0x668] sm:$0xff]
    %v4344 = vld [vmem:[#allocation7 + $0x670] sm:$0xff]
    %v4345 = vld [vmem:[#allocation7 + $0x678] sm:$0xff]
    %v4346 = vld [vmem:[#allocation7 + $0x680] sm:$0xff]
    %v4347 = vld [vmem:[#allocation7 + $0x688] sm:$0xff]
    %v4348 = vld [vmem:[#allocation7 + $0x690] sm:$0xff]
    %v4349 = vld [vmem:[#allocation7 + $0x698] sm:$0xff]
    %v4350 = vld [vmem:[#allocation7 + $0x6a0] sm:$0xff]
    %v4351 = vld [vmem:[#allocation7 + $0x6a8] sm:$0xff]
    %v4352 = vld [vmem:[#allocation7 + $0x6b0] sm:$0xff]
    %v4353 = vld [vmem:[#allocation7 + $0x6b8] sm:$0xff]
    %v4354 = vld [vmem:[#allocation7 + $0x6c0] sm:$0xff]
    %v4355 = vld [vmem:[#allocation7 + $0x6c8] sm:$0xff]
    %v4356 = vld [vmem:[#allocation7 + $0x6d0] sm:$0xff]
    %v4357 = vld [vmem:[#allocation7 + $0x6d8] sm:$0xff]
    %v4358 = vld [vmem:[#allocation7 + $0x6e0] sm:$0xff]
    %v4359 = vld [vmem:[#allocation7 + $0x6e8] sm:$0xff]
    %v4360 = vld [vmem:[#allocation7 + $0x6f0] sm:$0xff]
    %v4361 = vld [vmem:[#allocation7 + $0x6f8] sm:$0xff]
    %v4490 = vunpack.c.l.b16 %v4234
    %v4491 = vunpack.c.h.b16 %v4234
    %v4492 = vunpack.c.l.b16 %v4235
    %v4493 = vunpack.c.h.b16 %v4235
    %v4494 = vunpack.c.l.b16 %v4236
    %v4495 = vunpack.c.h.b16 %v4236
    %v4496 = vunpack.c.l.b16 %v4237
    %v4497 = vunpack.c.h.b16 %v4237
    %v4498 = vunpack.c.l.b16 %v4238
    %v4499 = vunpack.c.h.b16 %v4238
    %v4500 = vunpack.c.l.b16 %v4239
    %v4501 = vunpack.c.h.b16 %v4239
    %v4502 = vunpack.c.l.b16 %v4240
    %v4503 = vunpack.c.h.b16 %v4240
    %v4504 = vunpack.c.l.b16 %v4241
    %v4505 = vunpack.c.h.b16 %v4241
    %v4506 = vunpack.c.l.b16 %v4242
    %v4507 = vunpack.c.h.b16 %v4242
    %v4508 = vunpack.c.l.b16 %v4243
    %v4509 = vunpack.c.h.b16 %v4243
    %v4510 = vunpack.c.l.b16 %v4244
    %v4511 = vunpack.c.h.b16 %v4244
    %v4512 = vunpack.c.l.b16 %v4245
    %v4513 = vunpack.c.h.b16 %v4245
    %v4514 = vunpack.c.l.b16 %v4246
    %v4515 = vunpack.c.h.b16 %v4246
    %v4516 = vunpack.c.l.b16 %v4247
    %v4517 = vunpack.c.h.b16 %v4247
    %v4518 = vunpack.c.l.b16 %v4248
    %v4519 = vunpack.c.h.b16 %v4248
    %v4520 = vunpack.c.l.b16 %v4249
    %v4521 = vunpack.c.h.b16 %v4249
    %v4522 = vunpack.c.l.b16 %v4250
    %v4523 = vunpack.c.h.b16 %v4250
    %v4524 = vunpack.c.l.b16 %v4251
    %v4525 = vunpack.c.h.b16 %v4251
    %v4526 = vunpack.c.l.b16 %v4252
    %v4527 = vunpack.c.h.b16 %v4252
    %v4528 = vunpack.c.l.b16 %v4253
    %v4529 = vunpack.c.h.b16 %v4253
    %v4530 = vunpack.c.l.b16 %v4254
    %v4531 = vunpack.c.h.b16 %v4254
    %v4532 = vunpack.c.l.b16 %v4255
    %v4533 = vunpack.c.h.b16 %v4255
    %v4534 = vunpack.c.l.b16 %v4256
    %v4535 = vunpack.c.h.b16 %v4256
    %v4536 = vunpack.c.l.b16 %v4257
    %v4537 = vunpack.c.h.b16 %v4257
    %v4538 = vunpack.c.l.b16 %v4258
    %v4539 = vunpack.c.h.b16 %v4258
    %v4540 = vunpack.c.l.b16 %v4259
    %v4541 = vunpack.c.h.b16 %v4259
    %v4542 = vunpack.c.l.b16 %v4260
    %v4543 = vunpack.c.h.b16 %v4260
    %v4544 = vunpack.c.l.b16 %v4261
    %v4545 = vunpack.c.h.b16 %v4261
    %v4546 = vunpack.c.l.b16 %v4262
    %v4547 = vunpack.c.h.b16 %v4262
    %v4548 = vunpack.c.l.b16 %v4263
    %v4549 = vunpack.c.h.b16 %v4263
    %v4550 = vunpack.c.l.b16 %v4264
    %v4551 = vunpack.c.h.b16 %v4264
    %v4552 = vunpack.c.l.b16 %v4265
    %v4553 = vunpack.c.h.b16 %v4265
    %v4554 = vunpack.c.l.b16 %v4266
    %v4555 = vunpack.c.h.b16 %v4266
    %v4556 = vunpack.c.l.b16 %v4267
    %v4557 = vunpack.c.h.b16 %v4267
    %v4558 = vunpack.c.l.b16 %v4268
    %v4559 = vunpack.c.h.b16 %v4268
    %v4560 = vunpack.c.l.b16 %v4269
    %v4561 = vunpack.c.h.b16 %v4269
    %v4562 = vunpack.c.l.b16 %v4270
    %v4563 = vunpack.c.h.b16 %v4270
    %v4564 = vunpack.c.l.b16 %v4271
    %v4565 = vunpack.c.h.b16 %v4271
    %v4566 = vunpack.c.l.b16 %v4272
    %v4567 = vunpack.c.h.b16 %v4272
    %v4568 = vunpack.c.l.b16 %v4273
    %v4569 = vunpack.c.h.b16 %v4273
    %v4570 = vunpack.c.l.b16 %v4274
    %v4571 = vunpack.c.h.b16 %v4274
    %v4572 = vunpack.c.l.b16 %v4275
    %v4573 = vunpack.c.h.b16 %v4275
    %v4574 = vunpack.c.l.b16 %v4276
    %v4575 = vunpack.c.h.b16 %v4276
    %v4576 = vunpack.c.l.b16 %v4277
    %v4577 = vunpack.c.h.b16 %v4277
    %v4578 = vunpack.c.l.b16 %v4278
    %v4579 = vunpack.c.h.b16 %v4278
    %v4580 = vunpack.c.l.b16 %v4279
    %v4581 = vunpack.c.h.b16 %v4279
    %v4582 = vunpack.c.l.b16 %v4280
    %v4583 = vunpack.c.h.b16 %v4280
    %v4584 = vunpack.c.l.b16 %v4281
    %v4585 = vunpack.c.h.b16 %v4281
    %v4586 = vunpack.c.l.b16 %v4282
    %v4587 = vunpack.c.h.b16 %v4282
    %v4588 = vunpack.c.l.b16 %v4283
    %v4589 = vunpack.c.h.b16 %v4283
    %v4590 = vunpack.c.l.b16 %v4284
    %v4591 = vunpack.c.h.b16 %v4284
    %v4592 = vunpack.c.l.b16 %v4285
    %v4593 = vunpack.c.h.b16 %v4285
    %v4594 = vunpack.c.l.b16 %v4286
    %v4595 = vunpack.c.h.b16 %v4286
    %v4596 = vunpack.c.l.b16 %v4287
    %v4597 = vunpack.c.h.b16 %v4287
    %v4598 = vunpack.c.l.b16 %v4288
    %v4599 = vunpack.c.h.b16 %v4288
    %v4600 = vunpack.c.l.b16 %v4289
    %v4601 = vunpack.c.h.b16 %v4289
    %v4602 = vunpack.c.l.b16 %v4290
    %v4603 = vunpack.c.h.b16 %v4290
    %v4604 = vunpack.c.l.b16 %v4291
    %v4605 = vunpack.c.h.b16 %v4291
    %v4606 = vunpack.c.l.b16 %v4292
    %v4607 = vunpack.c.h.b16 %v4292
    %v4608 = vunpack.c.l.b16 %v4293
    %v4609 = vunpack.c.h.b16 %v4293
    %v4610 = vunpack.c.l.b16 %v4294
    %v4611 = vunpack.c.h.b16 %v4294
    %v4612 = vunpack.c.l.b16 %v4295
    %v4613 = vunpack.c.h.b16 %v4295
    %v4614 = vunpack.c.l.b16 %v4296
    %v4615 = vunpack.c.h.b16 %v4296
    %v4616 = vunpack.c.l.b16 %v4297
    %v4617 = vunpack.c.h.b16 %v4297
    %v4618 = vunpack.c.l.b16 %v4298
    %v4619 = vunpack.c.h.b16 %v4298
    %v4620 = vunpack.c.l.b16 %v4299
    %v4621 = vunpack.c.h.b16 %v4299
    %v4622 = vunpack.c.l.b16 %v4300
    %v4623 = vunpack.c.h.b16 %v4300
    %v4624 = vunpack.c.l.b16 %v4301
    %v4625 = vunpack.c.h.b16 %v4301
    %v4626 = vunpack.c.l.b16 %v4302
    %v4627 = vunpack.c.h.b16 %v4302
    %v4628 = vunpack.c.l.b16 %v4303
    %v4629 = vunpack.c.h.b16 %v4303
    %v4630 = vunpack.c.l.b16 %v4304
    %v4631 = vunpack.c.h.b16 %v4304
    %v4632 = vunpack.c.l.b16 %v4305
    %v4633 = vunpack.c.h.b16 %v4305
    %v4634 = vunpack.c.l.b16 %v4306
    %v4635 = vunpack.c.h.b16 %v4306
    %v4636 = vunpack.c.l.b16 %v4307
    %v4637 = vunpack.c.h.b16 %v4307
    %v4638 = vunpack.c.l.b16 %v4308
    %v4639 = vunpack.c.h.b16 %v4308
    %v4640 = vunpack.c.l.b16 %v4309
    %v4641 = vunpack.c.h.b16 %v4309
    %v4642 = vunpack.c.l.b16 %v4310
    %v4643 = vunpack.c.h.b16 %v4310
    %v4644 = vunpack.c.l.b16 %v4311
    %v4645 = vunpack.c.h.b16 %v4311
    %v4646 = vunpack.c.l.b16 %v4312
    %v4647 = vunpack.c.h.b16 %v4312
    %v4648 = vunpack.c.l.b16 %v4313
    %v4649 = vunpack.c.h.b16 %v4313
    %v4650 = vunpack.c.l.b16 %v4314
    %v4651 = vunpack.c.h.b16 %v4314
    %v4652 = vunpack.c.l.b16 %v4315
    %v4653 = vunpack.c.h.b16 %v4315
    %v4654 = vunpack.c.l.b16 %v4316
    %v4655 = vunpack.c.h.b16 %v4316
    %v4656 = vunpack.c.l.b16 %v4317
    %v4657 = vunpack.c.h.b16 %v4317
    %v4658 = vunpack.c.l.b16 %v4318
    %v4659 = vunpack.c.h.b16 %v4318
    %v4660 = vunpack.c.l.b16 %v4319
    %v4661 = vunpack.c.h.b16 %v4319
    %v4662 = vunpack.c.l.b16 %v4320
    %v4663 = vunpack.c.h.b16 %v4320
    %v4664 = vunpack.c.l.b16 %v4321
    %v4665 = vunpack.c.h.b16 %v4321
    %v4666 = vunpack.c.l.b16 %v4322
    %v4667 = vunpack.c.h.b16 %v4322
    %v4668 = vunpack.c.l.b16 %v4323
    %v4669 = vunpack.c.h.b16 %v4323
    %v4670 = vunpack.c.l.b16 %v4324
    %v4671 = vunpack.c.h.b16 %v4324
    %v4672 = vunpack.c.l.b16 %v4325
    %v4673 = vunpack.c.h.b16 %v4325
    %v4674 = vunpack.c.l.b16 %v4326
    %v4675 = vunpack.c.h.b16 %v4326
    %v4676 = vunpack.c.l.b16 %v4327
    %v4677 = vunpack.c.h.b16 %v4327
    %v4678 = vunpack.c.l.b16 %v4328
    %v4679 = vunpack.c.h.b16 %v4328
    %v4680 = vunpack.c.l.b16 %v4329
    %v4681 = vunpack.c.h.b16 %v4329
    %v4682 = vunpack.c.l.b16 %v4330
    %v4683 = vunpack.c.h.b16 %v4330
    %v4684 = vunpack.c.l.b16 %v4331
    %v4685 = vunpack.c.h.b16 %v4331
    %v4686 = vunpack.c.l.b16 %v4332
    %v4687 = vunpack.c.h.b16 %v4332
    %v4688 = vunpack.c.l.b16 %v4333
    %v4689 = vunpack.c.h.b16 %v4333
    %v4690 = vunpack.c.l.b16 %v4334
    %v4691 = vunpack.c.h.b16 %v4334
    %v4692 = vunpack.c.l.b16 %v4335
    %v4693 = vunpack.c.h.b16 %v4335
    %v4694 = vunpack.c.l.b16 %v4336
    %v4695 = vunpack.c.h.b16 %v4336
    %v4696 = vunpack.c.l.b16 %v4337
    %v4697 = vunpack.c.h.b16 %v4337
    %v4698 = vunpack.c.l.b16 %v4338
    %v4699 = vunpack.c.h.b16 %v4338
    %v4700 = vunpack.c.l.b16 %v4339
    %v4701 = vunpack.c.h.b16 %v4339
    %v4702 = vunpack.c.l.b16 %v4340
    %v4703 = vunpack.c.h.b16 %v4340
    %v4704 = vunpack.c.l.b16 %v4341
    %v4705 = vunpack.c.h.b16 %v4341
    %v4706 = vunpack.c.l.b16 %v4342
    %v4707 = vunpack.c.h.b16 %v4342
    %v4708 = vunpack.c.l.b16 %v4343
    %v4709 = vunpack.c.h.b16 %v4343
    %v4710 = vunpack.c.l.b16 %v4344
    %v4711 = vunpack.c.h.b16 %v4344
    %v4712 = vunpack.c.l.b16 %v4345
    %v4713 = vunpack.c.h.b16 %v4345
    %v4714 = vunpack.c.l.b16 %v4346
    %v4715 = vunpack.c.h.b16 %v4346
    %v4716 = vunpack.c.l.b16 %v4347
    %v4717 = vunpack.c.h.b16 %v4347
    %v4718 = vunpack.c.l.b16 %v4348
    %v4719 = vunpack.c.h.b16 %v4348
    %v4720 = vunpack.c.l.b16 %v4349
    %v4721 = vunpack.c.h.b16 %v4349
    %v4722 = vunpack.c.l.b16 %v4350
    %v4723 = vunpack.c.h.b16 %v4350
    %v4724 = vunpack.c.l.b16 %v4351
    %v4725 = vunpack.c.h.b16 %v4351
    %v4726 = vunpack.c.l.b16 %v4352
    %v4727 = vunpack.c.h.b16 %v4352
    %v4728 = vunpack.c.l.b16 %v4353
    %v4729 = vunpack.c.h.b16 %v4353
    %v4730 = vunpack.c.l.b16 %v4354
    %v4731 = vunpack.c.h.b16 %v4354
    %v4732 = vunpack.c.l.b16 %v4355
    %v4733 = vunpack.c.h.b16 %v4355
    %v4734 = vunpack.c.l.b16 %v4356
    %v4735 = vunpack.c.h.b16 %v4356
    %v4736 = vunpack.c.l.b16 %v4357
    %v4737 = vunpack.c.h.b16 %v4357
    %v4738 = vunpack.c.l.b16 %v4358
    %v4739 = vunpack.c.h.b16 %v4358
    %v4740 = vunpack.c.l.b16 %v4359
    %v4741 = vunpack.c.h.b16 %v4359
    %v4742 = vunpack.c.l.b16 %v4360
    %v4743 = vunpack.c.h.b16 %v4360
    %v4744 = vunpack.c.l.b16 %v4361
    %v4745 = vunpack.c.h.b16 %v4361
    %v4746 = vpack.c.b16 %v4494, %v4490
    %v4747 = vpack.c.b16 %v4495, %v4491
    %v4748 = vpack.c.b16 %v4496, %v4492
    %v4749 = vpack.c.b16 %v4497, %v4493
    %v4750 = vpack.c.b16 %v4502, %v4498
    %v4751 = vpack.c.b16 %v4503, %v4499
    %v4752 = vpack.c.b16 %v4504, %v4500
    %v4753 = vpack.c.b16 %v4505, %v4501
    %v4754 = vpack.c.b16 %v4510, %v4506
    %v4755 = vpack.c.b16 %v4511, %v4507
    %v4756 = vpack.c.b16 %v4512, %v4508
    %v4757 = vpack.c.b16 %v4513, %v4509
    %v4758 = vpack.c.b16 %v4518, %v4514
    %v4759 = vpack.c.b16 %v4519, %v4515
    %v4760 = vpack.c.b16 %v4520, %v4516
    %v4761 = vpack.c.b16 %v4521, %v4517
    %v4762 = vpack.c.b16 %v4526, %v4522
    %v4763 = vpack.c.b16 %v4527, %v4523
    %v4764 = vpack.c.b16 %v4528, %v4524
    %v4765 = vpack.c.b16 %v4529, %v4525
    %v4766 = vpack.c.b16 %v4534, %v4530
    %v4767 = vpack.c.b16 %v4535, %v4531
    %v4768 = vpack.c.b16 %v4536, %v4532
    %v4769 = vpack.c.b16 %v4537, %v4533
    %v4770 = vpack.c.b16 %v4542, %v4538
    %v4771 = vpack.c.b16 %v4543, %v4539
    %v4772 = vpack.c.b16 %v4544, %v4540
    %v4773 = vpack.c.b16 %v4545, %v4541
    %v4774 = vpack.c.b16 %v4550, %v4546
    %v4775 = vpack.c.b16 %v4551, %v4547
    %v4776 = vpack.c.b16 %v4552, %v4548
    %v4777 = vpack.c.b16 %v4553, %v4549
    %v4778 = vpack.c.b16 %v4558, %v4554
    %v4779 = vpack.c.b16 %v4559, %v4555
    %v4780 = vpack.c.b16 %v4560, %v4556
    %v4781 = vpack.c.b16 %v4561, %v4557
    %v4782 = vpack.c.b16 %v4566, %v4562
    %v4783 = vpack.c.b16 %v4567, %v4563
    %v4784 = vpack.c.b16 %v4568, %v4564
    %v4785 = vpack.c.b16 %v4569, %v4565
    %v4786 = vpack.c.b16 %v4574, %v4570
    %v4787 = vpack.c.b16 %v4575, %v4571
    %v4788 = vpack.c.b16 %v4576, %v4572
    %v4789 = vpack.c.b16 %v4577, %v4573
    %v4790 = vpack.c.b16 %v4582, %v4578
    %v4791 = vpack.c.b16 %v4583, %v4579
    %v4792 = vpack.c.b16 %v4584, %v4580
    %v4793 = vpack.c.b16 %v4585, %v4581
    %v4794 = vpack.c.b16 %v4590, %v4586
    %v4795 = vpack.c.b16 %v4591, %v4587
    %v4796 = vpack.c.b16 %v4592, %v4588
    %v4797 = vpack.c.b16 %v4593, %v4589
    %v4798 = vpack.c.b16 %v4598, %v4594
    %v4799 = vpack.c.b16 %v4599, %v4595
    %v4800 = vpack.c.b16 %v4600, %v4596
    %v4801 = vpack.c.b16 %v4601, %v4597
    %v4802 = vpack.c.b16 %v4606, %v4602
    %v4803 = vpack.c.b16 %v4607, %v4603
    %v4804 = vpack.c.b16 %v4608, %v4604
    %v4805 = vpack.c.b16 %v4609, %v4605
    %v4806 = vpack.c.b16 %v4614, %v4610
    %v4807 = vpack.c.b16 %v4615, %v4611
    %v4808 = vpack.c.b16 %v4616, %v4612
    %v4809 = vpack.c.b16 %v4617, %v4613
    %v4810 = vpack.c.b16 %v4622, %v4618
    %v4811 = vpack.c.b16 %v4623, %v4619
    %v4812 = vpack.c.b16 %v4624, %v4620
    %v4813 = vpack.c.b16 %v4625, %v4621
    %v4814 = vpack.c.b16 %v4630, %v4626
    %v4815 = vpack.c.b16 %v4631, %v4627
    %v4816 = vpack.c.b16 %v4632, %v4628
    %v4817 = vpack.c.b16 %v4633, %v4629
    %v4818 = vpack.c.b16 %v4638, %v4634
    %v4819 = vpack.c.b16 %v4639, %v4635
    %v4820 = vpack.c.b16 %v4640, %v4636
    %v4821 = vpack.c.b16 %v4641, %v4637
    %v4822 = vpack.c.b16 %v4646, %v4642
    %v4823 = vpack.c.b16 %v4647, %v4643
    %v4824 = vpack.c.b16 %v4648, %v4644
    %v4825 = vpack.c.b16 %v4649, %v4645
    %v4826 = vpack.c.b16 %v4654, %v4650
    %v4827 = vpack.c.b16 %v4655, %v4651
    %v4828 = vpack.c.b16 %v4656, %v4652
    %v4829 = vpack.c.b16 %v4657, %v4653
    %v4830 = vpack.c.b16 %v4662, %v4658
    %v4831 = vpack.c.b16 %v4663, %v4659
    %v4832 = vpack.c.b16 %v4664, %v4660
    %v4833 = vpack.c.b16 %v4665, %v4661
    %v4834 = vpack.c.b16 %v4670, %v4666
    %v4835 = vpack.c.b16 %v4671, %v4667
    %v4836 = vpack.c.b16 %v4672, %v4668
    %v4837 = vpack.c.b16 %v4673, %v4669
    %v4838 = vpack.c.b16 %v4678, %v4674
    %v4839 = vpack.c.b16 %v4679, %v4675
    %v4840 = vpack.c.b16 %v4680, %v4676
    %v4841 = vpack.c.b16 %v4681, %v4677
    %v4842 = vpack.c.b16 %v4686, %v4682
    %v4843 = vpack.c.b16 %v4687, %v4683
    %v4844 = vpack.c.b16 %v4688, %v4684
    %v4845 = vpack.c.b16 %v4689, %v4685
    %v4846 = vpack.c.b16 %v4694, %v4690
    %v4847 = vpack.c.b16 %v4695, %v4691
    %v4848 = vpack.c.b16 %v4696, %v4692
    %v4849 = vpack.c.b16 %v4697, %v4693
    %v4850 = vpack.c.b16 %v4702, %v4698
    %v4851 = vpack.c.b16 %v4703, %v4699
    %v4852 = vpack.c.b16 %v4704, %v4700
    %v4853 = vpack.c.b16 %v4705, %v4701
    %v4854 = vpack.c.b16 %v4710, %v4706
    %v4855 = vpack.c.b16 %v4711, %v4707
    %v4856 = vpack.c.b16 %v4712, %v4708
    %v4857 = vpack.c.b16 %v4713, %v4709
    %v4858 = vpack.c.b16 %v4718, %v4714
    %v4859 = vpack.c.b16 %v4719, %v4715
    %v4860 = vpack.c.b16 %v4720, %v4716
    %v4861 = vpack.c.b16 %v4721, %v4717
    %v4862 = vpack.c.b16 %v4726, %v4722
    %v4863 = vpack.c.b16 %v4727, %v4723
    %v4864 = vpack.c.b16 %v4728, %v4724
    %v4865 = vpack.c.b16 %v4729, %v4725
    %v4866 = vpack.c.b16 %v4734, %v4730
    %v4867 = vpack.c.b16 %v4735, %v4731
    %v4868 = vpack.c.b16 %v4736, %v4732
    %v4869 = vpack.c.b16 %v4737, %v4733
    %v4870 = vpack.c.b16 %v4742, %v4738
    %v4871 = vpack.c.b16 %v4743, %v4739
    %v4872 = vpack.c.b16 %v4744, %v4740
    %v4873 = vpack.c.b16 %v4745, %v4741
    %5002 = vmatpush.bf16.msra.mxu0 %v4774
    %5003 = vmatpush.bf16.msra.mxu0 %v4770
    %5004 = vmatpush.bf16.msra.mxu0 %v4766
    %5005 = vmatpush.bf16.msra.mxu0 %v4762
    %5006 = vmatpush.bf16.msra.mxu0 %v4758
    %5007 = vmatpush.bf16.msra.mxu0 %v4754
    %5008 = vmatpush.bf16.msra.mxu0 %v4750
    %5009 = vmatpush.bf16.msra.mxu0 %v4746
    %5010 = vmatmul.bf16.gmra.mxu0 %v4230
    %v5011 = vpop.f32.mrf.mxu0
    %v5012 = vadd.f32 0.0, %v5011
    %v5013 = vpop.f32.mrf.mxu0
    %5014 = vdwg.mxu0
    %5015 = vmatpush.bf16.msra.mxu0 %v4806
    %5016 = vmatpush.bf16.msra.mxu0 %v4802
    %5017 = vmatpush.bf16.msra.mxu0 %v4798
    %5018 = vmatpush.bf16.msra.mxu0 %v4794
    %5019 = vmatpush.bf16.msra.mxu0 %v4790
    %5020 = vmatpush.bf16.msra.mxu0 %v4786
    %5021 = vmatpush.bf16.msra.mxu0 %v4782
    %5022 = vmatpush.bf16.msra.mxu0 %v4778
    %5023 = vmatmul.bf16.gmra.mxu0 %v4231
    %v5024 = vpop.f32.mrf.mxu0
    %v5025 = vadd.f32 %v5012, %v5024
    %v5026 = vpop.f32.mrf.mxu0
    %5027 = vdwg.mxu0
    %5028 = vmatpush.bf16.msra.mxu0 %v4838
    %5029 = vmatpush.bf16.msra.mxu0 %v4834
    %5030 = vmatpush.bf16.msra.mxu0 %v4830
    %5031 = vmatpush.bf16.msra.mxu0 %v4826
    %5032 = vmatpush.bf16.msra.mxu0 %v4822
    %5033 = vmatpush.bf16.msra.mxu0 %v4818
    %5034 = vmatpush.bf16.msra.mxu0 %v4814
    %5035 = vmatpush.bf16.msra.mxu0 %v4810
    %5036 = vmatmul.bf16.gmra.mxu0 %v4232
    %v5037 = vpop.f32.mrf.mxu0
    %v5038 = vadd.f32 %v5025, %v5037
    %v5039 = vpop.f32.mrf.mxu0
    %5040 = vdwg.mxu0
    %5041 = vmatpush.bf16.msra.mxu0 %v4870
    %5042 = vmatpush.bf16.msra.mxu0 %v4866
    %5043 = vmatpush.bf16.msra.mxu0 %v4862
    %5044 = vmatpush.bf16.msra.mxu0 %v4858
    %5045 = vmatpush.bf16.msra.mxu0 %v4854
    %5046 = vmatpush.bf16.msra.mxu0 %v4850
    %5047 = vmatpush.bf16.msra.mxu0 %v4846
    %5048 = vmatpush.bf16.msra.mxu0 %v4842
    %5049 = vmatmul.bf16.gmra.mxu0 %v4233
    %v5050 = vpop.f32.mrf.mxu0
    %v5051 = vadd.f32 %v5038, %v5050
    %v5052 = vpop.f32.mrf.mxu0
    %5053 = vdwg.mxu0
    %5054 = vmatpush.bf16.msra.mxu0 %v4775
    %5055 = vmatpush.bf16.msra.mxu0 %v4771
    %5056 = vmatpush.bf16.msra.mxu0 %v4767
    %5057 = vmatpush.bf16.msra.mxu0 %v4763
    %5058 = vmatpush.bf16.msra.mxu0 %v4759
    %5059 = vmatpush.bf16.msra.mxu0 %v4755
    %5060 = vmatpush.bf16.msra.mxu0 %v4751
    %5061 = vmatpush.bf16.msra.mxu0 %v4747
    %5062 = vmatmul.bf16.gmra.mxu0 %v4230
    %v5063 = vpop.f32.mrf.mxu0
    %v5064 = vadd.f32 0.0, %v5063
    %v5065 = vpop.f32.mrf.mxu0
    %5066 = vdwg.mxu0
    %5067 = vmatpush.bf16.msra.mxu0 %v4807
    %5068 = vmatpush.bf16.msra.mxu0 %v4803
    %5069 = vmatpush.bf16.msra.mxu0 %v4799
    %5070 = vmatpush.bf16.msra.mxu0 %v4795
    %5071 = vmatpush.bf16.msra.mxu0 %v4791
    %5072 = vmatpush.bf16.msra.mxu0 %v4787
    %5073 = vmatpush.bf16.msra.mxu0 %v4783
    %5074 = vmatpush.bf16.msra.mxu0 %v4779
    %5075 = vmatmul.bf16.gmra.mxu0 %v4231
    %v5076 = vpop.f32.mrf.mxu0
    %v5077 = vadd.f32 %v5064, %v5076
    %v5078 = vpop.f32.mrf.mxu0
    %5079 = vdwg.mxu0
    %5080 = vmatpush.bf16.msra.mxu0 %v4839
    %5081 = vmatpush.bf16.msra.mxu0 %v4835
    %5082 = vmatpush.bf16.msra.mxu0 %v4831
    %5083 = vmatpush.bf16.msra.mxu0 %v4827
    %5084 = vmatpush.bf16.msra.mxu0 %v4823
    %5085 = vmatpush.bf16.msra.mxu0 %v4819
    %5086 = vmatpush.bf16.msra.mxu0 %v4815
    %5087 = vmatpush.bf16.msra.mxu0 %v4811
    %5088 = vmatmul.bf16.gmra.mxu0 %v4232
    %v5089 = vpop.f32.mrf.mxu0
    %v5090 = vadd.f32 %v5077, %v5089
    %v5091 = vpop.f32.mrf.mxu0
    %5092 = vdwg.mxu0
    %5093 = vmatpush.bf16.msra.mxu0 %v4871
    %5094 = vmatpush.bf16.msra.mxu0 %v4867
    %5095 = vmatpush.bf16.msra.mxu0 %v4863
    %5096 = vmatpush.bf16.msra.mxu0 %v4859
    %5097 = vmatpush.bf16.msra.mxu0 %v4855
    %5098 = vmatpush.bf16.msra.mxu0 %v4851
    %5099 = vmatpush.bf16.msra.mxu0 %v4847
    %5100 = vmatpush.bf16.msra.mxu0 %v4843
    %5101 = vmatmul.bf16.gmra.mxu0 %v4233
    %v5102 = vpop.f32.mrf.mxu0
    %v5103 = vadd.f32 %v5090, %v5102
    %v5104 = vpop.f32.mrf.mxu0
    %5105 = vdwg.mxu0
    %5106 = vmatpush.bf16.msra.mxu0 %v4776
    %5107 = vmatpush.bf16.msra.mxu0 %v4772
    %5108 = vmatpush.bf16.msra.mxu0 %v4768
    %5109 = vmatpush.bf16.msra.mxu0 %v4764
    %5110 = vmatpush.bf16.msra.mxu0 %v4760
    %5111 = vmatpush.bf16.msra.mxu0 %v4756
    %5112 = vmatpush.bf16.msra.mxu0 %v4752
    %5113 = vmatpush.bf16.msra.mxu0 %v4748
    %5114 = vmatmul.bf16.gmra.mxu0 %v4230
    %v5115 = vpop.f32.mrf.mxu0
    %v5116 = vadd.f32 0.0, %v5115
    %v5117 = vpop.f32.mrf.mxu0
    %5118 = vdwg.mxu0
    %5119 = vmatpush.bf16.msra.mxu0 %v4808
    %5120 = vmatpush.bf16.msra.mxu0 %v4804
    %5121 = vmatpush.bf16.msra.mxu0 %v4800
    %5122 = vmatpush.bf16.msra.mxu0 %v4796
    %5123 = vmatpush.bf16.msra.mxu0 %v4792
    %5124 = vmatpush.bf16.msra.mxu0 %v4788
    %5125 = vmatpush.bf16.msra.mxu0 %v4784
    %5126 = vmatpush.bf16.msra.mxu0 %v4780
    %5127 = vmatmul.bf16.gmra.mxu0 %v4231
    %v5128 = vpop.f32.mrf.mxu0
    %v5129 = vadd.f32 %v5116, %v5128
    %v5130 = vpop.f32.mrf.mxu0
    %5131 = vdwg.mxu0
    %5132 = vmatpush.bf16.msra.mxu0 %v4840
    %5133 = vmatpush.bf16.msra.mxu0 %v4836
    %5134 = vmatpush.bf16.msra.mxu0 %v4832
    %5135 = vmatpush.bf16.msra.mxu0 %v4828
    %5136 = vmatpush.bf16.msra.mxu0 %v4824
    %5137 = vmatpush.bf16.msra.mxu0 %v4820
    %5138 = vmatpush.bf16.msra.mxu0 %v4816
    %5139 = vmatpush.bf16.msra.mxu0 %v4812
    %5140 = vmatmul.bf16.gmra.mxu0 %v4232
    %v5141 = vpop.f32.mrf.mxu0
    %v5142 = vadd.f32 %v5129, %v5141
    %v5143 = vpop.f32.mrf.mxu0
    %5144 = vdwg.mxu0
    %5145 = vmatpush.bf16.msra.mxu0 %v4872
    %5146 = vmatpush.bf16.msra.mxu0 %v4868
    %5147 = vmatpush.bf16.msra.mxu0 %v4864
    %5148 = vmatpush.bf16.msra.mxu0 %v4860
    %5149 = vmatpush.bf16.msra.mxu0 %v4856
    %5150 = vmatpush.bf16.msra.mxu0 %v4852
    %5151 = vmatpush.bf16.msra.mxu0 %v4848
    %5152 = vmatpush.bf16.msra.mxu0 %v4844
    %5153 = vmatmul.bf16.gmra.mxu0 %v4233
    %v5154 = vpop.f32.mrf.mxu0
    %v5155 = vadd.f32 %v5142, %v5154
    %v5156 = vpop.f32.mrf.mxu0
    %5157 = vdwg.mxu0
    %5158 = vmatpush.bf16.msra.mxu0 %v4777
    %5159 = vmatpush.bf16.msra.mxu0 %v4773
    %5160 = vmatpush.bf16.msra.mxu0 %v4769
    %5161 = vmatpush.bf16.msra.mxu0 %v4765
    %5162 = vmatpush.bf16.msra.mxu0 %v4761
    %5163 = vmatpush.bf16.msra.mxu0 %v4757
    %5164 = vmatpush.bf16.msra.mxu0 %v4753
    %5165 = vmatpush.bf16.msra.mxu0 %v4749
    %5166 = vmatmul.bf16.gmra.mxu0 %v4230
    %v5167 = vpop.f32.mrf.mxu0
    %v5168 = vadd.f32 0.0, %v5167
    %v5169 = vpop.f32.mrf.mxu0
    %5170 = vdwg.mxu0
    %5171 = vmatpush.bf16.msra.mxu0 %v4809
    %5172 = vmatpush.bf16.msra.mxu0 %v4805
    %5173 = vmatpush.bf16.msra.mxu0 %v4801
    %5174 = vmatpush.bf16.msra.mxu0 %v4797
    %5175 = vmatpush.bf16.msra.mxu0 %v4793
    %5176 = vmatpush.bf16.msra.mxu0 %v4789
    %5177 = vmatpush.bf16.msra.mxu0 %v4785
    %5178 = vmatpush.bf16.msra.mxu0 %v4781
    %5179 = vmatmul.bf16.gmra.mxu0 %v4231
    %v5180 = vpop.f32.mrf.mxu0
    %v5181 = vadd.f32 %v5168, %v5180
    %v5182 = vpop.f32.mrf.mxu0
    %5183 = vdwg.mxu0
    %5184 = vmatpush.bf16.msra.mxu0 %v4841
    %5185 = vmatpush.bf16.msra.mxu0 %v4837
    %5186 = vmatpush.bf16.msra.mxu0 %v4833
    %5187 = vmatpush.bf16.msra.mxu0 %v4829
    %5188 = vmatpush.bf16.msra.mxu0 %v4825
    %5189 = vmatpush.bf16.msra.mxu0 %v4821
    %5190 = vmatpush.bf16.msra.mxu0 %v4817
    %5191 = vmatpush.bf16.msra.mxu0 %v4813
    %5192 = vmatmul.bf16.gmra.mxu0 %v4232
    %v5193 = vpop.f32.mrf.mxu0
    %v5194 = vadd.f32 %v5181, %v5193
    %v5195 = vpop.f32.mrf.mxu0
    %5196 = vdwg.mxu0
    %5197 = vmatpush.bf16.msra.mxu0 %v4873
    %5198 = vmatpush.bf16.msra.mxu0 %v4869
    %5199 = vmatpush.bf16.msra.mxu0 %v4865
    %5200 = vmatpush.bf16.msra.mxu0 %v4861
    %5201 = vmatpush.bf16.msra.mxu0 %v4857
    %5202 = vmatpush.bf16.msra.mxu0 %v4853
    %5203 = vmatpush.bf16.msra.mxu0 %v4849
    %5204 = vmatpush.bf16.msra.mxu0 %v4845
    %5205 = vmatmul.bf16.gmra.mxu0 %v4233
    %v5206 = vpop.f32.mrf.mxu0
    %v5207 = vadd.f32 %v5194, %v5206
    %v5208 = vpop.f32.mrf.mxu0
    %5209 = vdwg.mxu0
    %v5210 = vpack.c.bf16 %v5103, %v5051
    %v5211 = vpack.c.bf16 %v5207, %v5155
    %v5212 = vld [vmem:[#allocation11 + $0xc8] sm:$0x3]
    %v5213 = vld [vmem:[#allocation11 + $0xcc] sm:$0x3]
    %v5215 = vunpack.c.l.b16 %v5211
    %v5216 = vunpack.c.h.b16 %v5211
    %v5217 = vpack.c.b16 %v5215, %v5215
    %v5218 = vpack.c.b16 %v5216, %v5216
    %vm5219 = vcmask 15360
    %v5221 = vsel %vm5219, %v5213, 0
    %v5224 = vsel %vm2735, %v5217, 0
    %v5227 = vsel %vm2735, %v5218, 0
    %5229 = vmatpush.bf16.msra.mxu0 0
    %5230 = vmatpush.bf16.msra.mxu0 0
    %5231 = vmatpush.bf16.msra.mxu0 0
    %5232 = vmatpush.bf16.msra.mxu0 0
    %5233 = vmatpush.bf16.msra.mxu0 0
    %5234 = vmatpush.bf16.msra.mxu0 0
    %5235 = vmatpush.bf16.msra.mxu0 0
    %5236 = vmatpush.bf16.msra.mxu0 %v5224
    %5237 = vmatmul.bf16.gmra.mxu0 %v5221
    %v5238 = vpop.f32.mrf.mxu0
    %v5239 = vadd.f32 0.0, %v5238
    %v5240 = vpop.f32.mrf.mxu0
    %5241 = vdwg.mxu0
    %5242 = vmatpush.bf16.msra.mxu0 0
    %5243 = vmatpush.bf16.msra.mxu0 0
    %5244 = vmatpush.bf16.msra.mxu0 0
    %5245 = vmatpush.bf16.msra.mxu0 0
    %5246 = vmatpush.bf16.msra.mxu0 0
    %5247 = vmatpush.bf16.msra.mxu0 0
    %5248 = vmatpush.bf16.msra.mxu0 0
    %5249 = vmatpush.bf16.msra.mxu0 %v5227
    %5250 = vmatmul.bf16.gmra.mxu0 %v5221
    %v5251 = vpop.f32.mrf.mxu0
    %v5252 = vadd.f32 0.0, %v5251
    %v5253 = vpop.f32.mrf.mxu0
    %5254 = vdwg.mxu0
    %v5256 = vunpack.c.l.b16 %v5210
    %v5257 = vunpack.c.h.b16 %v5210
    %v5258 = vpack.c.b16 %v5256, %v5256
    %v5259 = vpack.c.b16 %v5257, %v5257
    %v5261 = vsel %vm5219, %v5212, 0
    %v5264 = vsel %vm2735, %v5258, 0
    %v5267 = vsel %vm2735, %v5259, 0
    %5269 = vmatpush.bf16.msra.mxu0 0
    %5270 = vmatpush.bf16.msra.mxu0 0
    %5271 = vmatpush.bf16.msra.mxu0 0
    %5272 = vmatpush.bf16.msra.mxu0 0
    %5273 = vmatpush.bf16.msra.mxu0 0
    %5274 = vmatpush.bf16.msra.mxu0 0
    %5275 = vmatpush.bf16.msra.mxu0 0
    %5276 = vmatpush.bf16.msra.mxu0 %v5264
    %5277 = vmatmul.bf16.gmra.mxu0 %v5261
    %v5278 = vpop.f32.mrf.mxu0
    %v5279 = vadd.f32 %v5239, %v5278
    %v5280 = vpop.f32.mrf.mxu0
    %5281 = vdwg.mxu0
    %5282 = vmatpush.bf16.msra.mxu0 0
    %5283 = vmatpush.bf16.msra.mxu0 0
    %5284 = vmatpush.bf16.msra.mxu0 0
    %5285 = vmatpush.bf16.msra.mxu0 0
    %5286 = vmatpush.bf16.msra.mxu0 0
    %5287 = vmatpush.bf16.msra.mxu0 0
    %5288 = vmatpush.bf16.msra.mxu0 0
    %5289 = vmatpush.bf16.msra.mxu0 %v5267
    %5290 = vmatmul.bf16.gmra.mxu0 %v5261
    %v5291 = vpop.f32.mrf.mxu0
    %v5292 = vadd.f32 %v5252, %v5291
    %v5293 = vpop.f32.mrf.mxu0
    %5294 = vdwg.mxu0
    %v5295 = vsel %vm2537, %v5279, 0.0
    %v5296 = vrot.slane %v5295, 4
    %v5297 = vadd.f32 %v5295, %v5296
    %v5298 = vrot.slane %v5297, 2
    %v5299 = vadd.f32 %v5297, %v5298
    %v5300 = vrot.slane %v5299, 1
    %v5301 = vadd.f32 %v5299, %v5300
    %v5302 = vsel %vm2537, %v5292, 0.0
    %v5303 = vrot.slane %v5302, 4
    %v5304 = vadd.f32 %v5302, %v5303
    %v5305 = vrot.slane %v5304, 2
    %v5306 = vadd.f32 %v5304, %v5305
    %v5307 = vrot.slane %v5306, 1
    %v5308 = vadd.f32 %v5306, %v5307
    %v5309 = vmul.f32 %v5301, 0.25
    %v5310 = vmul.f32 %v5308, 0.25
    %v5311 = vmul.f32 %v5279, %v5279
    %v5312 = vmul.f32 %v5292, %v5292
    %v5313 = vsel %vm2537, %v5311, 0.0
    %v5314 = vrot.slane %v5313, 4
    %v5315 = vadd.f32 %v5313, %v5314
    %v5316 = vrot.slane %v5315, 2
    %v5317 = vadd.f32 %v5315, %v5316
    %v5318 = vrot.slane %v5317, 1
    %v5319 = vadd.f32 %v5317, %v5318
    %v5320 = vsel %vm2537, %v5312, 0.0
    %v5321 = vrot.slane %v5320, 4
    %v5322 = vadd.f32 %v5320, %v5321
    %v5323 = vrot.slane %v5322, 2
    %v5324 = vadd.f32 %v5322, %v5323
    %v5325 = vrot.slane %v5324, 1
    %v5326 = vadd.f32 %v5324, %v5325
    %v5327 = vmul.f32 %v5319, 0.25
    %v5328 = vmul.f32 %v5326, 0.25
    %v5329 = vmul.f32 %v5309, %v5309
    %v5330 = vmul.f32 %v5310, %v5310
    %v5331 = vsub.f32 %v5327, %v5329
    %v5332 = vsub.f32 %v5328, %v5330
    %v5333 = vmax.f32 %v5331, 0.0
    %v5334 = vmax.f32 %v5332, 0.0
    %s5335 = scalar_lea.vmem %s7, 38
    %v5336 = vld [vmem:[%s5335] ss:$8 sm:$0x3]
    %s5337 = scalar_lea.vmem %s7, 39
    %v5338 = vld [vmem:[%s5337] ss:$8 sm:$0x3]
    %v5339 = vadd.f32 %v5333, 1e-05
    %v5340 = vadd.f32 %v5334, 1e-05
    %v5341 = vrsqrt.pop %v5339
    %v5342 = vmul.f32 %v5341, %v5339
    %v5343 = vmul.f32 %v5342, %v5341
    %v5344 = vmul.f32 0.5, %v5343
    %v5345 = vsub.f32 1.5, %v5344
    %v5346 = vmul.f32 %v5341, %v5345
    %vm5347 = vweird.f32 %v5339
    %vm5348 = vweird.f32 %v5341
    %vm5349 = vmor %vm5347, %vm5348
    %v5350 = vsel %vm5349, %v5341, %v5346
    %v5351 = vrsqrt.pop %v5340
    %v5352 = vmul.f32 %v5351, %v5340
    %v5353 = vmul.f32 %v5352, %v5351
    %v5354 = vmul.f32 0.5, %v5353
    %v5355 = vsub.f32 1.5, %v5354
    %v5356 = vmul.f32 %v5351, %v5355
    %vm5357 = vweird.f32 %v5340
    %vm5358 = vweird.f32 %v5351
    %vm5359 = vmor %vm5357, %vm5358
    %v5360 = vsel %vm5359, %v5351, %v5356
    %v5362 = vperm.slane %v5336, 0
    %v5363 = vperm.slane %v5336, 1
    %v5366 = vmul.f32 %v5350, %v5362
    %v5367 = vmul.f32 %v5360, %v5363
    %v5368 = vperm.slane %v5366, 0
    %v5369 = vperm.slane %v5367, 0
    %v5370 = vmul.f32 %v5279, %v5368
    %v5371 = vmul.f32 %v5292, %v5369
    %v5372 = vmul.f32 %v5309, %v5366
    %v5373 = vmul.f32 %v5310, %v5367
    %v5376 = vrot.slane %v5373, 7
    %v5377 = vsel %vm2735, %v5372, %v5376
    %v5379 = vsub.f32 %v5338, %v5377
    %v5381 = vperm.slane %v5379, 0
    %v5382 = vperm.slane %v5379, 1
    %v5385 = vadd.f32 %v5370, %v5381
    %v5386 = vadd.f32 %v5371, %v5382
    %vm5387 = vcmp.ge.f32.partialorder %v5385, 0.0
    %vm5388 = vcmp.ge.f32.partialorder %v5386, 0.0
    %v5389 = vmul.f32 %v5385, 0.01
    %v5390 = vmul.f32 %v5386, 0.01
    %v5391 = vsel %vm5387, %v5385, %v5389
    %v5392 = vsel %vm5388, %v5386, %v5390
    %v5393 = vpack.c.bf16 %v5391, %v5391
    %v5394 = vpack.c.bf16 %v5392, %v5392
    %v5395 = vld [vmem:[#allocation5 + $0x300] sm:$0xff]
    %v5396 = vld [vmem:[#allocation5 + $0x308] sm:$0xf]
    %v5397 = vld [vmem:[#allocation5 + $0x30c] sm:$0xff]
    %v5398 = vld [vmem:[#allocation5 + $0x314] sm:$0xf]
    %v5399 = vld [vmem:[#allocation5 + $0x318] sm:$0xff]
    %v5400 = vld [vmem:[#allocation5 + $0x320] sm:$0xf]
    %v5401 = vld [vmem:[#allocation5 + $0x324] sm:$0xff]
    %v5402 = vld [vmem:[#allocation5 + $0x32c] sm:$0xf]
    %v5403 = vld [vmem:[#allocation5 + $0x330] sm:$0xff]
    %v5404 = vld [vmem:[#allocation5 + $0x338] sm:$0xf]
    %v5405 = vld [vmem:[#allocation5 + $0x33c] sm:$0xff]
    %v5406 = vld [vmem:[#allocation5 + $0x344] sm:$0xf]
    %v5407 = vld [vmem:[#allocation5 + $0x348] sm:$0xff]
    %v5408 = vld [vmem:[#allocation5 + $0x350] sm:$0xf]
    %v5409 = vld [vmem:[#allocation5 + $0x354] sm:$0xff]
    %v5410 = vld [vmem:[#allocation5 + $0x35c] sm:$0xf]
    %v5411 = vld [vmem:[#allocation5 + $0x360] sm:$0xff]
    %v5412 = vld [vmem:[#allocation5 + $0x368] sm:$0xf]
    %v5413 = vld [vmem:[#allocation5 + $0x36c] sm:$0xff]
    %v5414 = vld [vmem:[#allocation5 + $0x374] sm:$0xf]
    %v5415 = vld [vmem:[#allocation5 + $0x378] sm:$0xff]
    %v5416 = vld [vmem:[#allocation5 + $0x380] sm:$0xf]
    %v5417 = vld [vmem:[#allocation5 + $0x384] sm:$0xff]
    %v5418 = vld [vmem:[#allocation5 + $0x38c] sm:$0xf]
    %v5419 = vld [vmem:[#allocation5 + $0x390] sm:$0xff]
    %v5420 = vld [vmem:[#allocation5 + $0x398] sm:$0xf]
    %v5421 = vld [vmem:[#allocation5 + $0x39c] sm:$0xff]
    %v5422 = vld [vmem:[#allocation5 + $0x3a4] sm:$0xf]
    %v5423 = vld [vmem:[#allocation5 + $0x3a8] sm:$0xff]
    %v5424 = vld [vmem:[#allocation5 + $0x3b0] sm:$0xf]
    %v5425 = vld [vmem:[#allocation5 + $0x3b4] sm:$0xff]
    %v5426 = vld [vmem:[#allocation5 + $0x3bc] sm:$0xf]
    %v5427 = vld [vmem:[#allocation5 + $0x3c0] sm:$0xff]
    %v5428 = vld [vmem:[#allocation5 + $0x3c8] sm:$0xf]
    %v5429 = vld [vmem:[#allocation5 + $0x3cc] sm:$0xff]
    %v5430 = vld [vmem:[#allocation5 + $0x3d4] sm:$0xf]
    %v5431 = vld [vmem:[#allocation5 + $0x3d8] sm:$0xff]
    %v5432 = vld [vmem:[#allocation5 + $0x3e0] sm:$0xf]
    %v5433 = vld [vmem:[#allocation5 + $0x3e4] sm:$0xff]
    %v5434 = vld [vmem:[#allocation5 + $0x3ec] sm:$0xf]
    %v5435 = vld [vmem:[#allocation5 + $0x3f0] sm:$0xff]
    %v5436 = vld [vmem:[#allocation5 + $0x3f8] sm:$0xf]
    %v5437 = vld [vmem:[#allocation5 + $0x3fc] sm:$0xff]
    %v5438 = vld [vmem:[#allocation5 + $0x404] sm:$0xf]
    %v5439 = vld [vmem:[#allocation5 + $0x408] sm:$0xff]
    %v5440 = vld [vmem:[#allocation5 + $0x410] sm:$0xf]
    %v5441 = vld [vmem:[#allocation5 + $0x414] sm:$0xff]
    %v5442 = vld [vmem:[#allocation5 + $0x41c] sm:$0xf]
    %v5443 = vld [vmem:[#allocation5 + $0x420] sm:$0xff]
    %v5444 = vld [vmem:[#allocation5 + $0x428] sm:$0xf]
    %v5445 = vld [vmem:[#allocation5 + $0x42c] sm:$0xff]
    %v5446 = vld [vmem:[#allocation5 + $0x434] sm:$0xf]
    %v5447 = vld [vmem:[#allocation5 + $0x438] sm:$0xff]
    %v5448 = vld [vmem:[#allocation5 + $0x440] sm:$0xf]
    %v5449 = vld [vmem:[#allocation5 + $0x444] sm:$0xff]
    %v5450 = vld [vmem:[#allocation5 + $0x44c] sm:$0xf]
    %v5451 = vld [vmem:[#allocation5 + $0x450] sm:$0xff]
    %v5452 = vld [vmem:[#allocation5 + $0x458] sm:$0xf]
    %v5453 = vld [vmem:[#allocation5 + $0x45c] sm:$0xff]
    %v5454 = vld [vmem:[#allocation5 + $0x464] sm:$0xf]
    %v5455 = vld [vmem:[#allocation5 + $0x468] sm:$0xff]
    %v5456 = vld [vmem:[#allocation5 + $0x470] sm:$0xf]
    %v5457 = vld [vmem:[#allocation5 + $0x474] sm:$0xff]
    %v5458 = vld [vmem:[#allocation5 + $0x47c] sm:$0xf]
    %v5523 = vunpack.c.l.b16 %v5395
    %v5524 = vunpack.c.h.b16 %v5395
    %v5525 = vunpack.c.l.b16 %v5396
    %v5526 = vunpack.c.l.b16 %v5397
    %v5527 = vunpack.c.h.b16 %v5397
    %v5528 = vunpack.c.l.b16 %v5398
    %v5529 = vunpack.c.l.b16 %v5399
    %v5530 = vunpack.c.h.b16 %v5399
    %v5531 = vunpack.c.l.b16 %v5400
    %v5532 = vunpack.c.l.b16 %v5401
    %v5533 = vunpack.c.h.b16 %v5401
    %v5534 = vunpack.c.l.b16 %v5402
    %v5535 = vunpack.c.l.b16 %v5403
    %v5536 = vunpack.c.h.b16 %v5403
    %v5537 = vunpack.c.l.b16 %v5404
    %v5538 = vunpack.c.l.b16 %v5405
    %v5539 = vunpack.c.h.b16 %v5405
    %v5540 = vunpack.c.l.b16 %v5406
    %v5541 = vunpack.c.l.b16 %v5407
    %v5542 = vunpack.c.h.b16 %v5407
    %v5543 = vunpack.c.l.b16 %v5408
    %v5544 = vunpack.c.l.b16 %v5409
    %v5545 = vunpack.c.h.b16 %v5409
    %v5546 = vunpack.c.l.b16 %v5410
    %v5547 = vunpack.c.l.b16 %v5411
    %v5548 = vunpack.c.h.b16 %v5411
    %v5549 = vunpack.c.l.b16 %v5412
    %v5550 = vunpack.c.l.b16 %v5413
    %v5551 = vunpack.c.h.b16 %v5413
    %v5552 = vunpack.c.l.b16 %v5414
    %v5553 = vunpack.c.l.b16 %v5415
    %v5554 = vunpack.c.h.b16 %v5415
    %v5555 = vunpack.c.l.b16 %v5416
    %v5556 = vunpack.c.l.b16 %v5417
    %v5557 = vunpack.c.h.b16 %v5417
    %v5558 = vunpack.c.l.b16 %v5418
    %v5559 = vunpack.c.l.b16 %v5419
    %v5560 = vunpack.c.h.b16 %v5419
    %v5561 = vunpack.c.l.b16 %v5420
    %v5562 = vunpack.c.l.b16 %v5421
    %v5563 = vunpack.c.h.b16 %v5421
    %v5564 = vunpack.c.l.b16 %v5422
    %v5565 = vunpack.c.l.b16 %v5423
    %v5566 = vunpack.c.h.b16 %v5423
    %v5567 = vunpack.c.l.b16 %v5424
    %v5568 = vunpack.c.l.b16 %v5425
    %v5569 = vunpack.c.h.b16 %v5425
    %v5570 = vunpack.c.l.b16 %v5426
    %v5571 = vunpack.c.l.b16 %v5427
    %v5572 = vunpack.c.h.b16 %v5427
    %v5573 = vunpack.c.l.b16 %v5428
    %v5574 = vunpack.c.l.b16 %v5429
    %v5575 = vunpack.c.h.b16 %v5429
    %v5576 = vunpack.c.l.b16 %v5430
    %v5577 = vunpack.c.l.b16 %v5431
    %v5578 = vunpack.c.h.b16 %v5431
    %v5579 = vunpack.c.l.b16 %v5432
    %v5580 = vunpack.c.l.b16 %v5433
    %v5581 = vunpack.c.h.b16 %v5433
    %v5582 = vunpack.c.l.b16 %v5434
    %v5583 = vunpack.c.l.b16 %v5435
    %v5584 = vunpack.c.h.b16 %v5435
    %v5585 = vunpack.c.l.b16 %v5436
    %v5586 = vunpack.c.l.b16 %v5437
    %v5587 = vunpack.c.h.b16 %v5437
    %v5588 = vunpack.c.l.b16 %v5438
    %v5589 = vunpack.c.l.b16 %v5439
    %v5590 = vunpack.c.h.b16 %v5439
    %v5591 = vunpack.c.l.b16 %v5440
    %v5592 = vunpack.c.l.b16 %v5441
    %v5593 = vunpack.c.h.b16 %v5441
    %v5594 = vunpack.c.l.b16 %v5442
    %v5595 = vunpack.c.l.b16 %v5443
    %v5596 = vunpack.c.h.b16 %v5443
    %v5597 = vunpack.c.l.b16 %v5444
    %v5598 = vunpack.c.l.b16 %v5445
    %v5599 = vunpack.c.h.b16 %v5445
    %v5600 = vunpack.c.l.b16 %v5446
    %v5601 = vunpack.c.l.b16 %v5447
    %v5602 = vunpack.c.h.b16 %v5447
    %v5603 = vunpack.c.l.b16 %v5448
    %v5604 = vunpack.c.l.b16 %v5449
    %v5605 = vunpack.c.h.b16 %v5449
    %v5606 = vunpack.c.l.b16 %v5450
    %v5607 = vunpack.c.l.b16 %v5451
    %v5608 = vunpack.c.h.b16 %v5451
    %v5609 = vunpack.c.l.b16 %v5452
    %v5610 = vunpack.c.l.b16 %v5453
    %v5611 = vunpack.c.h.b16 %v5453
    %v5612 = vunpack.c.l.b16 %v5454
    %v5613 = vunpack.c.l.b16 %v5455
    %v5614 = vunpack.c.h.b16 %v5455
    %v5615 = vunpack.c.l.b16 %v5456
    %v5616 = vunpack.c.l.b16 %v5457
    %v5617 = vunpack.c.h.b16 %v5457
    %v5618 = vunpack.c.l.b16 %v5458
    %v5619 = vpack.c.b16 %v5526, %v5523
    %v5620 = vpack.c.b16 %v5527, %v5524
    %v5621 = vpack.c.b16 %v5528, %v5525
    %v5622 = vpack.c.b16 %v5532, %v5529
    %v5623 = vpack.c.b16 %v5533, %v5530
    %v5624 = vpack.c.b16 %v5534, %v5531
    %v5625 = vpack.c.b16 %v5538, %v5535
    %v5626 = vpack.c.b16 %v5539, %v5536
    %v5627 = vpack.c.b16 %v5540, %v5537
    %v5628 = vpack.c.b16 %v5544, %v5541
    %v5629 = vpack.c.b16 %v5545, %v5542
    %v5630 = vpack.c.b16 %v5546, %v5543
    %v5631 = vpack.c.b16 %v5550, %v5547
    %v5632 = vpack.c.b16 %v5551, %v5548
    %v5633 = vpack.c.b16 %v5552, %v5549
    %v5634 = vpack.c.b16 %v5556, %v5553
    %v5635 = vpack.c.b16 %v5557, %v5554
    %v5636 = vpack.c.b16 %v5558, %v5555
    %v5637 = vpack.c.b16 %v5562, %v5559
    %v5638 = vpack.c.b16 %v5563, %v5560
    %v5639 = vpack.c.b16 %v5564, %v5561
    %v5640 = vpack.c.b16 %v5568, %v5565
    %v5641 = vpack.c.b16 %v5569, %v5566
    %v5642 = vpack.c.b16 %v5570, %v5567
    %v5643 = vpack.c.b16 %v5574, %v5571
    %v5644 = vpack.c.b16 %v5575, %v5572
    %v5645 = vpack.c.b16 %v5576, %v5573
    %v5646 = vpack.c.b16 %v5580, %v5577
    %v5647 = vpack.c.b16 %v5581, %v5578
    %v5648 = vpack.c.b16 %v5582, %v5579
    %v5649 = vpack.c.b16 %v5586, %v5583
    %v5650 = vpack.c.b16 %v5587, %v5584
    %v5651 = vpack.c.b16 %v5588, %v5585
    %v5652 = vpack.c.b16 %v5592, %v5589
    %v5653 = vpack.c.b16 %v5593, %v5590
    %v5654 = vpack.c.b16 %v5594, %v5591
    %v5655 = vpack.c.b16 %v5598, %v5595
    %v5656 = vpack.c.b16 %v5599, %v5596
    %v5657 = vpack.c.b16 %v5600, %v5597
    %v5658 = vpack.c.b16 %v5604, %v5601
    %v5659 = vpack.c.b16 %v5605, %v5602
    %v5660 = vpack.c.b16 %v5606, %v5603
    %v5661 = vpack.c.b16 %v5610, %v5607
    %v5662 = vpack.c.b16 %v5611, %v5608
    %v5663 = vpack.c.b16 %v5612, %v5609
    %v5664 = vpack.c.b16 %v5616, %v5613
    %v5665 = vpack.c.b16 %v5617, %v5614
    %v5666 = vpack.c.b16 %v5618, %v5615
    %5715 = vmatpush.bf16.msra.mxu0 %v5640
    %5716 = vmatpush.bf16.msra.mxu0 %v5637
    %5717 = vmatpush.bf16.msra.mxu0 %v5634
    %5718 = vmatpush.bf16.msra.mxu0 %v5631
    %5719 = vmatpush.bf16.msra.mxu0 %v5628
    %5720 = vmatpush.bf16.msra.mxu0 %v5625
    %5721 = vmatpush.bf16.msra.mxu0 %v5622
    %5722 = vmatpush.bf16.msra.mxu0 %v5619
    %5723 = vmatmul.bf16.gmra.mxu0 %v5393
    %v5724 = vpop.f32.mrf.mxu0
    %v5725 = vadd.f32 0.0, %v5724
    %v5726 = vpop.f32.mrf.mxu0
    %5727 = vdwg.mxu0
    %5728 = vmatpush.bf16.msra.mxu0 %v5664
    %5729 = vmatpush.bf16.msra.mxu0 %v5661
    %5730 = vmatpush.bf16.msra.mxu0 %v5658
    %5731 = vmatpush.bf16.msra.mxu0 %v5655
    %5732 = vmatpush.bf16.msra.mxu0 %v5652
    %5733 = vmatpush.bf16.msra.mxu0 %v5649
    %5734 = vmatpush.bf16.msra.mxu0 %v5646
    %5735 = vmatpush.bf16.msra.mxu0 %v5643
    %5736 = vmatmul.bf16.gmra.mxu0 %v5394
    %v5737 = vpop.f32.mrf.mxu0
    %v5738 = vadd.f32 %v5725, %v5737
    %v5739 = vpop.f32.mrf.mxu0
    %5740 = vdwg.mxu0
    %5741 = vmatpush.bf16.msra.mxu0 %v5641
    %5742 = vmatpush.bf16.msra.mxu0 %v5638
    %5743 = vmatpush.bf16.msra.mxu0 %v5635
    %5744 = vmatpush.bf16.msra.mxu0 %v5632
    %5745 = vmatpush.bf16.msra.mxu0 %v5629
    %5746 = vmatpush.bf16.msra.mxu0 %v5626
    %5747 = vmatpush.bf16.msra.mxu0 %v5623
    %5748 = vmatpush.bf16.msra.mxu0 %v5620
    %5749 = vmatmul.bf16.gmra.mxu0 %v5393
    %v5750 = vpop.f32.mrf.mxu0
    %v5751 = vadd.f32 0.0, %v5750
    %v5752 = vpop.f32.mrf.mxu0
    %5753 = vdwg.mxu0
    %5754 = vmatpush.bf16.msra.mxu0 %v5665
    %5755 = vmatpush.bf16.msra.mxu0 %v5662
    %5756 = vmatpush.bf16.msra.mxu0 %v5659
    %5757 = vmatpush.bf16.msra.mxu0 %v5656
    %5758 = vmatpush.bf16.msra.mxu0 %v5653
    %5759 = vmatpush.bf16.msra.mxu0 %v5650
    %5760 = vmatpush.bf16.msra.mxu0 %v5647
    %5761 = vmatpush.bf16.msra.mxu0 %v5644
    %5762 = vmatmul.bf16.gmra.mxu0 %v5394
    %v5763 = vpop.f32.mrf.mxu0
    %v5764 = vadd.f32 %v5751, %v5763
    %v5765 = vpop.f32.mrf.mxu0
    %5766 = vdwg.mxu0
    %5767 = vmatpush.bf16.msra.mxu0 %v5642
    %5768 = vmatpush.bf16.msra.mxu0 %v5639
    %5769 = vmatpush.bf16.msra.mxu0 %v5636
    %5770 = vmatpush.bf16.msra.mxu0 %v5633
    %5771 = vmatpush.bf16.msra.mxu0 %v5630
    %5772 = vmatpush.bf16.msra.mxu0 %v5627
    %5773 = vmatpush.bf16.msra.mxu0 %v5624
    %5774 = vmatpush.bf16.msra.mxu0 %v5621
    %5775 = vmatmul.bf16.gmra.mxu0 %v5393
    %v5776 = vpop.f32.mrf.mxu0
    %v5777 = vadd.f32 0.0, %v5776
    %v5778 = vpop.f32.mrf.mxu0
    %5779 = vdwg.mxu0
    %5780 = vmatpush.bf16.msra.mxu0 %v5666
    %5781 = vmatpush.bf16.msra.mxu0 %v5663
    %5782 = vmatpush.bf16.msra.mxu0 %v5660
    %5783 = vmatpush.bf16.msra.mxu0 %v5657
    %5784 = vmatpush.bf16.msra.mxu0 %v5654
    %5785 = vmatpush.bf16.msra.mxu0 %v5651
    %5786 = vmatpush.bf16.msra.mxu0 %v5648
    %5787 = vmatpush.bf16.msra.mxu0 %v5645
    %5788 = vmatmul.bf16.gmra.mxu0 %v5394
    %v5789 = vpop.f32.mrf.mxu0
    %v5790 = vadd.f32 %v5777, %v5789
    %v5791 = vpop.f32.mrf.mxu0
    %5792 = vdwg.mxu0
    %v5793 = vpack.c.bf16 %v5764, %v5738
    %v5794 = vpack.c.bf16 %v5790, %v5790
    %v5795 = vld [vmem:[#allocation11 + $0xd0] sm:$0xf]
    %v5796 = vld [vmem:[#allocation11 + $0xd4] sm:$0xf]
    %v5798 = vunpack.c.h.b16 %v5793
    %v5799 = vpack.c.b16 %v5798, %v5798
    %v5801 = vsel %vm3932, %v5796, 0
    %v5804 = vsel %vm3405, %v5799, 0
    %5806 = vmatpush.bf16.msra.mxu0 0
    %5807 = vmatpush.bf16.msra.mxu0 0
    %5808 = vmatpush.bf16.msra.mxu0 0
    %5809 = vmatpush.bf16.msra.mxu0 0
    %5810 = vmatpush.bf16.msra.mxu0 0
    %5811 = vmatpush.bf16.msra.mxu0 0
    %5812 = vmatpush.bf16.msra.mxu0 0
    %5813 = vmatpush.bf16.msra.mxu0 %v5804
    %5814 = vmatmul.bf16.gmra.mxu0 %v5801
    %v5815 = vpop.f32.mrf.mxu0
    %v5816 = vadd.f32 0.0, %v5815
    %v5817 = vpop.f32.mrf.mxu0
    %5818 = vdwg.mxu0
    %v5820 = vsel %vm3932, %v5795, 0
    %v5823 = vsel %vm3405, %v5793, 0
    %5825 = vmatpush.bf16.msra.mxu0 0
    %5826 = vmatpush.bf16.msra.mxu0 0
    %5827 = vmatpush.bf16.msra.mxu0 0
    %5828 = vmatpush.bf16.msra.mxu0 0
    %5829 = vmatpush.bf16.msra.mxu0 0
    %5830 = vmatpush.bf16.msra.mxu0 0
    %5831 = vmatpush.bf16.msra.mxu0 0
    %5832 = vmatpush.bf16.msra.mxu0 %v5823
    %5833 = vmatmul.bf16.gmra.mxu0 %v5820
    %v5834 = vpop.f32.mrf.mxu0
    %v5835 = vadd.f32 %v5816, %v5834
    %v5836 = vpop.f32.mrf.mxu0
    %5837 = vdwg.mxu0
    %v5838 = vld [vmem:[#allocation11 + $0xd8] sm:$0xf]
    %v5840 = vsel %vm3932, %v5838, 0
    %v5843 = vsel %vm3405, %v5794, 0
    %5845 = vmatpush.bf16.msra.mxu0 0
    %5846 = vmatpush.bf16.msra.mxu0 0
    %5847 = vmatpush.bf16.msra.mxu0 0
    %5848 = vmatpush.bf16.msra.mxu0 0
    %5849 = vmatpush.bf16.msra.mxu0 0
    %5850 = vmatpush.bf16.msra.mxu0 0
    %5851 = vmatpush.bf16.msra.mxu0 0
    %5852 = vmatpush.bf16.msra.mxu0 %v5843
    %5853 = vmatmul.bf16.gmra.mxu0 %v5840
    %v5854 = vpop.f32.mrf.mxu0
    %v5855 = vadd.f32 0.0, %v5854
    %v5856 = vpop.f32.mrf.mxu0
    %5857 = vdwg.mxu0
    %v5858 = vadd.f32 %v5835, %v5855
    %v5859 = vrot.slane %v5858, 4
    %v5860 = vadd.f32 %v5858, %v5859
    %v5861 = vrot.slane %v5860, 2
    %v5862 = vadd.f32 %v5860, %v5861
    %v5863 = vrot.slane %v5862, 1
    %v5864 = vadd.f32 %v5862, %v5863
    %v5865 = vmul.f32 %v5864, 0.125
    %v5866 = vmul.f32 %v5858, %v5858
    %v5867 = vrot.slane %v5866, 4
    %v5868 = vadd.f32 %v5866, %v5867
    %v5869 = vrot.slane %v5868, 2
    %v5870 = vadd.f32 %v5868, %v5869
    %v5871 = vrot.slane %v5870, 1
    %v5872 = vadd.f32 %v5870, %v5871
    %v5873 = vmul.f32 %v5872, 0.125
    %v5874 = vmul.f32 %v5865, %v5865
    %v5875 = vsub.f32 %v5873, %v5874
    %v5876 = vmax.f32 %v5875, 0.0
    %v5877 = vld [vmem:[%s7 + $0x40] ss:$0 sm:$0xff]
    %v5878 = vld [vmem:[%s7 + $0x41] ss:$0 sm:$0xff]
    %v5879 = vadd.f32 %v5876, 1e-05
    %v5880 = vrsqrt.pop %v5879
    %v5881 = vmul.f32 %v5880, %v5879
    %v5882 = vmul.f32 %v5881, %v5880
    %v5883 = vmul.f32 0.5, %v5882
    %v5884 = vsub.f32 1.5, %v5883
    %v5885 = vmul.f32 %v5880, %v5884
    %vm5886 = vweird.f32 %v5879
    %vm5887 = vweird.f32 %v5880
    %vm5888 = vmor %vm5886, %vm5887
    %v5889 = vsel %vm5888, %v5880, %v5885
    %v5890 = vmul.f32 %v5889, %v5877
    %v5891 = vmul.f32 %v5858, %v5890
    %v5892 = vmul.f32 %v5865, %v5890
    %v5893 = vsub.f32 %v5878, %v5892
    %v5894 = vadd.f32 %v5891, %v5893
    %vm5895 = vcmp.ge.f32.partialorder %v5894, 0.0
    %v5896 = vmul.f32 %v5894, 0.01
    %v5897 = vsel %vm5895, %v5894, %v5896
    %v5898 = vpack.c.bf16 %v5897, %v5897
    %v5899 = vld [vmem:[#allocation5 + $0x480] sm:$0xff]
    %v5900 = vld [vmem:[#allocation5 + $0x488] sm:$0xf]
    %v5901 = vld [vmem:[#allocation5 + $0x48c] sm:$0xff]
    %v5902 = vld [vmem:[#allocation5 + $0x494] sm:$0xf]
    %v5903 = vld [vmem:[#allocation5 + $0x498] sm:$0xff]
    %v5904 = vld [vmem:[#allocation5 + $0x4a0] sm:$0xf]
    %v5905 = vld [vmem:[#allocation5 + $0x4a4] sm:$0xff]
    %v5906 = vld [vmem:[#allocation5 + $0x4ac] sm:$0xf]
    %v5907 = vld [vmem:[#allocation5 + $0x4b0] sm:$0xff]
    %v5908 = vld [vmem:[#allocation5 + $0x4b8] sm:$0xf]
    %v5909 = vld [vmem:[#allocation5 + $0x4bc] sm:$0xff]
    %v5910 = vld [vmem:[#allocation5 + $0x4c4] sm:$0xf]
    %v5911 = vld [vmem:[#allocation5 + $0x4c8] sm:$0xff]
    %v5912 = vld [vmem:[#allocation5 + $0x4d0] sm:$0xf]
    %v5913 = vld [vmem:[#allocation5 + $0x4d4] sm:$0xff]
    %v5914 = vld [vmem:[#allocation5 + $0x4dc] sm:$0xf]
    %v5915 = vld [vmem:[#allocation5 + $0x4e0] sm:$0xff]
    %v5916 = vld [vmem:[#allocation5 + $0x4e8] sm:$0xf]
    %v5917 = vld [vmem:[#allocation5 + $0x4ec] sm:$0xff]
    %v5918 = vld [vmem:[#allocation5 + $0x4f4] sm:$0xf]
    %v5919 = vld [vmem:[#allocation5 + $0x4f8] sm:$0xff]
    %v5920 = vld [vmem:[#allocation5 + $0x500] sm:$0xf]
    %v5921 = vld [vmem:[#allocation5 + $0x504] sm:$0xff]
    %v5922 = vld [vmem:[#allocation5 + $0x50c] sm:$0xf]
    %v5923 = vld [vmem:[#allocation5 + $0x510] sm:$0xff]
    %v5924 = vld [vmem:[#allocation5 + $0x518] sm:$0xf]
    %v5925 = vld [vmem:[#allocation5 + $0x51c] sm:$0xff]
    %v5926 = vld [vmem:[#allocation5 + $0x524] sm:$0xf]
    %v5927 = vld [vmem:[#allocation5 + $0x528] sm:$0xff]
    %v5928 = vld [vmem:[#allocation5 + $0x530] sm:$0xf]
    %v5929 = vld [vmem:[#allocation5 + $0x534] sm:$0xff]
    %v5930 = vld [vmem:[#allocation5 + $0x53c] sm:$0xf]
    %v5963 = vunpack.c.l.b16 %v5899
    %v5964 = vunpack.c.h.b16 %v5899
    %v5965 = vunpack.c.l.b16 %v5900
    %v5966 = vunpack.c.l.b16 %v5901
    %v5967 = vunpack.c.h.b16 %v5901
    %v5968 = vunpack.c.l.b16 %v5902
    %v5969 = vunpack.c.l.b16 %v5903
    %v5970 = vunpack.c.h.b16 %v5903
    %v5971 = vunpack.c.l.b16 %v5904
    %v5972 = vunpack.c.l.b16 %v5905
    %v5973 = vunpack.c.h.b16 %v5905
    %v5974 = vunpack.c.l.b16 %v5906
    %v5975 = vunpack.c.l.b16 %v5907
    %v5976 = vunpack.c.h.b16 %v5907
    %v5977 = vunpack.c.l.b16 %v5908
    %v5978 = vunpack.c.l.b16 %v5909
    %v5979 = vunpack.c.h.b16 %v5909
    %v5980 = vunpack.c.l.b16 %v5910
    %v5981 = vunpack.c.l.b16 %v5911
    %v5982 = vunpack.c.h.b16 %v5911
    %v5983 = vunpack.c.l.b16 %v5912
    %v5984 = vunpack.c.l.b16 %v5913
    %v5985 = vunpack.c.h.b16 %v5913
    %v5986 = vunpack.c.l.b16 %v5914
    %v5987 = vunpack.c.l.b16 %v5915
    %v5988 = vunpack.c.h.b16 %v5915
    %v5989 = vunpack.c.l.b16 %v5916
    %v5990 = vunpack.c.l.b16 %v5917
    %v5991 = vunpack.c.h.b16 %v5917
    %v5992 = vunpack.c.l.b16 %v5918
    %v5993 = vunpack.c.l.b16 %v5919
    %v5994 = vunpack.c.h.b16 %v5919
    %v5995 = vunpack.c.l.b16 %v5920
    %v5996 = vunpack.c.l.b16 %v5921
    %v5997 = vunpack.c.h.b16 %v5921
    %v5998 = vunpack.c.l.b16 %v5922
    %v5999 = vunpack.c.l.b16 %v5923
    %v6000 = vunpack.c.h.b16 %v5923
    %v6001 = vunpack.c.l.b16 %v5924
    %v6002 = vunpack.c.l.b16 %v5925
    %v6003 = vunpack.c.h.b16 %v5925
    %v6004 = vunpack.c.l.b16 %v5926
    %v6005 = vunpack.c.l.b16 %v5927
    %v6006 = vunpack.c.h.b16 %v5927
    %v6007 = vunpack.c.l.b16 %v5928
    %v6008 = vunpack.c.l.b16 %v5929
    %v6009 = vunpack.c.h.b16 %v5929
    %v6010 = vunpack.c.l.b16 %v5930
    %v6011 = vpack.c.b16 %v5966, %v5963
    %v6012 = vpack.c.b16 %v5967, %v5964
    %v6013 = vpack.c.b16 %v5968, %v5965
    %v6014 = vpack.c.b16 %v5972, %v5969
    %v6015 = vpack.c.b16 %v5973, %v5970
    %v6016 = vpack.c.b16 %v5974, %v5971
    %v6017 = vpack.c.b16 %v5978, %v5975
    %v6018 = vpack.c.b16 %v5979, %v5976
    %v6019 = vpack.c.b16 %v5980, %v5977
    %v6020 = vpack.c.b16 %v5984, %v5981
    %v6021 = vpack.c.b16 %v5985, %v5982
    %v6022 = vpack.c.b16 %v5986, %v5983
    %v6023 = vpack.c.b16 %v5990, %v5987
    %v6024 = vpack.c.b16 %v5991, %v5988
    %v6025 = vpack.c.b16 %v5992, %v5989
    %v6026 = vpack.c.b16 %v5996, %v5993
    %v6027 = vpack.c.b16 %v5997, %v5994
    %v6028 = vpack.c.b16 %v5998, %v5995
    %v6029 = vpack.c.b16 %v6002, %v5999
    %v6030 = vpack.c.b16 %v6003, %v6000
    %v6031 = vpack.c.b16 %v6004, %v6001
    %v6032 = vpack.c.b16 %v6008, %v6005
    %v6033 = vpack.c.b16 %v6009, %v6006
    %v6034 = vpack.c.b16 %v6010, %v6007
    %6059 = vmatpush.bf16.msra.mxu0 %v6032
    %6060 = vmatpush.bf16.msra.mxu0 %v6029
    %6061 = vmatpush.bf16.msra.mxu0 %v6026
    %6062 = vmatpush.bf16.msra.mxu0 %v6023
    %6063 = vmatpush.bf16.msra.mxu0 %v6020
    %6064 = vmatpush.bf16.msra.mxu0 %v6017
    %6065 = vmatpush.bf16.msra.mxu0 %v6014
    %6066 = vmatpush.bf16.msra.mxu0 %v6011
    %6067 = vmatmul.bf16.gmra.mxu0 %v5898
    %v6068 = vpop.f32.mrf.mxu0
    %v6069 = vadd.f32 0.0, %v6068
    %v6070 = vpop.f32.mrf.mxu0
    %6071 = vdwg.mxu0
    %6072 = vmatpush.bf16.msra.mxu0 %v6033
    %6073 = vmatpush.bf16.msra.mxu0 %v6030
    %6074 = vmatpush.bf16.msra.mxu0 %v6027
    %6075 = vmatpush.bf16.msra.mxu0 %v6024
    %6076 = vmatpush.bf16.msra.mxu0 %v6021
    %6077 = vmatpush.bf16.msra.mxu0 %v6018
    %6078 = vmatpush.bf16.msra.mxu0 %v6015
    %6079 = vmatpush.bf16.msra.mxu0 %v6012
    %6080 = vmatmul.bf16.gmra.mxu0 %v5898
    %v6081 = vpop.f32.mrf.mxu0
    %v6082 = vadd.f32 0.0, %v6081
    %v6083 = vpop.f32.mrf.mxu0
    %6084 = vdwg.mxu0
    %6085 = vmatpush.bf16.msra.mxu0 %v6034
    %6086 = vmatpush.bf16.msra.mxu0 %v6031
    %6087 = vmatpush.bf16.msra.mxu0 %v6028
    %6088 = vmatpush.bf16.msra.mxu0 %v6025
    %6089 = vmatpush.bf16.msra.mxu0 %v6022
    %6090 = vmatpush.bf16.msra.mxu0 %v6019
    %6091 = vmatpush.bf16.msra.mxu0 %v6016
    %6092 = vmatpush.bf16.msra.mxu0 %v6013
    %6093 = vmatmul.bf16.gmra.mxu0 %v5898
    %v6094 = vpop.f32.mrf.mxu0
    %v6095 = vadd.f32 0.0, %v6094
    %v6096 = vpop.f32.mrf.mxu0
    %6097 = vdwg.mxu0
    %v6098 = vpack.c.bf16 %v6082, %v6069
    %v6099 = vpack.c.bf16 %v6095, %v6095
    %v6100 = vld [vmem:[#allocation11 + $0xdc] sm:$0xf]
    %v6101 = vld [vmem:[#allocation11 + $0xe0] sm:$0xf]
    %v6102 = vld [vmem:[#allocation11 + $0xe4] sm:$0xf]
    %v6103 = vld [vmem:[#allocation11 + $0xe8] sm:$0xf]
    %v6106 = vunpack.c.l.b16 %v6102
    %v6107 = vunpack.c.l.b16 %v6103
    %v6108 = vpack.c.b16 %v6107, %v6106
    %v6110 = vunpack.c.h.b16 %v6098
    %v6111 = vpack.c.b16 %v6110, %v6110
    %v6113 = vsel %vm2533, %v6108, 0
    %v6116 = vsel %vm2537, %v6111, 0
    %6118 = vmatpush.bf16.msra.mxu0 0
    %6119 = vmatpush.bf16.msra.mxu0 0
    %6120 = vmatpush.bf16.msra.mxu0 0
    %6121 = vmatpush.bf16.msra.mxu0 0
    %6122 = vmatpush.bf16.msra.mxu0 0
    %6123 = vmatpush.bf16.msra.mxu0 0
    %6124 = vmatpush.bf16.msra.mxu0 0
    %6125 = vmatpush.bf16.msra.mxu0 %v6116
    %6126 = vmatmul.bf16.gmra.mxu0 %v6113
    %v6127 = vpop.f32.mrf.mxu0
    %v6128 = vadd.f32 0.0, %v6127
    %v6129 = vpop.f32.mrf.mxu0
    %v6130 = vadd.f32 0.0, %v6129
    %6131 = vdwg.mxu0
    %v6134 = vunpack.c.l.b16 %v6100
    %v6135 = vunpack.c.l.b16 %v6101
    %v6136 = vpack.c.b16 %v6135, %v6134
    %v6138 = vsel %vm2533, %v6136, 0
    %v6141 = vsel %vm2537, %v6098, 0
    %6143 = vmatpush.bf16.msra.mxu0 0
    %6144 = vmatpush.bf16.msra.mxu0 0
    %6145 = vmatpush.bf16.msra.mxu0 0
    %6146 = vmatpush.bf16.msra.mxu0 0
    %6147 = vmatpush.bf16.msra.mxu0 0
    %6148 = vmatpush.bf16.msra.mxu0 0
    %6149 = vmatpush.bf16.msra.mxu0 0
    %6150 = vmatpush.bf16.msra.mxu0 %v6141
    %6151 = vmatmul.bf16.gmra.mxu0 %v6138
    %v6152 = vpop.f32.mrf.mxu0
    %v6153 = vadd.f32 %v6128, %v6152
    %v6154 = vpop.f32.mrf.mxu0
    %v6155 = vadd.f32 %v6130, %v6154
    %6156 = vdwg.mxu0
    %v6157 = vld [vmem:[#allocation11 + $0xec] sm:$0xf]
    %v6158 = vld [vmem:[#allocation11 + $0xf0] sm:$0xf]
    %v6161 = vunpack.c.l.b16 %v6157
    %v6162 = vunpack.c.l.b16 %v6158
    %v6163 = vpack.c.b16 %v6162, %v6161
    %v6165 = vsel %vm2533, %v6163, 0
    %v6168 = vsel %vm2537, %v6099, 0
    %6170 = vmatpush.bf16.msra.mxu0 0
    %6171 = vmatpush.bf16.msra.mxu0 0
    %6172 = vmatpush.bf16.msra.mxu0 0
    %6173 = vmatpush.bf16.msra.mxu0 0
    %6174 = vmatpush.bf16.msra.mxu0 0
    %6175 = vmatpush.bf16.msra.mxu0 0
    %6176 = vmatpush.bf16.msra.mxu0 0
    %6177 = vmatpush.bf16.msra.mxu0 %v6168
    %6178 = vmatmul.bf16.gmra.mxu0 %v6165
    %v6179 = vpop.f32.mrf.mxu0
    %v6180 = vadd.f32 0.0, %v6179
    %v6181 = vpop.f32.mrf.mxu0
    %v6182 = vadd.f32 0.0, %v6181
    %6183 = vdwg.mxu0
    %v6184 = vadd.f32 %v6153, %v6180
    %v6185 = vadd.f32 %v6155, %v6182
    %v6186 = vadd.f32 %v6184, %v6185
    %v6187 = vrot.slane %v6186, 4
    %v6188 = vadd.f32 %v6186, %v6187
    %v6189 = vrot.slane %v6188, 2
    %v6190 = vadd.f32 %v6188, %v6189
    %v6191 = vrot.slane %v6190, 1
    %v6192 = vadd.f32 %v6190, %v6191
    %v6193 = vmul.f32 %v6192, 0.0625
    %v6194 = vmul.f32 %v6184, %v6184
    %v6195 = vmul.f32 %v6185, %v6185
    %v6196 = vadd.f32 %v6194, %v6195
    %v6197 = vrot.slane %v6196, 4
    %v6198 = vadd.f32 %v6196, %v6197
    %v6199 = vrot.slane %v6198, 2
    %v6200 = vadd.f32 %v6198, %v6199
    %v6201 = vrot.slane %v6200, 1
    %v6202 = vadd.f32 %v6200, %v6201
    %v6203 = vmul.f32 %v6202, 0.0625
    %v6204 = vmul.f32 %v6193, %v6193
    %v6205 = vsub.f32 %v6203, %v6204
    %v6206 = vmax.f32 %v6205, 0.0
    %v6207 = vld [vmem:[%s7 + $0x42] ss:$0 sm:$0xff]
    %v6208 = vld [vmem:[%s7 + $0x43] ss:$0 sm:$0xff]
    %v6209 = vadd.f32 %v6206, 1e-05
    %v6210 = vrsqrt.pop %v6209
    %v6211 = vmul.f32 %v6210, %v6209
    %v6212 = vmul.f32 %v6211, %v6210
    %v6213 = vmul.f32 0.5, %v6212
    %v6214 = vsub.f32 1.5, %v6213
    %v6215 = vmul.f32 %v6210, %v6214
    %vm6216 = vweird.f32 %v6209
    %vm6217 = vweird.f32 %v6210
    %vm6218 = vmor %vm6216, %vm6217
    %v6219 = vsel %vm6218, %v6210, %v6215
    %v6220 = vmul.f32 %v6219, %v6207
    %v6221 = vmul.f32 %v6184, %v6220
    %v6222 = vmul.f32 %v6185, %v6220
    %v6223 = vmul.f32 %v6193, %v6220
    %v6224 = vsub.f32 %v6208, %v6223
    %v6225 = vadd.f32 %v6221, %v6224
    %v6226 = vadd.f32 %v6222, %v6224
    %vm6227 = vcmp.ge.f32.partialorder %v6225, 0.0
    %vm6228 = vcmp.ge.f32.partialorder %v6226, 0.0
    %v6229 = vmul.f32 %v6225, 0.01
    %v6230 = vmul.f32 %v6226, 0.01
    %v6231 = vsel %vm6227, %v6225, %v6229
    %v6232 = vsel %vm6228, %v6226, %v6230
    %v6233 = vpack.c.bf16 %v6232, %v6231
    %v6234 = vld [vmem:[#allocation5 + $0x540] sm:$0xff]
    %v6235 = vld [vmem:[#allocation5 + $0x548] sm:$0xf]
    %v6236 = vld [vmem:[#allocation5 + $0x54c] sm:$0xff]
    %v6237 = vld [vmem:[#allocation5 + $0x554] sm:$0xf]
    %v6238 = vld [vmem:[#allocation5 + $0x558] sm:$0xff]
    %v6239 = vld [vmem:[#allocation5 + $0x560] sm:$0xf]
    %v6240 = vld [vmem:[#allocation5 + $0x564] sm:$0xff]
    %v6241 = vld [vmem:[#allocation5 + $0x56c] sm:$0xf]
    %v6242 = vld [vmem:[#allocation5 + $0x570] sm:$0xff]
    %v6243 = vld [vmem:[#allocation5 + $0x578] sm:$0xf]
    %v6244 = vld [vmem:[#allocation5 + $0x57c] sm:$0xff]
    %v6245 = vld [vmem:[#allocation5 + $0x584] sm:$0xf]
    %v6246 = vld [vmem:[#allocation5 + $0x588] sm:$0xff]
    %v6247 = vld [vmem:[#allocation5 + $0x590] sm:$0xf]
    %v6248 = vld [vmem:[#allocation5 + $0x594] sm:$0xff]
    %v6249 = vld [vmem:[#allocation5 + $0x59c] sm:$0xf]
    %v6250 = vld [vmem:[#allocation5 + $0x5a0] sm:$0xff]
    %v6251 = vld [vmem:[#allocation5 + $0x5a8] sm:$0xf]
    %v6252 = vld [vmem:[#allocation5 + $0x5ac] sm:$0xff]
    %v6253 = vld [vmem:[#allocation5 + $0x5b4] sm:$0xf]
    %v6254 = vld [vmem:[#allocation5 + $0x5b8] sm:$0xff]
    %v6255 = vld [vmem:[#allocation5 + $0x5c0] sm:$0xf]
    %v6256 = vld [vmem:[#allocation5 + $0x5c4] sm:$0xff]
    %v6257 = vld [vmem:[#allocation5 + $0x5cc] sm:$0xf]
    %v6258 = vld [vmem:[#allocation5 + $0x5d0] sm:$0xff]
    %v6259 = vld [vmem:[#allocation5 + $0x5d8] sm:$0xf]
    %v6260 = vld [vmem:[#allocation5 + $0x5dc] sm:$0xff]
    %v6261 = vld [vmem:[#allocation5 + $0x5e4] sm:$0xf]
    %v6262 = vld [vmem:[#allocation5 + $0x5e8] sm:$0xff]
    %v6263 = vld [vmem:[#allocation5 + $0x5f0] sm:$0xf]
    %v6264 = vld [vmem:[#allocation5 + $0x5f4] sm:$0xff]
    %v6265 = vld [vmem:[#allocation5 + $0x5fc] sm:$0xf]
    %v6298 = vunpack.c.l.b16 %v6234
    %v6299 = vunpack.c.h.b16 %v6234
    %v6300 = vunpack.c.l.b16 %v6235
    %v6301 = vunpack.c.l.b16 %v6236
    %v6302 = vunpack.c.h.b16 %v6236
    %v6303 = vunpack.c.l.b16 %v6237
    %v6304 = vunpack.c.l.b16 %v6238
    %v6305 = vunpack.c.h.b16 %v6238
    %v6306 = vunpack.c.l.b16 %v6239
    %v6307 = vunpack.c.l.b16 %v6240
    %v6308 = vunpack.c.h.b16 %v6240
    %v6309 = vunpack.c.l.b16 %v6241
    %v6310 = vunpack.c.l.b16 %v6242
    %v6311 = vunpack.c.h.b16 %v6242
    %v6312 = vunpack.c.l.b16 %v6243
    %v6313 = vunpack.c.l.b16 %v6244
    %v6314 = vunpack.c.h.b16 %v6244
    %v6315 = vunpack.c.l.b16 %v6245
    %v6316 = vunpack.c.l.b16 %v6246
    %v6317 = vunpack.c.h.b16 %v6246
    %v6318 = vunpack.c.l.b16 %v6247
    %v6319 = vunpack.c.l.b16 %v6248
    %v6320 = vunpack.c.h.b16 %v6248
    %v6321 = vunpack.c.l.b16 %v6249
    %v6322 = vunpack.c.l.b16 %v6250
    %v6323 = vunpack.c.h.b16 %v6250
    %v6324 = vunpack.c.l.b16 %v6251
    %v6325 = vunpack.c.l.b16 %v6252
    %v6326 = vunpack.c.h.b16 %v6252
    %v6327 = vunpack.c.l.b16 %v6253
    %v6328 = vunpack.c.l.b16 %v6254
    %v6329 = vunpack.c.h.b16 %v6254
    %v6330 = vunpack.c.l.b16 %v6255
    %v6331 = vunpack.c.l.b16 %v6256
    %v6332 = vunpack.c.h.b16 %v6256
    %v6333 = vunpack.c.l.b16 %v6257
    %v6334 = vunpack.c.l.b16 %v6258
    %v6335 = vunpack.c.h.b16 %v6258
    %v6336 = vunpack.c.l.b16 %v6259
    %v6337 = vunpack.c.l.b16 %v6260
    %v6338 = vunpack.c.h.b16 %v6260
    %v6339 = vunpack.c.l.b16 %v6261
    %v6340 = vunpack.c.l.b16 %v6262
    %v6341 = vunpack.c.h.b16 %v6262
    %v6342 = vunpack.c.l.b16 %v6263
    %v6343 = vunpack.c.l.b16 %v6264
    %v6344 = vunpack.c.h.b16 %v6264
    %v6345 = vunpack.c.l.b16 %v6265
    %v6346 = vpack.c.b16 %v6301, %v6298
    %v6347 = vpack.c.b16 %v6302, %v6299
    %v6348 = vpack.c.b16 %v6303, %v6300
    %v6349 = vpack.c.b16 %v6307, %v6304
    %v6350 = vpack.c.b16 %v6308, %v6305
    %v6351 = vpack.c.b16 %v6309, %v6306
    %v6352 = vpack.c.b16 %v6313, %v6310
    %v6353 = vpack.c.b16 %v6314, %v6311
    %v6354 = vpack.c.b16 %v6315, %v6312
    %v6355 = vpack.c.b16 %v6319, %v6316
    %v6356 = vpack.c.b16 %v6320, %v6317
    %v6357 = vpack.c.b16 %v6321, %v6318
    %v6358 = vpack.c.b16 %v6325, %v6322
    %v6359 = vpack.c.b16 %v6326, %v6323
    %v6360 = vpack.c.b16 %v6327, %v6324
    %v6361 = vpack.c.b16 %v6331, %v6328
    %v6362 = vpack.c.b16 %v6332, %v6329
    %v6363 = vpack.c.b16 %v6333, %v6330
    %v6364 = vpack.c.b16 %v6337, %v6334
    %v6365 = vpack.c.b16 %v6338, %v6335
    %v6366 = vpack.c.b16 %v6339, %v6336
    %v6367 = vpack.c.b16 %v6343, %v6340
    %v6368 = vpack.c.b16 %v6344, %v6341
    %v6369 = vpack.c.b16 %v6345, %v6342
    %6394 = vmatpush.bf16.msra.mxu0 %v6367
    %6395 = vmatpush.bf16.msra.mxu0 %v6364
    %6396 = vmatpush.bf16.msra.mxu0 %v6361
    %6397 = vmatpush.bf16.msra.mxu0 %v6358
    %6398 = vmatpush.bf16.msra.mxu0 %v6355
    %6399 = vmatpush.bf16.msra.mxu0 %v6352
    %6400 = vmatpush.bf16.msra.mxu0 %v6349
    %6401 = vmatpush.bf16.msra.mxu0 %v6346
    %6402 = vmatmul.bf16.gmra.mxu0 %v6233
    %v6403 = vpop.f32.mrf.mxu0
    %v6404 = vadd.f32 0.0, %v6403
    %v6405 = vpop.f32.mrf.mxu0
    %v6406 = vadd.f32 0.0, %v6405
    %6407 = vdwg.mxu0
    %6408 = vmatpush.bf16.msra.mxu0 %v6368
    %6409 = vmatpush.bf16.msra.mxu0 %v6365
    %6410 = vmatpush.bf16.msra.mxu0 %v6362
    %6411 = vmatpush.bf16.msra.mxu0 %v6359
    %6412 = vmatpush.bf16.msra.mxu0 %v6356
    %6413 = vmatpush.bf16.msra.mxu0 %v6353
    %6414 = vmatpush.bf16.msra.mxu0 %v6350
    %6415 = vmatpush.bf16.msra.mxu0 %v6347
    %6416 = vmatmul.bf16.gmra.mxu0 %v6233
    %v6417 = vpop.f32.mrf.mxu0
    %v6418 = vadd.f32 0.0, %v6417
    %v6419 = vpop.f32.mrf.mxu0
    %v6420 = vadd.f32 0.0, %v6419
    %6421 = vdwg.mxu0
    %6422 = vmatpush.bf16.msra.mxu0 %v6369
    %6423 = vmatpush.bf16.msra.mxu0 %v6366
    %6424 = vmatpush.bf16.msra.mxu0 %v6363
    %6425 = vmatpush.bf16.msra.mxu0 %v6360
    %6426 = vmatpush.bf16.msra.mxu0 %v6357
    %6427 = vmatpush.bf16.msra.mxu0 %v6354
    %6428 = vmatpush.bf16.msra.mxu0 %v6351
    %6429 = vmatpush.bf16.msra.mxu0 %v6348
    %6430 = vmatmul.bf16.gmra.mxu0 %v6233
    %v6431 = vpop.f32.mrf.mxu0
    %v6432 = vadd.f32 0.0, %v6431
    %v6433 = vpop.f32.mrf.mxu0
    %v6434 = vadd.f32 0.0, %v6433
    %6435 = vdwg.mxu0
    %v6436 = vpack.c.bf16 %v6418, %v6404
    %v6437 = vpack.c.bf16 %v6432, %v6432
    %v6438 = vpack.c.bf16 %v6420, %v6406
    %v6439 = vpack.c.bf16 %v6434, %v6434
    %v6440 = vld [vmem:[#allocation11 + $0xf4] sm:$0xf]
    %v6441 = vld [vmem:[#allocation11 + $0xf8] sm:$0xf]
    %v6442 = vld [vmem:[#allocation11 + $0xfc] sm:$0xf]
    %v6443 = vld [vmem:[#allocation11 + $0x100] sm:$0xf]
    %v6444 = vld [vmem:[#allocation11 + $0x104] sm:$0xf]
    %v6445 = vld [vmem:[#allocation11 + $0x108] sm:$0xf]
    %v6446 = vld [vmem:[#allocation11 + $0x10c] sm:$0xf]
    %v6447 = vld [vmem:[#allocation11 + $0x110] sm:$0xf]
    %v6452 = vunpack.c.l.b16 %v6444
    %v6453 = vunpack.c.l.b16 %v6445
    %v6454 = vunpack.c.l.b16 %v6446
    %v6455 = vunpack.c.l.b16 %v6447
    %v6456 = vpack.c.b16 %v6453, %v6452
    %v6457 = vpack.c.b16 %v6455, %v6454
    %v6460 = vunpack.c.h.b16 %v6436
    %v6461 = vunpack.c.h.b16 %v6438
    %v6462 = vpack.c.b16 %v6461, %v6460
    %v6465 = vsel %vm2056, %v6456, 0
    %v6468 = vsel %vm2056, %v6457, 0
    %6470 = vmatpush.bf16.msra.mxu0 0
    %6471 = vmatpush.bf16.msra.mxu0 0
    %6472 = vmatpush.bf16.msra.mxu0 0
    %6473 = vmatpush.bf16.msra.mxu0 0
    %6474 = vmatpush.bf16.msra.mxu0 0
    %6475 = vmatpush.bf16.msra.mxu0 0
    %6476 = vmatpush.bf16.msra.mxu0 0
    %6477 = vmatpush.bf16.msra.mxu0 %v6462
    %6478 = vmatmul.bf16.gmra.mxu0 %v6465
    %v6479 = vpop.f32.mrf.mxu0
    %v6480 = vadd.f32 0.0, %v6479
    %v6481 = vpop.f32.mrf.mxu0
    %v6482 = vadd.f32 0.0, %v6481
    %6483 = vmatmul.bf16.gmra.mxu0 %v6468
    %v6484 = vpop.f32.mrf.mxu0
    %v6485 = vadd.f32 0.0, %v6484
    %v6486 = vpop.f32.mrf.mxu0
    %v6487 = vadd.f32 0.0, %v6486
    %6488 = vdwg.mxu0
    %v6493 = vunpack.c.l.b16 %v6440
    %v6494 = vunpack.c.l.b16 %v6441
    %v6495 = vunpack.c.l.b16 %v6442
    %v6496 = vunpack.c.l.b16 %v6443
    %v6497 = vpack.c.b16 %v6494, %v6493
    %v6498 = vpack.c.b16 %v6496, %v6495
    %v6499 = vunpack.c.l.b16 %v6436
    %v6500 = vunpack.c.l.b16 %v6438
    %v6501 = vpack.c.b16 %v6500, %v6499
    %v6504 = vsel %vm2056, %v6497, 0
    %v6507 = vsel %vm2056, %v6498, 0
    %6509 = vmatpush.bf16.msra.mxu0 0
    %6510 = vmatpush.bf16.msra.mxu0 0
    %6511 = vmatpush.bf16.msra.mxu0 0
    %6512 = vmatpush.bf16.msra.mxu0 0
    %6513 = vmatpush.bf16.msra.mxu0 0
    %6514 = vmatpush.bf16.msra.mxu0 0
    %6515 = vmatpush.bf16.msra.mxu0 0
    %6516 = vmatpush.bf16.msra.mxu0 %v6501
    %6517 = vmatmul.bf16.gmra.mxu0 %v6504
    %v6518 = vpop.f32.mrf.mxu0
    %v6519 = vadd.f32 %v6480, %v6518
    %v6520 = vpop.f32.mrf.mxu0
    %v6521 = vadd.f32 %v6482, %v6520
    %6522 = vmatmul.bf16.gmra.mxu0 %v6507
    %v6523 = vpop.f32.mrf.mxu0
    %v6524 = vadd.f32 %v6485, %v6523
    %v6525 = vpop.f32.mrf.mxu0
    %v6526 = vadd.f32 %v6487, %v6525
    %6527 = vdwg.mxu0
    %v6528 = vld [vmem:[#allocation11 + $0x114] sm:$0xf]
    %v6529 = vld [vmem:[#allocation11 + $0x118] sm:$0xf]
    %v6530 = vld [vmem:[#allocation11 + $0x11c] sm:$0xf]
    %v6531 = vld [vmem:[#allocation11 + $0x120] sm:$0xf]
    %v6536 = vunpack.c.l.b16 %v6528
    %v6537 = vunpack.c.l.b16 %v6529
    %v6538 = vunpack.c.l.b16 %v6530
    %v6539 = vunpack.c.l.b16 %v6531
    %v6540 = vpack.c.b16 %v6537, %v6536
    %v6541 = vpack.c.b16 %v6539, %v6538
    %v6544 = vunpack.c.l.b16 %v6437
    %v6545 = vunpack.c.l.b16 %v6439
    %v6546 = vpack.c.b16 %v6545, %v6544
    %v6549 = vsel %vm2056, %v6540, 0
    %v6552 = vsel %vm2056, %v6541, 0
    %6554 = vmatpush.bf16.msra.mxu0 0
    %6555 = vmatpush.bf16.msra.mxu0 0
    %6556 = vmatpush.bf16.msra.mxu0 0
    %6557 = vmatpush.bf16.msra.mxu0 0
    %6558 = vmatpush.bf16.msra.mxu0 0
    %6559 = vmatpush.bf16.msra.mxu0 0
    %6560 = vmatpush.bf16.msra.mxu0 0
    %6561 = vmatpush.bf16.msra.mxu0 %v6546
    %6562 = vmatmul.bf16.gmra.mxu0 %v6549
    %v6563 = vpop.f32.mrf.mxu0
    %v6564 = vadd.f32 0.0, %v6563
    %v6565 = vpop.f32.mrf.mxu0
    %v6566 = vadd.f32 0.0, %v6565
    %6567 = vmatmul.bf16.gmra.mxu0 %v6552
    %v6568 = vpop.f32.mrf.mxu0
    %v6569 = vadd.f32 0.0, %v6568
    %v6570 = vpop.f32.mrf.mxu0
    %v6571 = vadd.f32 0.0, %v6570
    %6572 = vdwg.mxu0
    %v6573 = vadd.f32 %v6519, %v6564
    %v6574 = vadd.f32 %v6521, %v6566
    %v6575 = vadd.f32 %v6524, %v6569
    %v6576 = vadd.f32 %v6526, %v6571
    %v6577 = vadd.f32 %v6573, %v6574
    %v6578 = vadd.f32 %v6577, %v6575
    %v6579 = vadd.f32 %v6578, %v6576
    %v6580 = vrot.slane %v6579, 4
    %v6581 = vadd.f32 %v6579, %v6580
    %v6582 = vrot.slane %v6581, 2
    %v6583 = vadd.f32 %v6581, %v6582
    %v6584 = vrot.slane %v6583, 1
    %v6585 = vadd.f32 %v6583, %v6584
    %v6586 = vmul.f32 %v6585, 0.03125
    %v6587 = vmul.f32 %v6573, %v6573
    %v6588 = vmul.f32 %v6574, %v6574
    %v6589 = vmul.f32 %v6575, %v6575
    %v6590 = vmul.f32 %v6576, %v6576
    %v6591 = vadd.f32 %v6587, %v6588
    %v6592 = vadd.f32 %v6591, %v6589
    %v6593 = vadd.f32 %v6592, %v6590
    %v6594 = vrot.slane %v6593, 4
    %v6595 = vadd.f32 %v6593, %v6594
    %v6596 = vrot.slane %v6595, 2
    %v6597 = vadd.f32 %v6595, %v6596
    %v6598 = vrot.slane %v6597, 1
    %v6599 = vadd.f32 %v6597, %v6598
    %v6600 = vmul.f32 %v6599, 0.03125
    %v6601 = vmul.f32 %v6586, %v6586
    %v6602 = vsub.f32 %v6600, %v6601
    %v6603 = vmax.f32 %v6602, 0.0
    %v6604 = vld [vmem:[%s7 + $0x44] ss:$0 sm:$0xff]
    %v6605 = vld [vmem:[%s7 + $0x45] ss:$0 sm:$0xff]
    %v6606 = vadd.f32 %v6603, 1e-05
    %v6607 = vrsqrt.pop %v6606
    %v6608 = vmul.f32 %v6607, %v6606
    %v6609 = vmul.f32 %v6608, %v6607
    %v6610 = vmul.f32 0.5, %v6609
    %v6611 = vsub.f32 1.5, %v6610
    %v6612 = vmul.f32 %v6607, %v6611
    %vm6613 = vweird.f32 %v6606
    %vm6614 = vweird.f32 %v6607
    %vm6615 = vmor %vm6613, %vm6614
    %v6616 = vsel %vm6615, %v6607, %v6612
    %v6617 = vmul.f32 %v6616, %v6604
    %v6618 = vmul.f32 %v6573, %v6617
    %v6619 = vmul.f32 %v6574, %v6617
    %v6620 = vmul.f32 %v6575, %v6617
    %v6621 = vmul.f32 %v6576, %v6617
    %v6622 = vmul.f32 %v6586, %v6617
    %v6623 = vsub.f32 %v6605, %v6622
    %v6624 = vadd.f32 %v6618, %v6623
    %v6625 = vadd.f32 %v6619, %v6623
    %v6626 = vadd.f32 %v6620, %v6623
    %v6627 = vadd.f32 %v6621, %v6623
    %vm6628 = vcmp.ge.f32.partialorder %v6624, 0.0
    %vm6629 = vcmp.ge.f32.partialorder %v6625, 0.0
    %vm6630 = vcmp.ge.f32.partialorder %v6626, 0.0
    %vm6631 = vcmp.ge.f32.partialorder %v6627, 0.0
    %v6632 = vmul.f32 %v6624, 0.01
    %v6633 = vmul.f32 %v6625, 0.01
    %v6634 = vmul.f32 %v6626, 0.01
    %v6635 = vmul.f32 %v6627, 0.01
    %v6636 = vsel %vm6628, %v6624, %v6632
    %v6637 = vsel %vm6629, %v6625, %v6633
    %v6638 = vsel %vm6630, %v6626, %v6634
    %v6639 = vsel %vm6631, %v6627, %v6635
    %v6640 = vpack.c.bf16 %v6637, %v6636
    %v6641 = vpack.c.bf16 %v6639, %v6638
    %v6642 = vld [vmem:[#allocation5 + $0x600] sm:$0xff]
    %v6643 = vld [vmem:[#allocation5 + $0x608] sm:$0xf]
    %v6644 = vld [vmem:[#allocation5 + $0x60c] sm:$0xff]
    %v6645 = vld [vmem:[#allocation5 + $0x614] sm:$0xf]
    %v6646 = vld [vmem:[#allocation5 + $0x618] sm:$0xff]
    %v6647 = vld [vmem:[#allocation5 + $0x620] sm:$0xf]
    %v6648 = vld [vmem:[#allocation5 + $0x624] sm:$0xff]
    %v6649 = vld [vmem:[#allocation5 + $0x62c] sm:$0xf]
    %v6650 = vld [vmem:[#allocation5 + $0x630] sm:$0xff]
    %v6651 = vld [vmem:[#allocation5 + $0x638] sm:$0xf]
    %v6652 = vld [vmem:[#allocation5 + $0x63c] sm:$0xff]
    %v6653 = vld [vmem:[#allocation5 + $0x644] sm:$0xf]
    %v6654 = vld [vmem:[#allocation5 + $0x648] sm:$0xff]
    %v6655 = vld [vmem:[#allocation5 + $0x650] sm:$0xf]
    %v6656 = vld [vmem:[#allocation5 + $0x654] sm:$0xff]
    %v6657 = vld [vmem:[#allocation5 + $0x65c] sm:$0xf]
    %v6658 = vld [vmem:[#allocation5 + $0x660] sm:$0xff]
    %v6659 = vld [vmem:[#allocation5 + $0x668] sm:$0xf]
    %v6660 = vld [vmem:[#allocation5 + $0x66c] sm:$0xff]
    %v6661 = vld [vmem:[#allocation5 + $0x674] sm:$0xf]
    %v6662 = vld [vmem:[#allocation5 + $0x678] sm:$0xff]
    %v6663 = vld [vmem:[#allocation5 + $0x680] sm:$0xf]
    %v6664 = vld [vmem:[#allocation5 + $0x684] sm:$0xff]
    %v6665 = vld [vmem:[#allocation5 + $0x68c] sm:$0xf]
    %v6666 = vld [vmem:[#allocation5 + $0x690] sm:$0xff]
    %v6667 = vld [vmem:[#allocation5 + $0x698] sm:$0xf]
    %v6668 = vld [vmem:[#allocation5 + $0x69c] sm:$0xff]
    %v6669 = vld [vmem:[#allocation5 + $0x6a4] sm:$0xf]
    %v6670 = vld [vmem:[#allocation5 + $0x6a8] sm:$0xff]
    %v6671 = vld [vmem:[#allocation5 + $0x6b0] sm:$0xf]
    %v6672 = vld [vmem:[#allocation5 + $0x6b4] sm:$0xff]
    %v6673 = vld [vmem:[#allocation5 + $0x6bc] sm:$0xf]
    %v6706 = vunpack.c.l.b16 %v6642
    %v6707 = vunpack.c.h.b16 %v6642
    %v6708 = vunpack.c.l.b16 %v6643
    %v6709 = vunpack.c.l.b16 %v6644
    %v6710 = vunpack.c.h.b16 %v6644
    %v6711 = vunpack.c.l.b16 %v6645
    %v6712 = vunpack.c.l.b16 %v6646
    %v6713 = vunpack.c.h.b16 %v6646
    %v6714 = vunpack.c.l.b16 %v6647
    %v6715 = vunpack.c.l.b16 %v6648
    %v6716 = vunpack.c.h.b16 %v6648
    %v6717 = vunpack.c.l.b16 %v6649
    %v6718 = vunpack.c.l.b16 %v6650
    %v6719 = vunpack.c.h.b16 %v6650
    %v6720 = vunpack.c.l.b16 %v6651
    %v6721 = vunpack.c.l.b16 %v6652
    %v6722 = vunpack.c.h.b16 %v6652
    %v6723 = vunpack.c.l.b16 %v6653
    %v6724 = vunpack.c.l.b16 %v6654
    %v6725 = vunpack.c.h.b16 %v6654
    %v6726 = vunpack.c.l.b16 %v6655
    %v6727 = vunpack.c.l.b16 %v6656
    %v6728 = vunpack.c.h.b16 %v6656
    %v6729 = vunpack.c.l.b16 %v6657
    %v6730 = vunpack.c.l.b16 %v6658
    %v6731 = vunpack.c.h.b16 %v6658
    %v6732 = vunpack.c.l.b16 %v6659
    %v6733 = vunpack.c.l.b16 %v6660
    %v6734 = vunpack.c.h.b16 %v6660
    %v6735 = vunpack.c.l.b16 %v6661
    %v6736 = vunpack.c.l.b16 %v6662
    %v6737 = vunpack.c.h.b16 %v6662
    %v6738 = vunpack.c.l.b16 %v6663
    %v6739 = vunpack.c.l.b16 %v6664
    %v6740 = vunpack.c.h.b16 %v6664
    %v6741 = vunpack.c.l.b16 %v6665
    %v6742 = vunpack.c.l.b16 %v6666
    %v6743 = vunpack.c.h.b16 %v6666
    %v6744 = vunpack.c.l.b16 %v6667
    %v6745 = vunpack.c.l.b16 %v6668
    %v6746 = vunpack.c.h.b16 %v6668
    %v6747 = vunpack.c.l.b16 %v6669
    %v6748 = vunpack.c.l.b16 %v6670
    %v6749 = vunpack.c.h.b16 %v6670
    %v6750 = vunpack.c.l.b16 %v6671
    %v6751 = vunpack.c.l.b16 %v6672
    %v6752 = vunpack.c.h.b16 %v6672
    %v6753 = vunpack.c.l.b16 %v6673
    %v6754 = vpack.c.b16 %v6709, %v6706
    %v6755 = vpack.c.b16 %v6710, %v6707
    %v6756 = vpack.c.b16 %v6711, %v6708
    %v6757 = vpack.c.b16 %v6715, %v6712
    %v6758 = vpack.c.b16 %v6716, %v6713
    %v6759 = vpack.c.b16 %v6717, %v6714
    %v6760 = vpack.c.b16 %v6721, %v6718
    %v6761 = vpack.c.b16 %v6722, %v6719
    %v6762 = vpack.c.b16 %v6723, %v6720
    %v6763 = vpack.c.b16 %v6727, %v6724
    %v6764 = vpack.c.b16 %v6728, %v6725
    %v6765 = vpack.c.b16 %v6729, %v6726
    %v6766 = vpack.c.b16 %v6733, %v6730
    %v6767 = vpack.c.b16 %v6734, %v6731
    %v6768 = vpack.c.b16 %v6735, %v6732
    %v6769 = vpack.c.b16 %v6739, %v6736
    %v6770 = vpack.c.b16 %v6740, %v6737
    %v6771 = vpack.c.b16 %v6741, %v6738
    %v6772 = vpack.c.b16 %v6745, %v6742
    %v6773 = vpack.c.b16 %v6746, %v6743
    %v6774 = vpack.c.b16 %v6747, %v6744
    %v6775 = vpack.c.b16 %v6751, %v6748
    %v6776 = vpack.c.b16 %v6752, %v6749
    %v6777 = vpack.c.b16 %v6753, %v6750
    %6802 = vmatpush.bf16.msra.mxu0 %v6775
    %6803 = vmatpush.bf16.msra.mxu0 %v6772
    %6804 = vmatpush.bf16.msra.mxu0 %v6769
    %6805 = vmatpush.bf16.msra.mxu0 %v6766
    %6806 = vmatpush.bf16.msra.mxu0 %v6763
    %6807 = vmatpush.bf16.msra.mxu0 %v6760
    %6808 = vmatpush.bf16.msra.mxu0 %v6757
    %6809 = vmatpush.bf16.msra.mxu0 %v6754
    %6810 = vmatmul.bf16.gmra.mxu0 %v6640
    %v6811 = vpop.f32.mrf.mxu0
    %v6812 = vadd.f32 0.0, %v6811
    %v6813 = vpop.f32.mrf.mxu0
    %v6814 = vadd.f32 0.0, %v6813
    %6815 = vmatmul.bf16.gmra.mxu0 %v6641
    %v6816 = vpop.f32.mrf.mxu0
    %v6817 = vadd.f32 0.0, %v6816
    %v6818 = vpop.f32.mrf.mxu0
    %v6819 = vadd.f32 0.0, %v6818
    %6820 = vdwg.mxu0
    %6821 = vmatpush.bf16.msra.mxu0 %v6776
    %6822 = vmatpush.bf16.msra.mxu0 %v6773
    %6823 = vmatpush.bf16.msra.mxu0 %v6770
    %6824 = vmatpush.bf16.msra.mxu0 %v6767
    %6825 = vmatpush.bf16.msra.mxu0 %v6764
    %6826 = vmatpush.bf16.msra.mxu0 %v6761
    %6827 = vmatpush.bf16.msra.mxu0 %v6758
    %6828 = vmatpush.bf16.msra.mxu0 %v6755
    %6829 = vmatmul.bf16.gmra.mxu0 %v6640
    %v6830 = vpop.f32.mrf.mxu0
    %v6831 = vadd.f32 0.0, %v6830
    %v6832 = vpop.f32.mrf.mxu0
    %v6833 = vadd.f32 0.0, %v6832
    %6834 = vmatmul.bf16.gmra.mxu0 %v6641
    %v6835 = vpop.f32.mrf.mxu0
    %v6836 = vadd.f32 0.0, %v6835
    %v6837 = vpop.f32.mrf.mxu0
    %v6838 = vadd.f32 0.0, %v6837
    %6839 = vdwg.mxu0
    %6840 = vmatpush.bf16.msra.mxu0 %v6777
    %6841 = vmatpush.bf16.msra.mxu0 %v6774
    %6842 = vmatpush.bf16.msra.mxu0 %v6771
    %6843 = vmatpush.bf16.msra.mxu0 %v6768
    %6844 = vmatpush.bf16.msra.mxu0 %v6765
    %6845 = vmatpush.bf16.msra.mxu0 %v6762
    %6846 = vmatpush.bf16.msra.mxu0 %v6759
    %6847 = vmatpush.bf16.msra.mxu0 %v6756
    %6848 = vmatmul.bf16.gmra.mxu0 %v6640
    %v6849 = vpop.f32.mrf.mxu0
    %v6850 = vadd.f32 0.0, %v6849
    %v6851 = vpop.f32.mrf.mxu0
    %v6852 = vadd.f32 0.0, %v6851
    %6853 = vmatmul.bf16.gmra.mxu0 %v6641
    %v6854 = vpop.f32.mrf.mxu0
    %v6855 = vadd.f32 0.0, %v6854
    %v6856 = vpop.f32.mrf.mxu0
    %v6857 = vadd.f32 0.0, %v6856
    %6858 = vdwg.mxu0
    %v6859 = vpack.c.bf16 %v6831, %v6812
    %v6860 = vpack.c.bf16 %v6850, %v6850
    %v6861 = vpack.c.bf16 %v6833, %v6814
    %v6862 = vpack.c.bf16 %v6852, %v6852
    %v6863 = vpack.c.bf16 %v6836, %v6817
    %v6864 = vpack.c.bf16 %v6855, %v6855
    %v6865 = vpack.c.bf16 %v6838, %v6819
    %v6866 = vpack.c.bf16 %v6857, %v6857
    %v6867 = vld [vmem:[#allocation11 + $0x124] sm:$0xf]
    %v6868 = vld [vmem:[#allocation11 + $0x128] sm:$0xf]
    %v6869 = vld [vmem:[#allocation11 + $0x12c] sm:$0xf]
    %v6870 = vld [vmem:[#allocation11 + $0x130] sm:$0xf]
    %v6871 = vld [vmem:[#allocation11 + $0x134] sm:$0xf]
    %v6872 = vld [vmem:[#allocation11 + $0x138] sm:$0xf]
    %v6873 = vld [vmem:[#allocation11 + $0x13c] sm:$0xf]
    %v6874 = vld [vmem:[#allocation11 + $0x140] sm:$0xf]
    %v6875 = vld [vmem:[#allocation11 + $0x144] sm:$0xf]
    %v6876 = vld [vmem:[#allocation11 + $0x148] sm:$0xf]
    %v6877 = vld [vmem:[#allocation11 + $0x14c] sm:$0xf]
    %v6878 = vld [vmem:[#allocation11 + $0x150] sm:$0xf]
    %v6879 = vld [vmem:[#allocation11 + $0x154] sm:$0xf]
    %v6880 = vld [vmem:[#allocation11 + $0x158] sm:$0xf]
    %v6881 = vld [vmem:[#allocation11 + $0x15c] sm:$0xf]
    %v6882 = vld [vmem:[#allocation11 + $0x160] sm:$0xf]
    %v6891 = vunpack.c.l.b16 %v6875
    %v6892 = vunpack.c.l.b16 %v6876
    %v6893 = vunpack.c.l.b16 %v6877
    %v6894 = vunpack.c.l.b16 %v6878
    %v6895 = vunpack.c.l.b16 %v6879
    %v6896 = vunpack.c.l.b16 %v6880
    %v6897 = vunpack.c.l.b16 %v6881
    %v6898 = vunpack.c.l.b16 %v6882
    %v6899 = vpack.c.b16 %v6892, %v6891
    %v6900 = vpack.c.b16 %v6894, %v6893
    %v6901 = vpack.c.b16 %v6896, %v6895
    %v6902 = vpack.c.b16 %v6898, %v6897
    %v6907 = vunpack.c.h.b16 %v6859
    %v6908 = vunpack.c.h.b16 %v6861
    %v6909 = vunpack.c.h.b16 %v6863
    %v6910 = vunpack.c.h.b16 %v6865
    %v6911 = vpack.c.b16 %v6908, %v6907
    %v6912 = vpack.c.b16 %v6910, %v6909
    %v6916 = vsel %vm1708, %v6899, 0
    %v6919 = vsel %vm1708, %v6900, 0
    %v6922 = vsel %vm1708, %v6901, 0
    %v6925 = vsel %vm1708, %v6902, 0
    %6927 = vmatpush.bf16.msra.mxu0 0
    %6928 = vmatpush.bf16.msra.mxu0 0
    %6929 = vmatpush.bf16.msra.mxu0 0
    %6930 = vmatpush.bf16.msra.mxu0 0
    %6931 = vmatpush.bf16.msra.mxu0 0
    %6932 = vmatpush.bf16.msra.mxu0 0
    %6933 = vmatpush.bf16.msra.mxu0 %v6912
    %6934 = vmatpush.bf16.msra.mxu0 %v6911
    %6935 = vmatmul.bf16.gmra.mxu0 %v6916
    %v6936 = vpop.f32.mrf.mxu0
    %v6937 = vadd.f32 0.0, %v6936
    %v6938 = vpop.f32.mrf.mxu0
    %v6939 = vadd.f32 0.0, %v6938
    %6940 = vmatmul.bf16.gmra.mxu0 %v6919
    %v6941 = vpop.f32.mrf.mxu0
    %v6942 = vadd.f32 0.0, %v6941
    %v6943 = vpop.f32.mrf.mxu0
    %v6944 = vadd.f32 0.0, %v6943
    %6945 = vmatmul.bf16.gmra.mxu0 %v6922
    %v6946 = vpop.f32.mrf.mxu0
    %v6947 = vadd.f32 0.0, %v6946
    %v6948 = vpop.f32.mrf.mxu0
    %v6949 = vadd.f32 0.0, %v6948
    %6950 = vmatmul.bf16.gmra.mxu0 %v6925
    %v6951 = vpop.f32.mrf.mxu0
    %v6952 = vadd.f32 0.0, %v6951
    %v6953 = vpop.f32.mrf.mxu0
    %v6954 = vadd.f32 0.0, %v6953
    %6955 = vdwg.mxu0
    %v6964 = vunpack.c.l.b16 %v6867
    %v6965 = vunpack.c.l.b16 %v6868
    %v6966 = vunpack.c.l.b16 %v6869
    %v6967 = vunpack.c.l.b16 %v6870
    %v6968 = vunpack.c.l.b16 %v6871
    %v6969 = vunpack.c.l.b16 %v6872
    %v6970 = vunpack.c.l.b16 %v6873
    %v6971 = vunpack.c.l.b16 %v6874
    %v6972 = vpack.c.b16 %v6965, %v6964
    %v6973 = vpack.c.b16 %v6967, %v6966
    %v6974 = vpack.c.b16 %v6969, %v6968
    %v6975 = vpack.c.b16 %v6971, %v6970
    %v6976 = vunpack.c.l.b16 %v6859
    %v6977 = vunpack.c.l.b16 %v6861
    %v6978 = vunpack.c.l.b16 %v6863
    %v6979 = vunpack.c.l.b16 %v6865
    %v6980 = vpack.c.b16 %v6977, %v6976
    %v6981 = vpack.c.b16 %v6979, %v6978
    %v6985 = vsel %vm1708, %v6972, 0
    %v6988 = vsel %vm1708, %v6973, 0
    %v6991 = vsel %vm1708, %v6974, 0
    %v6994 = vsel %vm1708, %v6975, 0
    %6996 = vmatpush.bf16.msra.mxu0 0
    %6997 = vmatpush.bf16.msra.mxu0 0
    %6998 = vmatpush.bf16.msra.mxu0 0
    %6999 = vmatpush.bf16.msra.mxu0 0
    %7000 = vmatpush.bf16.msra.mxu0 0
    %7001 = vmatpush.bf16.msra.mxu0 0
    %7002 = vmatpush.bf16.msra.mxu0 %v6981
    %7003 = vmatpush.bf16.msra.mxu0 %v6980
    %7004 = vmatmul.bf16.gmra.mxu0 %v6985
    %v7005 = vpop.f32.mrf.mxu0
    %v7006 = vadd.f32 %v6937, %v7005
    %v7007 = vpop.f32.mrf.mxu0
    %v7008 = vadd.f32 %v6939, %v7007
    %7009 = vmatmul.bf16.gmra.mxu0 %v6988
    %v7010 = vpop.f32.mrf.mxu0
    %v7011 = vadd.f32 %v6942, %v7010
    %v7012 = vpop.f32.mrf.mxu0
    %v7013 = vadd.f32 %v6944, %v7012
    %7014 = vmatmul.bf16.gmra.mxu0 %v6991
    %v7015 = vpop.f32.mrf.mxu0
    %v7016 = vadd.f32 %v6947, %v7015
    %v7017 = vpop.f32.mrf.mxu0
    %v7018 = vadd.f32 %v6949, %v7017
    %7019 = vmatmul.bf16.gmra.mxu0 %v6994
    %v7020 = vpop.f32.mrf.mxu0
    %v7021 = vadd.f32 %v6952, %v7020
    %v7022 = vpop.f32.mrf.mxu0
    %v7023 = vadd.f32 %v6954, %v7022
    %7024 = vdwg.mxu0
    %v7025 = vld [vmem:[#allocation11 + $0x164] sm:$0xf]
    %v7026 = vld [vmem:[#allocation11 + $0x168] sm:$0xf]
    %v7027 = vld [vmem:[#allocation11 + $0x16c] sm:$0xf]
    %v7028 = vld [vmem:[#allocation11 + $0x170] sm:$0xf]
    %v7029 = vld [vmem:[#allocation11 + $0x174] sm:$0xf]
    %v7030 = vld [vmem:[#allocation11 + $0x178] sm:$0xf]
    %v7031 = vld [vmem:[#allocation11 + $0x17c] sm:$0xf]
    %v7032 = vld [vmem:[#allocation11 + $0x180] sm:$0xf]
    %v7041 = vunpack.c.l.b16 %v7025
    %v7042 = vunpack.c.l.b16 %v7026
    %v7043 = vunpack.c.l.b16 %v7027
    %v7044 = vunpack.c.l.b16 %v7028
    %v7045 = vunpack.c.l.b16 %v7029
    %v7046 = vunpack.c.l.b16 %v7030
    %v7047 = vunpack.c.l.b16 %v7031
    %v7048 = vunpack.c.l.b16 %v7032
    %v7049 = vpack.c.b16 %v7042, %v7041
    %v7050 = vpack.c.b16 %v7044, %v7043
    %v7051 = vpack.c.b16 %v7046, %v7045
    %v7052 = vpack.c.b16 %v7048, %v7047
    %v7057 = vunpack.c.l.b16 %v6860
    %v7058 = vunpack.c.l.b16 %v6862
    %v7059 = vunpack.c.l.b16 %v6864
    %v7060 = vunpack.c.l.b16 %v6866
    %v7061 = vpack.c.b16 %v7058, %v7057
    %v7062 = vpack.c.b16 %v7060, %v7059
    %v7066 = vsel %vm1708, %v7049, 0
    %v7069 = vsel %vm1708, %v7050, 0
    %v7072 = vsel %vm1708, %v7051, 0
    %v7075 = vsel %vm1708, %v7052, 0
    %7077 = vmatpush.bf16.msra.mxu0 0
    %7078 = vmatpush.bf16.msra.mxu0 0
    %7079 = vmatpush.bf16.msra.mxu0 0
    %7080 = vmatpush.bf16.msra.mxu0 0
    %7081 = vmatpush.bf16.msra.mxu0 0
    %7082 = vmatpush.bf16.msra.mxu0 0
    %7083 = vmatpush.bf16.msra.mxu0 %v7062
    %7084 = vmatpush.bf16.msra.mxu0 %v7061
    %7085 = vmatmul.bf16.gmra.mxu0 %v7066
    %v7086 = vpop.f32.mrf.mxu0
    %v7087 = vadd.f32 0.0, %v7086
    %v7088 = vpop.f32.mrf.mxu0
    %v7089 = vadd.f32 0.0, %v7088
    %7090 = vmatmul.bf16.gmra.mxu0 %v7069
    %v7091 = vpop.f32.mrf.mxu0
    %v7092 = vadd.f32 0.0, %v7091
    %v7093 = vpop.f32.mrf.mxu0
    %v7094 = vadd.f32 0.0, %v7093
    %7095 = vmatmul.bf16.gmra.mxu0 %v7072
    %v7096 = vpop.f32.mrf.mxu0
    %v7097 = vadd.f32 0.0, %v7096
    %v7098 = vpop.f32.mrf.mxu0
    %v7099 = vadd.f32 0.0, %v7098
    %7100 = vmatmul.bf16.gmra.mxu0 %v7075
    %v7101 = vpop.f32.mrf.mxu0
    %v7102 = vadd.f32 0.0, %v7101
    %v7103 = vpop.f32.mrf.mxu0
    %v7104 = vadd.f32 0.0, %v7103
    %7105 = vdwg.mxu0
    %v7106 = vadd.f32 %v7006, %v7087
    %v7107 = vadd.f32 %v7008, %v7089
    %v7108 = vadd.f32 %v7011, %v7092
    %v7109 = vadd.f32 %v7013, %v7094
    %v7110 = vadd.f32 %v7016, %v7097
    %v7111 = vadd.f32 %v7018, %v7099
    %v7112 = vadd.f32 %v7021, %v7102
    %v7113 = vadd.f32 %v7023, %v7104
    %v7114 = vadd.f32 %v7106, %v7107
    %v7115 = vadd.f32 %v7114, %v7108
    %v7116 = vadd.f32 %v7115, %v7109
    %v7117 = vadd.f32 %v7116, %v7110
    %v7118 = vadd.f32 %v7117, %v7111
    %v7119 = vadd.f32 %v7118, %v7112
    %v7120 = vadd.f32 %v7119, %v7113
    %v7121 = vrot.slane %v7120, 4
    %v7122 = vadd.f32 %v7120, %v7121
    %v7123 = vrot.slane %v7122, 2
    %v7124 = vadd.f32 %v7122, %v7123
    %v7125 = vrot.slane %v7124, 1
    %v7126 = vadd.f32 %v7124, %v7125
    %v7127 = vmul.f32 %v7126, 0.015625
    %v7128 = vmul.f32 %v7106, %v7106
    %v7129 = vmul.f32 %v7107, %v7107
    %v7130 = vmul.f32 %v7108, %v7108
    %v7131 = vmul.f32 %v7109, %v7109
    %v7132 = vmul.f32 %v7110, %v7110
    %v7133 = vmul.f32 %v7111, %v7111
    %v7134 = vmul.f32 %v7112, %v7112
    %v7135 = vmul.f32 %v7113, %v7113
    %v7136 = vadd.f32 %v7128, %v7129
    %v7137 = vadd.f32 %v7136, %v7130
    %v7138 = vadd.f32 %v7137, %v7131
    %v7139 = vadd.f32 %v7138, %v7132
    %v7140 = vadd.f32 %v7139, %v7133
    %v7141 = vadd.f32 %v7140, %v7134
    %v7142 = vadd.f32 %v7141, %v7135
    %v7143 = vrot.slane %v7142, 4
    %v7144 = vadd.f32 %v7142, %v7143
    %v7145 = vrot.slane %v7144, 2
    %v7146 = vadd.f32 %v7144, %v7145
    %v7147 = vrot.slane %v7146, 1
    %v7148 = vadd.f32 %v7146, %v7147
    %v7149 = vmul.f32 %v7148, 0.015625
    %v7150 = vmul.f32 %v7127, %v7127
    %v7151 = vsub.f32 %v7149, %v7150
    %v7152 = vmax.f32 %v7151, 0.0
    %v7153 = vld [vmem:[%s7 + $0x46] ss:$0 sm:$0xff]
    %v7154 = vld [vmem:[%s7 + $0x47] ss:$0 sm:$0xff]
    %v7155 = vadd.f32 %v7152, 1e-05
    %v7156 = vrsqrt.pop %v7155
    %v7157 = vmul.f32 %v7156, %v7155
    %v7158 = vmul.f32 %v7157, %v7156
    %v7159 = vmul.f32 0.5, %v7158
    %v7160 = vsub.f32 1.5, %v7159
    %v7161 = vmul.f32 %v7156, %v7160
    %vm7162 = vweird.f32 %v7155
    %vm7163 = vweird.f32 %v7156
    %vm7164 = vmor %vm7162, %vm7163
    %v7165 = vsel %vm7164, %v7156, %v7161
    %v7166 = vmul.f32 %v7165, %v7153
    %v7167 = vmul.f32 %v7106, %v7166
    %v7168 = vmul.f32 %v7107, %v7166
    %v7169 = vmul.f32 %v7108, %v7166
    %v7170 = vmul.f32 %v7109, %v7166
    %v7171 = vmul.f32 %v7110, %v7166
    %v7172 = vmul.f32 %v7111, %v7166
    %v7173 = vmul.f32 %v7112, %v7166
    %v7174 = vmul.f32 %v7113, %v7166
    %v7175 = vmul.f32 %v7127, %v7166
    %v7176 = vsub.f32 %v7154, %v7175
    %v7177 = vadd.f32 %v7167, %v7176
    %v7178 = vadd.f32 %v7168, %v7176
    %v7179 = vadd.f32 %v7169, %v7176
    %v7180 = vadd.f32 %v7170, %v7176
    %v7181 = vadd.f32 %v7171, %v7176
    %v7182 = vadd.f32 %v7172, %v7176
    %v7183 = vadd.f32 %v7173, %v7176
    %v7184 = vadd.f32 %v7174, %v7176
    %vm7185 = vcmp.ge.f32.partialorder %v7177, 0.0
    %vm7186 = vcmp.ge.f32.partialorder %v7178, 0.0
    %vm7187 = vcmp.ge.f32.partialorder %v7179, 0.0
    %vm7188 = vcmp.ge.f32.partialorder %v7180, 0.0
    %vm7189 = vcmp.ge.f32.partialorder %v7181, 0.0
    %vm7190 = vcmp.ge.f32.partialorder %v7182, 0.0
    %vm7191 = vcmp.ge.f32.partialorder %v7183, 0.0
    %vm7192 = vcmp.ge.f32.partialorder %v7184, 0.0
    %v7193 = vmul.f32 %v7177, 0.01
    %v7194 = vmul.f32 %v7178, 0.01
    %v7195 = vmul.f32 %v7179, 0.01
    %v7196 = vmul.f32 %v7180, 0.01
    %v7197 = vmul.f32 %v7181, 0.01
    %v7198 = vmul.f32 %v7182, 0.01
    %v7199 = vmul.f32 %v7183, 0.01
    %v7200 = vmul.f32 %v7184, 0.01
    %v7201 = vsel %vm7185, %v7177, %v7193
    %v7202 = vsel %vm7186, %v7178, %v7194
    %v7203 = vsel %vm7187, %v7179, %v7195
    %v7204 = vsel %vm7188, %v7180, %v7196
    %v7205 = vsel %vm7189, %v7181, %v7197
    %v7206 = vsel %vm7190, %v7182, %v7198
    %v7207 = vsel %vm7191, %v7183, %v7199
    %v7208 = vsel %vm7192, %v7184, %v7200
    %v7209 = vpack.c.bf16 %v7202, %v7201
    %v7210 = vpack.c.bf16 %v7204, %v7203
    %v7211 = vpack.c.bf16 %v7206, %v7205
    %v7212 = vpack.c.bf16 %v7208, %v7207
    %v7213 = vld [vmem:[#allocation5 + $0x6c0] sm:$0xff]
    %v7214 = vld [vmem:[#allocation5 + $0x6c8] sm:$0xf]
    %v7215 = vld [vmem:[#allocation5 + $0x6cc] sm:$0xff]
    %v7216 = vld [vmem:[#allocation5 + $0x6d4] sm:$0xf]
    %v7217 = vld [vmem:[#allocation5 + $0x6d8] sm:$0xff]
    %v7218 = vld [vmem:[#allocation5 + $0x6e0] sm:$0xf]
    %v7219 = vld [vmem:[#allocation5 + $0x6e4] sm:$0xff]
    %v7220 = vld [vmem:[#allocation5 + $0x6ec] sm:$0xf]
    %v7221 = vld [vmem:[#allocation5 + $0x6f0] sm:$0xff]
    %v7222 = vld [vmem:[#allocation5 + $0x6f8] sm:$0xf]
    %v7223 = vld [vmem:[#allocation5 + $0x6fc] sm:$0xff]
    %v7224 = vld [vmem:[#allocation5 + $0x704] sm:$0xf]
    %v7225 = vld [vmem:[#allocation5 + $0x708] sm:$0xff]
    %v7226 = vld [vmem:[#allocation5 + $0x710] sm:$0xf]
    %v7227 = vld [vmem:[#allocation5 + $0x714] sm:$0xff]
    %v7228 = vld [vmem:[#allocation5 + $0x71c] sm:$0xf]
    %v7229 = vld [vmem:[#allocation5 + $0x720] sm:$0xff]
    %v7230 = vld [vmem:[#allocation5 + $0x728] sm:$0xf]
    %v7231 = vld [vmem:[#allocation5 + $0x72c] sm:$0xff]
    %v7232 = vld [vmem:[#allocation5 + $0x734] sm:$0xf]
    %v7233 = vld [vmem:[#allocation5 + $0x738] sm:$0xff]
    %v7234 = vld [vmem:[#allocation5 + $0x740] sm:$0xf]
    %v7235 = vld [vmem:[#allocation5 + $0x744] sm:$0xff]
    %v7236 = vld [vmem:[#allocation5 + $0x74c] sm:$0xf]
    %v7237 = vld [vmem:[#allocation5 + $0x750] sm:$0xff]
    %v7238 = vld [vmem:[#allocation5 + $0x758] sm:$0xf]
    %v7239 = vld [vmem:[#allocation5 + $0x75c] sm:$0xff]
    %v7240 = vld [vmem:[#allocation5 + $0x764] sm:$0xf]
    %v7241 = vld [vmem:[#allocation5 + $0x768] sm:$0xff]
    %v7242 = vld [vmem:[#allocation5 + $0x770] sm:$0xf]
    %v7243 = vld [vmem:[#allocation5 + $0x774] sm:$0xff]
    %v7244 = vld [vmem:[#allocation5 + $0x77c] sm:$0xf]
    %v7277 = vunpack.c.l.b16 %v7213
    %v7278 = vunpack.c.h.b16 %v7213
    %v7279 = vunpack.c.l.b16 %v7214
    %v7280 = vunpack.c.l.b16 %v7215
    %v7281 = vunpack.c.h.b16 %v7215
    %v7282 = vunpack.c.l.b16 %v7216
    %v7283 = vunpack.c.l.b16 %v7217
    %v7284 = vunpack.c.h.b16 %v7217
    %v7285 = vunpack.c.l.b16 %v7218
    %v7286 = vunpack.c.l.b16 %v7219
    %v7287 = vunpack.c.h.b16 %v7219
    %v7288 = vunpack.c.l.b16 %v7220
    %v7289 = vunpack.c.l.b16 %v7221
    %v7290 = vunpack.c.h.b16 %v7221
    %v7291 = vunpack.c.l.b16 %v7222
    %v7292 = vunpack.c.l.b16 %v7223
    %v7293 = vunpack.c.h.b16 %v7223
    %v7294 = vunpack.c.l.b16 %v7224
    %v7295 = vunpack.c.l.b16 %v7225
    %v7296 = vunpack.c.h.b16 %v7225
    %v7297 = vunpack.c.l.b16 %v7226
    %v7298 = vunpack.c.l.b16 %v7227
    %v7299 = vunpack.c.h.b16 %v7227
    %v7300 = vunpack.c.l.b16 %v7228
    %v7301 = vunpack.c.l.b16 %v7229
    %v7302 = vunpack.c.h.b16 %v7229
    %v7303 = vunpack.c.l.b16 %v7230
    %v7304 = vunpack.c.l.b16 %v7231
    %v7305 = vunpack.c.h.b16 %v7231
    %v7306 = vunpack.c.l.b16 %v7232
    %v7307 = vunpack.c.l.b16 %v7233
    %v7308 = vunpack.c.h.b16 %v7233
    %v7309 = vunpack.c.l.b16 %v7234
    %v7310 = vunpack.c.l.b16 %v7235
    %v7311 = vunpack.c.h.b16 %v7235
    %v7312 = vunpack.c.l.b16 %v7236
    %v7313 = vunpack.c.l.b16 %v7237
    %v7314 = vunpack.c.h.b16 %v7237
    %v7315 = vunpack.c.l.b16 %v7238
    %v7316 = vunpack.c.l.b16 %v7239
    %v7317 = vunpack.c.h.b16 %v7239
    %v7318 = vunpack.c.l.b16 %v7240
    %v7319 = vunpack.c.l.b16 %v7241
    %v7320 = vunpack.c.h.b16 %v7241
    %v7321 = vunpack.c.l.b16 %v7242
    %v7322 = vunpack.c.l.b16 %v7243
    %v7323 = vunpack.c.h.b16 %v7243
    %v7324 = vunpack.c.l.b16 %v7244
    %v7325 = vpack.c.b16 %v7280, %v7277
    %v7326 = vpack.c.b16 %v7281, %v7278
    %v7327 = vpack.c.b16 %v7282, %v7279
    %v7328 = vpack.c.b16 %v7286, %v7283
    %v7329 = vpack.c.b16 %v7287, %v7284
    %v7330 = vpack.c.b16 %v7288, %v7285
    %v7331 = vpack.c.b16 %v7292, %v7289
    %v7332 = vpack.c.b16 %v7293, %v7290
    %v7333 = vpack.c.b16 %v7294, %v7291
    %v7334 = vpack.c.b16 %v7298, %v7295
    %v7335 = vpack.c.b16 %v7299, %v7296
    %v7336 = vpack.c.b16 %v7300, %v7297
    %v7337 = vpack.c.b16 %v7304, %v7301
    %v7338 = vpack.c.b16 %v7305, %v7302
    %v7339 = vpack.c.b16 %v7306, %v7303
    %v7340 = vpack.c.b16 %v7310, %v7307
    %v7341 = vpack.c.b16 %v7311, %v7308
    %v7342 = vpack.c.b16 %v7312, %v7309
    %v7343 = vpack.c.b16 %v7316, %v7313
    %v7344 = vpack.c.b16 %v7317, %v7314
    %v7345 = vpack.c.b16 %v7318, %v7315
    %v7346 = vpack.c.b16 %v7322, %v7319
    %v7347 = vpack.c.b16 %v7323, %v7320
    %v7348 = vpack.c.b16 %v7324, %v7321
    %7373 = vmatpush.bf16.msra.mxu0 %v7346
    %7374 = vmatpush.bf16.msra.mxu0 %v7343
    %7375 = vmatpush.bf16.msra.mxu0 %v7340
    %7376 = vmatpush.bf16.msra.mxu0 %v7337
    %7377 = vmatpush.bf16.msra.mxu0 %v7334
    %7378 = vmatpush.bf16.msra.mxu0 %v7331
    %7379 = vmatpush.bf16.msra.mxu0 %v7328
    %7380 = vmatpush.bf16.msra.mxu0 %v7325
    %7381 = vmatmul.bf16.gmra.mxu0 %v7209
    %v7382 = vpop.f32.mrf.mxu0
    %v7383 = vadd.f32 0.0, %v7382
    %v7384 = vpop.f32.mrf.mxu0
    %v7385 = vadd.f32 0.0, %v7384
    %7386 = vmatmul.bf16.gmra.mxu0 %v7210
    %v7387 = vpop.f32.mrf.mxu0
    %v7388 = vadd.f32 0.0, %v7387
    %v7389 = vpop.f32.mrf.mxu0
    %v7390 = vadd.f32 0.0, %v7389
    %7391 = vmatmul.bf16.gmra.mxu0 %v7211
    %v7392 = vpop.f32.mrf.mxu0
    %v7393 = vadd.f32 0.0, %v7392
    %v7394 = vpop.f32.mrf.mxu0
    %v7395 = vadd.f32 0.0, %v7394
    %7396 = vmatmul.bf16.gmra.mxu0 %v7212
    %v7397 = vpop.f32.mrf.mxu0
    %v7398 = vadd.f32 0.0, %v7397
    %v7399 = vpop.f32.mrf.mxu0
    %v7400 = vadd.f32 0.0, %v7399
    %7401 = vdwg.mxu0
    %7402 = vmatpush.bf16.msra.mxu0 %v7347
    %7403 = vmatpush.bf16.msra.mxu0 %v7344
    %7404 = vmatpush.bf16.msra.mxu0 %v7341
    %7405 = vmatpush.bf16.msra.mxu0 %v7338
    %7406 = vmatpush.bf16.msra.mxu0 %v7335
    %7407 = vmatpush.bf16.msra.mxu0 %v7332
    %7408 = vmatpush.bf16.msra.mxu0 %v7329
    %7409 = vmatpush.bf16.msra.mxu0 %v7326
    %7410 = vmatmul.bf16.gmra.mxu0 %v7209
    %v7411 = vpop.f32.mrf.mxu0
    %v7412 = vadd.f32 0.0, %v7411
    %v7413 = vpop.f32.mrf.mxu0
    %v7414 = vadd.f32 0.0, %v7413
    %7415 = vmatmul.bf16.gmra.mxu0 %v7210
    %v7416 = vpop.f32.mrf.mxu0
    %v7417 = vadd.f32 0.0, %v7416
    %v7418 = vpop.f32.mrf.mxu0
    %v7419 = vadd.f32 0.0, %v7418
    %7420 = vmatmul.bf16.gmra.mxu0 %v7211
    %v7421 = vpop.f32.mrf.mxu0
    %v7422 = vadd.f32 0.0, %v7421
    %v7423 = vpop.f32.mrf.mxu0
    %v7424 = vadd.f32 0.0, %v7423
    %7425 = vmatmul.bf16.gmra.mxu0 %v7212
    %v7426 = vpop.f32.mrf.mxu0
    %v7427 = vadd.f32 0.0, %v7426
    %v7428 = vpop.f32.mrf.mxu0
    %v7429 = vadd.f32 0.0, %v7428
    %7430 = vdwg.mxu0
    %7431 = vmatpush.bf16.msra.mxu0 %v7348
    %7432 = vmatpush.bf16.msra.mxu0 %v7345
    %7433 = vmatpush.bf16.msra.mxu0 %v7342
    %7434 = vmatpush.bf16.msra.mxu0 %v7339
    %7435 = vmatpush.bf16.msra.mxu0 %v7336
    %7436 = vmatpush.bf16.msra.mxu0 %v7333
    %7437 = vmatpush.bf16.msra.mxu0 %v7330
    %7438 = vmatpush.bf16.msra.mxu0 %v7327
    %7439 = vmatmul.bf16.gmra.mxu0 %v7209
    %v7440 = vpop.f32.mrf.mxu0
    %v7441 = vadd.f32 0.0, %v7440
    %v7442 = vpop.f32.mrf.mxu0
    %v7443 = vadd.f32 0.0, %v7442
    %7444 = vmatmul.bf16.gmra.mxu0 %v7210
    %v7445 = vpop.f32.mrf.mxu0
    %v7446 = vadd.f32 0.0, %v7445
    %v7447 = vpop.f32.mrf.mxu0
    %v7448 = vadd.f32 0.0, %v7447
    %7449 = vmatmul.bf16.gmra.mxu0 %v7211
    %v7450 = vpop.f32.mrf.mxu0
    %v7451 = vadd.f32 0.0, %v7450
    %v7452 = vpop.f32.mrf.mxu0
    %v7453 = vadd.f32 0.0, %v7452
    %7454 = vmatmul.bf16.gmra.mxu0 %v7212
    %v7455 = vpop.f32.mrf.mxu0
    %v7456 = vadd.f32 0.0, %v7455
    %v7457 = vpop.f32.mrf.mxu0
    %v7458 = vadd.f32 0.0, %v7457
    %7459 = vdwg.mxu0
    %v7460 = vpack.c.bf16 %v7412, %v7383
    %v7461 = vpack.c.bf16 %v7441, %v7441
    %v7462 = vpack.c.bf16 %v7414, %v7385
    %v7463 = vpack.c.bf16 %v7443, %v7443
    %v7464 = vpack.c.bf16 %v7417, %v7388
    %v7465 = vpack.c.bf16 %v7446, %v7446
    %v7466 = vpack.c.bf16 %v7419, %v7390
    %v7467 = vpack.c.bf16 %v7448, %v7448
    %v7468 = vpack.c.bf16 %v7422, %v7393
    %v7469 = vpack.c.bf16 %v7451, %v7451
    %v7470 = vpack.c.bf16 %v7424, %v7395
    %v7471 = vpack.c.bf16 %v7453, %v7453
    %v7472 = vpack.c.bf16 %v7427, %v7398
    %v7473 = vpack.c.bf16 %v7456, %v7456
    %v7474 = vpack.c.bf16 %v7429, %v7400
    %v7475 = vpack.c.bf16 %v7458, %v7458
    %v7476 = vld [vmem:[#allocation11 + $0x184] sm:$0xf]
    %v7477 = vld [vmem:[#allocation11 + $0x188] sm:$0xf]
    %v7478 = vld [vmem:[#allocation11 + $0x18c] sm:$0xf]
    %v7479 = vld [vmem:[#allocation11 + $0x190] sm:$0xf]
    %v7480 = vld [vmem:[#allocation11 + $0x194] sm:$0xf]
    %v7481 = vld [vmem:[#allocation11 + $0x198] sm:$0xf]
    %v7482 = vld [vmem:[#allocation11 + $0x19c] sm:$0xf]
    %v7483 = vld [vmem:[#allocation11 + $0x1a0] sm:$0xf]
    %v7484 = vld [vmem:[#allocation11 + $0x1a4] sm:$0xf]
    %v7485 = vld [vmem:[#allocation11 + $0x1a8] sm:$0xf]
    %v7486 = vld [vmem:[#allocation11 + $0x1ac] sm:$0xf]
    %v7487 = vld [vmem:[#allocation11 + $0x1b0] sm:$0xf]
    %v7488 = vld [vmem:[#allocation11 + $0x1b4] sm:$0xf]
    %v7489 = vld [vmem:[#allocation11 + $0x1b8] sm:$0xf]
    %v7490 = vld [vmem:[#allocation11 + $0x1bc] sm:$0xf]
    %v7491 = vld [vmem:[#allocation11 + $0x1c0] sm:$0x3]
    %v7492 = vld [vmem:[#allocation11 + $0x1c4] sm:$0xf]
    %v7493 = vld [vmem:[#allocation11 + $0x1c8] sm:$0xf]
    %v7494 = vld [vmem:[#allocation11 + $0x1cc] sm:$0xf]
    %v7495 = vld [vmem:[#allocation11 + $0x1d0] sm:$0xf]
    %v7496 = vld [vmem:[#allocation11 + $0x1d4] sm:$0xf]
    %v7497 = vld [vmem:[#allocation11 + $0x1d8] sm:$0xf]
    %v7498 = vld [vmem:[#allocation11 + $0x1dc] sm:$0xf]
    %v7499 = vld [vmem:[#allocation11 + $0x1e0] sm:$0xf]
    %v7500 = vld [vmem:[#allocation11 + $0x1e4] sm:$0xf]
    %v7501 = vld [vmem:[#allocation11 + $0x1e8] sm:$0xf]
    %v7502 = vld [vmem:[#allocation11 + $0x1ec] sm:$0xf]
    %v7503 = vld [vmem:[#allocation11 + $0x1f0] sm:$0xf]
    %v7504 = vld [vmem:[#allocation11 + $0x1f4] sm:$0xf]
    %v7505 = vld [vmem:[#allocation11 + $0x1f8] sm:$0xf]
    %v7506 = vld [vmem:[#allocation11 + $0x1fc] sm:$0xf]
    %v7507 = vld [vmem:[#allocation11 + $0x200] sm:$0x3]
    %v7524 = vunpack.c.l.b16 %v7492
    %v7525 = vunpack.c.l.b16 %v7493
    %v7526 = vunpack.c.l.b16 %v7494
    %v7527 = vunpack.c.l.b16 %v7495
    %v7528 = vunpack.c.l.b16 %v7496
    %v7529 = vunpack.c.l.b16 %v7497
    %v7530 = vunpack.c.l.b16 %v7498
    %v7531 = vunpack.c.l.b16 %v7499
    %v7532 = vunpack.c.l.b16 %v7500
    %v7533 = vunpack.c.l.b16 %v7501
    %v7534 = vunpack.c.l.b16 %v7502
    %v7535 = vunpack.c.l.b16 %v7503
    %v7536 = vunpack.c.l.b16 %v7504
    %v7537 = vunpack.c.l.b16 %v7505
    %v7538 = vunpack.c.l.b16 %v7506
    %v7539 = vunpack.c.l.b16 %v7507
    %v7540 = vpack.c.b16 %v7525, %v7524
    %v7541 = vpack.c.b16 %v7527, %v7526
    %v7542 = vpack.c.b16 %v7529, %v7528
    %v7543 = vpack.c.b16 %v7531, %v7530
    %v7544 = vpack.c.b16 %v7533, %v7532
    %v7545 = vpack.c.b16 %v7535, %v7534
    %v7546 = vpack.c.b16 %v7537, %v7536
    %v7547 = vpack.c.b16 %v7539, %v7538
    %v7556 = vunpack.c.h.b16 %v7460
    %v7557 = vunpack.c.h.b16 %v7462
    %v7558 = vunpack.c.h.b16 %v7464
    %v7559 = vunpack.c.h.b16 %v7466
    %v7560 = vunpack.c.h.b16 %v7468
    %v7561 = vunpack.c.h.b16 %v7470
    %v7562 = vunpack.c.h.b16 %v7472
    %v7563 = vunpack.c.h.b16 %v7474
    %v7564 = vpack.c.b16 %v7557, %v7556
    %v7565 = vpack.c.b16 %v7559, %v7558
    %v7566 = vpack.c.b16 %v7561, %v7560
    %v7567 = vpack.c.b16 %v7563, %v7562
    %v7573 = vsel %vm1253, %v7540, 0
    %v7576 = vsel %vm1253, %v7541, 0
    %v7579 = vsel %vm1253, %v7542, 0
    %v7582 = vsel %vm1253, %v7543, 0
    %v7585 = vsel %vm1253, %v7544, 0
    %v7588 = vsel %vm1253, %v7545, 0
    %v7591 = vsel %vm1253, %v7546, 0
    %v7594 = vsel %vm1253, %v7547, 0
    %7596 = vmatpush.bf16.msra.mxu0 0
    %7597 = vmatpush.bf16.msra.mxu0 0
    %7598 = vmatpush.bf16.msra.mxu0 0
    %7599 = vmatpush.bf16.msra.mxu0 0
    %7600 = vmatpush.bf16.msra.mxu0 %v7567
    %7601 = vmatpush.bf16.msra.mxu0 %v7566
    %7602 = vmatpush.bf16.msra.mxu0 %v7565
    %7603 = vmatpush.bf16.msra.mxu0 %v7564
    %7604 = vmatmul.bf16.gmra.mxu0 %v7573
    %v7605 = vpop.f32.mrf.mxu0
    %v7606 = vadd.f32 0.0, %v7605
    %v7607 = vpop.f32.mrf.mxu0
    %v7608 = vadd.f32 0.0, %v7607
    %7609 = vmatmul.bf16.gmra.mxu0 %v7576
    %v7610 = vpop.f32.mrf.mxu0
    %v7611 = vadd.f32 0.0, %v7610
    %v7612 = vpop.f32.mrf.mxu0
    %v7613 = vadd.f32 0.0, %v7612
    %7614 = vmatmul.bf16.gmra.mxu0 %v7579
    %v7615 = vpop.f32.mrf.mxu0
    %v7616 = vadd.f32 0.0, %v7615
    %v7617 = vpop.f32.mrf.mxu0
    %v7618 = vadd.f32 0.0, %v7617
    %7619 = vmatmul.bf16.gmra.mxu0 %v7582
    %v7620 = vpop.f32.mrf.mxu0
    %v7621 = vadd.f32 0.0, %v7620
    %v7622 = vpop.f32.mrf.mxu0
    %v7623 = vadd.f32 0.0, %v7622
    %7624 = vmatmul.bf16.gmra.mxu0 %v7585
    %v7625 = vpop.f32.mrf.mxu0
    %v7626 = vadd.f32 0.0, %v7625
    %v7627 = vpop.f32.mrf.mxu0
    %v7628 = vadd.f32 0.0, %v7627
    %7629 = vmatmul.bf16.gmra.mxu0 %v7588
    %v7630 = vpop.f32.mrf.mxu0
    %v7631 = vadd.f32 0.0, %v7630
    %v7632 = vpop.f32.mrf.mxu0
    %v7633 = vadd.f32 0.0, %v7632
    %7634 = vmatmul.bf16.gmra.mxu0 %v7591
    %v7635 = vpop.f32.mrf.mxu0
    %v7636 = vadd.f32 0.0, %v7635
    %v7637 = vpop.f32.mrf.mxu0
    %v7638 = vadd.f32 0.0, %v7637
    %7639 = vmatmul.bf16.gmra.mxu0 %v7594
    %v7640 = vpop.f32.mrf.mxu0
    %v7641 = vadd.f32 0.0, %v7640
    %v7642 = vpop.f32.mrf.mxu0
    %v7643 = vadd.f32 0.0, %v7642
    %7644 = vdwg.mxu0
    %v7661 = vunpack.c.l.b16 %v7476
    %v7662 = vunpack.c.l.b16 %v7477
    %v7663 = vunpack.c.l.b16 %v7478
    %v7664 = vunpack.c.l.b16 %v7479
    %v7665 = vunpack.c.l.b16 %v7480
    %v7666 = vunpack.c.l.b16 %v7481
    %v7667 = vunpack.c.l.b16 %v7482
    %v7668 = vunpack.c.l.b16 %v7483
    %v7669 = vunpack.c.l.b16 %v7484
    %v7670 = vunpack.c.l.b16 %v7485
    %v7671 = vunpack.c.l.b16 %v7486
    %v7672 = vunpack.c.l.b16 %v7487
    %v7673 = vunpack.c.l.b16 %v7488
    %v7674 = vunpack.c.l.b16 %v7489
    %v7675 = vunpack.c.l.b16 %v7490
    %v7676 = vunpack.c.l.b16 %v7491
    %v7677 = vpack.c.b16 %v7662, %v7661
    %v7678 = vpack.c.b16 %v7664, %v7663
    %v7679 = vpack.c.b16 %v7666, %v7665
    %v7680 = vpack.c.b16 %v7668, %v7667
    %v7681 = vpack.c.b16 %v7670, %v7669
    %v7682 = vpack.c.b16 %v7672, %v7671
    %v7683 = vpack.c.b16 %v7674, %v7673
    %v7684 = vpack.c.b16 %v7676, %v7675
    %v7685 = vunpack.c.l.b16 %v7460
    %v7686 = vunpack.c.l.b16 %v7462
    %v7687 = vunpack.c.l.b16 %v7464
    %v7688 = vunpack.c.l.b16 %v7466
    %v7689 = vunpack.c.l.b16 %v7468
    %v7690 = vunpack.c.l.b16 %v7470
    %v7691 = vunpack.c.l.b16 %v7472
    %v7692 = vunpack.c.l.b16 %v7474
    %v7693 = vpack.c.b16 %v7686, %v7685
    %v7694 = vpack.c.b16 %v7688, %v7687
    %v7695 = vpack.c.b16 %v7690, %v7689
    %v7696 = vpack.c.b16 %v7692, %v7691
    %v7702 = vsel %vm1253, %v7677, 0
    %v7705 = vsel %vm1253, %v7678, 0
    %v7708 = vsel %vm1253, %v7679, 0
    %v7711 = vsel %vm1253, %v7680, 0
    %v7714 = vsel %vm1253, %v7681, 0
    %v7717 = vsel %vm1253, %v7682, 0
    %v7720 = vsel %vm1253, %v7683, 0
    %v7723 = vsel %vm1253, %v7684, 0
    %7725 = vmatpush.bf16.msra.mxu0 0
    %7726 = vmatpush.bf16.msra.mxu0 0
    %7727 = vmatpush.bf16.msra.mxu0 0
    %7728 = vmatpush.bf16.msra.mxu0 0
    %7729 = vmatpush.bf16.msra.mxu0 %v7696
    %7730 = vmatpush.bf16.msra.mxu0 %v7695
    %7731 = vmatpush.bf16.msra.mxu0 %v7694
    %7732 = vmatpush.bf16.msra.mxu0 %v7693
    %7733 = vmatmul.bf16.gmra.mxu0 %v7702
    %v7734 = vpop.f32.mrf.mxu0
    %v7735 = vadd.f32 %v7606, %v7734
    %v7736 = vpop.f32.mrf.mxu0
    %v7737 = vadd.f32 %v7608, %v7736
    %7738 = vmatmul.bf16.gmra.mxu0 %v7705
    %v7739 = vpop.f32.mrf.mxu0
    %v7740 = vadd.f32 %v7611, %v7739
    %v7741 = vpop.f32.mrf.mxu0
    %v7742 = vadd.f32 %v7613, %v7741
    %7743 = vmatmul.bf16.gmra.mxu0 %v7708
    %v7744 = vpop.f32.mrf.mxu0
    %v7745 = vadd.f32 %v7616, %v7744
    %v7746 = vpop.f32.mrf.mxu0
    %v7747 = vadd.f32 %v7618, %v7746
    %7748 = vmatmul.bf16.gmra.mxu0 %v7711
    %v7749 = vpop.f32.mrf.mxu0
    %v7750 = vadd.f32 %v7621, %v7749
    %v7751 = vpop.f32.mrf.mxu0
    %v7752 = vadd.f32 %v7623, %v7751
    %7753 = vmatmul.bf16.gmra.mxu0 %v7714
    %v7754 = vpop.f32.mrf.mxu0
    %v7755 = vadd.f32 %v7626, %v7754
    %v7756 = vpop.f32.mrf.mxu0
    %v7757 = vadd.f32 %v7628, %v7756
    %7758 = vmatmul.bf16.gmra.mxu0 %v7717
    %v7759 = vpop.f32.mrf.mxu0
    %v7760 = vadd.f32 %v7631, %v7759
    %v7761 = vpop.f32.mrf.mxu0
    %v7762 = vadd.f32 %v7633, %v7761
    %7763 = vmatmul.bf16.gmra.mxu0 %v7720
    %v7764 = vpop.f32.mrf.mxu0
    %v7765 = vadd.f32 %v7636, %v7764
    %v7766 = vpop.f32.mrf.mxu0
    %v7767 = vadd.f32 %v7638, %v7766
    %7768 = vmatmul.bf16.gmra.mxu0 %v7723
    %v7769 = vpop.f32.mrf.mxu0
    %v7770 = vadd.f32 %v7641, %v7769
    %v7771 = vpop.f32.mrf.mxu0
    %v7772 = vadd.f32 %v7643, %v7771
    %7773 = vdwg.mxu0
    %v7774 = vld [vmem:[#allocation11 + $0x204] sm:$0xf]
    %v7775 = vld [vmem:[#allocation11 + $0x208] sm:$0xf]
    %v7776 = vld [vmem:[#allocation11 + $0x20c] sm:$0xf]
    %v7777 = vld [vmem:[#allocation11 + $0x210] sm:$0xf]
    %v7778 = vld [vmem:[#allocation11 + $0x214] sm:$0xf]
    %v7779 = vld [vmem:[#allocation11 + $0x218] sm:$0xf]
    %v7780 = vld [vmem:[#allocation11 + $0x21c] sm:$0xf]
    %v7781 = vld [vmem:[#allocation11 + $0x220] sm:$0xf]
    %v7782 = vld [vmem:[#allocation11 + $0x224] sm:$0xf]
    %v7783 = vld [vmem:[#allocation11 + $0x228] sm:$0xf]
    %v7784 = vld [vmem:[#allocation11 + $0x22c] sm:$0xf]
    %v7785 = vld [vmem:[#allocation11 + $0x230] sm:$0xf]
    %v7786 = vld [vmem:[#allocation11 + $0x234] sm:$0xf]
    %v7787 = vld [vmem:[#allocation11 + $0x238] sm:$0xf]
    %v7788 = vld [vmem:[#allocation11 + $0x23c] sm:$0xf]
    %v7789 = vld [vmem:[#allocation11 + $0x240] sm:$0x3]
    %v7806 = vunpack.c.l.b16 %v7774
    %v7807 = vunpack.c.l.b16 %v7775
    %v7808 = vunpack.c.l.b16 %v7776
    %v7809 = vunpack.c.l.b16 %v7777
    %v7810 = vunpack.c.l.b16 %v7778
    %v7811 = vunpack.c.l.b16 %v7779
    %v7812 = vunpack.c.l.b16 %v7780
    %v7813 = vunpack.c.l.b16 %v7781
    %v7814 = vunpack.c.l.b16 %v7782
    %v7815 = vunpack.c.l.b16 %v7783
    %v7816 = vunpack.c.l.b16 %v7784
    %v7817 = vunpack.c.l.b16 %v7785
    %v7818 = vunpack.c.l.b16 %v7786
    %v7819 = vunpack.c.l.b16 %v7787
    %v7820 = vunpack.c.l.b16 %v7788
    %v7821 = vunpack.c.l.b16 %v7789
    %v7822 = vpack.c.b16 %v7807, %v7806
    %v7823 = vpack.c.b16 %v7809, %v7808
    %v7824 = vpack.c.b16 %v7811, %v7810
    %v7825 = vpack.c.b16 %v7813, %v7812
    %v7826 = vpack.c.b16 %v7815, %v7814
    %v7827 = vpack.c.b16 %v7817, %v7816
    %v7828 = vpack.c.b16 %v7819, %v7818
    %v7829 = vpack.c.b16 %v7821, %v7820
    %v7838 = vunpack.c.l.b16 %v7461
    %v7839 = vunpack.c.l.b16 %v7463
    %v7840 = vunpack.c.l.b16 %v7465
    %v7841 = vunpack.c.l.b16 %v7467
    %v7842 = vunpack.c.l.b16 %v7469
    %v7843 = vunpack.c.l.b16 %v7471
    %v7844 = vunpack.c.l.b16 %v7473
    %v7845 = vunpack.c.l.b16 %v7475
    %v7846 = vpack.c.b16 %v7839, %v7838
    %v7847 = vpack.c.b16 %v7841, %v7840
    %v7848 = vpack.c.b16 %v7843, %v7842
    %v7849 = vpack.c.b16 %v7845, %v7844
    %v7855 = vsel %vm1253, %v7822, 0
    %v7858 = vsel %vm1253, %v7823, 0
    %v7861 = vsel %vm1253, %v7824, 0
    %v7864 = vsel %vm1253, %v7825, 0
    %v7867 = vsel %vm1253, %v7826, 0
    %v7870 = vsel %vm1253, %v7827, 0
    %v7873 = vsel %vm1253, %v7828, 0
    %v7876 = vsel %vm1253, %v7829, 0
    %7878 = vmatpush.bf16.msra.mxu0 0
    %7879 = vmatpush.bf16.msra.mxu0 0
    %7880 = vmatpush.bf16.msra.mxu0 0
    %7881 = vmatpush.bf16.msra.mxu0 0
    %7882 = vmatpush.bf16.msra.mxu0 %v7849
    %7883 = vmatpush.bf16.msra.mxu0 %v7848
    %7884 = vmatpush.bf16.msra.mxu0 %v7847
    %7885 = vmatpush.bf16.msra.mxu0 %v7846
    %7886 = vmatmul.bf16.gmra.mxu0 %v7855
    %v7887 = vpop.f32.mrf.mxu0
    %v7888 = vadd.f32 0.0, %v7887
    %v7889 = vpop.f32.mrf.mxu0
    %v7890 = vadd.f32 0.0, %v7889
    %7891 = vmatmul.bf16.gmra.mxu0 %v7858
    %v7892 = vpop.f32.mrf.mxu0
    %v7893 = vadd.f32 0.0, %v7892
    %v7894 = vpop.f32.mrf.mxu0
    %v7895 = vadd.f32 0.0, %v7894
    %7896 = vmatmul.bf16.gmra.mxu0 %v7861
    %v7897 = vpop.f32.mrf.mxu0
    %v7898 = vadd.f32 0.0, %v7897
    %v7899 = vpop.f32.mrf.mxu0
    %v7900 = vadd.f32 0.0, %v7899
    %7901 = vmatmul.bf16.gmra.mxu0 %v7864
    %v7902 = vpop.f32.mrf.mxu0
    %v7903 = vadd.f32 0.0, %v7902
    %v7904 = vpop.f32.mrf.mxu0
    %v7905 = vadd.f32 0.0, %v7904
    %7906 = vmatmul.bf16.gmra.mxu0 %v7867
    %v7907 = vpop.f32.mrf.mxu0
    %v7908 = vadd.f32 0.0, %v7907
    %v7909 = vpop.f32.mrf.mxu0
    %v7910 = vadd.f32 0.0, %v7909
    %7911 = vmatmul.bf16.gmra.mxu0 %v7870
    %v7912 = vpop.f32.mrf.mxu0
    %v7913 = vadd.f32 0.0, %v7912
    %v7914 = vpop.f32.mrf.mxu0
    %v7915 = vadd.f32 0.0, %v7914
    %7916 = vmatmul.bf16.gmra.mxu0 %v7873
    %v7917 = vpop.f32.mrf.mxu0
    %v7918 = vadd.f32 0.0, %v7917
    %v7919 = vpop.f32.mrf.mxu0
    %v7920 = vadd.f32 0.0, %v7919
    %7921 = vmatmul.bf16.gmra.mxu0 %v7876
    %v7922 = vpop.f32.mrf.mxu0
    %v7923 = vadd.f32 0.0, %v7922
    %v7924 = vpop.f32.mrf.mxu0
    %v7925 = vadd.f32 0.0, %v7924
    %7926 = vdwg.mxu0
    %v7927 = vadd.f32 %v7735, %v7888
    %v7928 = vadd.f32 %v7737, %v7890
    %v7929 = vadd.f32 %v7740, %v7893
    %v7930 = vadd.f32 %v7742, %v7895
    %v7931 = vadd.f32 %v7745, %v7898
    %v7932 = vadd.f32 %v7747, %v7900
    %v7933 = vadd.f32 %v7750, %v7903
    %v7934 = vadd.f32 %v7752, %v7905
    %v7935 = vadd.f32 %v7755, %v7908
    %v7936 = vadd.f32 %v7757, %v7910
    %v7937 = vadd.f32 %v7760, %v7913
    %v7938 = vadd.f32 %v7762, %v7915
    %v7939 = vadd.f32 %v7765, %v7918
    %v7940 = vadd.f32 %v7767, %v7920
    %v7941 = vadd.f32 %v7770, %v7923
    %v7942 = vadd.f32 %v7772, %v7925
    %v7943 = vadd.f32 %v7927, %v7928
    %v7944 = vadd.f32 %v7943, %v7929
    %v7945 = vadd.f32 %v7944, %v7930
    %v7946 = vadd.f32 %v7945, %v7931
    %v7947 = vadd.f32 %v7946, %v7932
    %v7948 = vadd.f32 %v7947, %v7933
    %v7949 = vadd.f32 %v7948, %v7934
    %v7950 = vadd.f32 %v7949, %v7935
    %v7951 = vadd.f32 %v7950, %v7936
    %v7952 = vadd.f32 %v7951, %v7937
    %v7953 = vadd.f32 %v7952, %v7938
    %v7954 = vadd.f32 %v7953, %v7939
    %v7955 = vadd.f32 %v7954, %v7940
    %v7956 = vadd.f32 %v7955, %v7941
    %v7957 = vsel %vm2537, %v7942, 0.0
    %v7958 = vadd.f32 %v7956, %v7957
    %v7959 = vrot.slane %v7958, 4
    %v7960 = vadd.f32 %v7958, %v7959
    %v7961 = vrot.slane %v7960, 2
    %v7962 = vadd.f32 %v7960, %v7961
    %v7963 = vrot.slane %v7962, 1
    %v7964 = vadd.f32 %v7962, %v7963
    %v7965 = vmul.f32 %v7964, 0.008064516
    %v7966 = vmul.f32 %v7927, %v7927
    %v7967 = vmul.f32 %v7928, %v7928
    %v7968 = vmul.f32 %v7929, %v7929
    %v7969 = vmul.f32 %v7930, %v7930
    %v7970 = vmul.f32 %v7931, %v7931
    %v7971 = vmul.f32 %v7932, %v7932
    %v7972 = vmul.f32 %v7933, %v7933
    %v7973 = vmul.f32 %v7934, %v7934
    %v7974 = vmul.f32 %v7935, %v7935
    %v7975 = vmul.f32 %v7936, %v7936
    %v7976 = vmul.f32 %v7937, %v7937
    %v7977 = vmul.f32 %v7938, %v7938
    %v7978 = vmul.f32 %v7939, %v7939
    %v7979 = vmul.f32 %v7940, %v7940
    %v7980 = vmul.f32 %v7941, %v7941
    %v7981 = vmul.f32 %v7942, %v7942
    %v7982 = vadd.f32 %v7966, %v7967
    %v7983 = vadd.f32 %v7982, %v7968
    %v7984 = vadd.f32 %v7983, %v7969
    %v7985 = vadd.f32 %v7984, %v7970
    %v7986 = vadd.f32 %v7985, %v7971
    %v7987 = vadd.f32 %v7986, %v7972
    %v7988 = vadd.f32 %v7987, %v7973
    %v7989 = vadd.f32 %v7988, %v7974
    %v7990 = vadd.f32 %v7989, %v7975
    %v7991 = vadd.f32 %v7990, %v7976
    %v7992 = vadd.f32 %v7991, %v7977
    %v7993 = vadd.f32 %v7992, %v7978
    %v7994 = vadd.f32 %v7993, %v7979
    %v7995 = vadd.f32 %v7994, %v7980
    %v7996 = vsel %vm2537, %v7981, 0.0
    %v7997 = vadd.f32 %v7995, %v7996
    %v7998 = vrot.slane %v7997, 4
    %v7999 = vadd.f32 %v7997, %v7998
    %v8000 = vrot.slane %v7999, 2
    %v8001 = vadd.f32 %v7999, %v8000
    %v8002 = vrot.slane %v8001, 1
    %v8003 = vadd.f32 %v8001, %v8002
    %v8004 = vmul.f32 %v8003, 0.008064516
    %v8005 = vmul.f32 %v7965, %v7965
    %v8006 = vsub.f32 %v8004, %v8005
    %v8007 = vmax.f32 %v8006, 0.0
    %v8008 = vld [vmem:[%s7 + $0x60] ss:$0 sm:$0xff]
    %v8009 = vld [vmem:[%s7 + $0x61] ss:$0 sm:$0xff]
    %v8010 = vadd.f32 %v8007, 1e-05
    %v8011 = vrsqrt.pop %v8010
    %v8012 = vmul.f32 %v8011, %v8010
    %v8013 = vmul.f32 %v8012, %v8011
    %v8014 = vmul.f32 0.5, %v8013
    %v8015 = vsub.f32 1.5, %v8014
    %v8016 = vmul.f32 %v8011, %v8015
    %vm8017 = vweird.f32 %v8010
    %vm8018 = vweird.f32 %v8011
    %vm8019 = vmor %vm8017, %vm8018
    %v8020 = vsel %vm8019, %v8011, %v8016
    %v8021 = vmul.f32 %v8020, %v8008
    %v8022 = vmul.f32 %v7927, %v8021
    %v8023 = vmul.f32 %v7928, %v8021
    %v8024 = vmul.f32 %v7929, %v8021
    %v8025 = vmul.f32 %v7930, %v8021
    %v8026 = vmul.f32 %v7931, %v8021
    %v8027 = vmul.f32 %v7932, %v8021
    %v8028 = vmul.f32 %v7933, %v8021
    %v8029 = vmul.f32 %v7934, %v8021
    %v8030 = vmul.f32 %v7935, %v8021
    %v8031 = vmul.f32 %v7936, %v8021
    %v8032 = vmul.f32 %v7937, %v8021
    %v8033 = vmul.f32 %v7938, %v8021
    %v8034 = vmul.f32 %v7939, %v8021
    %v8035 = vmul.f32 %v7940, %v8021
    %v8036 = vmul.f32 %v7941, %v8021
    %v8037 = vmul.f32 %v7942, %v8021
    %v8038 = vmul.f32 %v7965, %v8021
    %v8039 = vsub.f32 %v8009, %v8038
    %v8040 = vadd.f32 %v8022, %v8039
    %v8041 = vadd.f32 %v8023, %v8039
    %v8042 = vadd.f32 %v8024, %v8039
    %v8043 = vadd.f32 %v8025, %v8039
    %v8044 = vadd.f32 %v8026, %v8039
    %v8045 = vadd.f32 %v8027, %v8039
    %v8046 = vadd.f32 %v8028, %v8039
    %v8047 = vadd.f32 %v8029, %v8039
    %v8048 = vadd.f32 %v8030, %v8039
    %v8049 = vadd.f32 %v8031, %v8039
    %v8050 = vadd.f32 %v8032, %v8039
    %v8051 = vadd.f32 %v8033, %v8039
    %v8052 = vadd.f32 %v8034, %v8039
    %v8053 = vadd.f32 %v8035, %v8039
    %v8054 = vadd.f32 %v8036, %v8039
    %v8055 = vadd.f32 %v8037, %v8039
    %vm8056 = vcmp.ge.f32.partialorder %v8040, 0.0
    %vm8057 = vcmp.ge.f32.partialorder %v8041, 0.0
    %vm8058 = vcmp.ge.f32.partialorder %v8042, 0.0
    %vm8059 = vcmp.ge.f32.partialorder %v8043, 0.0
    %vm8060 = vcmp.ge.f32.partialorder %v8044, 0.0
    %vm8061 = vcmp.ge.f32.partialorder %v8045, 0.0
    %vm8062 = vcmp.ge.f32.partialorder %v8046, 0.0
    %vm8063 = vcmp.ge.f32.partialorder %v8047, 0.0
    %vm8064 = vcmp.ge.f32.partialorder %v8048, 0.0
    %vm8065 = vcmp.ge.f32.partialorder %v8049, 0.0
    %vm8066 = vcmp.ge.f32.partialorder %v8050, 0.0
    %vm8067 = vcmp.ge.f32.partialorder %v8051, 0.0
    %vm8068 = vcmp.ge.f32.partialorder %v8052, 0.0
    %vm8069 = vcmp.ge.f32.partialorder %v8053, 0.0
    %vm8070 = vcmp.ge.f32.partialorder %v8054, 0.0
    %vm8071 = vcmp.ge.f32.partialorder %v8055, 0.0
    %v8072 = vmul.f32 %v8040, 0.01
    %v8073 = vmul.f32 %v8041, 0.01
    %v8074 = vmul.f32 %v8042, 0.01
    %v8075 = vmul.f32 %v8043, 0.01
    %v8076 = vmul.f32 %v8044, 0.01
    %v8077 = vmul.f32 %v8045, 0.01
    %v8078 = vmul.f32 %v8046, 0.01
    %v8079 = vmul.f32 %v8047, 0.01
    %v8080 = vmul.f32 %v8048, 0.01
    %v8081 = vmul.f32 %v8049, 0.01
    %v8082 = vmul.f32 %v8050, 0.01
    %v8083 = vmul.f32 %v8051, 0.01
    %v8084 = vmul.f32 %v8052, 0.01
    %v8085 = vmul.f32 %v8053, 0.01
    %v8086 = vmul.f32 %v8054, 0.01
    %v8087 = vmul.f32 %v8055, 0.01
    %v8088 = vsel %vm8056, %v8040, %v8072
    %v8089 = vsel %vm8057, %v8041, %v8073
    %v8090 = vsel %vm8058, %v8042, %v8074
    %v8091 = vsel %vm8059, %v8043, %v8075
    %v8092 = vsel %vm8060, %v8044, %v8076
    %v8093 = vsel %vm8061, %v8045, %v8077
    %v8094 = vsel %vm8062, %v8046, %v8078
    %v8095 = vsel %vm8063, %v8047, %v8079
    %v8096 = vsel %vm8064, %v8048, %v8080
    %v8097 = vsel %vm8065, %v8049, %v8081
    %v8098 = vsel %vm8066, %v8050, %v8082
    %v8099 = vsel %vm8067, %v8051, %v8083
    %v8100 = vsel %vm8068, %v8052, %v8084
    %v8101 = vsel %vm8069, %v8053, %v8085
    %v8102 = vsel %vm8070, %v8054, %v8086
    %v8103 = vsel %vm8071, %v8055, %v8087
    %v8104 = vpack.c.bf16 %v8089, %v8088
    %v8105 = vpack.c.bf16 %v8091, %v8090
    %v8106 = vpack.c.bf16 %v8093, %v8092
    %v8107 = vpack.c.bf16 %v8095, %v8094
    %v8108 = vpack.c.bf16 %v8097, %v8096
    %v8109 = vpack.c.bf16 %v8099, %v8098
    %v8110 = vpack.c.bf16 %v8101, %v8100
    %v8111 = vpack.c.bf16 %v8103, %v8102
    %v8112 = vld [vmem:[#allocation8] sm:$0xff]
    %v8113 = vld [vmem:[#allocation8 + $0x8] sm:$0xff]
    %v8114 = vld [vmem:[#allocation8 + $0x10] sm:$0xf]
    %v8115 = vld [vmem:[#allocation8 + $0x14] sm:$0xff]
    %v8116 = vld [vmem:[#allocation8 + $0x1c] sm:$0xff]
    %v8117 = vld [vmem:[#allocation8 + $0x24] sm:$0xf]
    %v8118 = vld [vmem:[#allocation8 + $0x28] sm:$0xff]
    %v8119 = vld [vmem:[#allocation8 + $0x30] sm:$0xff]
    %v8120 = vld [vmem:[#allocation8 + $0x38] sm:$0xf]
    %v8121 = vld [vmem:[#allocation8 + $0x3c] sm:$0xff]
    %v8122 = vld [vmem:[#allocation8 + $0x44] sm:$0xff]
    %v8123 = vld [vmem:[#allocation8 + $0x4c] sm:$0xf]
    %v8124 = vld [vmem:[#allocation8 + $0x50] sm:$0xff]
    %v8125 = vld [vmem:[#allocation8 + $0x58] sm:$0xff]
    %v8126 = vld [vmem:[#allocation8 + $0x60] sm:$0xf]
    %v8127 = vld [vmem:[#allocation8 + $0x64] sm:$0xff]
    %v8128 = vld [vmem:[#allocation8 + $0x6c] sm:$0xff]
    %v8129 = vld [vmem:[#allocation8 + $0x74] sm:$0xf]
    %v8130 = vld [vmem:[#allocation8 + $0x78] sm:$0xff]
    %v8131 = vld [vmem:[#allocation8 + $0x80] sm:$0xff]
    %v8132 = vld [vmem:[#allocation8 + $0x88] sm:$0xf]
    %v8133 = vld [vmem:[#allocation8 + $0x8c] sm:$0xff]
    %v8134 = vld [vmem:[#allocation8 + $0x94] sm:$0xff]
    %v8135 = vld [vmem:[#allocation8 + $0x9c] sm:$0xf]
    %v8136 = vld [vmem:[#allocation8 + $0xa0] sm:$0xff]
    %v8137 = vld [vmem:[#allocation8 + $0xa8] sm:$0xff]
    %v8138 = vld [vmem:[#allocation8 + $0xb0] sm:$0xf]
    %v8139 = vld [vmem:[#allocation8 + $0xb4] sm:$0xff]
    %v8140 = vld [vmem:[#allocation8 + $0xbc] sm:$0xff]
    %v8141 = vld [vmem:[#allocation8 + $0xc4] sm:$0xf]
    %v8142 = vld [vmem:[#allocation8 + $0xc8] sm:$0xff]
    %v8143 = vld [vmem:[#allocation8 + $0xd0] sm:$0xff]
    %v8144 = vld [vmem:[#allocation8 + $0xd8] sm:$0xf]
    %v8145 = vld [vmem:[#allocation8 + $0xdc] sm:$0xff]
    %v8146 = vld [vmem:[#allocation8 + $0xe4] sm:$0xff]
    %v8147 = vld [vmem:[#allocation8 + $0xec] sm:$0xf]
    %v8148 = vld [vmem:[#allocation8 + $0xf0] sm:$0xff]
    %v8149 = vld [vmem:[#allocation8 + $0xf8] sm:$0xff]
    %v8150 = vld [vmem:[#allocation8 + $0x100] sm:$0xf]
    %v8151 = vld [vmem:[#allocation8 + $0x104] sm:$0xff]
    %v8152 = vld [vmem:[#allocation8 + $0x10c] sm:$0xff]
    %v8153 = vld [vmem:[#allocation8 + $0x114] sm:$0xf]
    %v8154 = vld [vmem:[#allocation8 + $0x118] sm:$0xff]
    %v8155 = vld [vmem:[#allocation8 + $0x120] sm:$0xff]
    %v8156 = vld [vmem:[#allocation8 + $0x128] sm:$0xf]
    %v8157 = vld [vmem:[#allocation8 + $0x12c] sm:$0xff]
    %v8158 = vld [vmem:[#allocation8 + $0x134] sm:$0xff]
    %v8159 = vld [vmem:[#allocation8 + $0x13c] sm:$0xf]
    %v8208 = vunpack.c.l.b16 %v8112
    %v8209 = vunpack.c.h.b16 %v8112
    %v8210 = vunpack.c.l.b16 %v8113
    %v8211 = vunpack.c.h.b16 %v8113
    %v8212 = vunpack.c.l.b16 %v8114
    %v8213 = vunpack.c.l.b16 %v8115
    %v8214 = vunpack.c.h.b16 %v8115
    %v8215 = vunpack.c.l.b16 %v8116
    %v8216 = vunpack.c.h.b16 %v8116
    %v8217 = vunpack.c.l.b16 %v8117
    %v8218 = vunpack.c.l.b16 %v8118
    %v8219 = vunpack.c.h.b16 %v8118
    %v8220 = vunpack.c.l.b16 %v8119
    %v8221 = vunpack.c.h.b16 %v8119
    %v8222 = vunpack.c.l.b16 %v8120
    %v8223 = vunpack.c.l.b16 %v8121
    %v8224 = vunpack.c.h.b16 %v8121
    %v8225 = vunpack.c.l.b16 %v8122
    %v8226 = vunpack.c.h.b16 %v8122
    %v8227 = vunpack.c.l.b16 %v8123
    %v8228 = vunpack.c.l.b16 %v8124
    %v8229 = vunpack.c.h.b16 %v8124
    %v8230 = vunpack.c.l.b16 %v8125
    %v8231 = vunpack.c.h.b16 %v8125
    %v8232 = vunpack.c.l.b16 %v8126
    %v8233 = vunpack.c.l.b16 %v8127
    %v8234 = vunpack.c.h.b16 %v8127
    %v8235 = vunpack.c.l.b16 %v8128
    %v8236 = vunpack.c.h.b16 %v8128
    %v8237 = vunpack.c.l.b16 %v8129
    %v8238 = vunpack.c.l.b16 %v8130
    %v8239 = vunpack.c.h.b16 %v8130
    %v8240 = vunpack.c.l.b16 %v8131
    %v8241 = vunpack.c.h.b16 %v8131
    %v8242 = vunpack.c.l.b16 %v8132
    %v8243 = vunpack.c.l.b16 %v8133
    %v8244 = vunpack.c.h.b16 %v8133
    %v8245 = vunpack.c.l.b16 %v8134
    %v8246 = vunpack.c.h.b16 %v8134
    %v8247 = vunpack.c.l.b16 %v8135
    %v8248 = vunpack.c.l.b16 %v8136
    %v8249 = vunpack.c.h.b16 %v8136
    %v8250 = vunpack.c.l.b16 %v8137
    %v8251 = vunpack.c.h.b16 %v8137
    %v8252 = vunpack.c.l.b16 %v8138
    %v8253 = vunpack.c.l.b16 %v8139
    %v8254 = vunpack.c.h.b16 %v8139
    %v8255 = vunpack.c.l.b16 %v8140
    %v8256 = vunpack.c.h.b16 %v8140
    %v8257 = vunpack.c.l.b16 %v8141
    %v8258 = vunpack.c.l.b16 %v8142
    %v8259 = vunpack.c.h.b16 %v8142
    %v8260 = vunpack.c.l.b16 %v8143
    %v8261 = vunpack.c.h.b16 %v8143
    %v8262 = vunpack.c.l.b16 %v8144
    %v8263 = vunpack.c.l.b16 %v8145
    %v8264 = vunpack.c.h.b16 %v8145
    %v8265 = vunpack.c.l.b16 %v8146
    %v8266 = vunpack.c.h.b16 %v8146
    %v8267 = vunpack.c.l.b16 %v8147
    %v8268 = vunpack.c.l.b16 %v8148
    %v8269 = vunpack.c.h.b16 %v8148
    %v8270 = vunpack.c.l.b16 %v8149
    %v8271 = vunpack.c.h.b16 %v8149
    %v8272 = vunpack.c.l.b16 %v8150
    %v8273 = vunpack.c.l.b16 %v8151
    %v8274 = vunpack.c.h.b16 %v8151
    %v8275 = vunpack.c.l.b16 %v8152
    %v8276 = vunpack.c.h.b16 %v8152
    %v8277 = vunpack.c.l.b16 %v8153
    %v8278 = vunpack.c.l.b16 %v8154
    %v8279 = vunpack.c.h.b16 %v8154
    %v8280 = vunpack.c.l.b16 %v8155
    %v8281 = vunpack.c.h.b16 %v8155
    %v8282 = vunpack.c.l.b16 %v8156
    %v8283 = vunpack.c.l.b16 %v8157
    %v8284 = vunpack.c.h.b16 %v8157
    %v8285 = vunpack.c.l.b16 %v8158
    %v8286 = vunpack.c.h.b16 %v8158
    %v8287 = vunpack.c.l.b16 %v8159
    %v8288 = vpack.c.b16 %v8213, %v8208
    %v8289 = vpack.c.b16 %v8214, %v8209
    %v8290 = vpack.c.b16 %v8215, %v8210
    %v8291 = vpack.c.b16 %v8216, %v8211
    %v8292 = vpack.c.b16 %v8217, %v8212
    %v8293 = vpack.c.b16 %v8223, %v8218
    %v8294 = vpack.c.b16 %v8224, %v8219
    %v8295 = vpack.c.b16 %v8225, %v8220
    %v8296 = vpack.c.b16 %v8226, %v8221
    %v8297 = vpack.c.b16 %v8227, %v8222
    %v8298 = vpack.c.b16 %v8233, %v8228
    %v8299 = vpack.c.b16 %v8234, %v8229
    %v8300 = vpack.c.b16 %v8235, %v8230
    %v8301 = vpack.c.b16 %v8236, %v8231
    %v8302 = vpack.c.b16 %v8237, %v8232
    %v8303 = vpack.c.b16 %v8243, %v8238
    %v8304 = vpack.c.b16 %v8244, %v8239
    %v8305 = vpack.c.b16 %v8245, %v8240
    %v8306 = vpack.c.b16 %v8246, %v8241
    %v8307 = vpack.c.b16 %v8247, %v8242
    %v8308 = vpack.c.b16 %v8253, %v8248
    %v8309 = vpack.c.b16 %v8254, %v8249
    %v8310 = vpack.c.b16 %v8255, %v8250
    %v8311 = vpack.c.b16 %v8256, %v8251
    %v8312 = vpack.c.b16 %v8257, %v8252
    %v8313 = vpack.c.b16 %v8263, %v8258
    %v8314 = vpack.c.b16 %v8264, %v8259
    %v8315 = vpack.c.b16 %v8265, %v8260
    %v8316 = vpack.c.b16 %v8266, %v8261
    %v8317 = vpack.c.b16 %v8267, %v8262
    %v8318 = vpack.c.b16 %v8273, %v8268
    %v8319 = vpack.c.b16 %v8274, %v8269
    %v8320 = vpack.c.b16 %v8275, %v8270
    %v8321 = vpack.c.b16 %v8276, %v8271
    %v8322 = vpack.c.b16 %v8277, %v8272
    %v8323 = vpack.c.b16 %v8283, %v8278
    %v8324 = vpack.c.b16 %v8284, %v8279
    %v8325 = vpack.c.b16 %v8285, %v8280
    %v8326 = vpack.c.b16 %v8286, %v8281
    %v8327 = vpack.c.b16 %v8287, %v8282
    %8368 = vmatpush.bf16.msra.mxu0 %v8323
    %8369 = vmatpush.bf16.msra.mxu0 %v8318
    %8370 = vmatpush.bf16.msra.mxu0 %v8313
    %8371 = vmatpush.bf16.msra.mxu0 %v8308
    %8372 = vmatpush.bf16.msra.mxu0 %v8303
    %8373 = vmatpush.bf16.msra.mxu0 %v8298
    %8374 = vmatpush.bf16.msra.mxu0 %v8293
    %8375 = vmatpush.bf16.msra.mxu0 %v8288
    %8376 = vmatmul.bf16.gmra.mxu0 %v8104
    %v8377 = vpop.f32.mrf.mxu0
    %v8378 = vadd.f32 0.0, %v8377
    %v8379 = vpop.f32.mrf.mxu0
    %v8380 = vadd.f32 0.0, %v8379
    %8381 = vmatmul.bf16.gmra.mxu0 %v8105
    %v8382 = vpop.f32.mrf.mxu0
    %v8383 = vadd.f32 0.0, %v8382
    %v8384 = vpop.f32.mrf.mxu0
    %v8385 = vadd.f32 0.0, %v8384
    %8386 = vmatmul.bf16.gmra.mxu0 %v8106
    %v8387 = vpop.f32.mrf.mxu0
    %v8388 = vadd.f32 0.0, %v8387
    %v8389 = vpop.f32.mrf.mxu0
    %v8390 = vadd.f32 0.0, %v8389
    %8391 = vmatmul.bf16.gmra.mxu0 %v8107
    %v8392 = vpop.f32.mrf.mxu0
    %v8393 = vadd.f32 0.0, %v8392
    %v8394 = vpop.f32.mrf.mxu0
    %v8395 = vadd.f32 0.0, %v8394
    %8396 = vmatmul.bf16.gmra.mxu0 %v8108
    %v8397 = vpop.f32.mrf.mxu0
    %v8398 = vadd.f32 0.0, %v8397
    %v8399 = vpop.f32.mrf.mxu0
    %v8400 = vadd.f32 0.0, %v8399
    %8401 = vmatmul.bf16.gmra.mxu0 %v8109
    %v8402 = vpop.f32.mrf.mxu0
    %v8403 = vadd.f32 0.0, %v8402
    %v8404 = vpop.f32.mrf.mxu0
    %v8405 = vadd.f32 0.0, %v8404
    %8406 = vmatmul.bf16.gmra.mxu0 %v8110
    %v8407 = vpop.f32.mrf.mxu0
    %v8408 = vadd.f32 0.0, %v8407
    %v8409 = vpop.f32.mrf.mxu0
    %v8410 = vadd.f32 0.0, %v8409
    %8411 = vmatmul.bf16.gmra.mxu0 %v8111
    %v8412 = vpop.f32.mrf.mxu0
    %v8413 = vadd.f32 0.0, %v8412
    %v8414 = vpop.f32.mrf.mxu0
    %v8415 = vadd.f32 0.0, %v8414
    %8416 = vdwg.mxu0
    %8417 = vmatpush.bf16.msra.mxu0 %v8324
    %8418 = vmatpush.bf16.msra.mxu0 %v8319
    %8419 = vmatpush.bf16.msra.mxu0 %v8314
    %8420 = vmatpush.bf16.msra.mxu0 %v8309
    %8421 = vmatpush.bf16.msra.mxu0 %v8304
    %8422 = vmatpush.bf16.msra.mxu0 %v8299
    %8423 = vmatpush.bf16.msra.mxu0 %v8294
    %8424 = vmatpush.bf16.msra.mxu0 %v8289
    %8425 = vmatmul.bf16.gmra.mxu0 %v8104
    %v8426 = vpop.f32.mrf.mxu0
    %v8427 = vadd.f32 0.0, %v8426
    %v8428 = vpop.f32.mrf.mxu0
    %v8429 = vadd.f32 0.0, %v8428
    %8430 = vmatmul.bf16.gmra.mxu0 %v8105
    %v8431 = vpop.f32.mrf.mxu0
    %v8432 = vadd.f32 0.0, %v8431
    %v8433 = vpop.f32.mrf.mxu0
    %v8434 = vadd.f32 0.0, %v8433
    %8435 = vmatmul.bf16.gmra.mxu0 %v8106
    %v8436 = vpop.f32.mrf.mxu0
    %v8437 = vadd.f32 0.0, %v8436
    %v8438 = vpop.f32.mrf.mxu0
    %v8439 = vadd.f32 0.0, %v8438
    %8440 = vmatmul.bf16.gmra.mxu0 %v8107
    %v8441 = vpop.f32.mrf.mxu0
    %v8442 = vadd.f32 0.0, %v8441
    %v8443 = vpop.f32.mrf.mxu0
    %v8444 = vadd.f32 0.0, %v8443
    %8445 = vmatmul.bf16.gmra.mxu0 %v8108
    %v8446 = vpop.f32.mrf.mxu0
    %v8447 = vadd.f32 0.0, %v8446
    %v8448 = vpop.f32.mrf.mxu0
    %v8449 = vadd.f32 0.0, %v8448
    %8450 = vmatmul.bf16.gmra.mxu0 %v8109
    %v8451 = vpop.f32.mrf.mxu0
    %v8452 = vadd.f32 0.0, %v8451
    %v8453 = vpop.f32.mrf.mxu0
    %v8454 = vadd.f32 0.0, %v8453
    %8455 = vmatmul.bf16.gmra.mxu0 %v8110
    %v8456 = vpop.f32.mrf.mxu0
    %v8457 = vadd.f32 0.0, %v8456
    %v8458 = vpop.f32.mrf.mxu0
    %v8459 = vadd.f32 0.0, %v8458
    %8460 = vmatmul.bf16.gmra.mxu0 %v8111
    %v8461 = vpop.f32.mrf.mxu0
    %v8462 = vadd.f32 0.0, %v8461
    %v8463 = vpop.f32.mrf.mxu0
    %v8464 = vadd.f32 0.0, %v8463
    %8465 = vdwg.mxu0
    %8466 = vmatpush.bf16.msra.mxu0 %v8325
    %8467 = vmatpush.bf16.msra.mxu0 %v8320
    %8468 = vmatpush.bf16.msra.mxu0 %v8315
    %8469 = vmatpush.bf16.msra.mxu0 %v8310
    %8470 = vmatpush.bf16.msra.mxu0 %v8305
    %8471 = vmatpush.bf16.msra.mxu0 %v8300
    %8472 = vmatpush.bf16.msra.mxu0 %v8295
    %8473 = vmatpush.bf16.msra.mxu0 %v8290
    %8474 = vmatmul.bf16.gmra.mxu0 %v8104
    %v8475 = vpop.f32.mrf.mxu0
    %v8476 = vadd.f32 0.0, %v8475
    %v8477 = vpop.f32.mrf.mxu0
    %v8478 = vadd.f32 0.0, %v8477
    %8479 = vmatmul.bf16.gmra.mxu0 %v8105
    %v8480 = vpop.f32.mrf.mxu0
    %v8481 = vadd.f32 0.0, %v8480
    %v8482 = vpop.f32.mrf.mxu0
    %v8483 = vadd.f32 0.0, %v8482
    %8484 = vmatmul.bf16.gmra.mxu0 %v8106
    %v8485 = vpop.f32.mrf.mxu0
    %v8486 = vadd.f32 0.0, %v8485
    %v8487 = vpop.f32.mrf.mxu0
    %v8488 = vadd.f32 0.0, %v8487
    %8489 = vmatmul.bf16.gmra.mxu0 %v8107
    %v8490 = vpop.f32.mrf.mxu0
    %v8491 = vadd.f32 0.0, %v8490
    %v8492 = vpop.f32.mrf.mxu0
    %v8493 = vadd.f32 0.0, %v8492
    %8494 = vmatmul.bf16.gmra.mxu0 %v8108
    %v8495 = vpop.f32.mrf.mxu0
    %v8496 = vadd.f32 0.0, %v8495
    %v8497 = vpop.f32.mrf.mxu0
    %v8498 = vadd.f32 0.0, %v8497
    %8499 = vmatmul.bf16.gmra.mxu0 %v8109
    %v8500 = vpop.f32.mrf.mxu0
    %v8501 = vadd.f32 0.0, %v8500
    %v8502 = vpop.f32.mrf.mxu0
    %v8503 = vadd.f32 0.0, %v8502
    %8504 = vmatmul.bf16.gmra.mxu0 %v8110
    %v8505 = vpop.f32.mrf.mxu0
    %v8506 = vadd.f32 0.0, %v8505
    %v8507 = vpop.f32.mrf.mxu0
    %v8508 = vadd.f32 0.0, %v8507
    %8509 = vmatmul.bf16.gmra.mxu0 %v8111
    %v8510 = vpop.f32.mrf.mxu0
    %v8511 = vadd.f32 0.0, %v8510
    %v8512 = vpop.f32.mrf.mxu0
    %v8513 = vadd.f32 0.0, %v8512
    %8514 = vdwg.mxu0
    %8515 = vmatpush.bf16.msra.mxu0 %v8326
    %8516 = vmatpush.bf16.msra.mxu0 %v8321
    %8517 = vmatpush.bf16.msra.mxu0 %v8316
    %8518 = vmatpush.bf16.msra.mxu0 %v8311
    %8519 = vmatpush.bf16.msra.mxu0 %v8306
    %8520 = vmatpush.bf16.msra.mxu0 %v8301
    %8521 = vmatpush.bf16.msra.mxu0 %v8296
    %8522 = vmatpush.bf16.msra.mxu0 %v8291
    %8523 = vmatmul.bf16.gmra.mxu0 %v8104
    %v8524 = vpop.f32.mrf.mxu0
    %v8525 = vadd.f32 0.0, %v8524
    %v8526 = vpop.f32.mrf.mxu0
    %v8527 = vadd.f32 0.0, %v8526
    %8528 = vmatmul.bf16.gmra.mxu0 %v8105
    %v8529 = vpop.f32.mrf.mxu0
    %v8530 = vadd.f32 0.0, %v8529
    %v8531 = vpop.f32.mrf.mxu0
    %v8532 = vadd.f32 0.0, %v8531
    %8533 = vmatmul.bf16.gmra.mxu0 %v8106
    %v8534 = vpop.f32.mrf.mxu0
    %v8535 = vadd.f32 0.0, %v8534
    %v8536 = vpop.f32.mrf.mxu0
    %v8537 = vadd.f32 0.0, %v8536
    %8538 = vmatmul.bf16.gmra.mxu0 %v8107
    %v8539 = vpop.f32.mrf.mxu0
    %v8540 = vadd.f32 0.0, %v8539
    %v8541 = vpop.f32.mrf.mxu0
    %v8542 = vadd.f32 0.0, %v8541
    %8543 = vmatmul.bf16.gmra.mxu0 %v8108
    %v8544 = vpop.f32.mrf.mxu0
    %v8545 = vadd.f32 0.0, %v8544
    %v8546 = vpop.f32.mrf.mxu0
    %v8547 = vadd.f32 0.0, %v8546
    %8548 = vmatmul.bf16.gmra.mxu0 %v8109
    %v8549 = vpop.f32.mrf.mxu0
    %v8550 = vadd.f32 0.0, %v8549
    %v8551 = vpop.f32.mrf.mxu0
    %v8552 = vadd.f32 0.0, %v8551
    %8553 = vmatmul.bf16.gmra.mxu0 %v8110
    %v8554 = vpop.f32.mrf.mxu0
    %v8555 = vadd.f32 0.0, %v8554
    %v8556 = vpop.f32.mrf.mxu0
    %v8557 = vadd.f32 0.0, %v8556
    %8558 = vmatmul.bf16.gmra.mxu0 %v8111
    %v8559 = vpop.f32.mrf.mxu0
    %v8560 = vadd.f32 0.0, %v8559
    %v8561 = vpop.f32.mrf.mxu0
    %v8562 = vadd.f32 0.0, %v8561
    %8563 = vdwg.mxu0
    %8564 = vmatpush.bf16.msra.mxu0 %v8327
    %8565 = vmatpush.bf16.msra.mxu0 %v8322
    %8566 = vmatpush.bf16.msra.mxu0 %v8317
    %8567 = vmatpush.bf16.msra.mxu0 %v8312
    %8568 = vmatpush.bf16.msra.mxu0 %v8307
    %8569 = vmatpush.bf16.msra.mxu0 %v8302
    %8570 = vmatpush.bf16.msra.mxu0 %v8297
    %8571 = vmatpush.bf16.msra.mxu0 %v8292
    %8572 = vmatmul.bf16.gmra.mxu0 %v8104
    %v8573 = vpop.f32.mrf.mxu0
    %v8574 = vadd.f32 0.0, %v8573
    %v8575 = vpop.f32.mrf.mxu0
    %v8576 = vadd.f32 0.0, %v8575
    %8577 = vmatmul.bf16.gmra.mxu0 %v8105
    %v8578 = vpop.f32.mrf.mxu0
    %v8579 = vadd.f32 0.0, %v8578
    %v8580 = vpop.f32.mrf.mxu0
    %v8581 = vadd.f32 0.0, %v8580
    %8582 = vmatmul.bf16.gmra.mxu0 %v8106
    %v8583 = vpop.f32.mrf.mxu0
    %v8584 = vadd.f32 0.0, %v8583
    %v8585 = vpop.f32.mrf.mxu0
    %v8586 = vadd.f32 0.0, %v8585
    %8587 = vmatmul.bf16.gmra.mxu0 %v8107
    %v8588 = vpop.f32.mrf.mxu0
    %v8589 = vadd.f32 0.0, %v8588
    %v8590 = vpop.f32.mrf.mxu0
    %v8591 = vadd.f32 0.0, %v8590
    %8592 = vmatmul.bf16.gmra.mxu0 %v8108
    %v8593 = vpop.f32.mrf.mxu0
    %v8594 = vadd.f32 0.0, %v8593
    %v8595 = vpop.f32.mrf.mxu0
    %v8596 = vadd.f32 0.0, %v8595
    %8597 = vmatmul.bf16.gmra.mxu0 %v8109
    %v8598 = vpop.f32.mrf.mxu0
    %v8599 = vadd.f32 0.0, %v8598
    %v8600 = vpop.f32.mrf.mxu0
    %v8601 = vadd.f32 0.0, %v8600
    %8602 = vmatmul.bf16.gmra.mxu0 %v8110
    %v8603 = vpop.f32.mrf.mxu0
    %v8604 = vadd.f32 0.0, %v8603
    %v8605 = vpop.f32.mrf.mxu0
    %v8606 = vadd.f32 0.0, %v8605
    %8607 = vmatmul.bf16.gmra.mxu0 %v8111
    %v8608 = vpop.f32.mrf.mxu0
    %v8609 = vadd.f32 0.0, %v8608
    %v8610 = vpop.f32.mrf.mxu0
    %v8611 = vadd.f32 0.0, %v8610
    %8612 = vdwg.mxu0
    %v8613 = vpack.c.bf16 %v8427, %v8378
    %v8614 = vpack.c.bf16 %v8525, %v8476
    %v8615 = vpack.c.bf16 %v8574, %v8574
    %v8616 = vpack.c.bf16 %v8429, %v8380
    %v8617 = vpack.c.bf16 %v8527, %v8478
    %v8618 = vpack.c.bf16 %v8576, %v8576
    %v8619 = vpack.c.bf16 %v8432, %v8383
    %v8620 = vpack.c.bf16 %v8530, %v8481
    %v8621 = vpack.c.bf16 %v8579, %v8579
    %v8622 = vpack.c.bf16 %v8434, %v8385
    %v8623 = vpack.c.bf16 %v8532, %v8483
    %v8624 = vpack.c.bf16 %v8581, %v8581
    %v8625 = vpack.c.bf16 %v8437, %v8388
    %v8626 = vpack.c.bf16 %v8535, %v8486
    %v8627 = vpack.c.bf16 %v8584, %v8584
    %v8628 = vpack.c.bf16 %v8439, %v8390
    %v8629 = vpack.c.bf16 %v8537, %v8488
    %v8630 = vpack.c.bf16 %v8586, %v8586
    %v8631 = vpack.c.bf16 %v8442, %v8393
    %v8632 = vpack.c.bf16 %v8540, %v8491
    %v8633 = vpack.c.bf16 %v8589, %v8589
    %v8634 = vpack.c.bf16 %v8444, %v8395
    %v8635 = vpack.c.bf16 %v8542, %v8493
    %v8636 = vpack.c.bf16 %v8591, %v8591
    %v8637 = vpack.c.bf16 %v8447, %v8398
    %v8638 = vpack.c.bf16 %v8545, %v8496
    %v8639 = vpack.c.bf16 %v8594, %v8594
    %v8640 = vpack.c.bf16 %v8449, %v8400
    %v8641 = vpack.c.bf16 %v8547, %v8498
    %v8642 = vpack.c.bf16 %v8596, %v8596
    %v8643 = vpack.c.bf16 %v8452, %v8403
    %v8644 = vpack.c.bf16 %v8550, %v8501
    %v8645 = vpack.c.bf16 %v8599, %v8599
    %v8646 = vpack.c.bf16 %v8454, %v8405
    %v8647 = vpack.c.bf16 %v8552, %v8503
    %v8648 = vpack.c.bf16 %v8601, %v8601
    %v8649 = vpack.c.bf16 %v8457, %v8408
    %v8650 = vpack.c.bf16 %v8555, %v8506
    %v8651 = vpack.c.bf16 %v8604, %v8604
    %v8652 = vpack.c.bf16 %v8459, %v8410
    %v8653 = vpack.c.bf16 %v8557, %v8508
    %v8654 = vpack.c.bf16 %v8606, %v8606
    %v8655 = vpack.c.bf16 %v8462, %v8413
    %v8656 = vpack.c.bf16 %v8560, %v8511
    %v8657 = vpack.c.bf16 %v8609, %v8609
    %v8658 = vpack.c.bf16 %v8464, %v8415
    %v8659 = vpack.c.bf16 %v8562, %v8513
    %v8660 = vpack.c.bf16 %v8611, %v8611
    %v8661 = vld [vmem:[#allocation11 + $0x244] sm:$0xf]
    %v8662 = vld [vmem:[#allocation11 + $0x248] sm:$0xf]
    %v8663 = vld [vmem:[#allocation11 + $0x24c] sm:$0xf]
    %v8664 = vld [vmem:[#allocation11 + $0x250] sm:$0xf]
    %v8665 = vld [vmem:[#allocation11 + $0x254] sm:$0xf]
    %v8666 = vld [vmem:[#allocation11 + $0x258] sm:$0xf]
    %v8667 = vld [vmem:[#allocation11 + $0x25c] sm:$0xf]
    %v8668 = vld [vmem:[#allocation11 + $0x260] sm:$0xf]
    %v8669 = vld [vmem:[#allocation11 + $0x264] sm:$0xf]
    %v8670 = vld [vmem:[#allocation11 + $0x268] sm:$0xf]
    %v8671 = vld [vmem:[#allocation11 + $0x26c] sm:$0xf]
    %v8672 = vld [vmem:[#allocation11 + $0x270] sm:$0xf]
    %v8673 = vld [vmem:[#allocation11 + $0x274] sm:$0xf]
    %v8674 = vld [vmem:[#allocation11 + $0x278] sm:$0xf]
    %v8675 = vld [vmem:[#allocation11 + $0x27c] sm:$0xf]
    %v8676 = vld [vmem:[#allocation11 + $0x280] sm:$0xf]
    %v8677 = vld [vmem:[#allocation11 + $0x284] sm:$0xf]
    %v8678 = vld [vmem:[#allocation11 + $0x288] sm:$0xf]
    %v8679 = vld [vmem:[#allocation11 + $0x28c] sm:$0xf]
    %v8680 = vld [vmem:[#allocation11 + $0x290] sm:$0xf]
    %v8681 = vld [vmem:[#allocation11 + $0x294] sm:$0xf]
    %v8682 = vld [vmem:[#allocation11 + $0x298] sm:$0xf]
    %v8683 = vld [vmem:[#allocation11 + $0x29c] sm:$0xf]
    %v8684 = vld [vmem:[#allocation11 + $0x2a0] sm:$0xf]
    %v8685 = vld [vmem:[#allocation11 + $0x2a4] sm:$0xf]
    %v8686 = vld [vmem:[#allocation11 + $0x2a8] sm:$0xf]
    %v8687 = vld [vmem:[#allocation11 + $0x2ac] sm:$0xf]
    %v8688 = vld [vmem:[#allocation11 + $0x2b0] sm:$0xf]
    %v8689 = vld [vmem:[#allocation11 + $0x2b4] sm:$0xf]
    %v8690 = vld [vmem:[#allocation11 + $0x2b8] sm:$0xf]
    %v8706 = vunpack.c.l.b16 %v8676
    %v8707 = vunpack.c.l.b16 %v8677
    %v8708 = vunpack.c.l.b16 %v8678
    %v8709 = vunpack.c.l.b16 %v8679
    %v8710 = vunpack.c.l.b16 %v8680
    %v8711 = vunpack.c.l.b16 %v8681
    %v8712 = vunpack.c.l.b16 %v8682
    %v8713 = vunpack.c.l.b16 %v8683
    %v8714 = vunpack.c.l.b16 %v8684
    %v8715 = vunpack.c.l.b16 %v8685
    %v8716 = vunpack.c.l.b16 %v8686
    %v8717 = vunpack.c.l.b16 %v8687
    %v8718 = vunpack.c.l.b16 %v8688
    %v8719 = vunpack.c.l.b16 %v8689
    %v8720 = vunpack.c.l.b16 %v8690
    %v8721 = vpack.c.b16 %v8707, %v8706
    %v8722 = vpack.c.b16 %v8709, %v8708
    %v8723 = vpack.c.b16 %v8711, %v8710
    %v8724 = vpack.c.b16 %v8713, %v8712
    %v8725 = vpack.c.b16 %v8715, %v8714
    %v8726 = vpack.c.b16 %v8717, %v8716
    %v8727 = vpack.c.b16 %v8719, %v8718
    %v8728 = vpack.c.b16 %v8720, %v8720
    %v8745 = vunpack.c.h.b16 %v8613
    %v8746 = vunpack.c.h.b16 %v8616
    %v8747 = vunpack.c.h.b16 %v8619
    %v8748 = vunpack.c.h.b16 %v8622
    %v8749 = vunpack.c.h.b16 %v8625
    %v8750 = vunpack.c.h.b16 %v8628
    %v8751 = vunpack.c.h.b16 %v8631
    %v8752 = vunpack.c.h.b16 %v8634
    %v8753 = vunpack.c.h.b16 %v8637
    %v8754 = vunpack.c.h.b16 %v8640
    %v8755 = vunpack.c.h.b16 %v8643
    %v8756 = vunpack.c.h.b16 %v8646
    %v8757 = vunpack.c.h.b16 %v8649
    %v8758 = vunpack.c.h.b16 %v8652
    %v8759 = vunpack.c.h.b16 %v8655
    %v8760 = vunpack.c.h.b16 %v8658
    %v8761 = vpack.c.b16 %v8746, %v8745
    %v8762 = vpack.c.b16 %v8748, %v8747
    %v8763 = vpack.c.b16 %v8750, %v8749
    %v8764 = vpack.c.b16 %v8752, %v8751
    %v8765 = vpack.c.b16 %v8754, %v8753
    %v8766 = vpack.c.b16 %v8756, %v8755
    %v8767 = vpack.c.b16 %v8758, %v8757
    %v8768 = vpack.c.b16 %v8760, %v8759
    %vm8776 = vcmask 1014784
    %v8778 = vsel %vm8776, %v8721, 0
    %v8781 = vsel %vm8776, %v8722, 0
    %v8784 = vsel %vm8776, %v8723, 0
    %v8787 = vsel %vm8776, %v8724, 0
    %v8790 = vsel %vm8776, %v8725, 0
    %v8793 = vsel %vm8776, %v8726, 0
    %v8796 = vsel %vm8776, %v8727, 0
    %v8799 = vsel %vm8776, %v8728, 0
    %vm8801 = vcmask 1045504
    %v8803 = vsel %vm8801, %v8768, 0
    %8805 = vmatpush.bf16.msra.mxu0 %v8803
    %8806 = vmatpush.bf16.msra.mxu0 %v8767
    %8807 = vmatpush.bf16.msra.mxu0 %v8766
    %8808 = vmatpush.bf16.msra.mxu0 %v8765
    %8809 = vmatpush.bf16.msra.mxu0 %v8764
    %8810 = vmatpush.bf16.msra.mxu0 %v8763
    %8811 = vmatpush.bf16.msra.mxu0 %v8762
    %8812 = vmatpush.bf16.msra.mxu0 %v8761
    %8813 = vmatmul.bf16.gmra.mxu0 %v8778
    %v8814 = vpop.f32.mrf.mxu0
    %v8815 = vadd.f32 0.0, %v8814
    %v8816 = vpop.f32.mrf.mxu0
    %v8817 = vadd.f32 0.0, %v8816
    %8818 = vmatmul.bf16.gmra.mxu0 %v8781
    %v8819 = vpop.f32.mrf.mxu0
    %v8820 = vadd.f32 0.0, %v8819
    %v8821 = vpop.f32.mrf.mxu0
    %v8822 = vadd.f32 0.0, %v8821
    %8823 = vmatmul.bf16.gmra.mxu0 %v8784
    %v8824 = vpop.f32.mrf.mxu0
    %v8825 = vadd.f32 0.0, %v8824
    %v8826 = vpop.f32.mrf.mxu0
    %v8827 = vadd.f32 0.0, %v8826
    %8828 = vmatmul.bf16.gmra.mxu0 %v8787
    %v8829 = vpop.f32.mrf.mxu0
    %v8830 = vadd.f32 0.0, %v8829
    %v8831 = vpop.f32.mrf.mxu0
    %v8832 = vadd.f32 0.0, %v8831
    %8833 = vmatmul.bf16.gmra.mxu0 %v8790
    %v8834 = vpop.f32.mrf.mxu0
    %v8835 = vadd.f32 0.0, %v8834
    %v8836 = vpop.f32.mrf.mxu0
    %v8837 = vadd.f32 0.0, %v8836
    %8838 = vmatmul.bf16.gmra.mxu0 %v8793
    %v8839 = vpop.f32.mrf.mxu0
    %v8840 = vadd.f32 0.0, %v8839
    %v8841 = vpop.f32.mrf.mxu0
    %v8842 = vadd.f32 0.0, %v8841
    %8843 = vmatmul.bf16.gmra.mxu0 %v8796
    %v8844 = vpop.f32.mrf.mxu0
    %v8845 = vadd.f32 0.0, %v8844
    %v8846 = vpop.f32.mrf.mxu0
    %v8847 = vadd.f32 0.0, %v8846
    %8848 = vmatmul.bf16.gmra.mxu0 %v8799
    %v8849 = vpop.f32.mrf.mxu0
    %v8850 = vadd.f32 0.0, %v8849
    %v8851 = vpop.f32.mrf.mxu0
    %8852 = vdwg.mxu0
    %v8868 = vunpack.c.l.b16 %v8661
    %v8869 = vunpack.c.l.b16 %v8662
    %v8870 = vunpack.c.l.b16 %v8663
    %v8871 = vunpack.c.l.b16 %v8664
    %v8872 = vunpack.c.l.b16 %v8665
    %v8873 = vunpack.c.l.b16 %v8666
    %v8874 = vunpack.c.l.b16 %v8667
    %v8875 = vunpack.c.l.b16 %v8668
    %v8876 = vunpack.c.l.b16 %v8669
    %v8877 = vunpack.c.l.b16 %v8670
    %v8878 = vunpack.c.l.b16 %v8671
    %v8879 = vunpack.c.l.b16 %v8672
    %v8880 = vunpack.c.l.b16 %v8673
    %v8881 = vunpack.c.l.b16 %v8674
    %v8882 = vunpack.c.l.b16 %v8675
    %v8883 = vpack.c.b16 %v8869, %v8868
    %v8884 = vpack.c.b16 %v8871, %v8870
    %v8885 = vpack.c.b16 %v8873, %v8872
    %v8886 = vpack.c.b16 %v8875, %v8874
    %v8887 = vpack.c.b16 %v8877, %v8876
    %v8888 = vpack.c.b16 %v8879, %v8878
    %v8889 = vpack.c.b16 %v8881, %v8880
    %v8890 = vpack.c.b16 %v8882, %v8882
    %v8891 = vunpack.c.l.b16 %v8613
    %v8892 = vunpack.c.l.b16 %v8616
    %v8893 = vunpack.c.l.b16 %v8619
    %v8894 = vunpack.c.l.b16 %v8622
    %v8895 = vunpack.c.l.b16 %v8625
    %v8896 = vunpack.c.l.b16 %v8628
    %v8897 = vunpack.c.l.b16 %v8631
    %v8898 = vunpack.c.l.b16 %v8634
    %v8899 = vunpack.c.l.b16 %v8637
    %v8900 = vunpack.c.l.b16 %v8640
    %v8901 = vunpack.c.l.b16 %v8643
    %v8902 = vunpack.c.l.b16 %v8646
    %v8903 = vunpack.c.l.b16 %v8649
    %v8904 = vunpack.c.l.b16 %v8652
    %v8905 = vunpack.c.l.b16 %v8655
    %v8906 = vunpack.c.l.b16 %v8658
    %v8907 = vpack.c.b16 %v8892, %v8891
    %v8908 = vpack.c.b16 %v8894, %v8893
    %v8909 = vpack.c.b16 %v8896, %v8895
    %v8910 = vpack.c.b16 %v8898, %v8897
    %v8911 = vpack.c.b16 %v8900, %v8899
    %v8912 = vpack.c.b16 %v8902, %v8901
    %v8913 = vpack.c.b16 %v8904, %v8903
    %v8914 = vpack.c.b16 %v8906, %v8905
    %v8923 = vsel %vm8776, %v8883, 0
    %v8926 = vsel %vm8776, %v8884, 0
    %v8929 = vsel %vm8776, %v8885, 0
    %v8932 = vsel %vm8776, %v8886, 0
    %v8935 = vsel %vm8776, %v8887, 0
    %v8938 = vsel %vm8776, %v8888, 0
    %v8941 = vsel %vm8776, %v8889, 0
    %v8944 = vsel %vm8776, %v8890, 0
    %v8947 = vsel %vm8801, %v8914, 0
    %8949 = vmatpush.bf16.msra.mxu0 %v8947
    %8950 = vmatpush.bf16.msra.mxu0 %v8913
    %8951 = vmatpush.bf16.msra.mxu0 %v8912
    %8952 = vmatpush.bf16.msra.mxu0 %v8911
    %8953 = vmatpush.bf16.msra.mxu0 %v8910
    %8954 = vmatpush.bf16.msra.mxu0 %v8909
    %8955 = vmatpush.bf16.msra.mxu0 %v8908
    %8956 = vmatpush.bf16.msra.mxu0 %v8907
    %8957 = vmatmul.bf16.gmra.mxu0 %v8923
    %v8958 = vpop.f32.mrf.mxu0
    %v8959 = vadd.f32 %v8815, %v8958
    %v8960 = vpop.f32.mrf.mxu0
    %v8961 = vadd.f32 %v8817, %v8960
    %8962 = vmatmul.bf16.gmra.mxu0 %v8926
    %v8963 = vpop.f32.mrf.mxu0
    %v8964 = vadd.f32 %v8820, %v8963
    %v8965 = vpop.f32.mrf.mxu0
    %v8966 = vadd.f32 %v8822, %v8965
    %8967 = vmatmul.bf16.gmra.mxu0 %v8929
    %v8968 = vpop.f32.mrf.mxu0
    %v8969 = vadd.f32 %v8825, %v8968
    %v8970 = vpop.f32.mrf.mxu0
    %v8971 = vadd.f32 %v8827, %v8970
    %8972 = vmatmul.bf16.gmra.mxu0 %v8932
    %v8973 = vpop.f32.mrf.mxu0
    %v8974 = vadd.f32 %v8830, %v8973
    %v8975 = vpop.f32.mrf.mxu0
    %v8976 = vadd.f32 %v8832, %v8975
    %8977 = vmatmul.bf16.gmra.mxu0 %v8935
    %v8978 = vpop.f32.mrf.mxu0
    %v8979 = vadd.f32 %v8835, %v8978
    %v8980 = vpop.f32.mrf.mxu0
    %v8981 = vadd.f32 %v8837, %v8980
    %8982 = vmatmul.bf16.gmra.mxu0 %v8938
    %v8983 = vpop.f32.mrf.mxu0
    %v8984 = vadd.f32 %v8840, %v8983
    %v8985 = vpop.f32.mrf.mxu0
    %v8986 = vadd.f32 %v8842, %v8985
    %8987 = vmatmul.bf16.gmra.mxu0 %v8941
    %v8988 = vpop.f32.mrf.mxu0
    %v8989 = vadd.f32 %v8845, %v8988
    %v8990 = vpop.f32.mrf.mxu0
    %v8991 = vadd.f32 %v8847, %v8990
    %8992 = vmatmul.bf16.gmra.mxu0 %v8944
    %v8993 = vpop.f32.mrf.mxu0
    %v8994 = vadd.f32 %v8850, %v8993
    %v8995 = vpop.f32.mrf.mxu0
    %8996 = vdwg.mxu0
    %v8997 = vld [vmem:[#allocation11 + $0x2bc] sm:$0xf]
    %v8998 = vld [vmem:[#allocation11 + $0x2c0] sm:$0xf]
    %v8999 = vld [vmem:[#allocation11 + $0x2c4] sm:$0xf]
    %v9000 = vld [vmem:[#allocation11 + $0x2c8] sm:$0xf]
    %v9001 = vld [vmem:[#allocation11 + $0x2cc] sm:$0xf]
    %v9002 = vld [vmem:[#allocation11 + $0x2d0] sm:$0xf]
    %v9003 = vld [vmem:[#allocation11 + $0x2d4] sm:$0xf]
    %v9004 = vld [vmem:[#allocation11 + $0x2d8] sm:$0xf]
    %v9005 = vld [vmem:[#allocation11 + $0x2dc] sm:$0xf]
    %v9006 = vld [vmem:[#allocation11 + $0x2e0] sm:$0xf]
    %v9007 = vld [vmem:[#allocation11 + $0x2e4] sm:$0xf]
    %v9008 = vld [vmem:[#allocation11 + $0x2e8] sm:$0xf]
    %v9009 = vld [vmem:[#allocation11 + $0x2ec] sm:$0xf]
    %v9010 = vld [vmem:[#allocation11 + $0x2f0] sm:$0xf]
    %v9011 = vld [vmem:[#allocation11 + $0x2f4] sm:$0xf]
    %v9027 = vunpack.c.l.b16 %v8997
    %v9028 = vunpack.c.l.b16 %v8998
    %v9029 = vunpack.c.l.b16 %v8999
    %v9030 = vunpack.c.l.b16 %v9000
    %v9031 = vunpack.c.l.b16 %v9001
    %v9032 = vunpack.c.l.b16 %v9002
    %v9033 = vunpack.c.l.b16 %v9003
    %v9034 = vunpack.c.l.b16 %v9004
    %v9035 = vunpack.c.l.b16 %v9005
    %v9036 = vunpack.c.l.b16 %v9006
    %v9037 = vunpack.c.l.b16 %v9007
    %v9038 = vunpack.c.l.b16 %v9008
    %v9039 = vunpack.c.l.b16 %v9009
    %v9040 = vunpack.c.l.b16 %v9010
    %v9041 = vunpack.c.l.b16 %v9011
    %v9042 = vpack.c.b16 %v9028, %v9027
    %v9043 = vpack.c.b16 %v9030, %v9029
    %v9044 = vpack.c.b16 %v9032, %v9031
    %v9045 = vpack.c.b16 %v9034, %v9033
    %v9046 = vpack.c.b16 %v9036, %v9035
    %v9047 = vpack.c.b16 %v9038, %v9037
    %v9048 = vpack.c.b16 %v9040, %v9039
    %v9049 = vpack.c.b16 %v9041, %v9041
    %v9066 = vunpack.c.l.b16 %v8614
    %v9067 = vunpack.c.l.b16 %v8617
    %v9068 = vunpack.c.l.b16 %v8620
    %v9069 = vunpack.c.l.b16 %v8623
    %v9070 = vunpack.c.l.b16 %v8626
    %v9071 = vunpack.c.l.b16 %v8629
    %v9072 = vunpack.c.l.b16 %v8632
    %v9073 = vunpack.c.l.b16 %v8635
    %v9074 = vunpack.c.l.b16 %v8638
    %v9075 = vunpack.c.l.b16 %v8641
    %v9076 = vunpack.c.l.b16 %v8644
    %v9077 = vunpack.c.l.b16 %v8647
    %v9078 = vunpack.c.l.b16 %v8650
    %v9079 = vunpack.c.l.b16 %v8653
    %v9080 = vunpack.c.l.b16 %v8656
    %v9081 = vunpack.c.l.b16 %v8659
    %v9082 = vpack.c.b16 %v9067, %v9066
    %v9083 = vpack.c.b16 %v9069, %v9068
    %v9084 = vpack.c.b16 %v9071, %v9070
    %v9085 = vpack.c.b16 %v9073, %v9072
    %v9086 = vpack.c.b16 %v9075, %v9074
    %v9087 = vpack.c.b16 %v9077, %v9076
    %v9088 = vpack.c.b16 %v9079, %v9078
    %v9089 = vpack.c.b16 %v9081, %v9080
    %v9098 = vsel %vm8776, %v9042, 0
    %v9101 = vsel %vm8776, %v9043, 0
    %v9104 = vsel %vm8776, %v9044, 0
    %v9107 = vsel %vm8776, %v9045, 0
    %v9110 = vsel %vm8776, %v9046, 0
    %v9113 = vsel %vm8776, %v9047, 0
    %v9116 = vsel %vm8776, %v9048, 0
    %v9119 = vsel %vm8776, %v9049, 0
    %v9122 = vsel %vm8801, %v9089, 0
    %9124 = vmatpush.bf16.msra.mxu0 %v9122
    %9125 = vmatpush.bf16.msra.mxu0 %v9088
    %9126 = vmatpush.bf16.msra.mxu0 %v9087
    %9127 = vmatpush.bf16.msra.mxu0 %v9086
    %9128 = vmatpush.bf16.msra.mxu0 %v9085
    %9129 = vmatpush.bf16.msra.mxu0 %v9084
    %9130 = vmatpush.bf16.msra.mxu0 %v9083
    %9131 = vmatpush.bf16.msra.mxu0 %v9082
    %9132 = vmatmul.bf16.gmra.mxu0 %v9098
    %v9133 = vpop.f32.mrf.mxu0
    %v9134 = vadd.f32 0.0, %v9133
    %v9135 = vpop.f32.mrf.mxu0
    %v9136 = vadd.f32 0.0, %v9135
    %9137 = vmatmul.bf16.gmra.mxu0 %v9101
    %v9138 = vpop.f32.mrf.mxu0
    %v9139 = vadd.f32 0.0, %v9138
    %v9140 = vpop.f32.mrf.mxu0
    %v9141 = vadd.f32 0.0, %v9140
    %9142 = vmatmul.bf16.gmra.mxu0 %v9104
    %v9143 = vpop.f32.mrf.mxu0
    %v9144 = vadd.f32 0.0, %v9143
    %v9145 = vpop.f32.mrf.mxu0
    %v9146 = vadd.f32 0.0, %v9145
    %9147 = vmatmul.bf16.gmra.mxu0 %v9107
    %v9148 = vpop.f32.mrf.mxu0
    %v9149 = vadd.f32 0.0, %v9148
    %v9150 = vpop.f32.mrf.mxu0
    %v9151 = vadd.f32 0.0, %v9150
    %9152 = vmatmul.bf16.gmra.mxu0 %v9110
    %v9153 = vpop.f32.mrf.mxu0
    %v9154 = vadd.f32 0.0, %v9153
    %v9155 = vpop.f32.mrf.mxu0
    %v9156 = vadd.f32 0.0, %v9155
    %9157 = vmatmul.bf16.gmra.mxu0 %v9113
    %v9158 = vpop.f32.mrf.mxu0
    %v9159 = vadd.f32 0.0, %v9158
    %v9160 = vpop.f32.mrf.mxu0
    %v9161 = vadd.f32 0.0, %v9160
    %9162 = vmatmul.bf16.gmra.mxu0 %v9116
    %v9163 = vpop.f32.mrf.mxu0
    %v9164 = vadd.f32 0.0, %v9163
    %v9165 = vpop.f32.mrf.mxu0
    %v9166 = vadd.f32 0.0, %v9165
    %9167 = vmatmul.bf16.gmra.mxu0 %v9119
    %v9168 = vpop.f32.mrf.mxu0
    %v9169 = vadd.f32 0.0, %v9168
    %v9170 = vpop.f32.mrf.mxu0
    %9171 = vdwg.mxu0
    %v9172 = vadd.f32 %v8959, %v9134
    %v9173 = vadd.f32 %v8961, %v9136
    %v9174 = vadd.f32 %v8964, %v9139
    %v9175 = vadd.f32 %v8966, %v9141
    %v9176 = vadd.f32 %v8969, %v9144
    %v9177 = vadd.f32 %v8971, %v9146
    %v9178 = vadd.f32 %v8974, %v9149
    %v9179 = vadd.f32 %v8976, %v9151
    %v9180 = vadd.f32 %v8979, %v9154
    %v9181 = vadd.f32 %v8981, %v9156
    %v9182 = vadd.f32 %v8984, %v9159
    %v9183 = vadd.f32 %v8986, %v9161
    %v9184 = vadd.f32 %v8989, %v9164
    %v9185 = vadd.f32 %v8991, %v9166
    %v9186 = vadd.f32 %v8994, %v9169
    %v9187 = vld [vmem:[#allocation11 + $0x2f8] sm:$0xf]
    %v9188 = vld [vmem:[#allocation11 + $0x2fc] sm:$0xf]
    %v9189 = vld [vmem:[#allocation11 + $0x300] sm:$0xf]
    %v9190 = vld [vmem:[#allocation11 + $0x304] sm:$0xf]
    %v9191 = vld [vmem:[#allocation11 + $0x308] sm:$0xf]
    %v9192 = vld [vmem:[#allocation11 + $0x30c] sm:$0xf]
    %v9193 = vld [vmem:[#allocation11 + $0x310] sm:$0xf]
    %v9194 = vld [vmem:[#allocation11 + $0x314] sm:$0xf]
    %v9195 = vld [vmem:[#allocation11 + $0x318] sm:$0xf]
    %v9196 = vld [vmem:[#allocation11 + $0x31c] sm:$0xf]
    %v9197 = vld [vmem:[#allocation11 + $0x320] sm:$0xf]
    %v9198 = vld [vmem:[#allocation11 + $0x324] sm:$0xf]
    %v9199 = vld [vmem:[#allocation11 + $0x328] sm:$0xf]
    %v9200 = vld [vmem:[#allocation11 + $0x32c] sm:$0xf]
    %v9201 = vld [vmem:[#allocation11 + $0x330] sm:$0xf]
    %v9217 = vunpack.c.l.b16 %v9187
    %v9218 = vunpack.c.l.b16 %v9188
    %v9219 = vunpack.c.l.b16 %v9189
    %v9220 = vunpack.c.l.b16 %v9190
    %v9221 = vunpack.c.l.b16 %v9191
    %v9222 = vunpack.c.l.b16 %v9192
    %v9223 = vunpack.c.l.b16 %v9193
    %v9224 = vunpack.c.l.b16 %v9194
    %v9225 = vunpack.c.l.b16 %v9195
    %v9226 = vunpack.c.l.b16 %v9196
    %v9227 = vunpack.c.l.b16 %v9197
    %v9228 = vunpack.c.l.b16 %v9198
    %v9229 = vunpack.c.l.b16 %v9199
    %v9230 = vunpack.c.l.b16 %v9200
    %v9231 = vunpack.c.l.b16 %v9201
    %v9232 = vpack.c.b16 %v9218, %v9217
    %v9233 = vpack.c.b16 %v9220, %v9219
    %v9234 = vpack.c.b16 %v9222, %v9221
    %v9235 = vpack.c.b16 %v9224, %v9223
    %v9236 = vpack.c.b16 %v9226, %v9225
    %v9237 = vpack.c.b16 %v9228, %v9227
    %v9238 = vpack.c.b16 %v9230, %v9229
    %v9239 = vpack.c.b16 %v9231, %v9231
    %v9240 = vunpack.c.h.b16 %v8614
    %v9241 = vunpack.c.h.b16 %v8617
    %v9242 = vunpack.c.h.b16 %v8620
    %v9243 = vunpack.c.h.b16 %v8623
    %v9244 = vunpack.c.h.b16 %v8626
    %v9245 = vunpack.c.h.b16 %v8629
    %v9246 = vunpack.c.h.b16 %v8632
    %v9247 = vunpack.c.h.b16 %v8635
    %v9248 = vunpack.c.h.b16 %v8638
    %v9249 = vunpack.c.h.b16 %v8641
    %v9250 = vunpack.c.h.b16 %v8644
    %v9251 = vunpack.c.h.b16 %v8647
    %v9252 = vunpack.c.h.b16 %v8650
    %v9253 = vunpack.c.h.b16 %v8653
    %v9254 = vunpack.c.h.b16 %v8656
    %v9255 = vunpack.c.h.b16 %v8659
    %v9256 = vpack.c.b16 %v9241, %v9240
    %v9257 = vpack.c.b16 %v9243, %v9242
    %v9258 = vpack.c.b16 %v9245, %v9244
    %v9259 = vpack.c.b16 %v9247, %v9246
    %v9260 = vpack.c.b16 %v9249, %v9248
    %v9261 = vpack.c.b16 %v9251, %v9250
    %v9262 = vpack.c.b16 %v9253, %v9252
    %v9263 = vpack.c.b16 %v9255, %v9254
    %v9272 = vsel %vm8776, %v9232, 0
    %v9275 = vsel %vm8776, %v9233, 0
    %v9278 = vsel %vm8776, %v9234, 0
    %v9281 = vsel %vm8776, %v9235, 0
    %v9284 = vsel %vm8776, %v9236, 0
    %v9287 = vsel %vm8776, %v9237, 0
    %v9290 = vsel %vm8776, %v9238, 0
    %v9293 = vsel %vm8776, %v9239, 0
    %v9296 = vsel %vm8801, %v9263, 0
    %9298 = vmatpush.bf16.msra.mxu0 %v9296
    %9299 = vmatpush.bf16.msra.mxu0 %v9262
    %9300 = vmatpush.bf16.msra.mxu0 %v9261
    %9301 = vmatpush.bf16.msra.mxu0 %v9260
    %9302 = vmatpush.bf16.msra.mxu0 %v9259
    %9303 = vmatpush.bf16.msra.mxu0 %v9258
    %9304 = vmatpush.bf16.msra.mxu0 %v9257
    %9305 = vmatpush.bf16.msra.mxu0 %v9256
    %9306 = vmatmul.bf16.gmra.mxu0 %v9272
    %v9307 = vpop.f32.mrf.mxu0
    %v9308 = vadd.f32 0.0, %v9307
    %v9309 = vpop.f32.mrf.mxu0
    %v9310 = vadd.f32 0.0, %v9309
    %9311 = vmatmul.bf16.gmra.mxu0 %v9275
    %v9312 = vpop.f32.mrf.mxu0
    %v9313 = vadd.f32 0.0, %v9312
    %v9314 = vpop.f32.mrf.mxu0
    %v9315 = vadd.f32 0.0, %v9314
    %9316 = vmatmul.bf16.gmra.mxu0 %v9278
    %v9317 = vpop.f32.mrf.mxu0
    %v9318 = vadd.f32 0.0, %v9317
    %v9319 = vpop.f32.mrf.mxu0
    %v9320 = vadd.f32 0.0, %v9319
    %9321 = vmatmul.bf16.gmra.mxu0 %v9281
    %v9322 = vpop.f32.mrf.mxu0
    %v9323 = vadd.f32 0.0, %v9322
    %v9324 = vpop.f32.mrf.mxu0
    %v9325 = vadd.f32 0.0, %v9324
    %9326 = vmatmul.bf16.gmra.mxu0 %v9284
    %v9327 = vpop.f32.mrf.mxu0
    %v9328 = vadd.f32 0.0, %v9327
    %v9329 = vpop.f32.mrf.mxu0
    %v9330 = vadd.f32 0.0, %v9329
    %9331 = vmatmul.bf16.gmra.mxu0 %v9287
    %v9332 = vpop.f32.mrf.mxu0
    %v9333 = vadd.f32 0.0, %v9332
    %v9334 = vpop.f32.mrf.mxu0
    %v9335 = vadd.f32 0.0, %v9334
    %9336 = vmatmul.bf16.gmra.mxu0 %v9290
    %v9337 = vpop.f32.mrf.mxu0
    %v9338 = vadd.f32 0.0, %v9337
    %v9339 = vpop.f32.mrf.mxu0
    %v9340 = vadd.f32 0.0, %v9339
    %9341 = vmatmul.bf16.gmra.mxu0 %v9293
    %v9342 = vpop.f32.mrf.mxu0
    %v9343 = vadd.f32 0.0, %v9342
    %v9344 = vpop.f32.mrf.mxu0
    %9345 = vdwg.mxu0
    %v9346 = vadd.f32 %v9172, %v9308
    %v9347 = vadd.f32 %v9173, %v9310
    %v9348 = vadd.f32 %v9174, %v9313
    %v9349 = vadd.f32 %v9175, %v9315
    %v9350 = vadd.f32 %v9176, %v9318
    %v9351 = vadd.f32 %v9177, %v9320
    %v9352 = vadd.f32 %v9178, %v9323
    %v9353 = vadd.f32 %v9179, %v9325
    %v9354 = vadd.f32 %v9180, %v9328
    %v9355 = vadd.f32 %v9181, %v9330
    %v9356 = vadd.f32 %v9182, %v9333
    %v9357 = vadd.f32 %v9183, %v9335
    %v9358 = vadd.f32 %v9184, %v9338
    %v9359 = vadd.f32 %v9185, %v9340
    %v9360 = vadd.f32 %v9186, %v9343
    %v9361 = vld [vmem:[#allocation11 + $0x334] sm:$0xf]
    %v9362 = vld [vmem:[#allocation11 + $0x338] sm:$0xf]
    %v9363 = vld [vmem:[#allocation11 + $0x33c] sm:$0xf]
    %v9364 = vld [vmem:[#allocation11 + $0x340] sm:$0xf]
    %v9365 = vld [vmem:[#allocation11 + $0x344] sm:$0xf]
    %v9366 = vld [vmem:[#allocation11 + $0x348] sm:$0xf]
    %v9367 = vld [vmem:[#allocation11 + $0x34c] sm:$0xf]
    %v9368 = vld [vmem:[#allocation11 + $0x350] sm:$0xf]
    %v9369 = vld [vmem:[#allocation11 + $0x354] sm:$0xf]
    %v9370 = vld [vmem:[#allocation11 + $0x358] sm:$0xf]
    %v9371 = vld [vmem:[#allocation11 + $0x35c] sm:$0xf]
    %v9372 = vld [vmem:[#allocation11 + $0x360] sm:$0xf]
    %v9373 = vld [vmem:[#allocation11 + $0x364] sm:$0xf]
    %v9374 = vld [vmem:[#allocation11 + $0x368] sm:$0xf]
    %v9375 = vld [vmem:[#allocation11 + $0x36c] sm:$0xf]
    %v9391 = vunpack.c.l.b16 %v9361
    %v9392 = vunpack.c.l.b16 %v9362
    %v9393 = vunpack.c.l.b16 %v9363
    %v9394 = vunpack.c.l.b16 %v9364
    %v9395 = vunpack.c.l.b16 %v9365
    %v9396 = vunpack.c.l.b16 %v9366
    %v9397 = vunpack.c.l.b16 %v9367
    %v9398 = vunpack.c.l.b16 %v9368
    %v9399 = vunpack.c.l.b16 %v9369
    %v9400 = vunpack.c.l.b16 %v9370
    %v9401 = vunpack.c.l.b16 %v9371
    %v9402 = vunpack.c.l.b16 %v9372
    %v9403 = vunpack.c.l.b16 %v9373
    %v9404 = vunpack.c.l.b16 %v9374
    %v9405 = vunpack.c.l.b16 %v9375
    %v9406 = vpack.c.b16 %v9392, %v9391
    %v9407 = vpack.c.b16 %v9394, %v9393
    %v9408 = vpack.c.b16 %v9396, %v9395
    %v9409 = vpack.c.b16 %v9398, %v9397
    %v9410 = vpack.c.b16 %v9400, %v9399
    %v9411 = vpack.c.b16 %v9402, %v9401
    %v9412 = vpack.c.b16 %v9404, %v9403
    %v9413 = vpack.c.b16 %v9405, %v9405
    %v9430 = vunpack.c.l.b16 %v8615
    %v9431 = vunpack.c.l.b16 %v8618
    %v9432 = vunpack.c.l.b16 %v8621
    %v9433 = vunpack.c.l.b16 %v8624
    %v9434 = vunpack.c.l.b16 %v8627
    %v9435 = vunpack.c.l.b16 %v8630
    %v9436 = vunpack.c.l.b16 %v8633
    %v9437 = vunpack.c.l.b16 %v8636
    %v9438 = vunpack.c.l.b16 %v8639
    %v9439 = vunpack.c.l.b16 %v8642
    %v9440 = vunpack.c.l.b16 %v8645
    %v9441 = vunpack.c.l.b16 %v8648
    %v9442 = vunpack.c.l.b16 %v8651
    %v9443 = vunpack.c.l.b16 %v8654
    %v9444 = vunpack.c.l.b16 %v8657
    %v9445 = vunpack.c.l.b16 %v8660
    %v9446 = vpack.c.b16 %v9431, %v9430
    %v9447 = vpack.c.b16 %v9433, %v9432
    %v9448 = vpack.c.b16 %v9435, %v9434
    %v9449 = vpack.c.b16 %v9437, %v9436
    %v9450 = vpack.c.b16 %v9439, %v9438
    %v9451 = vpack.c.b16 %v9441, %v9440
    %v9452 = vpack.c.b16 %v9443, %v9442
    %v9453 = vpack.c.b16 %v9445, %v9444
    %v9462 = vsel %vm8776, %v9406, 0
    %v9465 = vsel %vm8776, %v9407, 0
    %v9468 = vsel %vm8776, %v9408, 0
    %v9471 = vsel %vm8776, %v9409, 0
    %v9474 = vsel %vm8776, %v9410, 0
    %v9477 = vsel %vm8776, %v9411, 0
    %v9480 = vsel %vm8776, %v9412, 0
    %v9483 = vsel %vm8776, %v9413, 0
    %v9486 = vsel %vm8801, %v9453, 0
    %9488 = vmatpush.bf16.msra.mxu0 %v9486
    %9489 = vmatpush.bf16.msra.mxu0 %v9452
    %9490 = vmatpush.bf16.msra.mxu0 %v9451
    %9491 = vmatpush.bf16.msra.mxu0 %v9450
    %9492 = vmatpush.bf16.msra.mxu0 %v9449
    %9493 = vmatpush.bf16.msra.mxu0 %v9448
    %9494 = vmatpush.bf16.msra.mxu0 %v9447
    %9495 = vmatpush.bf16.msra.mxu0 %v9446
    %9496 = vmatmul.bf16.gmra.mxu0 %v9462
    %v9497 = vpop.f32.mrf.mxu0
    %v9498 = vadd.f32 0.0, %v9497
    %v9499 = vpop.f32.mrf.mxu0
    %v9500 = vadd.f32 0.0, %v9499
    %9501 = vmatmul.bf16.gmra.mxu0 %v9465
    %v9502 = vpop.f32.mrf.mxu0
    %v9503 = vadd.f32 0.0, %v9502
    %v9504 = vpop.f32.mrf.mxu0
    %v9505 = vadd.f32 0.0, %v9504
    %9506 = vmatmul.bf16.gmra.mxu0 %v9468
    %v9507 = vpop.f32.mrf.mxu0
    %v9508 = vadd.f32 0.0, %v9507
    %v9509 = vpop.f32.mrf.mxu0
    %v9510 = vadd.f32 0.0, %v9509
    %9511 = vmatmul.bf16.gmra.mxu0 %v9471
    %v9512 = vpop.f32.mrf.mxu0
    %v9513 = vadd.f32 0.0, %v9512
    %v9514 = vpop.f32.mrf.mxu0
    %v9515 = vadd.f32 0.0, %v9514
    %9516 = vmatmul.bf16.gmra.mxu0 %v9474
    %v9517 = vpop.f32.mrf.mxu0
    %v9518 = vadd.f32 0.0, %v9517
    %v9519 = vpop.f32.mrf.mxu0
    %v9520 = vadd.f32 0.0, %v9519
    %9521 = vmatmul.bf16.gmra.mxu0 %v9477
    %v9522 = vpop.f32.mrf.mxu0
    %v9523 = vadd.f32 0.0, %v9522
    %v9524 = vpop.f32.mrf.mxu0
    %v9525 = vadd.f32 0.0, %v9524
    %9526 = vmatmul.bf16.gmra.mxu0 %v9480
    %v9527 = vpop.f32.mrf.mxu0
    %v9528 = vadd.f32 0.0, %v9527
    %v9529 = vpop.f32.mrf.mxu0
    %v9530 = vadd.f32 0.0, %v9529
    %9531 = vmatmul.bf16.gmra.mxu0 %v9483
    %v9532 = vpop.f32.mrf.mxu0
    %v9533 = vadd.f32 0.0, %v9532
    %v9534 = vpop.f32.mrf.mxu0
    %9535 = vdwg.mxu0
    %v9536 = vadd.f32 %v9346, %v9498
    %v9537 = vadd.f32 %v9347, %v9500
    %v9538 = vadd.f32 %v9348, %v9503
    %v9539 = vadd.f32 %v9349, %v9505
    %v9540 = vadd.f32 %v9350, %v9508
    %v9541 = vadd.f32 %v9351, %v9510
    %v9542 = vadd.f32 %v9352, %v9513
    %v9543 = vadd.f32 %v9353, %v9515
    %v9544 = vadd.f32 %v9354, %v9518
    %v9545 = vadd.f32 %v9355, %v9520
    %v9546 = vadd.f32 %v9356, %v9523
    %v9547 = vadd.f32 %v9357, %v9525
    %v9548 = vadd.f32 %v9358, %v9528
    %v9549 = vadd.f32 %v9359, %v9530
    %v9550 = vadd.f32 %v9360, %v9533
    %v9551 = vld [vmem:[%s7 + $0x62] ss:$0 sm:$0xff]
    %v9552 = vadd.f32 %v9536, %v9551
    %v9553 = vadd.f32 %v9537, %v9551
    %v9554 = vadd.f32 %v9538, %v9551
    %v9555 = vadd.f32 %v9539, %v9551
    %v9556 = vadd.f32 %v9540, %v9551
    %v9557 = vadd.f32 %v9541, %v9551
    %v9558 = vadd.f32 %v9542, %v9551
    %v9559 = vadd.f32 %v9543, %v9551
    %v9560 = vadd.f32 %v9544, %v9551
    %v9561 = vadd.f32 %v9545, %v9551
    %v9562 = vadd.f32 %v9546, %v9551
    %v9563 = vadd.f32 %v9547, %v9551
    %v9564 = vadd.f32 %v9548, %v9551
    %v9565 = vadd.f32 %v9549, %v9551
    %v9566 = vadd.f32 %v9550, %v9551
    %v9567 = vxor.u32 %v9552, 2147483648
    %v9568 = vxor.u32 %v9553, 2147483648
    %v9569 = vxor.u32 %v9554, 2147483648
    %v9570 = vxor.u32 %v9555, 2147483648
    %v9571 = vxor.u32 %v9556, 2147483648
    %v9572 = vxor.u32 %v9557, 2147483648
    %v9573 = vxor.u32 %v9558, 2147483648
    %v9574 = vxor.u32 %v9559, 2147483648
    %v9575 = vxor.u32 %v9560, 2147483648
    %v9576 = vxor.u32 %v9561, 2147483648
    %v9577 = vxor.u32 %v9562, 2147483648
    %v9578 = vxor.u32 %v9563, 2147483648
    %v9579 = vxor.u32 %v9564, 2147483648
    %v9580 = vxor.u32 %v9565, 2147483648
    %v9581 = vxor.u32 %v9566, 2147483648
    %v9582 = vmul.f32 %v9567, 1.442695
    %v9583 = vpow.pop %v9582
    %v9584 = vmul.f32 %v9568, 1.442695
    %v9585 = vpow.pop %v9584
    %v9586 = vmul.f32 %v9569, 1.442695
    %v9587 = vpow.pop %v9586
    %v9588 = vmul.f32 %v9570, 1.442695
    %v9589 = vpow.pop %v9588
    %v9590 = vmul.f32 %v9571, 1.442695
    %v9591 = vpow.pop %v9590
    %v9592 = vmul.f32 %v9572, 1.442695
    %v9593 = vpow.pop %v9592
    %v9594 = vmul.f32 %v9573, 1.442695
    %v9595 = vpow.pop %v9594
    %v9596 = vmul.f32 %v9574, 1.442695
    %v9597 = vpow.pop %v9596
    %v9598 = vmul.f32 %v9575, 1.442695
    %v9599 = vpow.pop %v9598
    %v9600 = vmul.f32 %v9576, 1.442695
    %v9601 = vpow.pop %v9600
    %v9602 = vmul.f32 %v9577, 1.442695
    %v9603 = vpow.pop %v9602
    %v9604 = vmul.f32 %v9578, 1.442695
    %v9605 = vpow.pop %v9604
    %v9606 = vmul.f32 %v9579, 1.442695
    %v9607 = vpow.pop %v9606
    %v9608 = vmul.f32 %v9580, 1.442695
    %v9609 = vpow.pop %v9608
    %v9610 = vmul.f32 %v9581, 1.442695
    %v9611 = vpow.pop %v9610
    %v9612 = vadd.f32 %v9583, 1.0
    %v9613 = vadd.f32 %v9585, 1.0
    %v9614 = vadd.f32 %v9587, 1.0
    %v9615 = vadd.f32 %v9589, 1.0
    %v9616 = vadd.f32 %v9591, 1.0
    %v9617 = vadd.f32 %v9593, 1.0
    %v9618 = vadd.f32 %v9595, 1.0
    %v9619 = vadd.f32 %v9597, 1.0
    %v9620 = vadd.f32 %v9599, 1.0
    %v9621 = vadd.f32 %v9601, 1.0
    %v9622 = vadd.f32 %v9603, 1.0
    %v9623 = vadd.f32 %v9605, 1.0
    %v9624 = vadd.f32 %v9607, 1.0
    %v9625 = vadd.f32 %v9609, 1.0
    %v9626 = vadd.f32 %v9611, 1.0
    %v9627 = vrcp.pop %v9612
    %v9628 = vmul.f32 %v9612, %v9627
    %v9629 = vsub.f32 1.0, %v9628
    %v9630 = vmul.f32 %v9627, %v9629
    %v9631 = vadd.f32 %v9627, %v9630
    %vm9632 = vweird.f32 %v9612
    %vm9633 = vweird.f32 %v9627
    %vm9634 = vmor %vm9632, %vm9633
    %v9635 = vsel %vm9634, %v9627, %v9631
    %v9636 = vand.u32 2147483647, %v9612
    %vm9637 = vcmp.eq.f32.partialorder %v9636, 8.507059e+37
    %v9638 = vand.u32 %v9612, 2147483648
    %v9639 = vor.u32 1.1754944e-38, %v9638
    %v9640 = vsel %vm9637, %v9639, %v9635
    %v9641 = vmul.f32 1.0, %v9640
    %v9642 = vrcp.pop %v9613
    %v9643 = vmul.f32 %v9613, %v9642
    %v9644 = vsub.f32 1.0, %v9643
    %v9645 = vmul.f32 %v9642, %v9644
    %v9646 = vadd.f32 %v9642, %v9645
    %vm9647 = vweird.f32 %v9613
    %vm9648 = vweird.f32 %v9642
    %vm9649 = vmor %vm9647, %vm9648
    %v9650 = vsel %vm9649, %v9642, %v9646
    %v9651 = vand.u32 2147483647, %v9613
    %vm9652 = vcmp.eq.f32.partialorder %v9651, 8.507059e+37
    %v9653 = vand.u32 %v9613, 2147483648
    %v9654 = vor.u32 1.1754944e-38, %v9653
    %v9655 = vsel %vm9652, %v9654, %v9650
    %v9656 = vmul.f32 1.0, %v9655
    %v9657 = vrcp.pop %v9614
    %v9658 = vmul.f32 %v9614, %v9657
    %v9659 = vsub.f32 1.0, %v9658
    %v9660 = vmul.f32 %v9657, %v9659
    %v9661 = vadd.f32 %v9657, %v9660
    %vm9662 = vweird.f32 %v9614
    %vm9663 = vweird.f32 %v9657
    %vm9664 = vmor %vm9662, %vm9663
    %v9665 = vsel %vm9664, %v9657, %v9661
    %v9666 = vand.u32 2147483647, %v9614
    %vm9667 = vcmp.eq.f32.partialorder %v9666, 8.507059e+37
    %v9668 = vand.u32 %v9614, 2147483648
    %v9669 = vor.u32 1.1754944e-38, %v9668
    %v9670 = vsel %vm9667, %v9669, %v9665
    %v9671 = vmul.f32 1.0, %v9670
    %v9672 = vrcp.pop %v9615
    %v9673 = vmul.f32 %v9615, %v9672
    %v9674 = vsub.f32 1.0, %v9673
    %v9675 = vmul.f32 %v9672, %v9674
    %v9676 = vadd.f32 %v9672, %v9675
    %vm9677 = vweird.f32 %v9615
    %vm9678 = vweird.f32 %v9672
    %vm9679 = vmor %vm9677, %vm9678
    %v9680 = vsel %vm9679, %v9672, %v9676
    %v9681 = vand.u32 2147483647, %v9615
    %vm9682 = vcmp.eq.f32.partialorder %v9681, 8.507059e+37
    %v9683 = vand.u32 %v9615, 2147483648
    %v9684 = vor.u32 1.1754944e-38, %v9683
    %v9685 = vsel %vm9682, %v9684, %v9680
    %v9686 = vmul.f32 1.0, %v9685
    %v9687 = vrcp.pop %v9616
    %v9688 = vmul.f32 %v9616, %v9687
    %v9689 = vsub.f32 1.0, %v9688
    %v9690 = vmul.f32 %v9687, %v9689
    %v9691 = vadd.f32 %v9687, %v9690
    %vm9692 = vweird.f32 %v9616
    %vm9693 = vweird.f32 %v9687
    %vm9694 = vmor %vm9692, %vm9693
    %v9695 = vsel %vm9694, %v9687, %v9691
    %v9696 = vand.u32 2147483647, %v9616
    %vm9697 = vcmp.eq.f32.partialorder %v9696, 8.507059e+37
    %v9698 = vand.u32 %v9616, 2147483648
    %v9699 = vor.u32 1.1754944e-38, %v9698
    %v9700 = vsel %vm9697, %v9699, %v9695
    %v9701 = vmul.f32 1.0, %v9700
    %v9702 = vrcp.pop %v9617
    %v9703 = vmul.f32 %v9617, %v9702
    %v9704 = vsub.f32 1.0, %v9703
    %v9705 = vmul.f32 %v9702, %v9704
    %v9706 = vadd.f32 %v9702, %v9705
    %vm9707 = vweird.f32 %v9617
    %vm9708 = vweird.f32 %v9702
    %vm9709 = vmor %vm9707, %vm9708
    %v9710 = vsel %vm9709, %v9702, %v9706
    %v9711 = vand.u32 2147483647, %v9617
    %vm9712 = vcmp.eq.f32.partialorder %v9711, 8.507059e+37
    %v9713 = vand.u32 %v9617, 2147483648
    %v9714 = vor.u32 1.1754944e-38, %v9713
    %v9715 = vsel %vm9712, %v9714, %v9710
    %v9716 = vmul.f32 1.0, %v9715
    %v9717 = vrcp.pop %v9618
    %v9718 = vmul.f32 %v9618, %v9717
    %v9719 = vsub.f32 1.0, %v9718
    %v9720 = vmul.f32 %v9717, %v9719
    %v9721 = vadd.f32 %v9717, %v9720
    %vm9722 = vweird.f32 %v9618
    %vm9723 = vweird.f32 %v9717
    %vm9724 = vmor %vm9722, %vm9723
    %v9725 = vsel %vm9724, %v9717, %v9721
    %v9726 = vand.u32 2147483647, %v9618
    %vm9727 = vcmp.eq.f32.partialorder %v9726, 8.507059e+37
    %v9728 = vand.u32 %v9618, 2147483648
    %v9729 = vor.u32 1.1754944e-38, %v9728
    %v9730 = vsel %vm9727, %v9729, %v9725
    %v9731 = vmul.f32 1.0, %v9730
    %v9732 = vrcp.pop %v9619
    %v9733 = vmul.f32 %v9619, %v9732
    %v9734 = vsub.f32 1.0, %v9733
    %v9735 = vmul.f32 %v9732, %v9734
    %v9736 = vadd.f32 %v9732, %v9735
    %vm9737 = vweird.f32 %v9619
    %vm9738 = vweird.f32 %v9732
    %vm9739 = vmor %vm9737, %vm9738
    %v9740 = vsel %vm9739, %v9732, %v9736
    %v9741 = vand.u32 2147483647, %v9619
    %vm9742 = vcmp.eq.f32.partialorder %v9741, 8.507059e+37
    %v9743 = vand.u32 %v9619, 2147483648
    %v9744 = vor.u32 1.1754944e-38, %v9743
    %v9745 = vsel %vm9742, %v9744, %v9740
    %v9746 = vmul.f32 1.0, %v9745
    %v9747 = vrcp.pop %v9620
    %v9748 = vmul.f32 %v9620, %v9747
    %v9749 = vsub.f32 1.0, %v9748
    %v9750 = vmul.f32 %v9747, %v9749
    %v9751 = vadd.f32 %v9747, %v9750
    %vm9752 = vweird.f32 %v9620
    %vm9753 = vweird.f32 %v9747
    %vm9754 = vmor %vm9752, %vm9753
    %v9755 = vsel %vm9754, %v9747, %v9751
    %v9756 = vand.u32 2147483647, %v9620
    %vm9757 = vcmp.eq.f32.partialorder %v9756, 8.507059e+37
    %v9758 = vand.u32 %v9620, 2147483648
    %v9759 = vor.u32 1.1754944e-38, %v9758
    %v9760 = vsel %vm9757, %v9759, %v9755
    %v9761 = vmul.f32 1.0, %v9760
    %v9762 = vrcp.pop %v9621
    %v9763 = vmul.f32 %v9621, %v9762
    %v9764 = vsub.f32 1.0, %v9763
    %v9765 = vmul.f32 %v9762, %v9764
    %v9766 = vadd.f32 %v9762, %v9765
    %vm9767 = vweird.f32 %v9621
    %vm9768 = vweird.f32 %v9762
    %vm9769 = vmor %vm9767, %vm9768
    %v9770 = vsel %vm9769, %v9762, %v9766
    %v9771 = vand.u32 2147483647, %v9621
    %vm9772 = vcmp.eq.f32.partialorder %v9771, 8.507059e+37
    %v9773 = vand.u32 %v9621, 2147483648
    %v9774 = vor.u32 1.1754944e-38, %v9773
    %v9775 = vsel %vm9772, %v9774, %v9770
    %v9776 = vmul.f32 1.0, %v9775
    %v9777 = vrcp.pop %v9622
    %v9778 = vmul.f32 %v9622, %v9777
    %v9779 = vsub.f32 1.0, %v9778
    %v9780 = vmul.f32 %v9777, %v9779
    %v9781 = vadd.f32 %v9777, %v9780
    %vm9782 = vweird.f32 %v9622
    %vm9783 = vweird.f32 %v9777
    %vm9784 = vmor %vm9782, %vm9783
    %v9785 = vsel %vm9784, %v9777, %v9781
    %v9786 = vand.u32 2147483647, %v9622
    %vm9787 = vcmp.eq.f32.partialorder %v9786, 8.507059e+37
    %v9788 = vand.u32 %v9622, 2147483648
    %v9789 = vor.u32 1.1754944e-38, %v9788
    %v9790 = vsel %vm9787, %v9789, %v9785
    %v9791 = vmul.f32 1.0, %v9790
    %v9792 = vrcp.pop %v9623
    %v9793 = vmul.f32 %v9623, %v9792
    %v9794 = vsub.f32 1.0, %v9793
    %v9795 = vmul.f32 %v9792, %v9794
    %v9796 = vadd.f32 %v9792, %v9795
    %vm9797 = vweird.f32 %v9623
    %vm9798 = vweird.f32 %v9792
    %vm9799 = vmor %vm9797, %vm9798
    %v9800 = vsel %vm9799, %v9792, %v9796
    %v9801 = vand.u32 2147483647, %v9623
    %vm9802 = vcmp.eq.f32.partialorder %v9801, 8.507059e+37
    %v9803 = vand.u32 %v9623, 2147483648
    %v9804 = vor.u32 1.1754944e-38, %v9803
    %v9805 = vsel %vm9802, %v9804, %v9800
    %v9806 = vmul.f32 1.0, %v9805
    %v9807 = vrcp.pop %v9624
    %v9808 = vmul.f32 %v9624, %v9807
    %v9809 = vsub.f32 1.0, %v9808
    %v9810 = vmul.f32 %v9807, %v9809
    %v9811 = vadd.f32 %v9807, %v9810
    %vm9812 = vweird.f32 %v9624
    %vm9813 = vweird.f32 %v9807
    %vm9814 = vmor %vm9812, %vm9813
    %v9815 = vsel %vm9814, %v9807, %v9811
    %v9816 = vand.u32 2147483647, %v9624
    %vm9817 = vcmp.eq.f32.partialorder %v9816, 8.507059e+37
    %v9818 = vand.u32 %v9624, 2147483648
    %v9819 = vor.u32 1.1754944e-38, %v9818
    %v9820 = vsel %vm9817, %v9819, %v9815
    %v9821 = vmul.f32 1.0, %v9820
    %v9822 = vrcp.pop %v9625
    %v9823 = vmul.f32 %v9625, %v9822
    %v9824 = vsub.f32 1.0, %v9823
    %v9825 = vmul.f32 %v9822, %v9824
    %v9826 = vadd.f32 %v9822, %v9825
    %vm9827 = vweird.f32 %v9625
    %vm9828 = vweird.f32 %v9822
    %vm9829 = vmor %vm9827, %vm9828
    %v9830 = vsel %vm9829, %v9822, %v9826
    %v9831 = vand.u32 2147483647, %v9625
    %vm9832 = vcmp.eq.f32.partialorder %v9831, 8.507059e+37
    %v9833 = vand.u32 %v9625, 2147483648
    %v9834 = vor.u32 1.1754944e-38, %v9833
    %v9835 = vsel %vm9832, %v9834, %v9830
    %v9836 = vmul.f32 1.0, %v9835
    %v9837 = vrcp.pop %v9626
    %v9838 = vmul.f32 %v9626, %v9837
    %v9839 = vsub.f32 1.0, %v9838
    %v9840 = vmul.f32 %v9837, %v9839
    %v9841 = vadd.f32 %v9837, %v9840
    %vm9842 = vweird.f32 %v9626
    %vm9843 = vweird.f32 %v9837
    %vm9844 = vmor %vm9842, %vm9843
    %v9845 = vsel %vm9844, %v9837, %v9841
    %v9846 = vand.u32 2147483647, %v9626
    %vm9847 = vcmp.eq.f32.partialorder %v9846, 8.507059e+37
    %v9848 = vand.u32 %v9626, 2147483648
    %v9849 = vor.u32 1.1754944e-38, %v9848
    %v9850 = vsel %vm9847, %v9849, %v9845
    %v9851 = vmul.f32 1.0, %v9850
    %9852 = vst [vmem:[%s9] sm:$0xff] %v9641
    %9853 = vst [vmem:[%s9 + $0x8] sm:$0xff] %v9656
    %9854 = vst [vmem:[%s9 + $0x10] sm:$0xff] %v9671
    %9855 = vst [vmem:[%s9 + $0x18] sm:$0xff] %v9686
    %9856 = vst [vmem:[%s9 + $0x20] sm:$0xff] %v9701
    %9857 = vst [vmem:[%s9 + $0x28] sm:$0xff] %v9716
    %9858 = vst [vmem:[%s9 + $0x30] sm:$0xff] %v9731
    %9859 = vst [vmem:[%s9 + $0x38] sm:$0xff] %v9746
    %9860 = vst [vmem:[%s9 + $0x40] sm:$0xff] %v9761
    %9861 = vst [vmem:[%s9 + $0x48] sm:$0xff] %v9776
    %9862 = vst [vmem:[%s9 + $0x50] sm:$0xff] %v9791
    %9863 = vst [vmem:[%s9 + $0x58] sm:$0xff] %v9806
    %9864 = vst [vmem:[%s9 + $0x60] sm:$0xff] %v9821
    %9865 = vst [vmem:[%s9 + $0x68] sm:$0xff] %v9836
    %9866 = vst [vmem:[%s9 + $0x70] sm:$0xff] %v9851
    // Predicated region
    $region58: #{forward.1} parent=1 // pred_check
      _
    $region59: #{forward.1} parent=1 // pred_check_branch
      %9868 = sbr.rel (0) target = $region61
    $region60: #{forward.1} parent=1 // pred_region
      %9870 = vsyncadd [#allocation4], 0
      %s9872 = sshll.u32 [#allocation13], 4
      %s9873 = int_to_ptr.vmem [resolvable:$true] %s9872
      %s9874 = sshll.u32 %s8, 4
      %s9875 = int_to_ptr.hbm [resolvable:$true] %s9874
      %9877 = dma.vmem_to_hbm [thread:$0]  %s9873, 32, %s9875, [#allocation4]
    $region61: #{forward.1} parent=1 // pred_fallthru
      _
    // Predicated region
    $region62: #{forward.1} parent=1 // pred_check
      _
    $region63: #{forward.1} parent=1 // pred_check_branch
      %9879 = sbr.rel (0) target = $region65
    $region64: #{forward.1} parent=1 // pred_region
      _
    $region65: #{forward.1} parent=1 // pred_fallthru
      _
    // Predicated region
    $region66: #{forward.1} parent=1 // pred_check
      _
    $region67: #{forward.1} parent=1 // pred_check_branch
      %9881 = sbr.rel (0) target = $region69
    $region68: #{forward.1} parent=1 // pred_region
      %9883 = dma.done [#allocation4], 32
    $region69: #{forward.1} parent=1 // pred_fallthru
      _
    // Predicated region
    $region70: #{forward.1} parent=1 // pred_check
      _
    $region71: #{forward.1} parent=1 // pred_check_branch
      %9885 = sbr.rel (0) target = $region73
    $region72: #{forward.1} parent=1 // pred_region
      _
    $region73: #{forward.1} parent=1 // pred_fallthru
      _
    %9886 = vsyncpa [#allocation3], 1
    %9887 = vsyncpa [#allocation6], 1
    %9888 = vsyncpa [#allocation9], 1
    %9889 = vsyncpa [#allocation12], 1
    %9890 = vsyncpa [#allocation4], 1

</llo_original>
